<compile_context>
chip_gen: v7x
topology: tpu7x:2x2x1
jax: 0.10.0
libtpu: 0.0.40
codegen_flags: <defaults>
</compile_context>

<pallas_src>
import functools
import math

import jax
import jax.numpy as jnp
from jax.experimental import pallas as pl
from jax.experimental.pallas import tpu as pltpu


ROW_TILE = 512                      # row tile for row-parallel matmuls (sweep 256/512/1024)
KV_TILE = 512                       # KV tile for the online-softmax attention
_VMEM_LIMIT = 32 * 1024 * 1024      # explicit scoped-VMEM budget (raises v5e's 16 MiB default)


def _cparams(sem):
    return pltpu.CompilerParams(dimension_semantics=sem, vmem_limit_bytes=_VMEM_LIMIT)


# -----------------------------------------------------------------------------
# Fused matmul:  o = act( ln?( a @ w * scale + shift + residual ) )
# Optional operands are compiled out; activations/weights hit the MXU in bf16,
# accumulation and epilogue are f32.
# -----------------------------------------------------------------------------
def _mm_kernel(*refs, has_scale, has_shift, has_res, has_ln, out_act, ln_eps):
    it = iter(refs)
    a_ref = next(it)
    w_ref = next(it)
    scale_ref = next(it) if has_scale else None
    shift_ref = next(it) if has_shift else None
    res_ref = next(it) if has_res else None
    g_ref = next(it) if has_ln else None
    b_ref = next(it) if has_ln else None
    o_ref = next(it)

    a = a_ref[...]
    if a.dtype != jnp.bfloat16:
        a = a.astype(jnp.bfloat16)
    acc = jnp.dot(a, w_ref[...], preferred_element_type=jnp.float32)
    if has_scale:
        acc = acc * scale_ref[...]
    if has_shift:
        acc = acc + shift_ref[...]
    if has_res:
        acc = acc + res_ref[...].astype(jnp.float32)
    if has_ln:
        mu = jnp.mean(acc, axis=-1, keepdims=True)
        xc = acc - mu
        var = jnp.mean(xc * xc, axis=-1, keepdims=True)
        acc = xc * jax.lax.rsqrt(var + ln_eps) * g_ref[...] + b_ref[...]
    if out_act == "relu":
        acc = jnp.maximum(acc, 0.0)
    elif out_act == "sigmoid":
        acc = pl.reciprocal(1.0 + jnp.exp(-acc), approx=True)
    o_ref[...] = acc.astype(o_ref.dtype)


def _mm(a, w, *, scale=None, shift=None, residual=None, ln=None,
        out_act=None, out_dtype=jnp.float32, ln_eps=1e-5):
    rows, k = a.shape
    k2, n = w.shape
    assert k == k2, (k, k2)
    row_tile = min(rows, ROW_TILE)
    grid = (pl.cdiv(rows, row_tile),)          # ragged last block handled by Pallas masking

    operands = [a, w.astype(jnp.bfloat16)]
    in_specs = [pl.BlockSpec((row_tile, k), lambda i: (i, 0)),
                pl.BlockSpec((k, n), lambda i: (0, 0))]

    def add_row_vec(v):
        operands.append(v.reshape(1, n).astype(jnp.float32))
        in_specs.append(pl.BlockSpec((1, n), lambda i: (0, 0)))

    if scale is not None:
        add_row_vec(scale)
    if shift is not None:
        add_row_vec(shift)
    if residual is not None:
        operands.append(residual)
        in_specs.append(pl.BlockSpec((row_tile, n), lambda i: (i, 0)))
    if ln is not None:
        add_row_vec(ln[0])
        add_row_vec(ln[1])

    kernel = functools.partial(
        _mm_kernel, has_scale=scale is not None, has_shift=shift is not None,
        has_res=residual is not None, has_ln=ln is not None,
        out_act=out_act, ln_eps=ln_eps)

    return pl.pallas_call(
        kernel,
        out_shape=jax.ShapeDtypeStruct((rows, n), out_dtype),
        grid=grid,
        in_specs=in_specs,
        out_specs=pl.BlockSpec((row_tile, n), lambda i: (i, 0)),
        compiler_params=_cparams(("parallel",)),
    )(*operands)


# -----------------------------------------------------------------------------
# Fusion 1x1 conv as a dual matmul: o = conv_out @ Wc + trans @ Wt + bias
# (the channel concat is never materialized, no intermediate HBM round trip)
# -----------------------------------------------------------------------------
def _fusion_kernel(a_ref, wa_ref, b_ref, wb_ref, bias_ref, o_ref):
    a = a_ref[...]
    if a.dtype != jnp.bfloat16:
        a = a.astype(jnp.bfloat16)
    b = b_ref[...]
    if b.dtype != jnp.bfloat16:
        b = b.astype(jnp.bfloat16)
    acc = jnp.dot(a, wa_ref[...], preferred_element_type=jnp.float32)
    acc = acc + jnp.dot(b, wb_ref[...], preferred_element_type=jnp.float32)
    o_ref[...] = (acc + bias_ref[...]).astype(o_ref.dtype)


def _fusion_mm(a, wa, b, wb, bias, out_dtype=jnp.float32):
    rows, k = a.shape
    n = wa.shape[1]
    row_tile = min(rows, ROW_TILE)
    grid = (pl.cdiv(rows, row_tile),)
    return pl.pallas_call(
        _fusion_kernel,
        out_shape=jax.ShapeDtypeStruct((rows, n), out_dtype),
        grid=grid,
        in_specs=[pl.BlockSpec((row_tile, k), lambda i: (i, 0)),
                  pl.BlockSpec((k, n), lambda i: (0, 0)),
                  pl.BlockSpec((row_tile, k), lambda i: (i, 0)),
                  pl.BlockSpec((k, n), lambda i: (0, 0)),
                  pl.BlockSpec((1, n), lambda i: (0, 0))],
        out_specs=pl.BlockSpec((row_tile, n), lambda i: (i, 0)),
        compiler_params=_cparams(("parallel",)),
    )(a, wa.astype(jnp.bfloat16), b, wb.astype(jnp.bfloat16),
      bias.reshape(1, n).astype(jnp.float32))


# -----------------------------------------------------------------------------
# Patch embedding (per-batch):  o = patches @ W + bias + pos_enc
# One (s, d) copy of pos_enc stays resident; no jnp.tile over batch.
# -----------------------------------------------------------------------------
def _embed_kernel(a_ref, w_ref, bias_ref, pos_ref, o_ref):
    a = a_ref[...]
    if a.dtype != jnp.bfloat16:
        a = a.astype(jnp.bfloat16)
    acc = jnp.dot(a, w_ref[...], preferred_element_type=jnp.float32)
    o_ref[...] = (acc + bias_ref[...] + pos_ref[...]).astype(o_ref.dtype)


def _patch_embed(patches, w, bias, pos):
    b, s, k = patches.shape
    d = w.shape[1]
    return pl.pallas_call(
        _embed_kernel,
        out_shape=jax.ShapeDtypeStruct((b, s, d), jnp.float32),
        grid=(b,),
        in_specs=[pl.BlockSpec((None, s, k), lambda i: (i, 0, 0)),
                  pl.BlockSpec((k, d), lambda i: (0, 0)),
                  pl.BlockSpec((1, d), lambda i: (0, 0)),
                  pl.BlockSpec((s, d), lambda i: (0, 0))],
        out_specs=pl.BlockSpec((None, s, d), lambda i: (i, 0, 0)),
        compiler_params=_cparams(("parallel",)),
    )(patches, w.astype(jnp.bfloat16), bias.reshape(1, d).astype(jnp.float32),
      pos.astype(jnp.float32))


# -----------------------------------------------------------------------------
# 3x3 conv + folded BN (+ReLU) per batch, optional CA avg/max pooling outputs.
# Input z is the W-tap staged map: z[(y+1)*w + x, dx*d + i] = x[y+dy-1, x+dx-1, i]
# is obtained in-kernel by three row-shifted slices (H taps) of one bf16 staging
# tensor; each tap is a (hw, 3d) @ (3d, d) MXU dot accumulated in f32.
# -----------------------------------------------------------------------------
def _conv3x3_kernel(z_ref, w_ref, scale_ref, shift_ref, *out_refs,
                    hw, wcols, relu, pool):
    o_ref = out_refs[0]
    d = o_ref.shape[-1]
    acc = jnp.zeros((hw, d), jnp.float32)
    for dy in range(3):
        tap = z_ref[pl.ds(dy * wcols, hw), :]               # (hw, 3d) bf16
        acc = acc + jnp.dot(tap, w_ref[dy], preferred_element_type=jnp.float32)
    acc = acc * scale_ref[...] + shift_ref[...]
    if relu:
        acc = jnp.maximum(acc, 0.0)
    o_ref[...] = acc.astype(o_ref.dtype)
    if pool:                                                # CA pooling fused here
        out_refs[1][...] = jnp.mean(acc, axis=0, keepdims=True)
        out_refs[2][...] = jnp.max(acc, axis=0, keepdims=True)


def _conv3x3(x_map, w9, scale, shift, *, relu, pool, out_dtype):
    b, h, w, d = x_map.shape
    hw = h * w
    # Stage the three W-taps once (bf16, fused with the pad/cast in XLA): 3x the map,
    # instead of the 9x of a full im2col.  H-taps are done in-kernel by row shifts.
    xw = jnp.pad(x_map, ((0, 0), (0, 0), (1, 1), (0, 0)))
    z = jnp.concatenate([xw[:, :, 0:w, :], xw[:, :, 1:w + 1, :], xw[:, :, 2:w + 2, :]],
                        axis=-1)
    z = jnp.pad(z, ((0, 0), (1, 1), (0, 0), (0, 0))).astype(jnp.bfloat16)
    z = z.reshape(b, (h + 2) * w, 3 * d)

    out_shapes = [jax.ShapeDtypeStruct((b, hw, d), out_dtype)]
    out_specs = [pl.BlockSpec((None, hw, d), lambda i: (i, 0, 0))]
    if pool:
        out_shapes += [jax.ShapeDtypeStruct((b, 1, d), jnp.float32)] * 2
        out_specs += [pl.BlockSpec((None, 1, d), lambda i: (i, 0, 0))] * 2

    kernel = functools.partial(_conv3x3_kernel, hw=hw, wcols=w, relu=relu, pool=pool)
    res = pl.pallas_call(
        kernel,
        out_shape=tuple(out_shapes),
        grid=(b,),
        in_specs=[pl.BlockSpec((None, (h + 2) * w, 3 * d), lambda i: (i, 0, 0)),
                  pl.BlockSpec((3, 3 * d, d), lambda i: (0, 0, 0)),
                  pl.BlockSpec((1, d), lambda i: (0, 0)),
                  pl.BlockSpec((1, d), lambda i: (0, 0))],
        out_specs=tuple(out_specs),
        compiler_params=_cparams(("parallel",)),
    )(z, w9, scale.reshape(1, d).astype(jnp.float32),
      shift.reshape(1, d).astype(jnp.float32))
    return res if pool else res[0]


# -----------------------------------------------------------------------------
# Channel attention FCs: sigmoid(fc(avg) + fc(max)), both FCs + sigmoid fused.
# -----------------------------------------------------------------------------
def _ca_fc_kernel(avg_ref, max_ref, w1_ref, w2_ref, o_ref):
    w1 = w1_ref[...]
    w2 = w2_ref[...]

    def fc(x):
        hmid = jnp.dot(x.astype(jnp.bfloat16), w1, preferred_element_type=jnp.float32)
        hmid = jnp.maximum(hmid, 0.0)
        return jnp.dot(hmid.astype(jnp.bfloat16), w2, preferred_element_type=jnp.float32)

    logits = fc(avg_ref[...]) + fc(max_ref[...])
    o_ref[...] = pl.reciprocal(1.0 + jnp.exp(-logits), approx=True).astype(o_ref.dtype)


def _ca_fc(avg, mx, w1, w2):
    b, d = avg.shape
    dr = w1.shape[1]
    return pl.pallas_call(
        _ca_fc_kernel,
        out_shape=jax.ShapeDtypeStruct((b, d), jnp.float32),
        grid=(1,),
        in_specs=[pl.BlockSpec((b, d), lambda i: (0, 0)),
                  pl.BlockSpec((b, d), lambda i: (0, 0)),
                  pl.BlockSpec((d, dr), lambda i: (0, 0)),
                  pl.BlockSpec((dr, d), lambda i: (0, 0))],
        out_specs=pl.BlockSpec((b, d), lambda i: (0, 0)),
        compiler_params=_cparams(("arbitrary",)),
    )(avg, mx, w1.astype(jnp.bfloat16), w2.astype(jnp.bfloat16))


# -----------------------------------------------------------------------------
# CA scaling + SA input (per batch): y3 = ca * y  (in-kernel broadcast, no repeat);
# also emits the [mean_c, max_c] map used by the 7x7 spatial-attention conv.
# -----------------------------------------------------------------------------
def _ca_scale_kernel(y_ref, ca_ref, yo_ref, sa_ref):
    y = y_ref[...] * ca_ref[...]
    yo_ref[...] = y.astype(yo_ref.dtype)
    mean_c = jnp.mean(y, axis=-1, keepdims=True)
    max_c = jnp.max(y, axis=-1, keepdims=True)
    sa_ref[...] = jnp.concatenate([mean_c, max_c], axis=-1).astype(sa_ref.dtype)


def _ca_scale(y, ca):
    b, s, d = y.shape
    return pl.pallas_call(
        _ca_scale_kernel,
        out_shape=(jax.ShapeDtypeStruct((b, s, d), jnp.float32),
                   jax.ShapeDtypeStruct((b, s, 2), jnp.float32)),
        grid=(b,),
        in_specs=[pl.BlockSpec((None, s, d), lambda i: (i, 0, 0)),
                  pl.BlockSpec((None, 1, d), lambda i: (i, 0, 0))],
        out_specs=(pl.BlockSpec((None, s, d), lambda i: (i, 0, 0)),
                   pl.BlockSpec((None, s, 2), lambda i: (i, 0, 0))),
        compiler_params=_cparams(("parallel",)),
    )(y, ca)


# -----------------------------------------------------------------------------
# Final CBAM apply (per batch): out = relu(y3 * sa + residual)
# -----------------------------------------------------------------------------
def _cbam_apply_kernel(y_ref, sa_ref, res_ref, o_ref):
    out = y_ref[...] * sa_ref[...] + res_ref[...]
    o_ref[...] = jnp.maximum(out, 0.0).astype(o_ref.dtype)


def _cbam_apply(y, sa, res, out_dtype=jnp.bfloat16):
    b, s, d = y.shape
    return pl.pallas_call(
        _cbam_apply_kernel,
        out_shape=jax.ShapeDtypeStruct((b, s, d), out_dtype),
        grid=(b,),
        in_specs=[pl.BlockSpec((None, s, d), lambda i: (i, 0, 0)),
                  pl.BlockSpec((None, s, 1), lambda i: (i, 0, 0)),
                  pl.BlockSpec((None, s, d), lambda i: (i, 0, 0))],
        out_specs=pl.BlockSpec((None, s, d), lambda i: (i, 0, 0)),
        compiler_params=_cparams(("parallel",)),
    )(y, sa, res)


# -----------------------------------------------------------------------------
# Fused multi-head self-attention (per batch): QKV projection + KV-tiled online
# softmax, heads looped in-kernel, output written lane-dense as (s, D) bf16.
# -----------------------------------------------------------------------------
def _attn_kernel(x_ref, wqkv_ref, bqkv_ref, o_ref, *, num_heads):
    s, d = x_ref.shape
    hd = d // num_heads
    scale = 1.0 / math.sqrt(hd)

    x = x_ref[...]
    if x.dtype != jnp.bfloat16:
        x = x.astype(jnp.bfloat16)
    qkv = jnp.dot(x, wqkv_ref[...], preferred_element_type=jnp.float32)
    qkv = (qkv + bqkv_ref[...]).astype(jnp.bfloat16)           # (s, 3d)

    outs = []
    for h in range(num_heads):
        q = qkv[:, h * hd:(h + 1) * hd]
        k = qkv[:, d + h * hd:d + (h + 1) * hd]
        v = qkv[:, 2 * d + h * hd:2 * d + (h + 1) * hd]
        m = jnp.full((s, 1), -jnp.inf, jnp.float32)
        l = jnp.zeros((s, 1), jnp.float32)
        acc = jnp.zeros((s, hd), jnp.float32)
        for start in range(0, s, KV_TILE):                     # online softmax over KV tiles
            stop = min(start + KV_TILE, s)
            kt = k[start:stop, :]
            vt = v[start:stop, :]
            sc = jax.lax.dot_general(q, kt, (((1,), (1,)), ((), ())),
                                     preferred_element_type=jnp.float32) * scale
            m_new = jnp.maximum(m, jnp.max(sc, axis=-1, keepdims=True))
            alpha = jnp.exp(m - m_new)
            p = jnp.exp(sc - m_new)
            l = alpha * l + jnp.sum(p, axis=-1, keepdims=True)
            acc = alpha * acc + jnp.dot(p.astype(jnp.bfloat16), vt,
                                        preferred_element_type=jnp.float32)
            m = m_new
        outs.append(acc * pl.reciprocal(l, approx=True))
    o_ref[...] = jnp.concatenate(outs, axis=-1).astype(o_ref.dtype)


def _attention(x_bsd, w_qkv, b_qkv, num_heads):
    b, s, d = x_bsd.shape
    return pl.pallas_call(
        functools.partial(_attn_kernel, num_heads=num_heads),
        out_shape=jax.ShapeDtypeStruct((b, s, d), jnp.bfloat16),
        grid=(b,),
        in_specs=[pl.BlockSpec((None, s, d), lambda i: (i, 0, 0)),
                  pl.BlockSpec((d, 3 * d), lambda i: (0, 0)),
                  pl.BlockSpec((1, 3 * d), lambda i: (0, 0))],
        out_specs=pl.BlockSpec((None, s, d), lambda i: (i, 0, 0)),
        compiler_params=_cparams(("parallel",)),
    )(x_bsd, w_qkv.astype(jnp.bfloat16), b_qkv.reshape(1, 3 * d).astype(jnp.float32))


# -----------------------------------------------------------------------------
# JAX glue: im2col (7x7 SA conv only), weight layout, BN folding
# -----------------------------------------------------------------------------
def _im2col(x_nhwc, ksize, pad):
    n, h, w, c = x_nhwc.shape
    xp = jnp.pad(x_nhwc, ((0, 0), (pad, pad), (pad, pad), (0, 0)))
    taps = [xp[:, dy:dy + h, dx:dx + w, :] for dy in range(ksize) for dx in range(ksize)]
    patches = jnp.stack(taps, axis=3)                      # (n, h, w, k*k, c)
    return patches.reshape(n * h * w, ksize * ksize * c)


def _conv_weight_to_mm(w_oihw):
    co, ci, kh, kw = w_oihw.shape
    return jnp.transpose(w_oihw, (2, 3, 1, 0)).reshape(kh * kw * ci, co)


def _bn_fold(bn, eps=1e-5):
    gamma, beta, mean, var = bn
    scale = gamma * jax.lax.rsqrt(var + eps)
    return scale, beta - mean * scale


# -----------------------------------------------------------------------------
# BasicBlock (conv branch with channel + spatial attention)
# -----------------------------------------------------------------------------
def _basic_block(x_bsd, hp, wp, p):
    b, s, d = x_bsd.shape
    x_map = x_bsd.reshape(b, hp, wp, d)

    s1, t1 = _bn_fold(p["bn1"])
    s2, t2 = _bn_fold(p["bn2"])
    w1 = jnp.transpose(p["conv1"], (2, 3, 1, 0)).reshape(3, 3 * d, d).astype(jnp.bfloat16)
    w2 = jnp.transpose(p["conv2"], (2, 3, 1, 0)).reshape(3, 3 * d, d).astype(jnp.bfloat16)

    # conv1 -> bn1 -> relu   (bf16 out: only feeds conv2)
    y1 = _conv3x3(x_map, w1, s1, t1, relu=True, pool=False, out_dtype=jnp.bfloat16)
    # conv2 -> bn2, with CA avg/max pooling emitted from the same kernel
    y2, avg_p, max_p = _conv3x3(y1.reshape(b, hp, wp, d), w2, s2, t2,
                                relu=False, pool=True, out_dtype=jnp.float32)

    # channel attention (ratio=4): sigmoid(fc(avg) + fc(max)), single kernel
    ca = _ca_fc(avg_p.reshape(b, d), max_p.reshape(b, d),
                p["ca_w1"][:, :, 0, 0].T, p["ca_w2"][:, :, 0, 0].T)        # (b, d)

    # apply CA (in-kernel broadcast) and emit [mean_c, max_c] for SA
    y3, sa_in = _ca_scale(y2, ca.reshape(b, 1, d))                          # (b,s,d),(b,s,2)

    # spatial attention: sigmoid(conv7x7([mean_c, max_c]))  -- tiny (98-col) matmul
    # TODO(synk): n=1 output store is lane-sparse; fold the 7x7 conv into the apply
    # kernel (pure VPU shifts) if it ever shows up in a profile.
    sa = _mm(_im2col(sa_in.reshape(b, hp, wp, 2), 7, 3),
             _conv_weight_to_mm(p["sa_w"]), out_act="sigmoid")              # (b*s, 1)

    # sa * y3 + residual, relu   (bf16 out: only feeds the fusion matmul)
    return _cbam_apply(y3, sa.reshape(b, s, 1), x_bsd)


# -----------------------------------------------------------------------------
# TransformerEncoderLayer (post-norm, ReLU FFN, eval-mode dropout = identity)
# LayerNorms are fused into the out-proj(+res) and FFN-down(+res) matmul epilogues.
# -----------------------------------------------------------------------------
def _transformer_layer(x_bsd, lp, num_heads):
    b, s, d = x_bsd.shape
    rows = b * s

    ctx = _attention(x_bsd, lp["w_qkv"], lp["b_qkv"], num_heads)            # (b,s,d) bf16
    x1 = _mm(ctx.reshape(rows, d), lp["w_o"], shift=lp["b_o"],
             residual=x_bsd.reshape(rows, d), ln=(lp["ln1_g"], lp["ln1_b"]))
    hmid = _mm(x1, lp["w_ff1"], shift=lp["b_ff1"], out_act="relu",
               out_dtype=jnp.bfloat16)                                      # FFN up (bf16)
    x2 = _mm(hmid, lp["w_ff2"], shift=lp["b_ff2"], residual=x1,
             ln=(lp["ln2_g"], lp["ln2_b"]))                                 # FFN down + LN
    return x2.reshape(b, s, d)


# -----------------------------------------------------------------------------
# JointConvTransBlock forward
# -----------------------------------------------------------------------------
def joint_conv_trans_block(params, x, *, patch_size, num_heads):
    b, c, hh, ww = x.shape
    p = patch_size
    hp, wp = hh // p, ww // p
    s = hp * wp
    d = params["embed_w"].shape[0]

    # patch embedding (kernel == stride == P): per-batch matmul, bias + pos fused
    xt = jnp.transpose(x, (0, 2, 3, 1))                                     # NHWC
    patches = xt.reshape(b, hp, p, wp, p, c).transpose(0, 1, 3, 2, 4, 5)
    patches = patches.reshape(b, s, p * p * c).astype(jnp.bfloat16)
    x_seq = _patch_embed(patches, _conv_weight_to_mm(params["embed_w"]),
                         params["embed_b"], params["pos_enc"][:s, :])       # (b,s,d) f32

    for dp in params["depth"]:
        conv_out = _basic_block(x_seq, hp, wp, dp["conv"])                  # (b,s,d) bf16
        t = x_seq
        for lp in dp["transformer"]:
            t = _transformer_layer(t, lp, num_heads)                        # (b,s,d) f32
        # fusion 1x1 conv over cat([conv, trans], channels): single dual-matmul kernel
        w2d = dp["fusion_w"][:, :, 0, 0]                                    # (d, 2d)
        fused = _fusion_mm(conv_out.reshape(b * s, d), w2d[:, :d].T,
                           t.reshape(b * s, d), w2d[:, d:].T, dp["fusion_b"])
        x_seq = fused.reshape(b, s, d)

    out = x_seq.reshape(b, hp, wp, d)
    return jnp.transpose(out, (0, 3, 1, 2))                                 # (B, D, Hp, Wp)


# -----------------------------------------------------------------------------
# Parameter construction (PyTorch-style layouts for conv weights)
# -----------------------------------------------------------------------------
def init_params(key, in_channels, embedding_dim, patch_size, num_heads=8,
                num_layer=4, depth=1, ffn_dim=1024, max_patches=2352):
    d = embedding_dim
    keys = iter(jax.random.split(key, 64 + depth * (16 + num_layer * 12)))

    def nrm(shape, scl=0.1):
        return scl * jax.random.normal(next(keys), shape, jnp.float32)

    def bn():
        return (1.0 + nrm((d,), 0.1),                 # gamma
                nrm((d,), 0.05),                      # beta
                nrm((d,), 0.1),                       # running mean
                jnp.abs(nrm((d,), 0.1)) + 0.5)        # running var

    depth_params = []
    for _ in range(depth):
        conv = {
            "conv1": nrm((d, d, 3, 3)), "bn1": bn(),
            "conv2": nrm((d, d, 3, 3)), "bn2": bn(),
            "ca_w1": nrm((d // 4, d, 1, 1)),
            "ca_w2": nrm((d, d // 4, 1, 1)),
            "sa_w": nrm((1, 2, 7, 7)),
        }
        layers = []
        for _ in range(num_layer):
            layers.append({
                "w_qkv": nrm((d, 3 * d)), "b_qkv": nrm((3 * d,), 0.05),
                "w_o": nrm((d, d)), "b_o": nrm((d,), 0.05),
                "ln1_g": 1.0 + nrm((d,), 0.05), "ln1_b": nrm((d,), 0.05),
                "w_ff1": nrm((d, ffn_dim)), "b_ff1": nrm((ffn_dim,), 0.05),
                "w_ff2": nrm((ffn_dim, d)), "b_ff2": nrm((d,), 0.05),
                "ln2_g": 1.0 + nrm((d,), 0.05), "ln2_b": nrm((d,), 0.05),
            })
        depth_params.append({
            "conv": conv,
            "transformer": layers,
            "fusion_w": nrm((d, 2 * d, 1, 1)),
            "fusion_b": nrm((d,), 0.05),
        })

    return {
        "embed_w": nrm((d, in_channels, patch_size, patch_size)),
        "embed_b": nrm((d,), 0.05),
        "pos_enc": jax.random.uniform(next(keys), (max_patches, d), jnp.float32),
        "depth": depth_params,
    }


if __name__ == "__main__":
    key = jax.random.PRNGKey(0)
    kx, kp = jax.random.split(key)

    B, C_IN, H, W = 2, 4, 32, 32
    D, P, NH, NL, DEPTH = 32, 8, 8, 4, 1        # embedding_dim, patch, heads, layers, depth

    x = jax.random.normal(kx, (B, C_IN, H, W), jnp.float32)
    params = init_params(kp, C_IN, D, P, num_heads=NH, num_layer=NL, depth=DEPTH)

    fwd = jax.jit(functools.partial(joint_conv_trans_block, patch_size=P, num_heads=NH))
    out = jax.block_until_ready(fwd(params, x))

    assert out.shape == (B, D, H // P, W // P), out.shape
    assert bool(jnp.all(jnp.isfinite(out)))
    print("KERNEL_OK")
</pallas_src>

<mosaic_0001>
module attributes {stable_mosaic.version = 11 : i64} {
  func.func @_embed_kernel(%arg0: i32, %arg1: memref<1x16x256xbf16, #tpu.memory_space<vmem>>, %arg2: memref<256x32xbf16, #tpu.memory_space<vmem>>, %arg3: memref<1x32xf32, #tpu.memory_space<vmem>>, %arg4: memref<16x32xf32, #tpu.memory_space<vmem>>, %arg5: memref<1x16x32xf32, #tpu.memory_space<vmem>>) attributes {dimension_semantics = [#tpu.dimension_semantics<parallel>], iteration_bounds = array<i64: 2>, scalar_prefetch = 0 : i64, scratch_operands = 0 : i64, tpu.core_type = #tpu.core_type<tc>, window_params = [{transform_indices = @transform_0, window_bounds = array<i64: 1, 16, 256>}, {pipeline_mode = #tpu.pipeline_mode<synchronous>, transform_indices = @transform_1, window_bounds = array<i64: 256, 32>}, {pipeline_mode = #tpu.pipeline_mode<synchronous>, transform_indices = @transform_2, window_bounds = array<i64: 1, 32>}, {pipeline_mode = #tpu.pipeline_mode<synchronous>, transform_indices = @transform_3, window_bounds = array<i64: 16, 32>}, {transform_indices = @transform_4, window_bounds = array<i64: 1, 16, 32>}]} {
    %c0 = arith.constant 0 : index
    %c0_0 = arith.constant 0 : index
    %c0_1 = arith.constant 0 : index
    %0 = vector.load %arg1[%c0, %c0_0, %c0_1] : memref<1x16x256xbf16, #tpu.memory_space<vmem>>, vector<1x16x256xbf16>
    %1 = vector.shape_cast %0 : vector<1x16x256xbf16> to vector<16x256xbf16>
    %c0_2 = arith.constant 0 : index
    %c0_3 = arith.constant 0 : index
    %2 = vector.load %arg2[%c0_2, %c0_3] : memref<256x32xbf16, #tpu.memory_space<vmem>>, vector<256x32xbf16>
    %cst = arith.constant dense<0.000000e+00> : vector<16x32xf32>
    %3 = tpu.matmul %1, %2, %cst {dimension_numbers = #tpu.dot_dimension_numbers<[1], [0], [0], [1], [0, 0, 1, 1], [], []>} : vector<16x256xbf16>, vector<256x32xbf16>, vector<16x32xf32> -> vector<16x32xf32>
    %c0_4 = arith.constant 0 : index
    %c0_5 = arith.constant 0 : index
    %4 = vector.load %arg3[%c0_4, %c0_5] : memref<1x32xf32, #tpu.memory_space<vmem>>, vector<1x32xf32>
    %5 = vector.broadcast %4 : vector<1x32xf32> to vector<16x32xf32>
    %6 = arith.addf %3, %5 : vector<16x32xf32>
    %c0_6 = arith.constant 0 : index
    %c0_7 = arith.constant 0 : index
    %7 = vector.load %arg4[%c0_6, %c0_7] : memref<16x32xf32, #tpu.memory_space<vmem>>, vector<16x32xf32>
    %8 = arith.addf %6, %7 : vector<16x32xf32>
    %c0_8 = arith.constant 0 : index
    %c0_9 = arith.constant 0 : index
    %c0_10 = arith.constant 0 : index
    %9 = vector.load %arg5[%c0_8, %c0_9, %c0_10] : memref<1x16x32xf32, #tpu.memory_space<vmem>>, vector<1x16x32xf32>
    %10 = vector.shape_cast %9 : vector<1x16x32xf32> to vector<16x32xf32>
    %11 = vector.shape_cast %8 : vector<16x32xf32> to vector<1x16x32xf32>
    tpu.vector_store %arg5[%c0_8, %c0_9, %c0_10], %11 {strides = array<i32>} : memref<1x16x32xf32, #tpu.memory_space<vmem>>, vector<1x16x32xf32>,
    return
  }
  func.func @transform_0(%arg0: i32) -> (i32, i32, i32) {
    %c0_i32 = arith.constant 0 : i32
    %c0_i32_0 = arith.constant 0 : i32
    %c0_i32_1 = arith.constant 0 : i32
    return %arg0, %c0_i32, %c0_i32_0 : i32, i32, i32
  }
  func.func @transform_1(%arg0: i32) -> (i32, i32) {
    %c0_i32 = arith.constant 0 : i32
    %c0_i32_0 = arith.constant 0 : i32
    %c0_i32_1 = arith.constant 0 : i32
    return %c0_i32, %c0_i32_0 : i32, i32
  }
  func.func @transform_2(%arg0: i32) -> (i32, i32) {
    %c0_i32 = arith.constant 0 : i32
    %c0_i32_0 = arith.constant 0 : i32
    %c0_i32_1 = arith.constant 0 : i32
    return %c0_i32, %c0_i32_0 : i32, i32
  }
  func.func @transform_3(%arg0: i32) -> (i32, i32) {
    %c0_i32 = arith.constant 0 : i32
    %c0_i32_0 = arith.constant 0 : i32
    %c0_i32_1 = arith.constant 0 : i32
    return %c0_i32, %c0_i32_0 : i32, i32
  }
  func.func @transform_4(%arg0: i32) -> (i32, i32, i32) {
    %c0_i32 = arith.constant 0 : i32
    %c0_i32_0 = arith.constant 0 : i32
    %c0_i32_1 = arith.constant 0 : i32
    return %arg0, %c0_i32, %c0_i32_0 : i32, i32, i32
  }
}

module attributes {stable_mosaic.version = 11 : i64} {
  func.func @_conv3x3_kernel(%arg0: i32, %arg1: memref<1x24x96xbf16, #tpu.memory_space<vmem>>, %arg2: memref<3x96x32xbf16, #tpu.memory_space<vmem>>, %arg3: memref<1x32xf32, #tpu.memory_space<vmem>>, %arg4: memref<1x32xf32, #tpu.memory_space<vmem>>, %arg5: memref<1x16x32xbf16, #tpu.memory_space<vmem>>) attributes {dimension_semantics = [#tpu.dimension_semantics<parallel>], iteration_bounds = array<i64: 2>, scalar_prefetch = 0 : i64, scratch_operands = 0 : i64, tpu.core_type = #tpu.core_type<tc>, window_params = [{transform_indices = @transform_0, window_bounds = array<i64: 1, 24, 96>}, {pipeline_mode = #tpu.pipeline_mode<synchronous>, transform_indices = @transform_1, window_bounds = array<i64: 3, 96, 32>}, {pipeline_mode = #tpu.pipeline_mode<synchronous>, transform_indices = @transform_2, window_bounds = array<i64: 1, 32>}, {pipeline_mode = #tpu.pipeline_mode<synchronous>, transform_indices = @transform_3, window_bounds = array<i64: 1, 32>}, {transform_indices = @transform_4, window_bounds = array<i64: 1, 16, 32>}]} {
    %cst = arith.constant 0.000000e+00 : f32
    %0 = vector.broadcast %cst : f32 to vector<16x32xf32>
    %c0 = arith.constant 0 : index
    %c0_0 = arith.constant 0 : index
    %c0_1 = arith.constant 0 : index
    %1 = vector.load %arg1[%c0, %c0_0, %c0_1] : memref<1x24x96xbf16, #tpu.memory_space<vmem>>, vector<1x16x96xbf16>
    %2 = vector.shape_cast %1 : vector<1x16x96xbf16> to vector<16x96xbf16>
    %c0_2 = arith.constant 0 : index
    %c0_3 = arith.constant 0 : index
    %c0_4 = arith.constant 0 : index
    %3 = vector.load %arg2[%c0_2, %c0_3, %c0_4] : memref<3x96x32xbf16, #tpu.memory_space<vmem>>, vector<1x96x32xbf16>
    %4 = vector.shape_cast %3 : vector<1x96x32xbf16> to vector<96x32xbf16>
    %cst_5 = arith.constant dense<0.000000e+00> : vector<16x32xf32>
    %5 = tpu.matmul %2, %4, %cst_5 {dimension_numbers = #tpu.dot_dimension_numbers<[1], [0], [0], [1], [0, 0, 1, 1], [], []>} : vector<16x96xbf16>, vector<96x32xbf16>, vector<16x32xf32> -> vector<16x32xf32>
    %6 = arith.addf %0, %5 : vector<16x32xf32>
    %c0_6 = arith.constant 0 : index
    %c4 = arith.constant 4 : index
    %c0_7 = arith.constant 0 : index
    %7 = vector.load %arg1[%c0_6, %c4, %c0_7] : memref<1x24x96xbf16, #tpu.memory_space<vmem>>, vector<1x16x96xbf16>
    %8 = vector.shape_cast %7 : vector<1x16x96xbf16> to vector<16x96xbf16>
    %c1 = arith.constant 1 : index
    %c0_8 = arith.constant 0 : index
    %c0_9 = arith.constant 0 : index
    %9 = vector.load %arg2[%c1, %c0_8, %c0_9] : memref<3x96x32xbf16, #tpu.memory_space<vmem>>, vector<1x96x32xbf16>
    %10 = vector.shape_cast %9 : vector<1x96x32xbf16> to vector<96x32xbf16>
    %cst_10 = arith.constant dense<0.000000e+00> : vector<16x32xf32>
    %11 = tpu.matmul %8, %10, %cst_10 {dimension_numbers = #tpu.dot_dimension_numbers<[1], [0], [0], [1], [0, 0, 1, 1], [], []>} : vector<16x96xbf16>, vector<96x32xbf16>, vector<16x32xf32> -> vector<16x32xf32>
    %12 = arith.addf %6, %11 : vector<16x32xf32>
    %c0_11 = arith.constant 0 : index
    %c8 = arith.constant 8 : index
    %c0_12 = arith.constant 0 : index
    %13 = vector.load %arg1[%c0_11, %c8, %c0_12] : memref<1x24x96xbf16, #tpu.memory_space<vmem>>, vector<1x16x96xbf16>
    %14 = vector.shape_cast %13 : vector<1x16x96xbf16> to vector<16x96xbf16>
    %c2 = arith.constant 2 : index
    %c0_13 = arith.constant 0 : index
    %c0_14 = arith.constant 0 : index
    %15 = vector.load %arg2[%c2, %c0_13, %c0_14] : memref<3x96x32xbf16, #tpu.memory_space<vmem>>, vector<1x96x32xbf16>
    %16 = vector.shape_cast %15 : vector<1x96x32xbf16> to vector<96x32xbf16>
    %cst_15 = arith.constant dense<0.000000e+00> : vector<16x32xf32>
    %17 = tpu.matmul %14, %16, %cst_15 {dimension_numbers = #tpu.dot_dimension_numbers<[1], [0], [0], [1], [0, 0, 1, 1], [], []>} : vector<16x96xbf16>, vector<96x32xbf16>, vector<16x32xf32> -> vector<16x32xf32>
    %18 = arith.addf %12, %17 : vector<16x32xf32>
    %c0_16 = arith.constant 0 : index
    %c0_17 = arith.constant 0 : index
    %19 = vector.load %arg3[%c0_16, %c0_17] : memref<1x32xf32, #tpu.memory_space<vmem>>, vector<1x32xf32>
    %20 = vector.broadcast %19 : vector<1x32xf32> to vector<16x32xf32>
    %21 = arith.mulf %18, %20 : vector<16x32xf32>
    %c0_18 = arith.constant 0 : index
    %c0_19 = arith.constant 0 : index
    %22 = vector.load %arg4[%c0_18, %c0_19] : memref<1x32xf32, #tpu.memory_space<vmem>>, vector<1x32xf32>
    %23 = vector.broadcast %22 : vector<1x32xf32> to vector<16x32xf32>
    %24 = arith.addf %21, %23 : vector<16x32xf32>
    %cst_20 = arith.constant 0.000000e+00 : f32
    %25 = vector.broadcast %cst_20 : f32 to vector<16x32xf32>
    %26 = arith.maximumf %24, %25 : vector<16x32xf32>
    %27 = arith.truncf %26 : vector<16x32xf32> to vector<16x32xbf16>
    %c0_21 = arith.constant 0 : index
    %c0_22 = arith.constant 0 : index
    %c0_23 = arith.constant 0 : index
    %28 = vector.load %arg5[%c0_21, %c0_22, %c0_23] : memref<1x16x32xbf16, #tpu.memory_space<vmem>>, vector<1x16x32xbf16>
    %29 = vector.shape_cast %28 : vector<1x16x32xbf16> to vector<16x32xbf16>
    %30 = vector.shape_cast %27 : vector<16x32xbf16> to vector<1x16x32xbf16>
    tpu.vector_store %arg5[%c0_21, %c0_22, %c0_23], %30 {strides = array<i32>} : memref<1x16x32xbf16, #tpu.memory_space<vmem>>, vector<1x16x32xbf16>,
    return
  }
  func.func @transform_0(%arg0: i32) -> (i32, i32, i32) {
    %c0_i32 = arith.constant 0 : i32
    %c0_i32_0 = arith.constant 0 : i32
    %c0_i32_1 = arith.constant 0 : i32
    return %arg0, %c0_i32, %c0_i32_0 : i32, i32, i32
  }
  func.func @transform_1(%arg0: i32) -> (i32, i32, i32) {
    %c0_i32 = arith.constant 0 : i32
    %c0_i32_0 = arith.constant 0 : i32
    %c0_i32_1 = arith.constant 0 : i32
    %c0_i32_2 = arith.constant 0 : i32
    return %c0_i32, %c0_i32_0, %c0_i32_1 : i32, i32, i32
  }
  func.func @transform_2(%arg0: i32) -> (i32, i32) {
    %c0_i32 = arith.constant 0 : i32
    %c0_i32_0 = arith.constant 0 : i32
    %c0_i32_1 = arith.constant 0 : i32
    return %c0_i32, %c0_i32_0 : i32, i32
  }
  func.func @transform_3(%arg0: i32) -> (i32, i32) {
    %c0_i32 = arith.constant 0 : i32
    %c0_i32_0 = arith.constant 0 : i32
    %c0_i32_1 = arith.constant 0 : i32
    return %c0_i32, %c0_i32_0 : i32, i32
  }
  func.func @transform_4(%arg0: i32) -> (i32, i32, i32) {
    %c0_i32 = arith.constant 0 : i32
    %c0_i32_0 = arith.constant 0 : i32
    %c0_i32_1 = arith.constant 0 : i32
    return %arg0, %c0_i32, %c0_i32_0 : i32, i32, i32
  }
}

module attributes {stable_mosaic.version = 11 : i64} {
  func.func @_conv3x3_kernel(%arg0: i32, %arg1: memref<1x24x96xbf16, #tpu.memory_space<vmem>>, %arg2: memref<3x96x32xbf16, #tpu.memory_space<vmem>>, %arg3: memref<1x32xf32, #tpu.memory_space<vmem>>, %arg4: memref<1x32xf32, #tpu.memory_space<vmem>>, %arg5: memref<1x16x32xf32, #tpu.memory_space<vmem>>, %arg6: memref<1x1x32xf32, #tpu.memory_space<vmem>>, %arg7: memref<1x1x32xf32, #tpu.memory_space<vmem>>) attributes {dimension_semantics = [#tpu.dimension_semantics<parallel>], iteration_bounds = array<i64: 2>, scalar_prefetch = 0 : i64, scratch_operands = 0 : i64, tpu.core_type = #tpu.core_type<tc>, window_params = [{transform_indices = @transform_0, window_bounds = array<i64: 1, 24, 96>}, {pipeline_mode = #tpu.pipeline_mode<synchronous>, transform_indices = @transform_1, window_bounds = array<i64: 3, 96, 32>}, {pipeline_mode = #tpu.pipeline_mode<synchronous>, transform_indices = @transform_2, window_bounds = array<i64: 1, 32>}, {pipeline_mode = #tpu.pipeline_mode<synchronous>, transform_indices = @transform_3, window_bounds = array<i64: 1, 32>}, {transform_indices = @transform_4, window_bounds = array<i64: 1, 16, 32>}, {transform_indices = @transform_5, window_bounds = array<i64: 1, 1, 32>}, {transform_indices = @transform_6, window_bounds = array<i64: 1, 1, 32>}]} {
    %cst = arith.constant 0.000000e+00 : f32
    %0 = vector.broadcast %cst : f32 to vector<16x32xf32>
    %c0 = arith.constant 0 : index
    %c0_0 = arith.constant 0 : index
    %c0_1 = arith.constant 0 : index
    %1 = vector.load %arg1[%c0, %c0_0, %c0_1] : memref<1x24x96xbf16, #tpu.memory_space<vmem>>, vector<1x16x96xbf16>
    %2 = vector.shape_cast %1 : vector<1x16x96xbf16> to vector<16x96xbf16>
    %c0_2 = arith.constant 0 : index
    %c0_3 = arith.constant 0 : index
    %c0_4 = arith.constant 0 : index
    %3 = vector.load %arg2[%c0_2, %c0_3, %c0_4] : memref<3x96x32xbf16, #tpu.memory_space<vmem>>, vector<1x96x32xbf16>
    %4 = vector.shape_cast %3 : vector<1x96x32xbf16> to vector<96x32xbf16>
    %cst_5 = arith.constant dense<0.000000e+00> : vector<16x32xf32>
    %5 = tpu.matmul %2, %4, %cst_5 {dimension_numbers = #tpu.dot_dimension_numbers<[1], [0], [0], [1], [0, 0, 1, 1], [], []>} : vector<16x96xbf16>, vector<96x32xbf16>, vector<16x32xf32> -> vector<16x32xf32>
    %6 = arith.addf %0, %5 : vector<16x32xf32>
    %c0_6 = arith.constant 0 : index
    %c4 = arith.constant 4 : index
    %c0_7 = arith.constant 0 : index
    %7 = vector.load %arg1[%c0_6, %c4, %c0_7] : memref<1x24x96xbf16, #tpu.memory_space<vmem>>, vector<1x16x96xbf16>
    %8 = vector.shape_cast %7 : vector<1x16x96xbf16> to vector<16x96xbf16>
    %c1 = arith.constant 1 : index
    %c0_8 = arith.constant 0 : index
    %c0_9 = arith.constant 0 : index
    %9 = vector.load %arg2[%c1, %c0_8, %c0_9] : memref<3x96x32xbf16, #tpu.memory_space<vmem>>, vector<1x96x32xbf16>
    %10 = vector.shape_cast %9 : vector<1x96x32xbf16> to vector<96x32xbf16>
    %cst_10 = arith.constant dense<0.000000e+00> : vector<16x32xf32>
    %11 = tpu.matmul %8, %10, %cst_10 {dimension_numbers = #tpu.dot_dimension_numbers<[1], [0], [0], [1], [0, 0, 1, 1], [], []>} : vector<16x96xbf16>, vector<96x32xbf16>, vector<16x32xf32> -> vector<16x32xf32>
    %12 = arith.addf %6, %11 : vector<16x32xf32>
    %c0_11 = arith.constant 0 : index
    %c8 = arith.constant 8 : index
    %c0_12 = arith.constant 0 : index
    %13 = vector.load %arg1[%c0_11, %c8, %c0_12] : memref<1x24x96xbf16, #tpu.memory_space<vmem>>, vector<1x16x96xbf16>
    %14 = vector.shape_cast %13 : vector<1x16x96xbf16> to vector<16x96xbf16>
    %c2 = arith.constant 2 : index
    %c0_13 = arith.constant 0 : index
    %c0_14 = arith.constant 0 : index
    %15 = vector.load %arg2[%c2, %c0_13, %c0_14] : memref<3x96x32xbf16, #tpu.memory_space<vmem>>, vector<1x96x32xbf16>
    %16 = vector.shape_cast %15 : vector<1x96x32xbf16> to vector<96x32xbf16>
    %cst_15 = arith.constant dense<0.000000e+00> : vector<16x32xf32>
    %17 = tpu.matmul %14, %16, %cst_15 {dimension_numbers = #tpu.dot_dimension_numbers<[1], [0], [0], [1], [0, 0, 1, 1], [], []>} : vector<16x96xbf16>, vector<96x32xbf16>, vector<16x32xf32> -> vector<16x32xf32>
    %18 = arith.addf %12, %17 : vector<16x32xf32>
    %c0_16 = arith.constant 0 : index
    %c0_17 = arith.constant 0 : index
    %19 = vector.load %arg3[%c0_16, %c0_17] : memref<1x32xf32, #tpu.memory_space<vmem>>, vector<1x32xf32>
    %20 = vector.broadcast %19 : vector<1x32xf32> to vector<16x32xf32>
    %21 = arith.mulf %18, %20 : vector<16x32xf32>
    %c0_18 = arith.constant 0 : index
    %c0_19 = arith.constant 0 : index
    %22 = vector.load %arg4[%c0_18, %c0_19] : memref<1x32xf32, #tpu.memory_space<vmem>>, vector<1x32xf32>
    %23 = vector.broadcast %22 : vector<1x32xf32> to vector<16x32xf32>
    %24 = arith.addf %21, %23 : vector<16x32xf32>
    %c0_20 = arith.constant 0 : index
    %c0_21 = arith.constant 0 : index
    %c0_22 = arith.constant 0 : index
    %25 = vector.load %arg5[%c0_20, %c0_21, %c0_22] : memref<1x16x32xf32, #tpu.memory_space<vmem>>, vector<1x16x32xf32>
    %26 = vector.shape_cast %25 : vector<1x16x32xf32> to vector<16x32xf32>
    %27 = vector.shape_cast %24 : vector<16x32xf32> to vector<1x16x32xf32>
    tpu.vector_store %arg5[%c0_20, %c0_21, %c0_22], %27 {strides = array<i32>} : memref<1x16x32xf32, #tpu.memory_space<vmem>>, vector<1x16x32xf32>,
    %cst_23 = arith.constant dense<0.000000e+00> : vector<32xf32>
    %28 = vector.multi_reduction <add>, %24, %cst_23 [0] : vector<16x32xf32> to vector<32xf32>
    %29 = vector.shape_cast %28 : vector<32xf32> to vector<1x32xf32>
    %cst_24 = arith.constant 1.600000e+01 : f32
    %30 = vector.broadcast %cst_24 : f32 to vector<1x32xf32>
    %31 = arith.divf %29, %30 : vector<1x32xf32>
    %c0_25 = arith.constant 0 : index
    %c0_26 = arith.constant 0 : index
    %c0_27 = arith.constant 0 : index
    %32 = vector.load %arg6[%c0_25, %c0_26, %c0_27] : memref<1x1x32xf32, #tpu.memory_space<vmem>>, vector<1x1x32xf32>
    %33 = vector.shape_cast %32 : vector<1x1x32xf32> to vector<1x32xf32>
    %34 = vector.shape_cast %31 : vector<1x32xf32> to vector<1x1x32xf32>
    tpu.vector_store %arg6[%c0_25, %c0_26, %c0_27], %34 {strides = array<i32>} : memref<1x1x32xf32, #tpu.memory_space<vmem>>, vector<1x1x32xf32>,
    %cst_28 = arith.constant dense<0xFF800000> : vector<32xf32>
    %35 = vector.multi_reduction <maximumf>, %24, %cst_28 [0] : vector<16x32xf32> to vector<32xf32>
    %36 = vector.shape_cast %35 : vector<32xf32> to vector<1x32xf32>
    %c0_29 = arith.constant 0 : index
    %c0_30 = arith.constant 0 : index
    %c0_31 = arith.constant 0 : index
    %37 = vector.load %arg7[%c0_29, %c0_30, %c0_31] : memref<1x1x32xf32, #tpu.memory_space<vmem>>, vector<1x1x32xf32>
    %38 = vector.shape_cast %37 : vector<1x1x32xf32> to vector<1x32xf32>
    %39 = vector.shape_cast %36 : vector<1x32xf32> to vector<1x1x32xf32>
    tpu.vector_store %arg7[%c0_29, %c0_30, %c0_31], %39 {strides = array<i32>} : memref<1x1x32xf32, #tpu.memory_space<vmem>>, vector<1x1x32xf32>,
    return
  }
  func.func @transform_0(%arg0: i32) -> (i32, i32, i32) {
    %c0_i32 = arith.constant 0 : i32
    %c0_i32_0 = arith.constant 0 : i32
    %c0_i32_1 = arith.constant 0 : i32
    return %arg0, %c0_i32, %c0_i32_0 : i32, i32, i32
  }
  func.func @transform_1(%arg0: i32) -> (i32, i32, i32) {
    %c0_i32 = arith.constant 0 : i32
    %c0_i32_0 = arith.constant 0 : i32
    %c0_i32_1 = arith.constant 0 : i32
    %c0_i32_2 = arith.constant 0 : i32
    return %c0_i32, %c0_i32_0, %c0_i32_1 : i32, i32, i32
  }
  func.func @transform_2(%arg0: i32) -> (i32, i32) {
    %c0_i32 = arith.constant 0 : i32
    %c0_i32_0 = arith.constant 0 : i32
    %c0_i32_1 = arith.constant 0 : i32
    return %c0_i32, %c0_i32_0 : i32, i32
  }
  func.func @transform_3(%arg0: i32) -> (i32, i32) {
    %c0_i32 = arith.constant 0 : i32
    %c0_i32_0 = arith.constant 0 : i32
    %c0_i32_1 = arith.constant 0 : i32
    return %c0_i32, %c0_i32_0 : i32, i32
  }
  func.func @transform_4(%arg0: i32) -> (i32, i32, i32) {
    %c0_i32 = arith.constant 0 : i32
    %c0_i32_0 = arith.constant 0 : i32
    %c0_i32_1 = arith.constant 0 : i32
    return %arg0, %c0_i32, %c0_i32_0 : i32, i32, i32
  }
  func.func @transform_5(%arg0: i32) -> (i32, i32, i32) {
    %c0_i32 = arith.constant 0 : i32
    %c0_i32_0 = arith.constant 0 : i32
    %c0_i32_1 = arith.constant 0 : i32
    return %arg0, %c0_i32, %c0_i32_0 : i32, i32, i32
  }
  func.func @transform_6(%arg0: i32) -> (i32, i32, i32) {
    %c0_i32 = arith.constant 0 : i32
    %c0_i32_0 = arith.constant 0 : i32
    %c0_i32_1 = arith.constant 0 : i32
    return %arg0, %c0_i32, %c0_i32_0 : i32, i32, i32
  }
}

module attributes {stable_mosaic.version = 11 : i64} {
  func.func @_ca_fc_kernel(%arg0: i32, %arg1: memref<2x32xf32, #tpu.memory_space<vmem>>, %arg2: memref<2x32xf32, #tpu.memory_space<vmem>>, %arg3: memref<32x8xbf16, #tpu.memory_space<vmem>>, %arg4: memref<8x32xbf16, #tpu.memory_space<vmem>>, %arg5: memref<2x32xf32, #tpu.memory_space<vmem>>) attributes {dimension_semantics = [#tpu.dimension_semantics<arbitrary>], iteration_bounds = array<i64: 1>, scalar_prefetch = 0 : i64, scratch_operands = 0 : i64, tpu.core_type = #tpu.core_type<tc>, window_params = [{pipeline_mode = #tpu.pipeline_mode<synchronous>, transform_indices = @transform_0, window_bounds = array<i64: 2, 32>}, {pipeline_mode = #tpu.pipeline_mode<synchronous>, transform_indices = @transform_1, window_bounds = array<i64: 2, 32>}, {pipeline_mode = #tpu.pipeline_mode<synchronous>, transform_indices = @transform_2, window_bounds = array<i64: 32, 8>}, {pipeline_mode = #tpu.pipeline_mode<synchronous>, transform_indices = @transform_3, window_bounds = array<i64: 8, 32>}, {pipeline_mode = #tpu.pipeline_mode<synchronous>, transform_indices = @transform_4, window_bounds = array<i64: 2, 32>}]} {
    %c0 = arith.constant 0 : index
    %c0_0 = arith.constant 0 : index
    %0 = vector.load %arg3[%c0, %c0_0] : memref<32x8xbf16, #tpu.memory_space<vmem>>, vector<32x8xbf16>
    %c0_1 = arith.constant 0 : index
    %c0_2 = arith.constant 0 : index
    %1 = vector.load %arg4[%c0_1, %c0_2] : memref<8x32xbf16, #tpu.memory_space<vmem>>, vector<8x32xbf16>
    %c0_3 = arith.constant 0 : index
    %c0_4 = arith.constant 0 : index
    %2 = vector.load %arg1[%c0_3, %c0_4] : memref<2x32xf32, #tpu.memory_space<vmem>>, vector<2x32xf32>
    %3 = arith.truncf %2 : vector<2x32xf32> to vector<2x32xbf16>
    %cst = arith.constant dense<0.000000e+00> : vector<2x8xf32>
    %4 = tpu.matmul %3, %0, %cst {dimension_numbers = #tpu.dot_dimension_numbers<[1], [0], [0], [1], [0, 0, 1, 1], [], []>} : vector<2x32xbf16>, vector<32x8xbf16>, vector<2x8xf32> -> vector<2x8xf32>
    %cst_5 = arith.constant 0.000000e+00 : f32
    %5 = vector.broadcast %cst_5 : f32 to vector<2x8xf32>
    %6 = arith.maximumf %4, %5 : vector<2x8xf32>
    %7 = arith.truncf %6 : vector<2x8xf32> to vector<2x8xbf16>
    %cst_6 = arith.constant dense<0.000000e+00> : vector<2x32xf32>
    %8 = tpu.matmul %7, %1, %cst_6 {dimension_numbers = #tpu.dot_dimension_numbers<[1], [0], [0], [1], [0, 0, 1, 1], [], []>} : vector<2x8xbf16>, vector<8x32xbf16>, vector<2x32xf32> -> vector<2x32xf32>
    %c0_7 = arith.constant 0 : index
    %c0_8 = arith.constant 0 : index
    %9 = vector.load %arg2[%c0_7, %c0_8] : memref<2x32xf32, #tpu.memory_space<vmem>>, vector<2x32xf32>
    %10 = arith.truncf %9 : vector<2x32xf32> to vector<2x32xbf16>
    %cst_9 = arith.constant dense<0.000000e+00> : vector<2x8xf32>
    %11 = tpu.matmul %10, %0, %cst_9 {dimension_numbers = #tpu.dot_dimension_numbers<[1], [0], [0], [1], [0, 0, 1, 1], [], []>} : vector<2x32xbf16>, vector<32x8xbf16>, vector<2x8xf32> -> vector<2x8xf32>
    %cst_10 = arith.constant 0.000000e+00 : f32
    %12 = vector.broadcast %cst_10 : f32 to vector<2x8xf32>
    %13 = arith.maximumf %11, %12 : vector<2x8xf32>
    %14 = arith.truncf %13 : vector<2x8xf32> to vector<2x8xbf16>
    %cst_11 = arith.constant dense<0.000000e+00> : vector<2x32xf32>
    %15 = tpu.matmul %14, %1, %cst_11 {dimension_numbers = #tpu.dot_dimension_numbers<[1], [0], [0], [1], [0, 0, 1, 1], [], []>} : vector<2x8xbf16>, vector<8x32xbf16>, vector<2x32xf32> -> vector<2x32xf32>
    %16 = arith.addf %8, %15 : vector<2x32xf32>
    %cst_12 = arith.constant 0.000000e+00 : f32
    %17 = vector.broadcast %cst_12 : f32 to vector<2x32xf32>
    %18 = arith.subf %17, %16 : vector<2x32xf32>
    %19 = math.exp %18 : vector<2x32xf32>
    %cst_13 = arith.constant 1.000000e+00 : f32
    %20 = vector.broadcast %cst_13 : f32 to vector<2x32xf32>
    %21 = arith.addf %20, %19 : vector<2x32xf32>
    %22 = tpu.reciprocal %21 {approx = true} : vector<2x32xf32> -> vector<2x32xf32>
    %c0_14 = arith.constant 0 : index
    %c0_15 = arith.constant 0 : index
    %23 = vector.load %arg5[%c0_14, %c0_15] : memref<2x32xf32, #tpu.memory_space<vmem>>, vector<2x32xf32>
    tpu.vector_store %arg5[%c0_14, %c0_15], %22 {strides = array<i32>} : memref<2x32xf32, #tpu.memory_space<vmem>>, vector<2x32xf32>,
    return
  }
  func.func @transform_0(%arg0: i32) -> (i32, i32) {
    %c0_i32 = arith.constant 0 : i32
    %c0_i32_0 = arith.constant 0 : i32
    %c0_i32_1 = arith.constant 0 : i32
    return %c0_i32, %c0_i32_0 : i32, i32
  }
  func.func @transform_1(%arg0: i32) -> (i32, i32) {
    %c0_i32 = arith.constant 0 : i32
    %c0_i32_0 = arith.constant 0 : i32
    %c0_i32_1 = arith.constant 0 : i32
    return %c0_i32, %c0_i32_0 : i32, i32
  }
  func.func @transform_2(%arg0: i32) -> (i32, i32) {
    %c0_i32 = arith.constant 0 : i32
    %c0_i32_0 = arith.constant 0 : i32
    %c0_i32_1 = arith.constant 0 : i32
    return %c0_i32, %c0_i32_0 : i32, i32
  }
  func.func @transform_3(%arg0: i32) -> (i32, i32) {
    %c0_i32 = arith.constant 0 : i32
    %c0_i32_0 = arith.constant 0 : i32
    %c0_i32_1 = arith.constant 0 : i32
    return %c0_i32, %c0_i32_0 : i32, i32
  }
  func.func @transform_4(%arg0: i32) -> (i32, i32) {
    %c0_i32 = arith.constant 0 : i32
    %c0_i32_0 = arith.constant 0 : i32
    %c0_i32_1 = arith.constant 0 : i32
    return %c0_i32, %c0_i32_0 : i32, i32
  }
}

module attributes {stable_mosaic.version = 11 : i64} {
  func.func @_ca_scale_kernel(%arg0: i32, %arg1: memref<1x16x32xf32, #tpu.memory_space<vmem>>, %arg2: memref<1x1x32xf32, #tpu.memory_space<vmem>>, %arg3: memref<1x16x32xf32, #tpu.memory_space<vmem>>, %arg4: memref<1x16x2xf32, #tpu.memory_space<vmem>>) attributes {dimension_semantics = [#tpu.dimension_semantics<parallel>], iteration_bounds = array<i64: 2>, scalar_prefetch = 0 : i64, scratch_operands = 0 : i64, tpu.core_type = #tpu.core_type<tc>, window_params = [{transform_indices = @transform_0, window_bounds = array<i64: 1, 16, 32>}, {transform_indices = @transform_1, window_bounds = array<i64: 1, 1, 32>}, {transform_indices = @transform_2, window_bounds = array<i64: 1, 16, 32>}, {transform_indices = @transform_3, window_bounds = array<i64: 1, 16, 2>}]} {
    %c0 = arith.constant 0 : index
    %c0_0 = arith.constant 0 : index
    %c0_1 = arith.constant 0 : index
    %0 = vector.load %arg1[%c0, %c0_0, %c0_1] : memref<1x16x32xf32, #tpu.memory_space<vmem>>, vector<1x16x32xf32>
    %1 = vector.shape_cast %0 : vector<1x16x32xf32> to vector<16x32xf32>
    %c0_2 = arith.constant 0 : index
    %c0_3 = arith.constant 0 : index
    %c0_4 = arith.constant 0 : index
    %2 = vector.load %arg2[%c0_2, %c0_3, %c0_4] : memref<1x1x32xf32, #tpu.memory_space<vmem>>, vector<1x1x32xf32>
    %3 = vector.shape_cast %2 : vector<1x1x32xf32> to vector<1x32xf32>
    %4 = vector.broadcast %3 : vector<1x32xf32> to vector<16x32xf32>
    %5 = arith.mulf %1, %4 : vector<16x32xf32>
    %c0_5 = arith.constant 0 : index
    %c0_6 = arith.constant 0 : index
    %c0_7 = arith.constant 0 : index
    %6 = vector.load %arg3[%c0_5, %c0_6, %c0_7] : memref<1x16x32xf32, #tpu.memory_space<vmem>>, vector<1x16x32xf32>
    %7 = vector.shape_cast %6 : vector<1x16x32xf32> to vector<16x32xf32>
    %8 = vector.shape_cast %5 : vector<16x32xf32> to vector<1x16x32xf32>
    tpu.vector_store %arg3[%c0_5, %c0_6, %c0_7], %8 {strides = array<i32>} : memref<1x16x32xf32, #tpu.memory_space<vmem>>, vector<1x16x32xf32>,
    %cst = arith.constant dense<0.000000e+00> : vector<16xf32>
    %9 = vector.multi_reduction <add>, %5, %cst [1] : vector<16x32xf32> to vector<16xf32>
    %10 = vector.shape_cast %9 : vector<16xf32> to vector<16x1xf32>
    %cst_8 = arith.constant 3.200000e+01 : f32
    %11 = vector.broadcast %cst_8 : f32 to vector<16x1xf32>
    %12 = arith.divf %10, %11 : vector<16x1xf32>
    %cst_9 = arith.constant dense<0xFF800000> : vector<16xf32>
    %13 = vector.multi_reduction <maximumf>, %5, %cst_9 [1] : vector<16x32xf32> to vector<16xf32>
    %14 = vector.shape_cast %13 : vector<16xf32> to vector<16x1xf32>
    %15 = tpu.concatenate %12, %14 in 1 : vector<16x1xf32>, vector<16x1xf32> -> vector<16x2xf32>
    %c0_10 = arith.constant 0 : index
    %c0_11 = arith.constant 0 : index
    %c0_12 = arith.constant 0 : index
    %16 = vector.load %arg4[%c0_10, %c0_11, %c0_12] : memref<1x16x2xf32, #tpu.memory_space<vmem>>, vector<1x16x2xf32>
    %17 = vector.shape_cast %16 : vector<1x16x2xf32> to vector<16x2xf32>
    %18 = vector.shape_cast %15 : vector<16x2xf32> to vector<1x16x2xf32>
    tpu.vector_store %arg4[%c0_10, %c0_11, %c0_12], %18 {strides = array<i32>} : memref<1x16x2xf32, #tpu.memory_space<vmem>>, vector<1x16x2xf32>,
    return
  }
  func.func @transform_0(%arg0: i32) -> (i32, i32, i32) {
    %c0_i32 = arith.constant 0 : i32
    %c0_i32_0 = arith.constant 0 : i32
    %c0_i32_1 = arith.constant 0 : i32
    return %arg0, %c0_i32, %c0_i32_0 : i32, i32, i32
  }
  func.func @transform_1(%arg0: i32) -> (i32, i32, i32) {
    %c0_i32 = arith.constant 0 : i32
    %c0_i32_0 = arith.constant 0 : i32
    %c0_i32_1 = arith.constant 0 : i32
    return %arg0, %c0_i32, %c0_i32_0 : i32, i32, i32
  }
  func.func @transform_2(%arg0: i32) -> (i32, i32, i32) {
    %c0_i32 = arith.constant 0 : i32
    %c0_i32_0 = arith.constant 0 : i32
    %c0_i32_1 = arith.constant 0 : i32
    return %arg0, %c0_i32, %c0_i32_0 : i32, i32, i32
  }
  func.func @transform_3(%arg0: i32) -> (i32, i32, i32) {
    %c0_i32 = arith.constant 0 : i32
    %c0_i32_0 = arith.constant 0 : i32
    %c0_i32_1 = arith.constant 0 : i32
    return %arg0, %c0_i32, %c0_i32_0 : i32, i32, i32
  }
}

module attributes {stable_mosaic.version = 11 : i64} {
  func.func @_mm_kernel(%arg0: i32, %arg1: memref<32x98xf32, #tpu.memory_space<vmem>>, %arg2: memref<98x1xbf16, #tpu.memory_space<vmem>>, %arg3: memref<32x1xf32, #tpu.memory_space<vmem>>) attributes {dimension_semantics = [#tpu.dimension_semantics<parallel>], iteration_bounds = array<i64: 1>, scalar_prefetch = 0 : i64, scratch_operands = 0 : i64, tpu.core_type = #tpu.core_type<tc>, window_params = [{transform_indices = @transform_0, window_bounds = array<i64: 32, 98>}, {pipeline_mode = #tpu.pipeline_mode<synchronous>, transform_indices = @transform_1, window_bounds = array<i64: 98, 1>}, {transform_indices = @transform_2, window_bounds = array<i64: 32, 1>}]} {
    %c0 = arith.constant 0 : index
    %c0_0 = arith.constant 0 : index
    %0 = vector.load %arg1[%c0, %c0_0] : memref<32x98xf32, #tpu.memory_space<vmem>>, vector<32x98xf32>
    %1 = arith.truncf %0 : vector<32x98xf32> to vector<32x98xbf16>
    %c0_1 = arith.constant 0 : index
    %c0_2 = arith.constant 0 : index
    %2 = vector.load %arg2[%c0_1, %c0_2] : memref<98x1xbf16, #tpu.memory_space<vmem>>, vector<98x1xbf16>
    %cst = arith.constant dense<0.000000e+00> : vector<32x1xf32>
    %3 = tpu.matmul %1, %2, %cst {dimension_numbers = #tpu.dot_dimension_numbers<[1], [0], [0], [1], [0, 0, 1, 1], [], []>} : vector<32x98xbf16>, vector<98x1xbf16>, vector<32x1xf32> -> vector<32x1xf32>
    %cst_3 = arith.constant 0.000000e+00 : f32
    %4 = vector.broadcast %cst_3 : f32 to vector<32x1xf32>
    %5 = arith.subf %4, %3 : vector<32x1xf32>
    %6 = math.exp %5 : vector<32x1xf32>
    %cst_4 = arith.constant 1.000000e+00 : f32
    %7 = vector.broadcast %cst_4 : f32 to vector<32x1xf32>
    %8 = arith.addf %7, %6 : vector<32x1xf32>
    %9 = tpu.reciprocal %8 {approx = true} : vector<32x1xf32> -> vector<32x1xf32>
    %c0_5 = arith.constant 0 : index
    %c0_6 = arith.constant 0 : index
    %10 = vector.load %arg3[%c0_5, %c0_6] : memref<32x1xf32, #tpu.memory_space<vmem>>, vector<32x1xf32>
    tpu.vector_store %arg3[%c0_5, %c0_6], %9 {strides = array<i32>} : memref<32x1xf32, #tpu.memory_space<vmem>>, vector<32x1xf32>,
    return
  }
  func.func @transform_0(%arg0: i32) -> (i32, i32) {
    %c0_i32 = arith.constant 0 : i32
    %c0_i32_0 = arith.constant 0 : i32
    return %arg0, %c0_i32 : i32, i32
  }
  func.func @transform_1(%arg0: i32) -> (i32, i32) {
    %c0_i32 = arith.constant 0 : i32
    %c0_i32_0 = arith.constant 0 : i32
    %c0_i32_1 = arith.constant 0 : i32
    return %c0_i32, %c0_i32_0 : i32, i32
  }
  func.func @transform_2(%arg0: i32) -> (i32, i32) {
    %c0_i32 = arith.constant 0 : i32
    %c0_i32_0 = arith.constant 0 : i32
    return %arg0, %c0_i32 : i32, i32
  }
}

module attributes {stable_mosaic.version = 11 : i64} {
  func.func @_cbam_apply_kernel(%arg0: i32, %arg1: memref<1x16x32xf32, #tpu.memory_space<vmem>>, %arg2: memref<1x16x1xf32, #tpu.memory_space<vmem>>, %arg3: memref<1x16x32xf32, #tpu.memory_space<vmem>>, %arg4: memref<1x16x32xbf16, #tpu.memory_space<vmem>>) attributes {dimension_semantics = [#tpu.dimension_semantics<parallel>], iteration_bounds = array<i64: 2>, scalar_prefetch = 0 : i64, scratch_operands = 0 : i64, tpu.core_type = #tpu.core_type<tc>, window_params = [{transform_indices = @transform_0, window_bounds = array<i64: 1, 16, 32>}, {transform_indices = @transform_1, window_bounds = array<i64: 1, 16, 1>}, {transform_indices = @transform_2, window_bounds = array<i64: 1, 16, 32>}, {transform_indices = @transform_3, window_bounds = array<i64: 1, 16, 32>}]} {
    %c0 = arith.constant 0 : index
    %c0_0 = arith.constant 0 : index
    %c0_1 = arith.constant 0 : index
    %0 = vector.load %arg1[%c0, %c0_0, %c0_1] : memref<1x16x32xf32, #tpu.memory_space<vmem>>, vector<1x16x32xf32>
    %1 = vector.shape_cast %0 : vector<1x16x32xf32> to vector<16x32xf32>
    %c0_2 = arith.constant 0 : index
    %c0_3 = arith.constant 0 : index
    %c0_4 = arith.constant 0 : index
    %2 = vector.load %arg2[%c0_2, %c0_3, %c0_4] : memref<1x16x1xf32, #tpu.memory_space<vmem>>, vector<1x16x1xf32>
    %3 = vector.shape_cast %2 : vector<1x16x1xf32> to vector<16x1xf32>
    %4 = vector.broadcast %3 : vector<16x1xf32> to vector<16x32xf32>
    %5 = arith.mulf %1, %4 : vector<16x32xf32>
    %c0_5 = arith.constant 0 : index
    %c0_6 = arith.constant 0 : index
    %c0_7 = arith.constant 0 : index
    %6 = vector.load %arg3[%c0_5, %c0_6, %c0_7] : memref<1x16x32xf32, #tpu.memory_space<vmem>>, vector<1x16x32xf32>
    %7 = vector.shape_cast %6 : vector<1x16x32xf32> to vector<16x32xf32>
    %8 = arith.addf %5, %7 : vector<16x32xf32>
    %cst = arith.constant 0.000000e+00 : f32
    %9 = vector.broadcast %cst : f32 to vector<16x32xf32>
    %10 = arith.maximumf %8, %9 : vector<16x32xf32>
    %11 = arith.truncf %10 : vector<16x32xf32> to vector<16x32xbf16>
    %c0_8 = arith.constant 0 : index
    %c0_9 = arith.constant 0 : index
    %c0_10 = arith.constant 0 : index
    %12 = vector.load %arg4[%c0_8, %c0_9, %c0_10] : memref<1x16x32xbf16, #tpu.memory_space<vmem>>, vector<1x16x32xbf16>
    %13 = vector.shape_cast %12 : vector<1x16x32xbf16> to vector<16x32xbf16>
    %14 = vector.shape_cast %11 : vector<16x32xbf16> to vector<1x16x32xbf16>
    tpu.vector_store %arg4[%c0_8, %c0_9, %c0_10], %14 {strides = array<i32>} : memref<1x16x32xbf16, #tpu.memory_space<vmem>>, vector<1x16x32xbf16>,
    return
  }
  func.func @transform_0(%arg0: i32) -> (i32, i32, i32) {
    %c0_i32 = arith.constant 0 : i32
    %c0_i32_0 = arith.constant 0 : i32
    %c0_i32_1 = arith.constant 0 : i32
    return %arg0, %c0_i32, %c0_i32_0 : i32, i32, i32
  }
  func.func @transform_1(%arg0: i32) -> (i32, i32, i32) {
    %c0_i32 = arith.constant 0 : i32
    %c0_i32_0 = arith.constant 0 : i32
    %c0_i32_1 = arith.constant 0 : i32
    return %arg0, %c0_i32, %c0_i32_0 : i32, i32, i32
  }
  func.func @transform_2(%arg0: i32) -> (i32, i32, i32) {
    %c0_i32 = arith.constant 0 : i32
    %c0_i32_0 = arith.constant 0 : i32
    %c0_i32_1 = arith.constant 0 : i32
    return %arg0, %c0_i32, %c0_i32_0 : i32, i32, i32
  }
  func.func @transform_3(%arg0: i32) -> (i32, i32, i32) {
    %c0_i32 = arith.constant 0 : i32
    %c0_i32_0 = arith.constant 0 : i32
    %c0_i32_1 = arith.constant 0 : i32
    return %arg0, %c0_i32, %c0_i32_0 : i32, i32, i32
  }
}

module attributes {stable_mosaic.version = 11 : i64} {
  func.func @_attn_kernel(%arg0: i32, %arg1: memref<1x16x32xf32, #tpu.memory_space<vmem>>, %arg2: memref<32x96xbf16, #tpu.memory_space<vmem>>, %arg3: memref<1x96xf32, #tpu.memory_space<vmem>>, %arg4: memref<1x16x32xbf16, #tpu.memory_space<vmem>>) attributes {dimension_semantics = [#tpu.dimension_semantics<parallel>], iteration_bounds = array<i64: 2>, scalar_prefetch = 0 : i64, scratch_operands = 0 : i64, tpu.core_type = #tpu.core_type<tc>, window_params = [{transform_indices = @transform_0, window_bounds = array<i64: 1, 16, 32>}, {pipeline_mode = #tpu.pipeline_mode<synchronous>, transform_indices = @transform_1, window_bounds = array<i64: 32, 96>}, {pipeline_mode = #tpu.pipeline_mode<synchronous>, transform_indices = @transform_2, window_bounds = array<i64: 1, 96>}, {transform_indices = @transform_3, window_bounds = array<i64: 1, 16, 32>}]} {
    %c0 = arith.constant 0 : index
    %c0_0 = arith.constant 0 : index
    %c0_1 = arith.constant 0 : index
    %0 = vector.load %arg1[%c0, %c0_0, %c0_1] : memref<1x16x32xf32, #tpu.memory_space<vmem>>, vector<1x16x32xf32>
    %1 = vector.shape_cast %0 : vector<1x16x32xf32> to vector<16x32xf32>
    %2 = arith.truncf %1 : vector<16x32xf32> to vector<16x32xbf16>
    %c0_2 = arith.constant 0 : index
    %c0_3 = arith.constant 0 : index
    %3 = vector.load %arg2[%c0_2, %c0_3] : memref<32x96xbf16, #tpu.memory_space<vmem>>, vector<32x96xbf16>
    %cst = arith.constant dense<0.000000e+00> : vector<16x96xf32>
    %4 = tpu.matmul %2, %3, %cst {dimension_numbers = #tpu.dot_dimension_numbers<[1], [0], [0], [1], [0, 0, 1, 1], [], []>} : vector<16x32xbf16>, vector<32x96xbf16>, vector<16x96xf32> -> vector<16x96xf32>
    %c0_4 = arith.constant 0 : index
    %c0_5 = arith.constant 0 : index
    %5 = vector.load %arg3[%c0_4, %c0_5] : memref<1x96xf32, #tpu.memory_space<vmem>>, vector<1x96xf32>
    %6 = vector.broadcast %5 : vector<1x96xf32> to vector<16x96xf32>
    %7 = arith.addf %4, %6 : vector<16x96xf32>
    %8 = arith.truncf %7 : vector<16x96xf32> to vector<16x96xbf16>
    %9 = vector.extract_strided_slice %8 {offsets = [0, 0], sizes = [16, 4], strides = [1, 1]} : vector<16x96xbf16> to vector<16x4xbf16>
    %10 = vector.extract_strided_slice %8 {offsets = [0, 32], sizes = [16, 4], strides = [1, 1]} : vector<16x96xbf16> to vector<16x4xbf16>
    %11 = vector.extract_strided_slice %8 {offsets = [0, 64], sizes = [16, 4], strides = [1, 1]} : vector<16x96xbf16> to vector<16x4xbf16>
    %cst_6 = arith.constant 0xFF800000 : f32
    %12 = vector.broadcast %cst_6 : f32 to vector<16x1xf32>
    %cst_7 = arith.constant 0.000000e+00 : f32
    %13 = vector.broadcast %cst_7 : f32 to vector<16x1xf32>
    %cst_8 = arith.constant 0.000000e+00 : f32
    %14 = vector.broadcast %cst_8 : f32 to vector<16x4xf32>
    %cst_9 = arith.constant dense<0.000000e+00> : vector<16x16xf32>
    %15 = tpu.matmul %9, %10, %cst_9 {dimension_numbers = #tpu.dot_dimension_numbers<[1], [1], [0], [0], [0, 0, 1, 0], [], []>} : vector<16x4xbf16>, vector<16x4xbf16>, vector<16x16xf32> -> vector<16x16xf32>
    %cst_10 = arith.constant 5.000000e-01 : f32
    %16 = vector.broadcast %cst_10 : f32 to vector<16x16xf32>
    %17 = arith.mulf %15, %16 : vector<16x16xf32>
    %cst_11 = arith.constant dense<0xFF800000> : vector<16xf32>
    %18 = vector.multi_reduction <maximumf>, %17, %cst_11 [1] : vector<16x16xf32> to vector<16xf32>
    %19 = vector.shape_cast %18 : vector<16xf32> to vector<16x1xf32>
    %20 = arith.maximumf %12, %19 : vector<16x1xf32>
    %21 = arith.subf %12, %20 : vector<16x1xf32>
    %22 = math.exp %21 : vector<16x1xf32>
    %23 = vector.broadcast %20 : vector<16x1xf32> to vector<16x16xf32>
    %24 = arith.subf %17, %23 : vector<16x16xf32>
    %25 = math.exp %24 : vector<16x16xf32>
    %26 = arith.mulf %22, %13 : vector<16x1xf32>
    %cst_12 = arith.constant dense<0.000000e+00> : vector<16xf32>
    %27 = vector.multi_reduction <add>, %25, %cst_12 [1] : vector<16x16xf32> to vector<16xf32>
    %28 = vector.shape_cast %27 : vector<16xf32> to vector<16x1xf32>
    %29 = arith.addf %26, %28 : vector<16x1xf32>
    %30 = vector.broadcast %22 : vector<16x1xf32> to vector<16x4xf32>
    %31 = arith.mulf %30, %14 : vector<16x4xf32>
    %32 = arith.truncf %25 : vector<16x16xf32> to vector<16x16xbf16>
    %cst_13 = arith.constant dense<0.000000e+00> : vector<16x4xf32>
    %33 = tpu.matmul %32, %11, %cst_13 {dimension_numbers = #tpu.dot_dimension_numbers<[1], [0], [0], [1], [0, 0, 1, 1], [], []>} : vector<16x16xbf16>, vector<16x4xbf16>, vector<16x4xf32> -> vector<16x4xf32>
    %34 = arith.addf %31, %33 : vector<16x4xf32>
    %35 = tpu.reciprocal %29 {approx = true} : vector<16x1xf32> -> vector<16x1xf32>
    %36 = vector.broadcast %35 : vector<16x1xf32> to vector<16x4xf32>
    %37 = arith.mulf %34, %36 : vector<16x4xf32>
    %38 = vector.extract_strided_slice %8 {offsets = [0, 4], sizes = [16, 4], strides = [1, 1]} : vector<16x96xbf16> to vector<16x4xbf16>
    %39 = vector.extract_strided_slice %8 {offsets = [0, 36], sizes = [16, 4], strides = [1, 1]} : vector<16x96xbf16> to vector<16x4xbf16>
    %40 = vector.extract_strided_slice %8 {offsets = [0, 68], sizes = [16, 4], strides = [1, 1]} : vector<16x96xbf16> to vector<16x4xbf16>
    %cst_14 = arith.constant 0xFF800000 : f32
    %41 = vector.broadcast %cst_14 : f32 to vector<16x1xf32>
    %cst_15 = arith.constant 0.000000e+00 : f32
    %42 = vector.broadcast %cst_15 : f32 to vector<16x1xf32>
    %cst_16 = arith.constant 0.000000e+00 : f32
    %43 = vector.broadcast %cst_16 : f32 to vector<16x4xf32>
    %cst_17 = arith.constant dense<0.000000e+00> : vector<16x16xf32>
    %44 = tpu.matmul %38, %39, %cst_17 {dimension_numbers = #tpu.dot_dimension_numbers<[1], [1], [0], [0], [0, 0, 1, 0], [], []>} : vector<16x4xbf16>, vector<16x4xbf16>, vector<16x16xf32> -> vector<16x16xf32>
    %cst_18 = arith.constant 5.000000e-01 : f32
    %45 = vector.broadcast %cst_18 : f32 to vector<16x16xf32>
    %46 = arith.mulf %44, %45 : vector<16x16xf32>
    %cst_19 = arith.constant dense<0xFF800000> : vector<16xf32>
    %47 = vector.multi_reduction <maximumf>, %46, %cst_19 [1] : vector<16x16xf32> to vector<16xf32>
    %48 = vector.shape_cast %47 : vector<16xf32> to vector<16x1xf32>
    %49 = arith.maximumf %41, %48 : vector<16x1xf32>
    %50 = arith.subf %41, %49 : vector<16x1xf32>
    %51 = math.exp %50 : vector<16x1xf32>
    %52 = vector.broadcast %49 : vector<16x1xf32> to vector<16x16xf32>
    %53 = arith.subf %46, %52 : vector<16x16xf32>
    %54 = math.exp %53 : vector<16x16xf32>
    %55 = arith.mulf %51, %42 : vector<16x1xf32>
    %cst_20 = arith.constant dense<0.000000e+00> : vector<16xf32>
    %56 = vector.multi_reduction <add>, %54, %cst_20 [1] : vector<16x16xf32> to vector<16xf32>
    %57 = vector.shape_cast %56 : vector<16xf32> to vector<16x1xf32>
    %58 = arith.addf %55, %57 : vector<16x1xf32>
    %59 = vector.broadcast %51 : vector<16x1xf32> to vector<16x4xf32>
    %60 = arith.mulf %59, %43 : vector<16x4xf32>
    %61 = arith.truncf %54 : vector<16x16xf32> to vector<16x16xbf16>
    %cst_21 = arith.constant dense<0.000000e+00> : vector<16x4xf32>
    %62 = tpu.matmul %61, %40, %cst_21 {dimension_numbers = #tpu.dot_dimension_numbers<[1], [0], [0], [1], [0, 0, 1, 1], [], []>} : vector<16x16xbf16>, vector<16x4xbf16>, vector<16x4xf32> -> vector<16x4xf32>
    %63 = arith.addf %60, %62 : vector<16x4xf32>
    %64 = tpu.reciprocal %58 {approx = true} : vector<16x1xf32> -> vector<16x1xf32>
    %65 = vector.broadcast %64 : vector<16x1xf32> to vector<16x4xf32>
    %66 = arith.mulf %63, %65 : vector<16x4xf32>
    %67 = vector.extract_strided_slice %8 {offsets = [0, 8], sizes = [16, 4], strides = [1, 1]} : vector<16x96xbf16> to vector<16x4xbf16>
    %68 = vector.extract_strided_slice %8 {offsets = [0, 40], sizes = [16, 4], strides = [1, 1]} : vector<16x96xbf16> to vector<16x4xbf16>
    %69 = vector.extract_strided_slice %8 {offsets = [0, 72], sizes = [16, 4], strides = [1, 1]} : vector<16x96xbf16> to vector<16x4xbf16>
    %cst_22 = arith.constant 0xFF800000 : f32
    %70 = vector.broadcast %cst_22 : f32 to vector<16x1xf32>
    %cst_23 = arith.constant 0.000000e+00 : f32
    %71 = vector.broadcast %cst_23 : f32 to vector<16x1xf32>
    %cst_24 = arith.constant 0.000000e+00 : f32
    %72 = vector.broadcast %cst_24 : f32 to vector<16x4xf32>
    %cst_25 = arith.constant dense<0.000000e+00> : vector<16x16xf32>
    %73 = tpu.matmul %67, %68, %cst_25 {dimension_numbers = #tpu.dot_dimension_numbers<[1], [1], [0], [0], [0, 0, 1, 0], [], []>} : vector<16x4xbf16>, vector<16x4xbf16>, vector<16x16xf32> -> vector<16x16xf32>
    %cst_26 = arith.constant 5.000000e-01 : f32
    %74 = vector.broadcast %cst_26 : f32 to vector<16x16xf32>
    %75 = arith.mulf %73, %74 : vector<16x16xf32>
    %cst_27 = arith.constant dense<0xFF800000> : vector<16xf32>
    %76 = vector.multi_reduction <maximumf>, %75, %cst_27 [1] : vector<16x16xf32> to vector<16xf32>
    %77 = vector.shape_cast %76 : vector<16xf32> to vector<16x1xf32>
    %78 = arith.maximumf %70, %77 : vector<16x1xf32>
    %79 = arith.subf %70, %78 : vector<16x1xf32>
    %80 = math.exp %79 : vector<16x1xf32>
    %81 = vector.broadcast %78 : vector<16x1xf32> to vector<16x16xf32>
    %82 = arith.subf %75, %81 : vector<16x16xf32>
    %83 = math.exp %82 : vector<16x16xf32>
    %84 = arith.mulf %80, %71 : vector<16x1xf32>
    %cst_28 = arith.constant dense<0.000000e+00> : vector<16xf32>
    %85 = vector.multi_reduction <add>, %83, %cst_28 [1] : vector<16x16xf32> to vector<16xf32>
    %86 = vector.shape_cast %85 : vector<16xf32> to vector<16x1xf32>
    %87 = arith.addf %84, %86 : vector<16x1xf32>
    %88 = vector.broadcast %80 : vector<16x1xf32> to vector<16x4xf32>
    %89 = arith.mulf %88, %72 : vector<16x4xf32>
    %90 = arith.truncf %83 : vector<16x16xf32> to vector<16x16xbf16>
    %cst_29 = arith.constant dense<0.000000e+00> : vector<16x4xf32>
    %91 = tpu.matmul %90, %69, %cst_29 {dimension_numbers = #tpu.dot_dimension_numbers<[1], [0], [0], [1], [0, 0, 1, 1], [], []>} : vector<16x16xbf16>, vector<16x4xbf16>, vector<16x4xf32> -> vector<16x4xf32>
    %92 = arith.addf %89, %91 : vector<16x4xf32>
    %93 = tpu.reciprocal %87 {approx = true} : vector<16x1xf32> -> vector<16x1xf32>
    %94 = vector.broadcast %93 : vector<16x1xf32> to vector<16x4xf32>
    %95 = arith.mulf %92, %94 : vector<16x4xf32>
    %96 = vector.extract_strided_slice %8 {offsets = [0, 12], sizes = [16, 4], strides = [1, 1]} : vector<16x96xbf16> to vector<16x4xbf16>
    %97 = vector.extract_strided_slice %8 {offsets = [0, 44], sizes = [16, 4], strides = [1, 1]} : vector<16x96xbf16> to vector<16x4xbf16>
    %98 = vector.extract_strided_slice %8 {offsets = [0, 76], sizes = [16, 4], strides = [1, 1]} : vector<16x96xbf16> to vector<16x4xbf16>
    %cst_30 = arith.constant 0xFF800000 : f32
    %99 = vector.broadcast %cst_30 : f32 to vector<16x1xf32>
    %cst_31 = arith.constant 0.000000e+00 : f32
    %100 = vector.broadcast %cst_31 : f32 to vector<16x1xf32>
    %cst_32 = arith.constant 0.000000e+00 : f32
    %101 = vector.broadcast %cst_32 : f32 to vector<16x4xf32>
    %cst_33 = arith.constant dense<0.000000e+00> : vector<16x16xf32>
    %102 = tpu.matmul %96, %97, %cst_33 {dimension_numbers = #tpu.dot_dimension_numbers<[1], [1], [0], [0], [0, 0, 1, 0], [], []>} : vector<16x4xbf16>, vector<16x4xbf16>, vector<16x16xf32> -> vector<16x16xf32>
    %cst_34 = arith.constant 5.000000e-01 : f32
    %103 = vector.broadcast %cst_34 : f32 to vector<16x16xf32>
    %104 = arith.mulf %102, %103 : vector<16x16xf32>
    %cst_35 = arith.constant dense<0xFF800000> : vector<16xf32>
    %105 = vector.multi_reduction <maximumf>, %104, %cst_35 [1] : vector<16x16xf32> to vector<16xf32>
    %106 = vector.shape_cast %105 : vector<16xf32> to vector<16x1xf32>
    %107 = arith.maximumf %99, %106 : vector<16x1xf32>
    %108 = arith.subf %99, %107 : vector<16x1xf32>
    %109 = math.exp %108 : vector<16x1xf32>
    %110 = vector.broadcast %107 : vector<16x1xf32> to vector<16x16xf32>
    %111 = arith.subf %104, %110 : vector<16x16xf32>
    %112 = math.exp %111 : vector<16x16xf32>
    %113 = arith.mulf %109, %100 : vector<16x1xf32>
    %cst_36 = arith.constant dense<0.000000e+00> : vector<16xf32>
    %114 = vector.multi_reduction <add>, %112, %cst_36 [1] : vector<16x16xf32> to vector<16xf32>
    %115 = vector.shape_cast %114 : vector<16xf32> to vector<16x1xf32>
    %116 = arith.addf %113, %115 : vector<16x1xf32>
    %117 = vector.broadcast %109 : vector<16x1xf32> to vector<16x4xf32>
    %118 = arith.mulf %117, %101 : vector<16x4xf32>
    %119 = arith.truncf %112 : vector<16x16xf32> to vector<16x16xbf16>
    %cst_37 = arith.constant dense<0.000000e+00> : vector<16x4xf32>
    %120 = tpu.matmul %119, %98, %cst_37 {dimension_numbers = #tpu.dot_dimension_numbers<[1], [0], [0], [1], [0, 0, 1, 1], [], []>} : vector<16x16xbf16>, vector<16x4xbf16>, vector<16x4xf32> -> vector<16x4xf32>
    %121 = arith.addf %118, %120 : vector<16x4xf32>
    %122 = tpu.reciprocal %116 {approx = true} : vector<16x1xf32> -> vector<16x1xf32>
    %123 = vector.broadcast %122 : vector<16x1xf32> to vector<16x4xf32>
    %124 = arith.mulf %121, %123 : vector<16x4xf32>
    %125 = vector.extract_strided_slice %8 {offsets = [0, 16], sizes = [16, 4], strides = [1, 1]} : vector<16x96xbf16> to vector<16x4xbf16>
    %126 = vector.extract_strided_slice %8 {offsets = [0, 48], sizes = [16, 4], strides = [1, 1]} : vector<16x96xbf16> to vector<16x4xbf16>
    %127 = vector.extract_strided_slice %8 {offsets = [0, 80], sizes = [16, 4], strides = [1, 1]} : vector<16x96xbf16> to vector<16x4xbf16>
    %cst_38 = arith.constant 0xFF800000 : f32
    %128 = vector.broadcast %cst_38 : f32 to vector<16x1xf32>
    %cst_39 = arith.constant 0.000000e+00 : f32
    %129 = vector.broadcast %cst_39 : f32 to vector<16x1xf32>
    %cst_40 = arith.constant 0.000000e+00 : f32
    %130 = vector.broadcast %cst_40 : f32 to vector<16x4xf32>
    %cst_41 = arith.constant dense<0.000000e+00> : vector<16x16xf32>
    %131 = tpu.matmul %125, %126, %cst_41 {dimension_numbers = #tpu.dot_dimension_numbers<[1], [1], [0], [0], [0, 0, 1, 0], [], []>} : vector<16x4xbf16>, vector<16x4xbf16>, vector<16x16xf32> -> vector<16x16xf32>
    %cst_42 = arith.constant 5.000000e-01 : f32
    %132 = vector.broadcast %cst_42 : f32 to vector<16x16xf32>
    %133 = arith.mulf %131, %132 : vector<16x16xf32>
    %cst_43 = arith.constant dense<0xFF800000> : vector<16xf32>
    %134 = vector.multi_reduction <maximumf>, %133, %cst_43 [1] : vector<16x16xf32> to vector<16xf32>
    %135 = vector.shape_cast %134 : vector<16xf32> to vector<16x1xf32>
    %136 = arith.maximumf %128, %135 : vector<16x1xf32>
    %137 = arith.subf %128, %136 : vector<16x1xf32>
    %138 = math.exp %137 : vector<16x1xf32>
    %139 = vector.broadcast %136 : vector<16x1xf32> to vector<16x16xf32>
    %140 = arith.subf %133, %139 : vector<16x16xf32>
    %141 = math.exp %140 : vector<16x16xf32>
    %142 = arith.mulf %138, %129 : vector<16x1xf32>
    %cst_44 = arith.constant dense<0.000000e+00> : vector<16xf32>
    %143 = vector.multi_reduction <add>, %141, %cst_44 [1] : vector<16x16xf32> to vector<16xf32>
    %144 = vector.shape_cast %143 : vector<16xf32> to vector<16x1xf32>
    %145 = arith.addf %142, %144 : vector<16x1xf32>
    %146 = vector.broadcast %138 : vector<16x1xf32> to vector<16x4xf32>
    %147 = arith.mulf %146, %130 : vector<16x4xf32>
    %148 = arith.truncf %141 : vector<16x16xf32> to vector<16x16xbf16>
    %cst_45 = arith.constant dense<0.000000e+00> : vector<16x4xf32>
    %149 = tpu.matmul %148, %127, %cst_45 {dimension_numbers = #tpu.dot_dimension_numbers<[1], [0], [0], [1], [0, 0, 1, 1], [], []>} : vector<16x16xbf16>, vector<16x4xbf16>, vector<16x4xf32> -> vector<16x4xf32>
    %150 = arith.addf %147, %149 : vector<16x4xf32>
    %151 = tpu.reciprocal %145 {approx = true} : vector<16x1xf32> -> vector<16x1xf32>
    %152 = vector.broadcast %151 : vector<16x1xf32> to vector<16x4xf32>
    %153 = arith.mulf %150, %152 : vector<16x4xf32>
    %154 = vector.extract_strided_slice %8 {offsets = [0, 20], sizes = [16, 4], strides = [1, 1]} : vector<16x96xbf16> to vector<16x4xbf16>
    %155 = vector.extract_strided_slice %8 {offsets = [0, 52], sizes = [16, 4], strides = [1, 1]} : vector<16x96xbf16> to vector<16x4xbf16>
    %156 = vector.extract_strided_slice %8 {offsets = [0, 84], sizes = [16, 4], strides = [1, 1]} : vector<16x96xbf16> to vector<16x4xbf16>
    %cst_46 = arith.constant 0xFF800000 : f32
    %157 = vector.broadcast %cst_46 : f32 to vector<16x1xf32>
    %cst_47 = arith.constant 0.000000e+00 : f32
    %158 = vector.broadcast %cst_47 : f32 to vector<16x1xf32>
    %cst_48 = arith.constant 0.000000e+00 : f32
    %159 = vector.broadcast %cst_48 : f32 to vector<16x4xf32>
    %cst_49 = arith.constant dense<0.000000e+00> : vector<16x16xf32>
    %160 = tpu.matmul %154, %155, %cst_49 {dimension_numbers = #tpu.dot_dimension_numbers<[1], [1], [0], [0], [0, 0, 1, 0], [], []>} : vector<16x4xbf16>, vector<16x4xbf16>, vector<16x16xf32> -> vector<16x16xf32>
    %cst_50 = arith.constant 5.000000e-01 : f32
    %161 = vector.broadcast %cst_50 : f32 to vector<16x16xf32>
    %162 = arith.mulf %160, %161 : vector<16x16xf32>
    %cst_51 = arith.constant dense<0xFF800000> : vector<16xf32>
    %163 = vector.multi_reduction <maximumf>, %162, %cst_51 [1] : vector<16x16xf32> to vector<16xf32>
    %164 = vector.shape_cast %163 : vector<16xf32> to vector<16x1xf32>
    %165 = arith.maximumf %157, %164 : vector<16x1xf32>
    %166 = arith.subf %157, %165 : vector<16x1xf32>
    %167 = math.exp %166 : vector<16x1xf32>
    %168 = vector.broadcast %165 : vector<16x1xf32> to vector<16x16xf32>
    %169 = arith.subf %162, %168 : vector<16x16xf32>
    %170 = math.exp %169 : vector<16x16xf32>
    %171 = arith.mulf %167, %158 : vector<16x1xf32>
    %cst_52 = arith.constant dense<0.000000e+00> : vector<16xf32>
    %172 = vector.multi_reduction <add>, %170, %cst_52 [1] : vector<16x16xf32> to vector<16xf32>
    %173 = vector.shape_cast %172 : vector<16xf32> to vector<16x1xf32>
    %174 = arith.addf %171, %173 : vector<16x1xf32>
    %175 = vector.broadcast %167 : vector<16x1xf32> to vector<16x4xf32>
    %176 = arith.mulf %175, %159 : vector<16x4xf32>
    %177 = arith.truncf %170 : vector<16x16xf32> to vector<16x16xbf16>
    %cst_53 = arith.constant dense<0.000000e+00> : vector<16x4xf32>
    %178 = tpu.matmul %177, %156, %cst_53 {dimension_numbers = #tpu.dot_dimension_numbers<[1], [0], [0], [1], [0, 0, 1, 1], [], []>} : vector<16x16xbf16>, vector<16x4xbf16>, vector<16x4xf32> -> vector<16x4xf32>
    %179 = arith.addf %176, %178 : vector<16x4xf32>
    %180 = tpu.reciprocal %174 {approx = true} : vector<16x1xf32> -> vector<16x1xf32>
    %181 = vector.broadcast %180 : vector<16x1xf32> to vector<16x4xf32>
    %182 = arith.mulf %179, %181 : vector<16x4xf32>
    %183 = vector.extract_strided_slice %8 {offsets = [0, 24], sizes = [16, 4], strides = [1, 1]} : vector<16x96xbf16> to vector<16x4xbf16>
    %184 = vector.extract_strided_slice %8 {offsets = [0, 56], sizes = [16, 4], strides = [1, 1]} : vector<16x96xbf16> to vector<16x4xbf16>
    %185 = vector.extract_strided_slice %8 {offsets = [0, 88], sizes = [16, 4], strides = [1, 1]} : vector<16x96xbf16> to vector<16x4xbf16>
    %cst_54 = arith.constant 0xFF800000 : f32
    %186 = vector.broadcast %cst_54 : f32 to vector<16x1xf32>
    %cst_55 = arith.constant 0.000000e+00 : f32
    %187 = vector.broadcast %cst_55 : f32 to vector<16x1xf32>
    %cst_56 = arith.constant 0.000000e+00 : f32
    %188 = vector.broadcast %cst_56 : f32 to vector<16x4xf32>
    %cst_57 = arith.constant dense<0.000000e+00> : vector<16x16xf32>
    %189 = tpu.matmul %183, %184, %cst_57 {dimension_numbers = #tpu.dot_dimension_numbers<[1], [1], [0], [0], [0, 0, 1, 0], [], []>} : vector<16x4xbf16>, vector<16x4xbf16>, vector<16x16xf32> -> vector<16x16xf32>
    %cst_58 = arith.constant 5.000000e-01 : f32
    %190 = vector.broadcast %cst_58 : f32 to vector<16x16xf32>
    %191 = arith.mulf %189, %190 : vector<16x16xf32>
    %cst_59 = arith.constant dense<0xFF800000> : vector<16xf32>
    %192 = vector.multi_reduction <maximumf>, %191, %cst_59 [1] : vector<16x16xf32> to vector<16xf32>
    %193 = vector.shape_cast %192 : vector<16xf32> to vector<16x1xf32>
    %194 = arith.maximumf %186, %193 : vector<16x1xf32>
    %195 = arith.subf %186, %194 : vector<16x1xf32>
    %196 = math.exp %195 : vector<16x1xf32>
    %197 = vector.broadcast %194 : vector<16x1xf32> to vector<16x16xf32>
    %198 = arith.subf %191, %197 : vector<16x16xf32>
    %199 = math.exp %198 : vector<16x16xf32>
    %200 = arith.mulf %196, %187 : vector<16x1xf32>
    %cst_60 = arith.constant dense<0.000000e+00> : vector<16xf32>
    %201 = vector.multi_reduction <add>, %199, %cst_60 [1] : vector<16x16xf32> to vector<16xf32>
    %202 = vector.shape_cast %201 : vector<16xf32> to vector<16x1xf32>
    %203 = arith.addf %200, %202 : vector<16x1xf32>
    %204 = vector.broadcast %196 : vector<16x1xf32> to vector<16x4xf32>
    %205 = arith.mulf %204, %188 : vector<16x4xf32>
    %206 = arith.truncf %199 : vector<16x16xf32> to vector<16x16xbf16>
    %cst_61 = arith.constant dense<0.000000e+00> : vector<16x4xf32>
    %207 = tpu.matmul %206, %185, %cst_61 {dimension_numbers = #tpu.dot_dimension_numbers<[1], [0], [0], [1], [0, 0, 1, 1], [], []>} : vector<16x16xbf16>, vector<16x4xbf16>, vector<16x4xf32> -> vector<16x4xf32>
    %208 = arith.addf %205, %207 : vector<16x4xf32>
    %209 = tpu.reciprocal %203 {approx = true} : vector<16x1xf32> -> vector<16x1xf32>
    %210 = vector.broadcast %209 : vector<16x1xf32> to vector<16x4xf32>
    %211 = arith.mulf %208, %210 : vector<16x4xf32>
    %212 = vector.extract_strided_slice %8 {offsets = [0, 28], sizes = [16, 4], strides = [1, 1]} : vector<16x96xbf16> to vector<16x4xbf16>
    %213 = vector.extract_strided_slice %8 {offsets = [0, 60], sizes = [16, 4], strides = [1, 1]} : vector<16x96xbf16> to vector<16x4xbf16>
    %214 = vector.extract_strided_slice %8 {offsets = [0, 92], sizes = [16, 4], strides = [1, 1]} : vector<16x96xbf16> to vector<16x4xbf16>
    %cst_62 = arith.constant 0xFF800000 : f32
    %215 = vector.broadcast %cst_62 : f32 to vector<16x1xf32>
    %cst_63 = arith.constant 0.000000e+00 : f32
    %216 = vector.broadcast %cst_63 : f32 to vector<16x1xf32>
    %cst_64 = arith.constant 0.000000e+00 : f32
    %217 = vector.broadcast %cst_64 : f32 to vector<16x4xf32>
    %cst_65 = arith.constant dense<0.000000e+00> : vector<16x16xf32>
    %218 = tpu.matmul %212, %213, %cst_65 {dimension_numbers = #tpu.dot_dimension_numbers<[1], [1], [0], [0], [0, 0, 1, 0], [], []>} : vector<16x4xbf16>, vector<16x4xbf16>, vector<16x16xf32> -> vector<16x16xf32>
    %cst_66 = arith.constant 5.000000e-01 : f32
    %219 = vector.broadcast %cst_66 : f32 to vector<16x16xf32>
    %220 = arith.mulf %218, %219 : vector<16x16xf32>
    %cst_67 = arith.constant dense<0xFF800000> : vector<16xf32>
    %221 = vector.multi_reduction <maximumf>, %220, %cst_67 [1] : vector<16x16xf32> to vector<16xf32>
    %222 = vector.shape_cast %221 : vector<16xf32> to vector<16x1xf32>
    %223 = arith.maximumf %215, %222 : vector<16x1xf32>
    %224 = arith.subf %215, %223 : vector<16x1xf32>
    %225 = math.exp %224 : vector<16x1xf32>
    %226 = vector.broadcast %223 : vector<16x1xf32> to vector<16x16xf32>
    %227 = arith.subf %220, %226 : vector<16x16xf32>
    %228 = math.exp %227 : vector<16x16xf32>
    %229 = arith.mulf %225, %216 : vector<16x1xf32>
    %cst_68 = arith.constant dense<0.000000e+00> : vector<16xf32>
    %230 = vector.multi_reduction <add>, %228, %cst_68 [1] : vector<16x16xf32> to vector<16xf32>
    %231 = vector.shape_cast %230 : vector<16xf32> to vector<16x1xf32>
    %232 = arith.addf %229, %231 : vector<16x1xf32>
    %233 = vector.broadcast %225 : vector<16x1xf32> to vector<16x4xf32>
    %234 = arith.mulf %233, %217 : vector<16x4xf32>
    %235 = arith.truncf %228 : vector<16x16xf32> to vector<16x16xbf16>
    %cst_69 = arith.constant dense<0.000000e+00> : vector<16x4xf32>
    %236 = tpu.matmul %235, %214, %cst_69 {dimension_numbers = #tpu.dot_dimension_numbers<[1], [0], [0], [1], [0, 0, 1, 1], [], []>} : vector<16x16xbf16>, vector<16x4xbf16>, vector<16x4xf32> -> vector<16x4xf32>
    %237 = arith.addf %234, %236 : vector<16x4xf32>
    %238 = tpu.reciprocal %232 {approx = true} : vector<16x1xf32> -> vector<16x1xf32>
    %239 = vector.broadcast %238 : vector<16x1xf32> to vector<16x4xf32>
    %240 = arith.mulf %237, %239 : vector<16x4xf32>
    %241 = tpu.concatenate %37, %66, %95, %124, %153, %182, %211, %240 in 1 : vector<16x4xf32>, vector<16x4xf32>, vector<16x4xf32>, vector<16x4xf32>, vector<16x4xf32>, vector<16x4xf32>, vector<16x4xf32>, vector<16x4xf32> -> vector<16x32xf32>
    %242 = arith.truncf %241 : vector<16x32xf32> to vector<16x32xbf16>
    %c0_70 = arith.constant 0 : index
    %c0_71 = arith.constant 0 : index
    %c0_72 = arith.constant 0 : index
    %243 = vector.load %arg4[%c0_70, %c0_71, %c0_72] : memref<1x16x32xbf16, #tpu.memory_space<vmem>>, vector<1x16x32xbf16>
    %244 = vector.shape_cast %243 : vector<1x16x32xbf16> to vector<16x32xbf16>
    %245 = vector.shape_cast %242 : vector<16x32xbf16> to vector<1x16x32xbf16>
    tpu.vector_store %arg4[%c0_70, %c0_71, %c0_72], %245 {strides = array<i32>} : memref<1x16x32xbf16, #tpu.memory_space<vmem>>, vector<1x16x32xbf16>,
    return
  }
  func.func @transform_0(%arg0: i32) -> (i32, i32, i32) {
    %c0_i32 = arith.constant 0 : i32
    %c0_i32_0 = arith.constant 0 : i32
    %c0_i32_1 = arith.constant 0 : i32
    return %arg0, %c0_i32, %c0_i32_0 : i32, i32, i32
  }
  func.func @transform_1(%arg0: i32) -> (i32, i32) {
    %c0_i32 = arith.constant 0 : i32
    %c0_i32_0 = arith.constant 0 : i32
    %c0_i32_1 = arith.constant 0 : i32
    return %c0_i32, %c0_i32_0 : i32, i32
  }
  func.func @transform_2(%arg0: i32) -> (i32, i32) {
    %c0_i32 = arith.constant 0 : i32
    %c0_i32_0 = arith.constant 0 : i32
    %c0_i32_1 = arith.constant 0 : i32
    return %c0_i32, %c0_i32_0 : i32, i32
  }
  func.func @transform_3(%arg0: i32) -> (i32, i32, i32) {
    %c0_i32 = arith.constant 0 : i32
    %c0_i32_0 = arith.constant 0 : i32
    %c0_i32_1 = arith.constant 0 : i32
    return %arg0, %c0_i32, %c0_i32_0 : i32, i32, i32
  }
}

module attributes {stable_mosaic.version = 11 : i64} {
  func.func @_mm_kernel(%arg0: i32, %arg1: memref<32x32xbf16, #tpu.memory_space<vmem>>, %arg2: memref<32x32xbf16, #tpu.memory_space<vmem>>, %arg3: memref<1x32xf32, #tpu.memory_space<vmem>>, %arg4: memref<32x32xf32, #tpu.memory_space<vmem>>, %arg5: memref<1x32xf32, #tpu.memory_space<vmem>>, %arg6: memref<1x32xf32, #tpu.memory_space<vmem>>, %arg7: memref<32x32xf32, #tpu.memory_space<vmem>>) attributes {dimension_semantics = [#tpu.dimension_semantics<parallel>], iteration_bounds = array<i64: 1>, scalar_prefetch = 0 : i64, scratch_operands = 0 : i64, tpu.core_type = #tpu.core_type<tc>, window_params = [{transform_indices = @transform_0, window_bounds = array<i64: 32, 32>}, {pipeline_mode = #tpu.pipeline_mode<synchronous>, transform_indices = @transform_1, window_bounds = array<i64: 32, 32>}, {pipeline_mode = #tpu.pipeline_mode<synchronous>, transform_indices = @transform_2, window_bounds = array<i64: 1, 32>}, {transform_indices = @transform_3, window_bounds = array<i64: 32, 32>}, {pipeline_mode = #tpu.pipeline_mode<synchronous>, transform_indices = @transform_4, window_bounds = array<i64: 1, 32>}, {pipeline_mode = #tpu.pipeline_mode<synchronous>, transform_indices = @transform_5, window_bounds = array<i64: 1, 32>}, {transform_indices = @transform_6, window_bounds = array<i64: 32, 32>}]} {
    %c0 = arith.constant 0 : index
    %c0_0 = arith.constant 0 : index
    %0 = vector.load %arg1[%c0, %c0_0] : memref<32x32xbf16, #tpu.memory_space<vmem>>, vector<32x32xbf16>
    %c0_1 = arith.constant 0 : index
    %c0_2 = arith.constant 0 : index
    %1 = vector.load %arg2[%c0_1, %c0_2] : memref<32x32xbf16, #tpu.memory_space<vmem>>, vector<32x32xbf16>
    %cst = arith.constant dense<0.000000e+00> : vector<32x32xf32>
    %2 = tpu.matmul %0, %1, %cst {dimension_numbers = #tpu.dot_dimension_numbers<[1], [0], [0], [1], [0, 0, 1, 1], [], []>} : vector<32x32xbf16>, vector<32x32xbf16>, vector<32x32xf32> -> vector<32x32xf32>
    %c0_3 = arith.constant 0 : index
    %c0_4 = arith.constant 0 : index
    %3 = vector.load %arg3[%c0_3, %c0_4] : memref<1x32xf32, #tpu.memory_space<vmem>>, vector<1x32xf32>
    %4 = vector.broadcast %3 : vector<1x32xf32> to vector<32x32xf32>
    %5 = arith.addf %2, %4 : vector<32x32xf32>
    %c0_5 = arith.constant 0 : index
    %c0_6 = arith.constant 0 : index
    %6 = vector.load %arg4[%c0_5, %c0_6] : memref<32x32xf32, #tpu.memory_space<vmem>>, vector<32x32xf32>
    %7 = arith.addf %5, %6 : vector<32x32xf32>
    %cst_7 = arith.constant dense<0.000000e+00> : vector<32xf32>
    %8 = vector.multi_reduction <add>, %7, %cst_7 [1] : vector<32x32xf32> to vector<32xf32>
    %9 = vector.shape_cast %8 : vector<32xf32> to vector<32x1xf32>
    %cst_8 = arith.constant 3.200000e+01 : f32
    %10 = vector.broadcast %cst_8 : f32 to vector<32x1xf32>
    %11 = arith.divf %9, %10 : vector<32x1xf32>
    %12 = vector.broadcast %11 : vector<32x1xf32> to vector<32x32xf32>
    %13 = arith.subf %7, %12 : vector<32x32xf32>
    %14 = arith.mulf %13, %13 : vector<32x32xf32>
    %cst_9 = arith.constant dense<0.000000e+00> : vector<32xf32>
    %15 = vector.multi_reduction <add>, %14, %cst_9 [1] : vector<32x32xf32> to vector<32xf32>
    %16 = vector.shape_cast %15 : vector<32xf32> to vector<32x1xf32>
    %cst_10 = arith.constant 3.200000e+01 : f32
    %17 = vector.broadcast %cst_10 : f32 to vector<32x1xf32>
    %18 = arith.divf %16, %17 : vector<32x1xf32>
    %cst_11 = arith.constant 9.99999974E-6 : f32
    %19 = vector.broadcast %cst_11 : f32 to vector<32x1xf32>
    %20 = arith.addf %18, %19 : vector<32x1xf32>
    %21 = math.rsqrt %20 : vector<32x1xf32>
    %22 = vector.broadcast %21 : vector<32x1xf32> to vector<32x32xf32>
    %23 = arith.mulf %13, %22 : vector<32x32xf32>
    %c0_12 = arith.constant 0 : index
    %c0_13 = arith.constant 0 : index
    %24 = vector.load %arg5[%c0_12, %c0_13] : memref<1x32xf32, #tpu.memory_space<vmem>>, vector<1x32xf32>
    %25 = vector.broadcast %24 : vector<1x32xf32> to vector<32x32xf32>
    %26 = arith.mulf %23, %25 : vector<32x32xf32>
    %c0_14 = arith.constant 0 : index
    %c0_15 = arith.constant 0 : index
    %27 = vector.load %arg6[%c0_14, %c0_15] : memref<1x32xf32, #tpu.memory_space<vmem>>, vector<1x32xf32>
    %28 = vector.broadcast %27 : vector<1x32xf32> to vector<32x32xf32>
    %29 = arith.addf %26, %28 : vector<32x32xf32>
    %c0_16 = arith.constant 0 : index
    %c0_17 = arith.constant 0 : index
    %30 = vector.load %arg7[%c0_16, %c0_17] : memref<32x32xf32, #tpu.memory_space<vmem>>, vector<32x32xf32>
    tpu.vector_store %arg7[%c0_16, %c0_17], %29 {strides = array<i32>} : memref<32x32xf32, #tpu.memory_space<vmem>>, vector<32x32xf32>,
    return
  }
  func.func @transform_0(%arg0: i32) -> (i32, i32) {
    %c0_i32 = arith.constant 0 : i32
    %c0_i32_0 = arith.constant 0 : i32
    return %arg0, %c0_i32 : i32, i32
  }
  func.func @transform_1(%arg0: i32) -> (i32, i32) {
    %c0_i32 = arith.constant 0 : i32
    %c0_i32_0 = arith.constant 0 : i32
    %c0_i32_1 = arith.constant 0 : i32
    return %c0_i32, %c0_i32_0 : i32, i32
  }
  func.func @transform_2(%arg0: i32) -> (i32, i32) {
    %c0_i32 = arith.constant 0 : i32
    %c0_i32_0 = arith.constant 0 : i32
    %c0_i32_1 = arith.constant 0 : i32
    return %c0_i32, %c0_i32_0 : i32, i32
  }
  func.func @transform_3(%arg0: i32) -> (i32, i32) {
    %c0_i32 = arith.constant 0 : i32
    %c0_i32_0 = arith.constant 0 : i32
    return %arg0, %c0_i32 : i32, i32
  }
  func.func @transform_4(%arg0: i32) -> (i32, i32) {
    %c0_i32 = arith.constant 0 : i32
    %c0_i32_0 = arith.constant 0 : i32
    %c0_i32_1 = arith.constant 0 : i32
    return %c0_i32, %c0_i32_0 : i32, i32
  }
  func.func @transform_5(%arg0: i32) -> (i32, i32) {
    %c0_i32 = arith.constant 0 : i32
    %c0_i32_0 = arith.constant 0 : i32
    %c0_i32_1 = arith.constant 0 : i32
    return %c0_i32, %c0_i32_0 : i32, i32
  }
  func.func @transform_6(%arg0: i32) -> (i32, i32) {
    %c0_i32 = arith.constant 0 : i32
    %c0_i32_0 = arith.constant 0 : i32
    return %arg0, %c0_i32 : i32, i32
  }
}

module attributes {stable_mosaic.version = 11 : i64} {
  func.func @_mm_kernel(%arg0: i32, %arg1: memref<32x32xf32, #tpu.memory_space<vmem>>, %arg2: memref<32x1024xbf16, #tpu.memory_space<vmem>>, %arg3: memref<1x1024xf32, #tpu.memory_space<vmem>>, %arg4: memref<32x1024xbf16, #tpu.memory_space<vmem>>) attributes {dimension_semantics = [#tpu.dimension_semantics<parallel>], iteration_bounds = array<i64: 1>, scalar_prefetch = 0 : i64, scratch_operands = 0 : i64, tpu.core_type = #tpu.core_type<tc>, window_params = [{transform_indices = @transform_0, window_bounds = array<i64: 32, 32>}, {pipeline_mode = #tpu.pipeline_mode<synchronous>, transform_indices = @transform_1, window_bounds = array<i64: 32, 1024>}, {pipeline_mode = #tpu.pipeline_mode<synchronous>, transform_indices = @transform_2, window_bounds = array<i64: 1, 1024>}, {transform_indices = @transform_3, window_bounds = array<i64: 32, 1024>}]} {
    %c0 = arith.constant 0 : index
    %c0_0 = arith.constant 0 : index
    %0 = vector.load %arg1[%c0, %c0_0] : memref<32x32xf32, #tpu.memory_space<vmem>>, vector<32x32xf32>
    %1 = arith.truncf %0 : vector<32x32xf32> to vector<32x32xbf16>
    %c0_1 = arith.constant 0 : index
    %c0_2 = arith.constant 0 : index
    %2 = vector.load %arg2[%c0_1, %c0_2] : memref<32x1024xbf16, #tpu.memory_space<vmem>>, vector<32x1024xbf16>
    %cst = arith.constant dense<0.000000e+00> : vector<32x1024xf32>
    %3 = tpu.matmul %1, %2, %cst {dimension_numbers = #tpu.dot_dimension_numbers<[1], [0], [0], [1], [0, 0, 1, 1], [], []>} : vector<32x32xbf16>, vector<32x1024xbf16>, vector<32x1024xf32> -> vector<32x1024xf32>
    %c0_3 = arith.constant 0 : index
    %c0_4 = arith.constant 0 : index
    %4 = vector.load %arg3[%c0_3, %c0_4] : memref<1x1024xf32, #tpu.memory_space<vmem>>, vector<1x1024xf32>
    %5 = vector.broadcast %4 : vector<1x1024xf32> to vector<32x1024xf32>
    %6 = arith.addf %3, %5 : vector<32x1024xf32>
    %cst_5 = arith.constant 0.000000e+00 : f32
    %7 = vector.broadcast %cst_5 : f32 to vector<32x1024xf32>
    %8 = arith.maximumf %6, %7 : vector<32x1024xf32>
    %9 = arith.truncf %8 : vector<32x1024xf32> to vector<32x1024xbf16>
    %c0_6 = arith.constant 0 : index
    %c0_7 = arith.constant 0 : index
    %10 = vector.load %arg4[%c0_6, %c0_7] : memref<32x1024xbf16, #tpu.memory_space<vmem>>, vector<32x1024xbf16>
    tpu.vector_store %arg4[%c0_6, %c0_7], %9 {strides = array<i32>} : memref<32x1024xbf16, #tpu.memory_space<vmem>>, vector<32x1024xbf16>,
    return
  }
  func.func @transform_0(%arg0: i32) -> (i32, i32) {
    %c0_i32 = arith.constant 0 : i32
    %c0_i32_0 = arith.constant 0 : i32
    return %arg0, %c0_i32 : i32, i32
  }
  func.func @transform_1(%arg0: i32) -> (i32, i32) {
    %c0_i32 = arith.constant 0 : i32
    %c0_i32_0 = arith.constant 0 : i32
    %c0_i32_1 = arith.constant 0 : i32
    return %c0_i32, %c0_i32_0 : i32, i32
  }
  func.func @transform_2(%arg0: i32) -> (i32, i32) {
    %c0_i32 = arith.constant 0 : i32
    %c0_i32_0 = arith.constant 0 : i32
    %c0_i32_1 = arith.constant 0 : i32
    return %c0_i32, %c0_i32_0 : i32, i32
  }
  func.func @transform_3(%arg0: i32) -> (i32, i32) {
    %c0_i32 = arith.constant 0 : i32
    %c0_i32_0 = arith.constant 0 : i32
    return %arg0, %c0_i32 : i32, i32
  }
}

module attributes {stable_mosaic.version = 11 : i64} {
  func.func @_mm_kernel(%arg0: i32, %arg1: memref<32x1024xbf16, #tpu.memory_space<vmem>>, %arg2: memref<1024x32xbf16, #tpu.memory_space<vmem>>, %arg3: memref<1x32xf32, #tpu.memory_space<vmem>>, %arg4: memref<32x32xf32, #tpu.memory_space<vmem>>, %arg5: memref<1x32xf32, #tpu.memory_space<vmem>>, %arg6: memref<1x32xf32, #tpu.memory_space<vmem>>, %arg7: memref<32x32xf32, #tpu.memory_space<vmem>>) attributes {dimension_semantics = [#tpu.dimension_semantics<parallel>], iteration_bounds = array<i64: 1>, scalar_prefetch = 0 : i64, scratch_operands = 0 : i64, tpu.core_type = #tpu.core_type<tc>, window_params = [{transform_indices = @transform_0, window_bounds = array<i64: 32, 1024>}, {pipeline_mode = #tpu.pipeline_mode<synchronous>, transform_indices = @transform_1, window_bounds = array<i64: 1024, 32>}, {pipeline_mode = #tpu.pipeline_mode<synchronous>, transform_indices = @transform_2, window_bounds = array<i64: 1, 32>}, {transform_indices = @transform_3, window_bounds = array<i64: 32, 32>}, {pipeline_mode = #tpu.pipeline_mode<synchronous>, transform_indices = @transform_4, window_bounds = array<i64: 1, 32>}, {pipeline_mode = #tpu.pipeline_mode<synchronous>, transform_indices = @transform_5, window_bounds = array<i64: 1, 32>}, {transform_indices = @transform_6, window_bounds = array<i64: 32, 32>}]} {
    %c0 = arith.constant 0 : index
    %c0_0 = arith.constant 0 : index
    %0 = vector.load %arg1[%c0, %c0_0] : memref<32x1024xbf16, #tpu.memory_space<vmem>>, vector<32x1024xbf16>
    %c0_1 = arith.constant 0 : index
    %c0_2 = arith.constant 0 : index
    %1 = vector.load %arg2[%c0_1, %c0_2] : memref<1024x32xbf16, #tpu.memory_space<vmem>>, vector<1024x32xbf16>
    %cst = arith.constant dense<0.000000e+00> : vector<32x32xf32>
    %2 = tpu.matmul %0, %1, %cst {dimension_numbers = #tpu.dot_dimension_numbers<[1], [0], [0], [1], [0, 0, 1, 1], [], []>} : vector<32x1024xbf16>, vector<1024x32xbf16>, vector<32x32xf32> -> vector<32x32xf32>
    %c0_3 = arith.constant 0 : index
    %c0_4 = arith.constant 0 : index
    %3 = vector.load %arg3[%c0_3, %c0_4] : memref<1x32xf32, #tpu.memory_space<vmem>>, vector<1x32xf32>
    %4 = vector.broadcast %3 : vector<1x32xf32> to vector<32x32xf32>
    %5 = arith.addf %2, %4 : vector<32x32xf32>
    %c0_5 = arith.constant 0 : index
    %c0_6 = arith.constant 0 : index
    %6 = vector.load %arg4[%c0_5, %c0_6] : memref<32x32xf32, #tpu.memory_space<vmem>>, vector<32x32xf32>
    %7 = arith.addf %5, %6 : vector<32x32xf32>
    %cst_7 = arith.constant dense<0.000000e+00> : vector<32xf32>
    %8 = vector.multi_reduction <add>, %7, %cst_7 [1] : vector<32x32xf32> to vector<32xf32>
    %9 = vector.shape_cast %8 : vector<32xf32> to vector<32x1xf32>
    %cst_8 = arith.constant 3.200000e+01 : f32
    %10 = vector.broadcast %cst_8 : f32 to vector<32x1xf32>
    %11 = arith.divf %9, %10 : vector<32x1xf32>
    %12 = vector.broadcast %11 : vector<32x1xf32> to vector<32x32xf32>
    %13 = arith.subf %7, %12 : vector<32x32xf32>
    %14 = arith.mulf %13, %13 : vector<32x32xf32>
    %cst_9 = arith.constant dense<0.000000e+00> : vector<32xf32>
    %15 = vector.multi_reduction <add>, %14, %cst_9 [1] : vector<32x32xf32> to vector<32xf32>
    %16 = vector.shape_cast %15 : vector<32xf32> to vector<32x1xf32>
    %cst_10 = arith.constant 3.200000e+01 : f32
    %17 = vector.broadcast %cst_10 : f32 to vector<32x1xf32>
    %18 = arith.divf %16, %17 : vector<32x1xf32>
    %cst_11 = arith.constant 9.99999974E-6 : f32
    %19 = vector.broadcast %cst_11 : f32 to vector<32x1xf32>
    %20 = arith.addf %18, %19 : vector<32x1xf32>
    %21 = math.rsqrt %20 : vector<32x1xf32>
    %22 = vector.broadcast %21 : vector<32x1xf32> to vector<32x32xf32>
    %23 = arith.mulf %13, %22 : vector<32x32xf32>
    %c0_12 = arith.constant 0 : index
    %c0_13 = arith.constant 0 : index
    %24 = vector.load %arg5[%c0_12, %c0_13] : memref<1x32xf32, #tpu.memory_space<vmem>>, vector<1x32xf32>
    %25 = vector.broadcast %24 : vector<1x32xf32> to vector<32x32xf32>
    %26 = arith.mulf %23, %25 : vector<32x32xf32>
    %c0_14 = arith.constant 0 : index
    %c0_15 = arith.constant 0 : index
    %27 = vector.load %arg6[%c0_14, %c0_15] : memref<1x32xf32, #tpu.memory_space<vmem>>, vector<1x32xf32>
    %28 = vector.broadcast %27 : vector<1x32xf32> to vector<32x32xf32>
    %29 = arith.addf %26, %28 : vector<32x32xf32>
    %c0_16 = arith.constant 0 : index
    %c0_17 = arith.constant 0 : index
    %30 = vector.load %arg7[%c0_16, %c0_17] : memref<32x32xf32, #tpu.memory_space<vmem>>, vector<32x32xf32>
    tpu.vector_store %arg7[%c0_16, %c0_17], %29 {strides = array<i32>} : memref<32x32xf32, #tpu.memory_space<vmem>>, vector<32x32xf32>,
    return
  }
  func.func @transform_0(%arg0: i32) -> (i32, i32) {
    %c0_i32 = arith.constant 0 : i32
    %c0_i32_0 = arith.constant 0 : i32
    return %arg0, %c0_i32 : i32, i32
  }
  func.func @transform_1(%arg0: i32) -> (i32, i32) {
    %c0_i32 = arith.constant 0 : i32
    %c0_i32_0 = arith.constant 0 : i32
    %c0_i32_1 = arith.constant 0 : i32
    return %c0_i32, %c0_i32_0 : i32, i32
  }
  func.func @transform_2(%arg0: i32) -> (i32, i32) {
    %c0_i32 = arith.constant 0 : i32
    %c0_i32_0 = arith.constant 0 : i32
    %c0_i32_1 = arith.constant 0 : i32
    return %c0_i32, %c0_i32_0 : i32, i32
  }
  func.func @transform_3(%arg0: i32) -> (i32, i32) {
    %c0_i32 = arith.constant 0 : i32
    %c0_i32_0 = arith.constant 0 : i32
    return %arg0, %c0_i32 : i32, i32
  }
  func.func @transform_4(%arg0: i32) -> (i32, i32) {
    %c0_i32 = arith.constant 0 : i32
    %c0_i32_0 = arith.constant 0 : i32
    %c0_i32_1 = arith.constant 0 : i32
    return %c0_i32, %c0_i32_0 : i32, i32
  }
  func.func @transform_5(%arg0: i32) -> (i32, i32) {
    %c0_i32 = arith.constant 0 : i32
    %c0_i32_0 = arith.constant 0 : i32
    %c0_i32_1 = arith.constant 0 : i32
    return %c0_i32, %c0_i32_0 : i32, i32
  }
  func.func @transform_6(%arg0: i32) -> (i32, i32) {
    %c0_i32 = arith.constant 0 : i32
    %c0_i32_0 = arith.constant 0 : i32
    return %arg0, %c0_i32 : i32, i32
  }
}

module attributes {stable_mosaic.version = 11 : i64} {
  func.func @_fusion_kernel(%arg0: i32, %arg1: memref<32x32xbf16, #tpu.memory_space<vmem>>, %arg2: memref<32x32xbf16, #tpu.memory_space<vmem>>, %arg3: memref<32x32xf32, #tpu.memory_space<vmem>>, %arg4: memref<32x32xbf16, #tpu.memory_space<vmem>>, %arg5: memref<1x32xf32, #tpu.memory_space<vmem>>, %arg6: memref<32x32xf32, #tpu.memory_space<vmem>>) attributes {dimension_semantics = [#tpu.dimension_semantics<parallel>], iteration_bounds = array<i64: 1>, scalar_prefetch = 0 : i64, scratch_operands = 0 : i64, tpu.core_type = #tpu.core_type<tc>, window_params = [{transform_indices = @transform_0, window_bounds = array<i64: 32, 32>}, {pipeline_mode = #tpu.pipeline_mode<synchronous>, transform_indices = @transform_1, window_bounds = array<i64: 32, 32>}, {transform_indices = @transform_2, window_bounds = array<i64: 32, 32>}, {pipeline_mode = #tpu.pipeline_mode<synchronous>, transform_indices = @transform_3, window_bounds = array<i64: 32, 32>}, {pipeline_mode = #tpu.pipeline_mode<synchronous>, transform_indices = @transform_4, window_bounds = array<i64: 1, 32>}, {transform_indices = @transform_5, window_bounds = array<i64: 32, 32>}]} {
    %c0 = arith.constant 0 : index
    %c0_0 = arith.constant 0 : index
    %0 = vector.load %arg1[%c0, %c0_0] : memref<32x32xbf16, #tpu.memory_space<vmem>>, vector<32x32xbf16>
    %c0_1 = arith.constant 0 : index
    %c0_2 = arith.constant 0 : index
    %1 = vector.load %arg3[%c0_1, %c0_2] : memref<32x32xf32, #tpu.memory_space<vmem>>, vector<32x32xf32>
    %2 = arith.truncf %1 : vector<32x32xf32> to vector<32x32xbf16>
    %c0_3 = arith.constant 0 : index
    %c0_4 = arith.constant 0 : index
    %3 = vector.load %arg2[%c0_3, %c0_4] : memref<32x32xbf16, #tpu.memory_space<vmem>>, vector<32x32xbf16>
    %cst = arith.constant dense<0.000000e+00> : vector<32x32xf32>
    %4 = tpu.matmul %0, %3, %cst {dimension_numbers = #tpu.dot_dimension_numbers<[1], [0], [0], [1], [0, 0, 1, 1], [], []>} : vector<32x32xbf16>, vector<32x32xbf16>, vector<32x32xf32> -> vector<32x32xf32>
    %c0_5 = arith.constant 0 : index
    %c0_6 = arith.constant 0 : index
    %5 = vector.load %arg4[%c0_5, %c0_6] : memref<32x32xbf16, #tpu.memory_space<vmem>>, vector<32x32xbf16>
    %cst_7 = arith.constant dense<0.000000e+00> : vector<32x32xf32>
    %6 = tpu.matmul %2, %5, %cst_7 {dimension_numbers = #tpu.dot_dimension_numbers<[1], [0], [0], [1], [0, 0, 1, 1], [], []>} : vector<32x32xbf16>, vector<32x32xbf16>, vector<32x32xf32> -> vector<32x32xf32>
    %7 = arith.addf %4, %6 : vector<32x32xf32>
    %c0_8 = arith.constant 0 : index
    %c0_9 = arith.constant 0 : index
    %8 = vector.load %arg5[%c0_8, %c0_9] : memref<1x32xf32, #tpu.memory_space<vmem>>, vector<1x32xf32>
    %9 = vector.broadcast %8 : vector<1x32xf32> to vector<32x32xf32>
    %10 = arith.addf %7, %9 : vector<32x32xf32>
    %c0_10 = arith.constant 0 : index
    %c0_11 = arith.constant 0 : index
    %11 = vector.load %arg6[%c0_10, %c0_11] : memref<32x32xf32, #tpu.memory_space<vmem>>, vector<32x32xf32>
    tpu.vector_store %arg6[%c0_10, %c0_11], %10 {strides = array<i32>} : memref<32x32xf32, #tpu.memory_space<vmem>>, vector<32x32xf32>,
    return
  }
  func.func @transform_0(%arg0: i32) -> (i32, i32) {
    %c0_i32 = arith.constant 0 : i32
    %c0_i32_0 = arith.constant 0 : i32
    return %arg0, %c0_i32 : i32, i32
  }
  func.func @transform_1(%arg0: i32) -> (i32, i32) {
    %c0_i32 = arith.constant 0 : i32
    %c0_i32_0 = arith.constant 0 : i32
    %c0_i32_1 = arith.constant 0 : i32
    return %c0_i32, %c0_i32_0 : i32, i32
  }
  func.func @transform_2(%arg0: i32) -> (i32, i32) {
    %c0_i32 = arith.constant 0 : i32
    %c0_i32_0 = arith.constant 0 : i32
    return %arg0, %c0_i32 : i32, i32
  }
  func.func @transform_3(%arg0: i32) -> (i32, i32) {
    %c0_i32 = arith.constant 0 : i32
    %c0_i32_0 = arith.constant 0 : i32
    %c0_i32_1 = arith.constant 0 : i32
    return %c0_i32, %c0_i32_0 : i32, i32
  }
  func.func @transform_4(%arg0: i32) -> (i32, i32) {
    %c0_i32 = arith.constant 0 : i32
    %c0_i32_0 = arith.constant 0 : i32
    %c0_i32_1 = arith.constant 0 : i32
    return %c0_i32, %c0_i32_0 : i32, i32
  }
  func.func @transform_5(%arg0: i32) -> (i32, i32) {
    %c0_i32 = arith.constant 0 : i32
    %c0_i32_0 = arith.constant 0 : i32
    return %arg0, %c0_i32 : i32, i32
  }
}

</mosaic_0001>

<llo_original>
// kernel: joint_conv_trans_block.24
$region0: #{joint_conv_trans_block.24}
  #allocation0 [shape = 'u32[]', space=smem, size = 0x4, offset = 0x4, fixed_abs, tag = 'smem constant byte address 0x4 - core index']
  #allocation1 [shape = 'u32[144,128]{1,0:T(1,128)}', space=vmem, size = 0x12000, scoped, tag = 'internal scratch']
  %s0 = inlined_call_operand.vmem [shape: bf16[2,16,256], index: 0, kind: input, shape index: {}]
  %s1 = inlined_call_operand.vmem [shape: bf16[256,32], index: 1, kind: input, shape index: {}]
  %s2 = inlined_call_operand.vmem [shape: f32[1,32], index: 2, kind: input, shape index: {}]
  %s3 = inlined_call_operand.vmem [shape: f32[16,32], index: 3, kind: input, shape index: {}]
  %s4 = inlined_call_operand.vmem [shape: f32[2,16,32], index: 4, kind: output, shape index: {}]
  %s5 = sld [smem:[#allocation0]]
  $region49: #{joint_conv_trans_block.24} parent=0
    _
  %s7 = ssub.s32 1, %s5
  %s8 = scalar_select 0, %s7, %s5
  loop: start=0, step=1, limit=4
  $region2: #{joint_conv_trans_block.24} parent=0 // loop_pre_header
    _
  $region3: #{joint_conv_trans_block.24} parent=0 // loop_header
    %s10 = sphi 0, %s14
    %p11 = scmp.ge.s32.totalorder %s10, 4
    %s20 = sphi 0, %s22
    %s23 = sphi 0, %s20
    %s24 = sphi 0, %s23
    %s40 = sphi 0, %s24
    %s44 = sphi 0, %s44
    %s46 = sphi 0, %s44
    %s47 = sphi 0, %s46
    %s61 = sphi 0, %s47
    %s65 = sphi 0, %s65
    %s67 = sphi 0, %s65
    %s68 = sphi 0, %s67
    %s82 = sphi 0, %s68
    %s86 = sphi 0, %s86
    %s88 = sphi 0, %s86
    %s89 = sphi 0, %s88
    %s103 = sphi 0, %s89
    %s109 = sphi 0, %s111
    %s112 = sphi 0, %s109
    %s113 = sphi 0, %s112
    %s129 = sphi 0, %s113
  $region4: #{joint_conv_trans_block.24} parent=0 // loop_header_branch
    %13 = sbr.rel (%p11) target = $region8
  $region5: #{joint_conv_trans_block.24} parent=0 // loop_body
    %s15 = ssub.s32 %s10, 1
    %s16 = ssub.s32 %s10, 2
    %s17 = sadd.s32 %s10, 1
    %s18 = ssub.s32 %s10, %s17
    %p19 = scmp.eq.s32.totalorder %s18, 0
    %s21 = sadd.s32 %s20, 1
    %s22 = scalar_select %p19, %s20, %s21
    %p25 = pneg %p19
    %p26 = scmp.eq.s32.totalorder %s10, 1
    %p27 = por %p25, %p26
    %p28 = scmp.ne.s32.totalorder %s20, %s23
    %p29 = scmp.eq.s32.totalorder %s10, 0
    %p30 = por %p28, %p29
    %p31 = scmp.ne.s32.totalorder %s20, %s23
    %p32 = scmp.eq.s32.totalorder %s15, 1
    %p33 = por %p31, %p32
    %p34 = scmp.ne.s32.totalorder %s23, %s24
    %p35 = scmp.eq.s32.totalorder %s15, 0
    %p36 = por %p34, %p35
    %p37 = scmp.ne.s32.totalorder %s23, %s24
    %p38 = scmp.eq.s32.totalorder %s16, 1
    %p39 = por %p37, %p38
    %p41 = scmp.ne.s32.totalorder %s24, %s40
    %p42 = scmp.eq.s32.totalorder %s16, 0
    %p43 = por %p41, %p42
    %s45 = sadd.s32 %s44, 1
    %p48 = scmp.eq.s32.totalorder %s10, 1
    %p49 = scmp.ne.s32.totalorder %s44, %s46
    %p50 = scmp.eq.s32.totalorder %s10, 0
    %p51 = por %p49, %p50
    %p52 = scmp.ne.s32.totalorder %s44, %s46
    %p53 = scmp.eq.s32.totalorder %s15, 1
    %p54 = por %p52, %p53
    %p55 = scmp.ne.s32.totalorder %s46, %s47
    %p56 = scmp.eq.s32.totalorder %s15, 0
    %p57 = por %p55, %p56
    %p58 = scmp.ne.s32.totalorder %s46, %s47
    %p59 = scmp.eq.s32.totalorder %s16, 1
    %p60 = por %p58, %p59
    %p62 = scmp.ne.s32.totalorder %s47, %s61
    %p63 = scmp.eq.s32.totalorder %s16, 0
    %p64 = por %p62, %p63
    %s66 = sadd.s32 %s65, 1
    %p69 = scmp.eq.s32.totalorder %s10, 1
    %p70 = scmp.ne.s32.totalorder %s65, %s67
    %p71 = scmp.eq.s32.totalorder %s10, 0
    %p72 = por %p70, %p71
    %p73 = scmp.ne.s32.totalorder %s65, %s67
    %p74 = scmp.eq.s32.totalorder %s15, 1
    %p75 = por %p73, %p74
    %p76 = scmp.ne.s32.totalorder %s67, %s68
    %p77 = scmp.eq.s32.totalorder %s15, 0
    %p78 = por %p76, %p77
    %p79 = scmp.ne.s32.totalorder %s67, %s68
    %p80 = scmp.eq.s32.totalorder %s16, 1
    %p81 = por %p79, %p80
    %p83 = scmp.ne.s32.totalorder %s68, %s82
    %p84 = scmp.eq.s32.totalorder %s16, 0
    %p85 = por %p83, %p84
    %s87 = sadd.s32 %s86, 1
    %p90 = scmp.eq.s32.totalorder %s10, 1
    %p91 = scmp.ne.s32.totalorder %s86, %s88
    %p92 = scmp.eq.s32.totalorder %s10, 0
    %p93 = por %p91, %p92
    %p94 = scmp.ne.s32.totalorder %s86, %s88
    %p95 = scmp.eq.s32.totalorder %s15, 1
    %p96 = por %p94, %p95
    %p97 = scmp.ne.s32.totalorder %s88, %s89
    %p98 = scmp.eq.s32.totalorder %s15, 0
    %p99 = por %p97, %p98
    %p100 = scmp.ne.s32.totalorder %s88, %s89
    %p101 = scmp.eq.s32.totalorder %s16, 1
    %p102 = por %p100, %p101
    %p104 = scmp.ne.s32.totalorder %s89, %s103
    %p105 = scmp.eq.s32.totalorder %s16, 0
    %p106 = por %p104, %p105
    %s107 = ssub.s32 %s10, %s17
    %p108 = scmp.eq.s32.totalorder %s107, 0
    %s110 = sadd.s32 %s109, 1
    %s111 = scalar_select %p108, %s109, %s110
    %p114 = pneg %p108
    %p115 = scmp.eq.s32.totalorder %s10, 1
    %p116 = por %p114, %p115
    %p117 = scmp.ne.s32.totalorder %s109, %s112
    %p118 = scmp.eq.s32.totalorder %s10, 0
    %p119 = por %p117, %p118
    %p120 = scmp.ne.s32.totalorder %s109, %s112
    %p121 = scmp.eq.s32.totalorder %s15, 1
    %p122 = por %p120, %p121
    %p123 = scmp.ne.s32.totalorder %s112, %s113
    %p124 = scmp.eq.s32.totalorder %s15, 0
    %p125 = por %p123, %p124
    %p126 = scmp.ne.s32.totalorder %s112, %s113
    %p127 = scmp.eq.s32.totalorder %s16, 1
    %p128 = por %p126, %p127
    %p130 = scmp.ne.s32.totalorder %s113, %s129
    %p131 = scmp.eq.s32.totalorder %s16, 0
    %p132 = por %p130, %p131
    %p133 = scmp.le.s32.totalorder 1, %s10
    %p134 = scmp.lt.s32.totalorder %s10, 3
    %p135 = pnand %p133, %p134
    %p136 = pneg %p135
    // Predicated region
    $region9: #{joint_conv_trans_block.24} parent=5 // pred_check
      _
    $region10: #{joint_conv_trans_block.24} parent=5 // pred_check_branch
      %138 = sbr.rel (%p135) target = $region12
    $region11: #{joint_conv_trans_block.24} parent=5 // pred_region
      %s139 = ssub.s32 %s10, 1
      // Predicated region
      $region13: #{joint_conv_trans_block.24} parent=11 // pred_check
        %p140 = pneg %p57
      $region14: #{joint_conv_trans_block.24} parent=11 // pred_check_branch
        %142 = sbr.rel (%p140) target = $region16
      $region15: #{joint_conv_trans_block.24} parent=11 // pred_region
        _
      $region16: #{joint_conv_trans_block.24} parent=11 // pred_fallthru
        _
      // Predicated region
      $region17: #{joint_conv_trans_block.24} parent=11 // pred_check
        %p143 = pneg %p78
      $region18: #{joint_conv_trans_block.24} parent=11 // pred_check_branch
        %145 = sbr.rel (%p143) target = $region20
      $region19: #{joint_conv_trans_block.24} parent=11 // pred_region
        _
      $region20: #{joint_conv_trans_block.24} parent=11 // pred_fallthru
        _
      // Predicated region
      $region21: #{joint_conv_trans_block.24} parent=11 // pred_check
        %p146 = pneg %p99
      $region22: #{joint_conv_trans_block.24} parent=11 // pred_check_branch
        %148 = sbr.rel (%p146) target = $region24
      $region23: #{joint_conv_trans_block.24} parent=11 // pred_region
        _
      $region24: #{joint_conv_trans_block.24} parent=11 // pred_fallthru
        _
    $region12: #{joint_conv_trans_block.24} parent=5 // pred_fallthru
      _
    %p149 = scmp.lt.s32.totalorder %s10, 2
    // Predicated region
    $region25: #{joint_conv_trans_block.24} parent=5 // pred_check
      %p150 = pneg %p149
    $region26: #{joint_conv_trans_block.24} parent=5 // pred_check_branch
      %152 = sbr.rel (%p150) target = $region28
    $region27: #{joint_conv_trans_block.24} parent=5 // pred_region
      // Predicated region
      $region29: #{joint_conv_trans_block.24} parent=27 // pred_check
        %p153 = pneg %p30
      $region30: #{joint_conv_trans_block.24} parent=27 // pred_check_branch
        %155 = sbr.rel (%p153) target = $region32
      $region31: #{joint_conv_trans_block.24} parent=27 // pred_region
        %p156 = scmp.lt.s32.totalorder %s10, 1
        %s157 = scalar_select %p156, %s10, 1
        %s158 = smul.addr %s157, 4
        %s159 = smul.addr %s158, 4
        %s160 = scalar_lea.vmem %s0, %s159
      $region32: #{joint_conv_trans_block.24} parent=27 // pred_fallthru
        _
    $region28: #{joint_conv_trans_block.24} parent=5 // pred_fallthru
      _
    %p161 = scmp.le.s32.totalorder 1, %s10
    %p162 = scmp.lt.s32.totalorder %s10, 3
    %p163 = pnand %p161, %p162
    %p164 = pneg %p163
    // Predicated region
    $region33: #{joint_conv_trans_block.24} parent=5 // pred_check
      _
    $region34: #{joint_conv_trans_block.24} parent=5 // pred_check_branch
      %166 = sbr.rel (%p163) target = $region36
    $region35: #{joint_conv_trans_block.24} parent=5 // pred_region
      %s167 = ssub.s32 %s10, 1
      %p168 = scmp.lt.s32.totalorder %s15, 1
      %s169 = scalar_select %p168, %s15, 1
      %s170 = smul.addr %s169, 4
      %s171 = smul.addr %s170, 4
      %s172 = scalar_lea.vmem %s0, %s171
      %p173 = pneg %p36
      %p174 = pneg %p33
      %p175 = pneg %p57
      %p176 = pneg %p54
      %p177 = pneg %p78
      %p178 = pneg %p75
      %p179 = pneg %p99
      %p180 = pneg %p96
      %p181 = pneg %p125
      %p182 = pneg %p122
      %p183 = scmp.lt.s32.totalorder %s15, 1
      %s184 = scalar_select %p183, %s15, 1
      %s185 = smul.addr %s184, 2
      %s186 = smul.addr %s185, 8
      %s187 = scalar_lea.vmem %s4, %s186
      %p188 = scmp.lt.s32.totalorder %s15, 1
      %s189 = scalar_select %p188, %s15, 1
      %s190 = smul.addr %s189, 4
      %s191 = smul.addr %s190, 4
      %s192 = scalar_lea.vmem %s0, %s191
      %p193 = scmp.lt.s32.totalorder %s15, 1
      %s194 = scalar_select %p193, %s15, 1
      %s195 = smul.addr %s194, 2
      %s196 = smul.addr %s195, 8
      %s197 = scalar_lea.vmem %s4, %s196
      %v199 = vld [vmem:[%s192] sm:$0xff]
      %v200 = vld [vmem:[%s192 + $0x8] sm:$0xff]
      %v201 = vld [vmem:[%s1] sm:$0xf]
      %v202 = vld [vmem:[%s1 + $0x4] sm:$0xf]
      %v203 = vld [vmem:[%s1 + $0x8] sm:$0xf]
      %v204 = vld [vmem:[%s1 + $0xc] sm:$0xf]
      %v205 = vld [vmem:[%s1 + $0x10] sm:$0xf]
      %v206 = vld [vmem:[%s1 + $0x14] sm:$0xf]
      %v207 = vld [vmem:[%s1 + $0x18] sm:$0xf]
      %v208 = vld [vmem:[%s1 + $0x1c] sm:$0xf]
      %v209 = vld [vmem:[%s1 + $0x20] sm:$0xf]
      %v210 = vld [vmem:[%s1 + $0x24] sm:$0xf]
      %v211 = vld [vmem:[%s1 + $0x28] sm:$0xf]
      %v212 = vld [vmem:[%s1 + $0x2c] sm:$0xf]
      %v213 = vld [vmem:[%s1 + $0x30] sm:$0xf]
      %v214 = vld [vmem:[%s1 + $0x34] sm:$0xf]
      %v215 = vld [vmem:[%s1 + $0x38] sm:$0xf]
      %v216 = vld [vmem:[%s1 + $0x3c] sm:$0xf]
      %v217 = vld [vmem:[%s1 + $0x40] sm:$0xf]
      %v218 = vld [vmem:[%s1 + $0x44] sm:$0xf]
      %v219 = vld [vmem:[%s1 + $0x48] sm:$0xf]
      %v220 = vld [vmem:[%s1 + $0x4c] sm:$0xf]
      %v221 = vld [vmem:[%s1 + $0x50] sm:$0xf]
      %v222 = vld [vmem:[%s1 + $0x54] sm:$0xf]
      %v223 = vld [vmem:[%s1 + $0x58] sm:$0xf]
      %v224 = vld [vmem:[%s1 + $0x5c] sm:$0xf]
      %v225 = vld [vmem:[%s1 + $0x60] sm:$0xf]
      %v226 = vld [vmem:[%s1 + $0x64] sm:$0xf]
      %v227 = vld [vmem:[%s1 + $0x68] sm:$0xf]
      %v228 = vld [vmem:[%s1 + $0x6c] sm:$0xf]
      %v229 = vld [vmem:[%s1 + $0x70] sm:$0xf]
      %v230 = vld [vmem:[%s1 + $0x74] sm:$0xf]
      %v231 = vld [vmem:[%s1 + $0x78] sm:$0xf]
      %v232 = vld [vmem:[%s1 + $0x7c] sm:$0xf]
      %v233 = vld [vmem:[%s2] sm:$0x1]
      %v235 = vlaneseq
      %v236 = vshrl.u32 %v235, 7
      %v237 = vsub.s32 0, %v236
      %v238 = vrot.slane %v233, %v237
      %v242 = vunpack.c.l.b16 %v199
      %v243 = vunpack.c.h.b16 %v199
      %v244 = vunpack.c.l.b16 %v200
      %v245 = vunpack.c.h.b16 %v200
      %v246 = vpack.c.b16 %v244, %v242
      %v247 = vpack.c.b16 %v245, %v243
      %v282 = vunpack.c.l.b16 %v201
      %v283 = vunpack.c.l.b16 %v202
      %v284 = vunpack.c.l.b16 %v203
      %v285 = vunpack.c.l.b16 %v204
      %v286 = vunpack.c.l.b16 %v205
      %v287 = vunpack.c.l.b16 %v206
      %v288 = vunpack.c.l.b16 %v207
      %v289 = vunpack.c.l.b16 %v208
      %v290 = vunpack.c.l.b16 %v209
      %v291 = vunpack.c.l.b16 %v210
      %v292 = vunpack.c.l.b16 %v211
      %v293 = vunpack.c.l.b16 %v212
      %v294 = vunpack.c.l.b16 %v213
      %v295 = vunpack.c.l.b16 %v214
      %v296 = vunpack.c.l.b16 %v215
      %v297 = vunpack.c.l.b16 %v216
      %v298 = vunpack.c.l.b16 %v217
      %v299 = vunpack.c.l.b16 %v218
      %v300 = vunpack.c.l.b16 %v219
      %v301 = vunpack.c.l.b16 %v220
      %v302 = vunpack.c.l.b16 %v221
      %v303 = vunpack.c.l.b16 %v222
      %v304 = vunpack.c.l.b16 %v223
      %v305 = vunpack.c.l.b16 %v224
      %v306 = vunpack.c.l.b16 %v225
      %v307 = vunpack.c.l.b16 %v226
      %v308 = vunpack.c.l.b16 %v227
      %v309 = vunpack.c.l.b16 %v228
      %v310 = vunpack.c.l.b16 %v229
      %v311 = vunpack.c.l.b16 %v230
      %v312 = vunpack.c.l.b16 %v231
      %v313 = vunpack.c.l.b16 %v232
      %v314 = vpack.c.b16 %v283, %v282
      %v315 = vpack.c.b16 %v285, %v284
      %v316 = vpack.c.b16 %v287, %v286
      %v317 = vpack.c.b16 %v289, %v288
      %v318 = vpack.c.b16 %v291, %v290
      %v319 = vpack.c.b16 %v293, %v292
      %v320 = vpack.c.b16 %v295, %v294
      %v321 = vpack.c.b16 %v297, %v296
      %v322 = vpack.c.b16 %v299, %v298
      %v323 = vpack.c.b16 %v301, %v300
      %v324 = vpack.c.b16 %v303, %v302
      %v325 = vpack.c.b16 %v305, %v304
      %v326 = vpack.c.b16 %v307, %v306
      %v327 = vpack.c.b16 %v309, %v308
      %v328 = vpack.c.b16 %v311, %v310
      %v329 = vpack.c.b16 %v313, %v312
      %346 = vmatprep.subr.bf16.mxu0 0
      %347 = vmatpush1.bf16.msra.mxu0 %v314
      %348 = vmatprep.subr.bf16.mxu0 0
      %349 = vmatpush1.bf16.msra.mxu0 %v315
      %350 = vmatprep.subr.bf16.mxu0 0
      %351 = vmatpush1.bf16.msra.mxu0 %v316
      %352 = vmatprep.subr.bf16.mxu0 0
      %353 = vmatpush1.bf16.msra.mxu0 %v317
      %354 = vmatprep.subr.bf16.mxu0 0
      %355 = vmatpush1.bf16.msra.mxu0 %v318
      %356 = vmatprep.subr.bf16.mxu0 0
      %357 = vmatpush1.bf16.msra.mxu0 %v319
      %358 = vmatprep.subr.bf16.mxu0 0
      %359 = vmatpush1.bf16.msra.mxu0 %v320
      %360 = vmatprep.subr.bf16.mxu0 0
      %361 = vmatpush1.bf16.msra.mxu0 %v321
      %362 = vmatprep.subr.bf16.mxu0 0
      %363 = vmatpush1.bf16.msra.mxu0 %v322
      %364 = vmatprep.subr.bf16.mxu0 0
      %365 = vmatpush1.bf16.msra.mxu0 %v323
      %366 = vmatprep.subr.bf16.mxu0 0
      %367 = vmatpush1.bf16.msra.mxu0 %v324
      %368 = vmatprep.subr.bf16.mxu0 0
      %369 = vmatpush1.bf16.msra.mxu0 %v325
      %370 = vmatprep.subr.bf16.mxu0 0
      %371 = vmatpush1.bf16.msra.mxu0 %v326
      %372 = vmatprep.subr.bf16.mxu0 0
      %373 = vmatpush1.bf16.msra.mxu0 %v327
      %374 = vmatprep.subr.bf16.mxu0 0
      %375 = vmatpush1.bf16.msra.mxu0 %v328
      %376 = vmatprep.subr.bf16.mxu0 0
      %377 = vmatpush1.bf16.msra.mxu0 %v329
      %378 = vmatprep.mubr.bf16.mxu0 %v247
      %379 = vmatmul.mubr.bf16.gmra.mrb[0].mxu0 %v246
      %v380 = vpop.f32.mrb[0].mxu0
      %v381 = vadd.f32 %v238, %v380
      %v382 = vpop.f32.mrb[0].mxu0
      %v383 = vpop.f32.mrb[0].mxu0
      %v384 = vadd.f32 %v238, %v383
      %v385 = vpop.f32.mrb[0].mxu0
      %386 = vdwg.mxu0
      %v387 = vld [vmem:[%s3] sm:$0xff]
      %v388 = vld [vmem:[%s3 + $0x8] sm:$0xff]
      %v389 = vadd.f32 %v381, %v387
      %v390 = vadd.f32 %v384, %v388
      %vm391 = vcmask 261120
      %392 = vst.msk [vmem:[%s197] sm:$0xff] %vm391, %v389
      %393 = vst.msk [vmem:[%s197 + $0x8] sm:$0xff] %vm391, %v390
      %p394 = scmp.lt.s32.totalorder %s15, 1
      %s395 = scalar_select %p394, %s15, 1
      %s396 = smul.addr %s395, 2
      %s397 = smul.addr %s396, 8
      %s398 = scalar_lea.vmem %s4, %s397
      // Predicated region
      $region37: #{joint_conv_trans_block.24} parent=35 // pred_check
        %p399 = pneg %p122
      $region38: #{joint_conv_trans_block.24} parent=35 // pred_check_branch
        %401 = sbr.rel (%p399) target = $region40
      $region39: #{joint_conv_trans_block.24} parent=35 // pred_region
        _
      $region40: #{joint_conv_trans_block.24} parent=35 // pred_fallthru
        _
    $region36: #{joint_conv_trans_block.24} parent=5 // pred_fallthru
      _
    %p402 = scmp.le.s32.totalorder 2, %s10
    // Predicated region
    $region41: #{joint_conv_trans_block.24} parent=5 // pred_check
      %p403 = pneg %p402
    $region42: #{joint_conv_trans_block.24} parent=5 // pred_check_branch
      %405 = sbr.rel (%p403) target = $region44
    $region43: #{joint_conv_trans_block.24} parent=5 // pred_region
      %s406 = ssub.s32 %s10, 2
      // Predicated region
      $region45: #{joint_conv_trans_block.24} parent=43 // pred_check
        %p407 = pneg %p128
      $region46: #{joint_conv_trans_block.24} parent=43 // pred_check_branch
        %409 = sbr.rel (%p407) target = $region48
      $region47: #{joint_conv_trans_block.24} parent=43 // pred_region
        %p410 = scmp.lt.s32.totalorder %s16, 1
        %s411 = scalar_select %p410, %s16, 1
        %s412 = smul.addr %s411, 2
        %s413 = smul.addr %s412, 8
        %s414 = scalar_lea.vmem %s4, %s413
      $region48: #{joint_conv_trans_block.24} parent=43 // pred_fallthru
        _
    $region44: #{joint_conv_trans_block.24} parent=5 // pred_fallthru
      _
  $region6: #{joint_conv_trans_block.24} parent=0 // loop_footer
    %s14 = sadd.s32 1, %s10
  $region7: #{joint_conv_trans_block.24} parent=0 // loop_footer_branch
    %9 = sbr.rel target = $region3
  $region8: #{joint_conv_trans_block.24} parent=0 // loop_exit
    _

// kernel: joint_conv_trans_block.25
$region0: #{joint_conv_trans_block.25}
  #allocation0 [shape = 'u32[]', space=smem, size = 0x4, offset = 0x4, fixed_abs, tag = 'smem constant byte address 0x4 - core index']
  #allocation1 [shape = 'u32[144,128]{1,0:T(1,128)}', space=vmem, size = 0x12000, scoped, tag = 'internal scratch']
  %s0 = inlined_call_operand.vmem [shape: bf16[2,24,96], index: 0, kind: input, shape index: {}]
  %s1 = inlined_call_operand.vmem [shape: bf16[3,96,32], index: 1, kind: input, shape index: {}]
  %s2 = inlined_call_operand.vmem [shape: f32[1,32], index: 2, kind: input, shape index: {}]
  %s3 = inlined_call_operand.vmem [shape: f32[1,32], index: 3, kind: input, shape index: {}]
  %s4 = inlined_call_operand.vmem [shape: bf16[2,16,32], index: 4, kind: output, shape index: {}]
  %s5 = sld [smem:[#allocation0]]
  $region49: #{joint_conv_trans_block.25} parent=0
    _
  %s7 = ssub.s32 1, %s5
  %s8 = scalar_select 0, %s7, %s5
  loop: start=0, step=1, limit=4
  $region2: #{joint_conv_trans_block.25} parent=0 // loop_pre_header
    _
  $region3: #{joint_conv_trans_block.25} parent=0 // loop_header
    %s10 = sphi 0, %s14
    %p11 = scmp.ge.s32.totalorder %s10, 4
    %s20 = sphi 0, %s22
    %s23 = sphi 0, %s20
    %s24 = sphi 0, %s23
    %s40 = sphi 0, %s24
    %s44 = sphi 0, %s44
    %s46 = sphi 0, %s44
    %s47 = sphi 0, %s46
    %s61 = sphi 0, %s47
    %s65 = sphi 0, %s65
    %s67 = sphi 0, %s65
    %s68 = sphi 0, %s67
    %s82 = sphi 0, %s68
    %s86 = sphi 0, %s86
    %s88 = sphi 0, %s86
    %s89 = sphi 0, %s88
    %s103 = sphi 0, %s89
    %s109 = sphi 0, %s111
    %s112 = sphi 0, %s109
    %s113 = sphi 0, %s112
    %s129 = sphi 0, %s113
  $region4: #{joint_conv_trans_block.25} parent=0 // loop_header_branch
    %13 = sbr.rel (%p11) target = $region8
  $region5: #{joint_conv_trans_block.25} parent=0 // loop_body
    %s15 = ssub.s32 %s10, 1
    %s16 = ssub.s32 %s10, 2
    %s17 = sadd.s32 %s10, 1
    %s18 = ssub.s32 %s10, %s17
    %p19 = scmp.eq.s32.totalorder %s18, 0
    %s21 = sadd.s32 %s20, 1
    %s22 = scalar_select %p19, %s20, %s21
    %p25 = pneg %p19
    %p26 = scmp.eq.s32.totalorder %s10, 1
    %p27 = por %p25, %p26
    %p28 = scmp.ne.s32.totalorder %s20, %s23
    %p29 = scmp.eq.s32.totalorder %s10, 0
    %p30 = por %p28, %p29
    %p31 = scmp.ne.s32.totalorder %s20, %s23
    %p32 = scmp.eq.s32.totalorder %s15, 1
    %p33 = por %p31, %p32
    %p34 = scmp.ne.s32.totalorder %s23, %s24
    %p35 = scmp.eq.s32.totalorder %s15, 0
    %p36 = por %p34, %p35
    %p37 = scmp.ne.s32.totalorder %s23, %s24
    %p38 = scmp.eq.s32.totalorder %s16, 1
    %p39 = por %p37, %p38
    %p41 = scmp.ne.s32.totalorder %s24, %s40
    %p42 = scmp.eq.s32.totalorder %s16, 0
    %p43 = por %p41, %p42
    %s45 = sadd.s32 %s44, 1
    %p48 = scmp.eq.s32.totalorder %s10, 1
    %p49 = scmp.ne.s32.totalorder %s44, %s46
    %p50 = scmp.eq.s32.totalorder %s10, 0
    %p51 = por %p49, %p50
    %p52 = scmp.ne.s32.totalorder %s44, %s46
    %p53 = scmp.eq.s32.totalorder %s15, 1
    %p54 = por %p52, %p53
    %p55 = scmp.ne.s32.totalorder %s46, %s47
    %p56 = scmp.eq.s32.totalorder %s15, 0
    %p57 = por %p55, %p56
    %p58 = scmp.ne.s32.totalorder %s46, %s47
    %p59 = scmp.eq.s32.totalorder %s16, 1
    %p60 = por %p58, %p59
    %p62 = scmp.ne.s32.totalorder %s47, %s61
    %p63 = scmp.eq.s32.totalorder %s16, 0
    %p64 = por %p62, %p63
    %s66 = sadd.s32 %s65, 1
    %p69 = scmp.eq.s32.totalorder %s10, 1
    %p70 = scmp.ne.s32.totalorder %s65, %s67
    %p71 = scmp.eq.s32.totalorder %s10, 0
    %p72 = por %p70, %p71
    %p73 = scmp.ne.s32.totalorder %s65, %s67
    %p74 = scmp.eq.s32.totalorder %s15, 1
    %p75 = por %p73, %p74
    %p76 = scmp.ne.s32.totalorder %s67, %s68
    %p77 = scmp.eq.s32.totalorder %s15, 0
    %p78 = por %p76, %p77
    %p79 = scmp.ne.s32.totalorder %s67, %s68
    %p80 = scmp.eq.s32.totalorder %s16, 1
    %p81 = por %p79, %p80
    %p83 = scmp.ne.s32.totalorder %s68, %s82
    %p84 = scmp.eq.s32.totalorder %s16, 0
    %p85 = por %p83, %p84
    %s87 = sadd.s32 %s86, 1
    %p90 = scmp.eq.s32.totalorder %s10, 1
    %p91 = scmp.ne.s32.totalorder %s86, %s88
    %p92 = scmp.eq.s32.totalorder %s10, 0
    %p93 = por %p91, %p92
    %p94 = scmp.ne.s32.totalorder %s86, %s88
    %p95 = scmp.eq.s32.totalorder %s15, 1
    %p96 = por %p94, %p95
    %p97 = scmp.ne.s32.totalorder %s88, %s89
    %p98 = scmp.eq.s32.totalorder %s15, 0
    %p99 = por %p97, %p98
    %p100 = scmp.ne.s32.totalorder %s88, %s89
    %p101 = scmp.eq.s32.totalorder %s16, 1
    %p102 = por %p100, %p101
    %p104 = scmp.ne.s32.totalorder %s89, %s103
    %p105 = scmp.eq.s32.totalorder %s16, 0
    %p106 = por %p104, %p105
    %s107 = ssub.s32 %s10, %s17
    %p108 = scmp.eq.s32.totalorder %s107, 0
    %s110 = sadd.s32 %s109, 1
    %s111 = scalar_select %p108, %s109, %s110
    %p114 = pneg %p108
    %p115 = scmp.eq.s32.totalorder %s10, 1
    %p116 = por %p114, %p115
    %p117 = scmp.ne.s32.totalorder %s109, %s112
    %p118 = scmp.eq.s32.totalorder %s10, 0
    %p119 = por %p117, %p118
    %p120 = scmp.ne.s32.totalorder %s109, %s112
    %p121 = scmp.eq.s32.totalorder %s15, 1
    %p122 = por %p120, %p121
    %p123 = scmp.ne.s32.totalorder %s112, %s113
    %p124 = scmp.eq.s32.totalorder %s15, 0
    %p125 = por %p123, %p124
    %p126 = scmp.ne.s32.totalorder %s112, %s113
    %p127 = scmp.eq.s32.totalorder %s16, 1
    %p128 = por %p126, %p127
    %p130 = scmp.ne.s32.totalorder %s113, %s129
    %p131 = scmp.eq.s32.totalorder %s16, 0
    %p132 = por %p130, %p131
    %p133 = scmp.le.s32.totalorder 1, %s10
    %p134 = scmp.lt.s32.totalorder %s10, 3
    %p135 = pnand %p133, %p134
    %p136 = pneg %p135
    // Predicated region
    $region9: #{joint_conv_trans_block.25} parent=5 // pred_check
      _
    $region10: #{joint_conv_trans_block.25} parent=5 // pred_check_branch
      %138 = sbr.rel (%p135) target = $region12
    $region11: #{joint_conv_trans_block.25} parent=5 // pred_region
      %s139 = ssub.s32 %s10, 1
      // Predicated region
      $region13: #{joint_conv_trans_block.25} parent=11 // pred_check
        %p140 = pneg %p57
      $region14: #{joint_conv_trans_block.25} parent=11 // pred_check_branch
        %142 = sbr.rel (%p140) target = $region16
      $region15: #{joint_conv_trans_block.25} parent=11 // pred_region
        _
      $region16: #{joint_conv_trans_block.25} parent=11 // pred_fallthru
        _
      // Predicated region
      $region17: #{joint_conv_trans_block.25} parent=11 // pred_check
        %p143 = pneg %p78
      $region18: #{joint_conv_trans_block.25} parent=11 // pred_check_branch
        %145 = sbr.rel (%p143) target = $region20
      $region19: #{joint_conv_trans_block.25} parent=11 // pred_region
        _
      $region20: #{joint_conv_trans_block.25} parent=11 // pred_fallthru
        _
      // Predicated region
      $region21: #{joint_conv_trans_block.25} parent=11 // pred_check
        %p146 = pneg %p99
      $region22: #{joint_conv_trans_block.25} parent=11 // pred_check_branch
        %148 = sbr.rel (%p146) target = $region24
      $region23: #{joint_conv_trans_block.25} parent=11 // pred_region
        _
      $region24: #{joint_conv_trans_block.25} parent=11 // pred_fallthru
        _
    $region12: #{joint_conv_trans_block.25} parent=5 // pred_fallthru
      _
    %p149 = scmp.lt.s32.totalorder %s10, 2
    // Predicated region
    $region25: #{joint_conv_trans_block.25} parent=5 // pred_check
      %p150 = pneg %p149
    $region26: #{joint_conv_trans_block.25} parent=5 // pred_check_branch
      %152 = sbr.rel (%p150) target = $region28
    $region27: #{joint_conv_trans_block.25} parent=5 // pred_region
      // Predicated region
      $region29: #{joint_conv_trans_block.25} parent=27 // pred_check
        %p153 = pneg %p30
      $region30: #{joint_conv_trans_block.25} parent=27 // pred_check_branch
        %155 = sbr.rel (%p153) target = $region32
      $region31: #{joint_conv_trans_block.25} parent=27 // pred_region
        %p156 = scmp.lt.s32.totalorder %s10, 1
        %s157 = scalar_select %p156, %s10, 1
        %s158 = smul.addr %s157, 3
        %s159 = smul.addr %s158, 4
        %s160 = scalar_lea.vmem %s0, %s159
      $region32: #{joint_conv_trans_block.25} parent=27 // pred_fallthru
        _
    $region28: #{joint_conv_trans_block.25} parent=5 // pred_fallthru
      _
    %p161 = scmp.le.s32.totalorder 1, %s10
    %p162 = scmp.lt.s32.totalorder %s10, 3
    %p163 = pnand %p161, %p162
    %p164 = pneg %p163
    // Predicated region
    $region33: #{joint_conv_trans_block.25} parent=5 // pred_check
      _
    $region34: #{joint_conv_trans_block.25} parent=5 // pred_check_branch
      %166 = sbr.rel (%p163) target = $region36
    $region35: #{joint_conv_trans_block.25} parent=5 // pred_region
      %s167 = ssub.s32 %s10, 1
      %p168 = scmp.lt.s32.totalorder %s15, 1
      %s169 = scalar_select %p168, %s15, 1
      %s170 = smul.addr %s169, 3
      %s171 = smul.addr %s170, 4
      %s172 = scalar_lea.vmem %s0, %s171
      %p173 = pneg %p36
      %p174 = pneg %p33
      %p175 = pneg %p57
      %p176 = pneg %p54
      %p177 = pneg %p78
      %p178 = pneg %p75
      %p179 = pneg %p99
      %p180 = pneg %p96
      %p181 = pneg %p125
      %p182 = pneg %p122
      %p183 = scmp.lt.s32.totalorder %s15, 1
      %s184 = scalar_select %p183, %s15, 1
      %s185 = smul.addr %s184, 2
      %s186 = smul.addr %s185, 4
      %s187 = scalar_lea.vmem %s4, %s186
      %p188 = scmp.lt.s32.totalorder %s15, 1
      %s189 = scalar_select %p188, %s15, 1
      %s190 = smul.addr %s189, 3
      %s191 = smul.addr %s190, 4
      %s192 = scalar_lea.vmem %s0, %s191
      %p193 = scmp.lt.s32.totalorder %s15, 1
      %s194 = scalar_select %p193, %s15, 1
      %s195 = smul.addr %s194, 2
      %s196 = smul.addr %s195, 4
      %s197 = scalar_lea.vmem %s4, %s196
      %v199 = vld [vmem:[%s192] sm:$0xf]
      %v200 = vld [vmem:[%s192 + $0x4] sm:$0xf]
      %v201 = vld [vmem:[%s1] sm:$0xf]
      %v202 = vld [vmem:[%s1 + $0x4] sm:$0xf]
      %v203 = vld [vmem:[%s1 + $0x8] sm:$0xf]
      %v204 = vld [vmem:[%s1 + $0xc] sm:$0xf]
      %v205 = vld [vmem:[%s1 + $0x10] sm:$0xf]
      %v206 = vld [vmem:[%s1 + $0x14] sm:$0xf]
      %v207 = vld [vmem:[%s1 + $0x18] sm:$0xf]
      %v208 = vld [vmem:[%s1 + $0x1c] sm:$0xf]
      %v209 = vld [vmem:[%s1 + $0x20] sm:$0xf]
      %v210 = vld [vmem:[%s1 + $0x24] sm:$0xf]
      %v211 = vld [vmem:[%s1 + $0x28] sm:$0xf]
      %v212 = vld [vmem:[%s1 + $0x2c] sm:$0xf]
      %v213 = vld [vmem:[%s192] sm:$0xc]
      %v214 = vld [vmem:[%s192 + $0x8] sm:$0x3]
      %s215 = scalar_lea.vmem %s1, 48
      %v216 = vld [vmem:[%s215] sm:$0xf]
      %v217 = vld [vmem:[%s215 + $0x4] sm:$0xf]
      %v218 = vld [vmem:[%s215 + $0x8] sm:$0xf]
      %v219 = vld [vmem:[%s215 + $0xc] sm:$0xf]
      %v220 = vld [vmem:[%s215 + $0x10] sm:$0xf]
      %v221 = vld [vmem:[%s215 + $0x14] sm:$0xf]
      %v222 = vld [vmem:[%s215 + $0x18] sm:$0xf]
      %v223 = vld [vmem:[%s215 + $0x1c] sm:$0xf]
      %v224 = vld [vmem:[%s215 + $0x20] sm:$0xf]
      %v225 = vld [vmem:[%s215 + $0x24] sm:$0xf]
      %v226 = vld [vmem:[%s215 + $0x28] sm:$0xf]
      %v227 = vld [vmem:[%s215 + $0x2c] sm:$0xf]
      %v231 = vunpack.c.l.b16 %v213
      %v232 = vunpack.c.l.b16 %v200
      %v233 = vunpack.c.l.b16 %v214
      %v234 = vpack.c.b16 %v232, %v231
      %v235 = vpack.c.b16 %v233, %v233
      %vm236 = vcmask 1045504
      %v237 = vrot.slane %v234, 2
      %v238 = vrot.slane %v235, 2
      %v239 = vsel %vm236, %v237, %v238
      %v252 = vunpack.c.l.b16 %v216
      %v253 = vunpack.c.l.b16 %v217
      %v254 = vunpack.c.l.b16 %v218
      %v255 = vunpack.c.l.b16 %v219
      %v256 = vunpack.c.l.b16 %v220
      %v257 = vunpack.c.l.b16 %v221
      %v258 = vunpack.c.l.b16 %v222
      %v259 = vunpack.c.l.b16 %v223
      %v260 = vunpack.c.l.b16 %v224
      %v261 = vunpack.c.l.b16 %v225
      %v262 = vunpack.c.l.b16 %v226
      %v263 = vunpack.c.l.b16 %v227
      %v264 = vpack.c.b16 %v253, %v252
      %v265 = vpack.c.b16 %v255, %v254
      %v266 = vpack.c.b16 %v257, %v256
      %v267 = vpack.c.b16 %v259, %v258
      %v268 = vpack.c.b16 %v261, %v260
      %v269 = vpack.c.b16 %v263, %v262
      %vm276 = vcmask 785408
      %v278 = vsel %vm276, %v239, 0
      %280 = vmatprep.subr.bf16.mxu0 0
      %281 = vmatpush1.bf16.msra.mxu0 %v264
      %282 = vmatprep.subr.bf16.mxu0 0
      %283 = vmatpush1.bf16.msra.mxu0 %v265
      %284 = vmatprep.subr.bf16.mxu0 0
      %285 = vmatpush1.bf16.msra.mxu0 %v266
      %286 = vmatprep.subr.bf16.mxu0 0
      %287 = vmatpush1.bf16.msra.mxu0 %v267
      %288 = vmatprep.subr.bf16.mxu0 0
      %289 = vmatpush1.bf16.msra.mxu0 %v268
      %290 = vmatprep.subr.bf16.mxu0 0
      %291 = vmatpush1.bf16.msra.mxu0 %v269
      %292 = vmatprep.subr.bf16.mxu0 0
      %293 = vmatpush1.bf16.msra.mxu0 0
      %294 = vmatprep.subr.bf16.mxu0 0
      %295 = vmatpush1.bf16.msra.mxu0 0
      %296 = vmatprep.subr.bf16.mxu0 0
      %297 = vmatpush1.bf16.msra.mxu0 0
      %298 = vmatprep.subr.bf16.mxu0 0
      %299 = vmatpush1.bf16.msra.mxu0 0
      %300 = vmatprep.subr.bf16.mxu0 0
      %301 = vmatpush1.bf16.msra.mxu0 0
      %302 = vmatprep.subr.bf16.mxu0 0
      %303 = vmatpush1.bf16.msra.mxu0 0
      %304 = vmatprep.subr.bf16.mxu0 0
      %305 = vmatpush1.bf16.msra.mxu0 0
      %306 = vmatprep.subr.bf16.mxu0 0
      %307 = vmatpush1.bf16.msra.mxu0 0
      %308 = vmatprep.subr.bf16.mxu0 0
      %309 = vmatpush1.bf16.msra.mxu0 0
      %310 = vmatprep.subr.bf16.mxu0 0
      %311 = vmatpush1.bf16.msra.mxu0 0
      %312 = vmatprep.mubr.bf16.mxu0 0
      %313 = vmatmul.mubr.bf16.gmra.mrb[0].mxu0 %v278
      %v314 = vpop.f32.mrb[0].mxu0
      %v315 = vadd.f32 0.0, %v314
      %v316 = vpop.f32.mrb[0].mxu0
      %v317 = vpop.f32.mrb[0].mxu0
      %v318 = vadd.f32 0.0, %v317
      %v319 = vpop.f32.mrb[0].mxu0
      %320 = vdwg.mxu0
      %v322 = vunpack.c.l.b16 %v199
      %v323 = vpack.c.b16 %v232, %v322
      %v336 = vunpack.c.l.b16 %v201
      %v337 = vunpack.c.l.b16 %v202
      %v338 = vunpack.c.l.b16 %v203
      %v339 = vunpack.c.l.b16 %v204
      %v340 = vunpack.c.l.b16 %v205
      %v341 = vunpack.c.l.b16 %v206
      %v342 = vunpack.c.l.b16 %v207
      %v343 = vunpack.c.l.b16 %v208
      %v344 = vunpack.c.l.b16 %v209
      %v345 = vunpack.c.l.b16 %v210
      %v346 = vunpack.c.l.b16 %v211
      %v347 = vunpack.c.l.b16 %v212
      %v348 = vpack.c.b16 %v337, %v336
      %v349 = vpack.c.b16 %v339, %v338
      %v350 = vpack.c.b16 %v341, %v340
      %v351 = vpack.c.b16 %v343, %v342
      %v352 = vpack.c.b16 %v345, %v344
      %v353 = vpack.c.b16 %v347, %v346
      %v361 = vsel %vm276, %v323, 0
      %363 = vmatprep.subr.bf16.mxu0 0
      %364 = vmatpush1.bf16.msra.mxu0 %v348
      %365 = vmatprep.subr.bf16.mxu0 0
      %366 = vmatpush1.bf16.msra.mxu0 %v349
      %367 = vmatprep.subr.bf16.mxu0 0
      %368 = vmatpush1.bf16.msra.mxu0 %v350
      %369 = vmatprep.subr.bf16.mxu0 0
      %370 = vmatpush1.bf16.msra.mxu0 %v351
      %371 = vmatprep.subr.bf16.mxu0 0
      %372 = vmatpush1.bf16.msra.mxu0 %v352
      %373 = vmatprep.subr.bf16.mxu0 0
      %374 = vmatpush1.bf16.msra.mxu0 %v353
      %375 = vmatprep.subr.bf16.mxu0 0
      %376 = vmatpush1.bf16.msra.mxu0 0
      %377 = vmatprep.subr.bf16.mxu0 0
      %378 = vmatpush1.bf16.msra.mxu0 0
      %379 = vmatprep.subr.bf16.mxu0 0
      %380 = vmatpush1.bf16.msra.mxu0 0
      %381 = vmatprep.subr.bf16.mxu0 0
      %382 = vmatpush1.bf16.msra.mxu0 0
      %383 = vmatprep.subr.bf16.mxu0 0
      %384 = vmatpush1.bf16.msra.mxu0 0
      %385 = vmatprep.subr.bf16.mxu0 0
      %386 = vmatpush1.bf16.msra.mxu0 0
      %387 = vmatprep.subr.bf16.mxu0 0
      %388 = vmatpush1.bf16.msra.mxu0 0
      %389 = vmatprep.subr.bf16.mxu0 0
      %390 = vmatpush1.bf16.msra.mxu0 0
      %391 = vmatprep.subr.bf16.mxu0 0
      %392 = vmatpush1.bf16.msra.mxu0 0
      %393 = vmatprep.subr.bf16.mxu0 0
      %394 = vmatpush1.bf16.msra.mxu0 0
      %395 = vmatprep.mubr.bf16.mxu0 0
      %396 = vmatmul.mubr.bf16.gmra.mrb[0].mxu0 %v361
      %v397 = vpop.f32.mrb[0].mxu0
      %v398 = vadd.f32 %v315, %v397
      %v399 = vpop.f32.mrb[0].mxu0
      %v400 = vpop.f32.mrb[0].mxu0
      %v401 = vadd.f32 %v318, %v400
      %v402 = vpop.f32.mrb[0].mxu0
      %403 = vdwg.mxu0
      %v404 = vld [vmem:[%s192 + $0x8] sm:$0xf]
      %s405 = scalar_lea.vmem %s1, 96
      %v406 = vld [vmem:[%s405] sm:$0xf]
      %v407 = vld [vmem:[%s405 + $0x4] sm:$0xf]
      %v408 = vld [vmem:[%s405 + $0x8] sm:$0xf]
      %v409 = vld [vmem:[%s405 + $0xc] sm:$0xf]
      %v410 = vld [vmem:[%s405 + $0x10] sm:$0xf]
      %v411 = vld [vmem:[%s405 + $0x14] sm:$0xf]
      %v412 = vld [vmem:[%s405 + $0x18] sm:$0xf]
      %v413 = vld [vmem:[%s405 + $0x1c] sm:$0xf]
      %v414 = vld [vmem:[%s405 + $0x20] sm:$0xf]
      %v415 = vld [vmem:[%s405 + $0x24] sm:$0xf]
      %v416 = vld [vmem:[%s405 + $0x28] sm:$0xf]
      %v417 = vld [vmem:[%s405 + $0x2c] sm:$0xf]
      %v419 = vunpack.c.l.b16 %v404
      %v420 = vpack.c.b16 %v419, %v232
      %v433 = vunpack.c.l.b16 %v406
      %v434 = vunpack.c.l.b16 %v407
      %v435 = vunpack.c.l.b16 %v408
      %v436 = vunpack.c.l.b16 %v409
      %v437 = vunpack.c.l.b16 %v410
      %v438 = vunpack.c.l.b16 %v411
      %v439 = vunpack.c.l.b16 %v412
      %v440 = vunpack.c.l.b16 %v413
      %v441 = vunpack.c.l.b16 %v414
      %v442 = vunpack.c.l.b16 %v415
      %v443 = vunpack.c.l.b16 %v416
      %v444 = vunpack.c.l.b16 %v417
      %v445 = vpack.c.b16 %v434, %v433
      %v446 = vpack.c.b16 %v436, %v435
      %v447 = vpack.c.b16 %v438, %v437
      %v448 = vpack.c.b16 %v440, %v439
      %v449 = vpack.c.b16 %v442, %v441
      %v450 = vpack.c.b16 %v444, %v443
      %v458 = vsel %vm276, %v420, 0
      %460 = vmatprep.subr.bf16.mxu0 0
      %461 = vmatpush1.bf16.msra.mxu0 %v445
      %462 = vmatprep.subr.bf16.mxu0 0
      %463 = vmatpush1.bf16.msra.mxu0 %v446
      %464 = vmatprep.subr.bf16.mxu0 0
      %465 = vmatpush1.bf16.msra.mxu0 %v447
      %466 = vmatprep.subr.bf16.mxu0 0
      %467 = vmatpush1.bf16.msra.mxu0 %v448
      %468 = vmatprep.subr.bf16.mxu0 0
      %469 = vmatpush1.bf16.msra.mxu0 %v449
      %470 = vmatprep.subr.bf16.mxu0 0
      %471 = vmatpush1.bf16.msra.mxu0 %v450
      %472 = vmatprep.subr.bf16.mxu0 0
      %473 = vmatpush1.bf16.msra.mxu0 0
      %474 = vmatprep.subr.bf16.mxu0 0
      %475 = vmatpush1.bf16.msra.mxu0 0
      %476 = vmatprep.subr.bf16.mxu0 0
      %477 = vmatpush1.bf16.msra.mxu0 0
      %478 = vmatprep.subr.bf16.mxu0 0
      %479 = vmatpush1.bf16.msra.mxu0 0
      %480 = vmatprep.subr.bf16.mxu0 0
      %481 = vmatpush1.bf16.msra.mxu0 0
      %482 = vmatprep.subr.bf16.mxu0 0
      %483 = vmatpush1.bf16.msra.mxu0 0
      %484 = vmatprep.subr.bf16.mxu0 0
      %485 = vmatpush1.bf16.msra.mxu0 0
      %486 = vmatprep.subr.bf16.mxu0 0
      %487 = vmatpush1.bf16.msra.mxu0 0
      %488 = vmatprep.subr.bf16.mxu0 0
      %489 = vmatpush1.bf16.msra.mxu0 0
      %490 = vmatprep.subr.bf16.mxu0 0
      %491 = vmatpush1.bf16.msra.mxu0 0
      %492 = vmatprep.mubr.bf16.mxu0 0
      %493 = vmatmul.mubr.bf16.gmra.mrb[0].mxu0 %v458
      %v494 = vpop.f32.mrb[0].mxu0
      %v495 = vadd.f32 0.0, %v494
      %v496 = vpop.f32.mrb[0].mxu0
      %v497 = vpop.f32.mrb[0].mxu0
      %v498 = vadd.f32 0.0, %v497
      %v499 = vpop.f32.mrb[0].mxu0
      %500 = vdwg.mxu0
      %v501 = vadd.f32 %v398, %v495
      %v502 = vadd.f32 %v401, %v498
      %v503 = vld [vmem:[%s2] sm:$0x1]
      %v505 = vlaneseq
      %v506 = vshrl.u32 %v505, 7
      %v507 = vsub.s32 0, %v506
      %v508 = vrot.slane %v503, %v507
      %v510 = vmul.f32 %v501, %v508
      %v511 = vmul.f32 %v502, %v508
      %v512 = vld [vmem:[%s3] sm:$0x1]
      %v514 = vlaneseq
      %v515 = vshrl.u32 %v514, 7
      %v516 = vsub.s32 0, %v515
      %v517 = vrot.slane %v512, %v516
      %v519 = vadd.f32 %v510, %v517
      %v520 = vadd.f32 %v511, %v517
      %v521 = vmax.f32 %v519, 0.0
      %v522 = vmax.f32 %v520, 0.0
      %v523 = vpack.c.bf16 %v522, %v521
      %v525 = vunpack.c.l.b16 %v523
      %v526 = vunpack.c.h.b16 %v523
      %v527 = vpack.c.b16 %v525, %v525
      %v528 = vpack.c.b16 %v526, %v526
      %vm531 = vcmask 257024
      %532 = vst.msk [vmem:[%s197] sm:$0xf] %vm531, %v527
      %533 = vst.msk [vmem:[%s197 + $0x4] sm:$0xf] %vm531, %v528
      %p534 = scmp.lt.s32.totalorder %s15, 1
      %s535 = scalar_select %p534, %s15, 1
      %s536 = smul.addr %s535, 2
      %s537 = smul.addr %s536, 4
      %s538 = scalar_lea.vmem %s4, %s537
      // Predicated region
      $region37: #{joint_conv_trans_block.25} parent=35 // pred_check
        %p539 = pneg %p122
      $region38: #{joint_conv_trans_block.25} parent=35 // pred_check_branch
        %541 = sbr.rel (%p539) target = $region40
      $region39: #{joint_conv_trans_block.25} parent=35 // pred_region
        _
      $region40: #{joint_conv_trans_block.25} parent=35 // pred_fallthru
        _
    $region36: #{joint_conv_trans_block.25} parent=5 // pred_fallthru
      _
    %p542 = scmp.le.s32.totalorder 2, %s10
    // Predicated region
    $region41: #{joint_conv_trans_block.25} parent=5 // pred_check
      %p543 = pneg %p542
    $region42: #{joint_conv_trans_block.25} parent=5 // pred_check_branch
      %545 = sbr.rel (%p543) target = $region44
    $region43: #{joint_conv_trans_block.25} parent=5 // pred_region
      %s546 = ssub.s32 %s10, 2
      // Predicated region
      $region45: #{joint_conv_trans_block.25} parent=43 // pred_check
        %p547 = pneg %p128
      $region46: #{joint_conv_trans_block.25} parent=43 // pred_check_branch
        %549 = sbr.rel (%p547) target = $region48
      $region47: #{joint_conv_trans_block.25} parent=43 // pred_region
        %p550 = scmp.lt.s32.totalorder %s16, 1
        %s551 = scalar_select %p550, %s16, 1
        %s552 = smul.addr %s551, 2
        %s553 = smul.addr %s552, 4
        %s554 = scalar_lea.vmem %s4, %s553
      $region48: #{joint_conv_trans_block.25} parent=43 // pred_fallthru
        _
    $region44: #{joint_conv_trans_block.25} parent=5 // pred_fallthru
      _
  $region6: #{joint_conv_trans_block.25} parent=0 // loop_footer
    %s14 = sadd.s32 1, %s10
  $region7: #{joint_conv_trans_block.25} parent=0 // loop_footer_branch
    %9 = sbr.rel target = $region3
  $region8: #{joint_conv_trans_block.25} parent=0 // loop_exit
    _

// kernel: joint_conv_trans_block.26
$region0: #{joint_conv_trans_block.26}
  #allocation0 [shape = 'u32[]', space=smem, size = 0x4, offset = 0x4, fixed_abs, tag = 'smem constant byte address 0x4 - core index']
  #allocation1 [shape = 'u32[144,128]{1,0:T(1,128)}', space=vmem, size = 0x12000, scoped, tag = 'internal scratch']
  %s0 = inlined_call_operand.vmem [shape: bf16[2,24,96], index: 0, kind: input, shape index: {}]
  %s1 = inlined_call_operand.vmem [shape: bf16[3,96,32], index: 1, kind: input, shape index: {}]
  %s2 = inlined_call_operand.vmem [shape: f32[1,32], index: 2, kind: input, shape index: {}]
  %s3 = inlined_call_operand.vmem [shape: f32[1,32], index: 3, kind: input, shape index: {}]
  %s4 = inlined_call_operand.vmem [shape: f32[2,16,32], index: 4, kind: output, shape index: {0}]
  %s5 = inlined_call_operand.vmem [shape: f32[2,1,32], index: 5, kind: output, shape index: {1}]
  %s6 = inlined_call_operand.vmem [shape: f32[2,1,32], index: 6, kind: output, shape index: {2}]
  %7 = xla_tuple %s4, %s5, %s6
  %s8 = sld [smem:[#allocation0]]
  $region65: #{joint_conv_trans_block.26} parent=0
    _
  %s10 = ssub.s32 1, %s8
  %s11 = scalar_select 0, %s10, %s8
  loop: start=0, step=1, limit=4
  $region2: #{joint_conv_trans_block.26} parent=0 // loop_pre_header
    _
  $region3: #{joint_conv_trans_block.26} parent=0 // loop_header
    %s13 = sphi 0, %s17
    %p14 = scmp.ge.s32.totalorder %s13, 4
    %s23 = sphi 0, %s25
    %s26 = sphi 0, %s23
    %s27 = sphi 0, %s26
    %s43 = sphi 0, %s27
    %s47 = sphi 0, %s47
    %s49 = sphi 0, %s47
    %s50 = sphi 0, %s49
    %s64 = sphi 0, %s50
    %s68 = sphi 0, %s68
    %s70 = sphi 0, %s68
    %s71 = sphi 0, %s70
    %s85 = sphi 0, %s71
    %s89 = sphi 0, %s89
    %s91 = sphi 0, %s89
    %s92 = sphi 0, %s91
    %s106 = sphi 0, %s92
    %s112 = sphi 0, %s114
    %s115 = sphi 0, %s112
    %s116 = sphi 0, %s115
    %s132 = sphi 0, %s116
    %s138 = sphi 0, %s140
    %s141 = sphi 0, %s138
    %s142 = sphi 0, %s141
    %s158 = sphi 0, %s142
    %s164 = sphi 0, %s166
    %s167 = sphi 0, %s164
    %s168 = sphi 0, %s167
    %s184 = sphi 0, %s168
  $region4: #{joint_conv_trans_block.26} parent=0 // loop_header_branch
    %16 = sbr.rel (%p14) target = $region8
  $region5: #{joint_conv_trans_block.26} parent=0 // loop_body
    %s18 = ssub.s32 %s13, 1
    %s19 = ssub.s32 %s13, 2
    %s20 = sadd.s32 %s13, 1
    %s21 = ssub.s32 %s13, %s20
    %p22 = scmp.eq.s32.totalorder %s21, 0
    %s24 = sadd.s32 %s23, 1
    %s25 = scalar_select %p22, %s23, %s24
    %p28 = pneg %p22
    %p29 = scmp.eq.s32.totalorder %s13, 1
    %p30 = por %p28, %p29
    %p31 = scmp.ne.s32.totalorder %s23, %s26
    %p32 = scmp.eq.s32.totalorder %s13, 0
    %p33 = por %p31, %p32
    %p34 = scmp.ne.s32.totalorder %s23, %s26
    %p35 = scmp.eq.s32.totalorder %s18, 1
    %p36 = por %p34, %p35
    %p37 = scmp.ne.s32.totalorder %s26, %s27
    %p38 = scmp.eq.s32.totalorder %s18, 0
    %p39 = por %p37, %p38
    %p40 = scmp.ne.s32.totalorder %s26, %s27
    %p41 = scmp.eq.s32.totalorder %s19, 1
    %p42 = por %p40, %p41
    %p44 = scmp.ne.s32.totalorder %s27, %s43
    %p45 = scmp.eq.s32.totalorder %s19, 0
    %p46 = por %p44, %p45
    %s48 = sadd.s32 %s47, 1
    %p51 = scmp.eq.s32.totalorder %s13, 1
    %p52 = scmp.ne.s32.totalorder %s47, %s49
    %p53 = scmp.eq.s32.totalorder %s13, 0
    %p54 = por %p52, %p53
    %p55 = scmp.ne.s32.totalorder %s47, %s49
    %p56 = scmp.eq.s32.totalorder %s18, 1
    %p57 = por %p55, %p56
    %p58 = scmp.ne.s32.totalorder %s49, %s50
    %p59 = scmp.eq.s32.totalorder %s18, 0
    %p60 = por %p58, %p59
    %p61 = scmp.ne.s32.totalorder %s49, %s50
    %p62 = scmp.eq.s32.totalorder %s19, 1
    %p63 = por %p61, %p62
    %p65 = scmp.ne.s32.totalorder %s50, %s64
    %p66 = scmp.eq.s32.totalorder %s19, 0
    %p67 = por %p65, %p66
    %s69 = sadd.s32 %s68, 1
    %p72 = scmp.eq.s32.totalorder %s13, 1
    %p73 = scmp.ne.s32.totalorder %s68, %s70
    %p74 = scmp.eq.s32.totalorder %s13, 0
    %p75 = por %p73, %p74
    %p76 = scmp.ne.s32.totalorder %s68, %s70
    %p77 = scmp.eq.s32.totalorder %s18, 1
    %p78 = por %p76, %p77
    %p79 = scmp.ne.s32.totalorder %s70, %s71
    %p80 = scmp.eq.s32.totalorder %s18, 0
    %p81 = por %p79, %p80
    %p82 = scmp.ne.s32.totalorder %s70, %s71
    %p83 = scmp.eq.s32.totalorder %s19, 1
    %p84 = por %p82, %p83
    %p86 = scmp.ne.s32.totalorder %s71, %s85
    %p87 = scmp.eq.s32.totalorder %s19, 0
    %p88 = por %p86, %p87
    %s90 = sadd.s32 %s89, 1
    %p93 = scmp.eq.s32.totalorder %s13, 1
    %p94 = scmp.ne.s32.totalorder %s89, %s91
    %p95 = scmp.eq.s32.totalorder %s13, 0
    %p96 = por %p94, %p95
    %p97 = scmp.ne.s32.totalorder %s89, %s91
    %p98 = scmp.eq.s32.totalorder %s18, 1
    %p99 = por %p97, %p98
    %p100 = scmp.ne.s32.totalorder %s91, %s92
    %p101 = scmp.eq.s32.totalorder %s18, 0
    %p102 = por %p100, %p101
    %p103 = scmp.ne.s32.totalorder %s91, %s92
    %p104 = scmp.eq.s32.totalorder %s19, 1
    %p105 = por %p103, %p104
    %p107 = scmp.ne.s32.totalorder %s92, %s106
    %p108 = scmp.eq.s32.totalorder %s19, 0
    %p109 = por %p107, %p108
    %s110 = ssub.s32 %s13, %s20
    %p111 = scmp.eq.s32.totalorder %s110, 0
    %s113 = sadd.s32 %s112, 1
    %s114 = scalar_select %p111, %s112, %s113
    %p117 = pneg %p111
    %p118 = scmp.eq.s32.totalorder %s13, 1
    %p119 = por %p117, %p118
    %p120 = scmp.ne.s32.totalorder %s112, %s115
    %p121 = scmp.eq.s32.totalorder %s13, 0
    %p122 = por %p120, %p121
    %p123 = scmp.ne.s32.totalorder %s112, %s115
    %p124 = scmp.eq.s32.totalorder %s18, 1
    %p125 = por %p123, %p124
    %p126 = scmp.ne.s32.totalorder %s115, %s116
    %p127 = scmp.eq.s32.totalorder %s18, 0
    %p128 = por %p126, %p127
    %p129 = scmp.ne.s32.totalorder %s115, %s116
    %p130 = scmp.eq.s32.totalorder %s19, 1
    %p131 = por %p129, %p130
    %p133 = scmp.ne.s32.totalorder %s116, %s132
    %p134 = scmp.eq.s32.totalorder %s19, 0
    %p135 = por %p133, %p134
    %s136 = ssub.s32 %s13, %s20
    %p137 = scmp.eq.s32.totalorder %s136, 0
    %s139 = sadd.s32 %s138, 1
    %s140 = scalar_select %p137, %s138, %s139
    %p143 = pneg %p137
    %p144 = scmp.eq.s32.totalorder %s13, 1
    %p145 = por %p143, %p144
    %p146 = scmp.ne.s32.totalorder %s138, %s141
    %p147 = scmp.eq.s32.totalorder %s13, 0
    %p148 = por %p146, %p147
    %p149 = scmp.ne.s32.totalorder %s138, %s141
    %p150 = scmp.eq.s32.totalorder %s18, 1
    %p151 = por %p149, %p150
    %p152 = scmp.ne.s32.totalorder %s141, %s142
    %p153 = scmp.eq.s32.totalorder %s18, 0
    %p154 = por %p152, %p153
    %p155 = scmp.ne.s32.totalorder %s141, %s142
    %p156 = scmp.eq.s32.totalorder %s19, 1
    %p157 = por %p155, %p156
    %p159 = scmp.ne.s32.totalorder %s142, %s158
    %p160 = scmp.eq.s32.totalorder %s19, 0
    %p161 = por %p159, %p160
    %s162 = ssub.s32 %s13, %s20
    %p163 = scmp.eq.s32.totalorder %s162, 0
    %s165 = sadd.s32 %s164, 1
    %s166 = scalar_select %p163, %s164, %s165
    %p169 = pneg %p163
    %p170 = scmp.eq.s32.totalorder %s13, 1
    %p171 = por %p169, %p170
    %p172 = scmp.ne.s32.totalorder %s164, %s167
    %p173 = scmp.eq.s32.totalorder %s13, 0
    %p174 = por %p172, %p173
    %p175 = scmp.ne.s32.totalorder %s164, %s167
    %p176 = scmp.eq.s32.totalorder %s18, 1
    %p177 = por %p175, %p176
    %p178 = scmp.ne.s32.totalorder %s167, %s168
    %p179 = scmp.eq.s32.totalorder %s18, 0
    %p180 = por %p178, %p179
    %p181 = scmp.ne.s32.totalorder %s167, %s168
    %p182 = scmp.eq.s32.totalorder %s19, 1
    %p183 = por %p181, %p182
    %p185 = scmp.ne.s32.totalorder %s168, %s184
    %p186 = scmp.eq.s32.totalorder %s19, 0
    %p187 = por %p185, %p186
    %p188 = scmp.le.s32.totalorder 1, %s13
    %p189 = scmp.lt.s32.totalorder %s13, 3
    %p190 = pnand %p188, %p189
    %p191 = pneg %p190
    // Predicated region
    $region9: #{joint_conv_trans_block.26} parent=5 // pred_check
      _
    $region10: #{joint_conv_trans_block.26} parent=5 // pred_check_branch
      %193 = sbr.rel (%p190) target = $region12
    $region11: #{joint_conv_trans_block.26} parent=5 // pred_region
      %s194 = ssub.s32 %s13, 1
      // Predicated region
      $region13: #{joint_conv_trans_block.26} parent=11 // pred_check
        %p195 = pneg %p60
      $region14: #{joint_conv_trans_block.26} parent=11 // pred_check_branch
        %197 = sbr.rel (%p195) target = $region16
      $region15: #{joint_conv_trans_block.26} parent=11 // pred_region
        _
      $region16: #{joint_conv_trans_block.26} parent=11 // pred_fallthru
        _
      // Predicated region
      $region17: #{joint_conv_trans_block.26} parent=11 // pred_check
        %p198 = pneg %p81
      $region18: #{joint_conv_trans_block.26} parent=11 // pred_check_branch
        %200 = sbr.rel (%p198) target = $region20
      $region19: #{joint_conv_trans_block.26} parent=11 // pred_region
        _
      $region20: #{joint_conv_trans_block.26} parent=11 // pred_fallthru
        _
      // Predicated region
      $region21: #{joint_conv_trans_block.26} parent=11 // pred_check
        %p201 = pneg %p102
      $region22: #{joint_conv_trans_block.26} parent=11 // pred_check_branch
        %203 = sbr.rel (%p201) target = $region24
      $region23: #{joint_conv_trans_block.26} parent=11 // pred_region
        _
      $region24: #{joint_conv_trans_block.26} parent=11 // pred_fallthru
        _
    $region12: #{joint_conv_trans_block.26} parent=5 // pred_fallthru
      _
    %p204 = scmp.lt.s32.totalorder %s13, 2
    // Predicated region
    $region25: #{joint_conv_trans_block.26} parent=5 // pred_check
      %p205 = pneg %p204
    $region26: #{joint_conv_trans_block.26} parent=5 // pred_check_branch
      %207 = sbr.rel (%p205) target = $region28
    $region27: #{joint_conv_trans_block.26} parent=5 // pred_region
      // Predicated region
      $region29: #{joint_conv_trans_block.26} parent=27 // pred_check
        %p208 = pneg %p33
      $region30: #{joint_conv_trans_block.26} parent=27 // pred_check_branch
        %210 = sbr.rel (%p208) target = $region32
      $region31: #{joint_conv_trans_block.26} parent=27 // pred_region
        %p211 = scmp.lt.s32.totalorder %s13, 1
        %s212 = scalar_select %p211, %s13, 1
        %s213 = smul.addr %s212, 3
        %s214 = smul.addr %s213, 4
        %s215 = scalar_lea.vmem %s0, %s214
      $region32: #{joint_conv_trans_block.26} parent=27 // pred_fallthru
        _
    $region28: #{joint_conv_trans_block.26} parent=5 // pred_fallthru
      _
    %p216 = scmp.le.s32.totalorder 1, %s13
    %p217 = scmp.lt.s32.totalorder %s13, 3
    %p218 = pnand %p216, %p217
    %p219 = pneg %p218
    // Predicated region
    $region33: #{joint_conv_trans_block.26} parent=5 // pred_check
      _
    $region34: #{joint_conv_trans_block.26} parent=5 // pred_check_branch
      %221 = sbr.rel (%p218) target = $region36
    $region35: #{joint_conv_trans_block.26} parent=5 // pred_region
      %s222 = ssub.s32 %s13, 1
      %p223 = scmp.lt.s32.totalorder %s18, 1
      %s224 = scalar_select %p223, %s18, 1
      %s225 = smul.addr %s224, 3
      %s226 = smul.addr %s225, 4
      %s227 = scalar_lea.vmem %s0, %s226
      %p228 = pneg %p39
      %p229 = pneg %p36
      %p230 = pneg %p60
      %p231 = pneg %p57
      %p232 = pneg %p81
      %p233 = pneg %p78
      %p234 = pneg %p102
      %p235 = pneg %p99
      %p236 = pneg %p128
      %p237 = pneg %p125
      %p238 = scmp.lt.s32.totalorder %s18, 1
      %s239 = scalar_select %p238, %s18, 1
      %s240 = smul.addr %s239, 2
      %s241 = smul.addr %s240, 8
      %s242 = scalar_lea.vmem %s4, %s241
      %p243 = pneg %p154
      %p244 = pneg %p151
      %p245 = scmp.lt.s32.totalorder %s18, 1
      %s246 = scalar_select %p245, %s18, 1
      %s247 = scalar_lea.vmem %s5, %s246
      %p248 = pneg %p180
      %p249 = pneg %p177
      %p250 = scmp.lt.s32.totalorder %s18, 1
      %s251 = scalar_select %p250, %s18, 1
      %s252 = scalar_lea.vmem %s6, %s251
      %p253 = scmp.lt.s32.totalorder %s18, 1
      %s254 = scalar_select %p253, %s18, 1
      %s255 = smul.addr %s254, 3
      %s256 = smul.addr %s255, 4
      %s257 = scalar_lea.vmem %s0, %s256
      %p258 = scmp.lt.s32.totalorder %s18, 1
      %s259 = scalar_select %p258, %s18, 1
      %s260 = smul.addr %s259, 2
      %s261 = smul.addr %s260, 8
      %s262 = scalar_lea.vmem %s4, %s261
      %p263 = scmp.lt.s32.totalorder %s18, 1
      %s264 = scalar_select %p263, %s18, 1
      %s265 = scalar_lea.vmem %s5, %s264
      %p266 = scmp.lt.s32.totalorder %s18, 1
      %s267 = scalar_select %p266, %s18, 1
      %s268 = scalar_lea.vmem %s6, %s267
      %v270 = vld [vmem:[%s257] sm:$0xf]
      %v271 = vld [vmem:[%s257 + $0x4] sm:$0xf]
      %v272 = vld [vmem:[%s1] sm:$0xf]
      %v273 = vld [vmem:[%s1 + $0x4] sm:$0xf]
      %v274 = vld [vmem:[%s1 + $0x8] sm:$0xf]
      %v275 = vld [vmem:[%s1 + $0xc] sm:$0xf]
      %v276 = vld [vmem:[%s1 + $0x10] sm:$0xf]
      %v277 = vld [vmem:[%s1 + $0x14] sm:$0xf]
      %v278 = vld [vmem:[%s1 + $0x18] sm:$0xf]
      %v279 = vld [vmem:[%s1 + $0x1c] sm:$0xf]
      %v280 = vld [vmem:[%s1 + $0x20] sm:$0xf]
      %v281 = vld [vmem:[%s1 + $0x24] sm:$0xf]
      %v282 = vld [vmem:[%s1 + $0x28] sm:$0xf]
      %v283 = vld [vmem:[%s1 + $0x2c] sm:$0xf]
      %v284 = vld [vmem:[%s257] sm:$0xc]
      %v285 = vld [vmem:[%s257 + $0x8] sm:$0x3]
      %s286 = scalar_lea.vmem %s1, 48
      %v287 = vld [vmem:[%s286] sm:$0xf]
      %v288 = vld [vmem:[%s286 + $0x4] sm:$0xf]
      %v289 = vld [vmem:[%s286 + $0x8] sm:$0xf]
      %v290 = vld [vmem:[%s286 + $0xc] sm:$0xf]
      %v291 = vld [vmem:[%s286 + $0x10] sm:$0xf]
      %v292 = vld [vmem:[%s286 + $0x14] sm:$0xf]
      %v293 = vld [vmem:[%s286 + $0x18] sm:$0xf]
      %v294 = vld [vmem:[%s286 + $0x1c] sm:$0xf]
      %v295 = vld [vmem:[%s286 + $0x20] sm:$0xf]
      %v296 = vld [vmem:[%s286 + $0x24] sm:$0xf]
      %v297 = vld [vmem:[%s286 + $0x28] sm:$0xf]
      %v298 = vld [vmem:[%s286 + $0x2c] sm:$0xf]
      %v302 = vunpack.c.l.b16 %v284
      %v303 = vunpack.c.l.b16 %v271
      %v304 = vunpack.c.l.b16 %v285
      %v305 = vpack.c.b16 %v303, %v302
      %v306 = vpack.c.b16 %v304, %v304
      %vm307 = vcmask 1045504
      %v308 = vrot.slane %v305, 2
      %v309 = vrot.slane %v306, 2
      %v310 = vsel %vm307, %v308, %v309
      %v323 = vunpack.c.l.b16 %v287
      %v324 = vunpack.c.l.b16 %v288
      %v325 = vunpack.c.l.b16 %v289
      %v326 = vunpack.c.l.b16 %v290
      %v327 = vunpack.c.l.b16 %v291
      %v328 = vunpack.c.l.b16 %v292
      %v329 = vunpack.c.l.b16 %v293
      %v330 = vunpack.c.l.b16 %v294
      %v331 = vunpack.c.l.b16 %v295
      %v332 = vunpack.c.l.b16 %v296
      %v333 = vunpack.c.l.b16 %v297
      %v334 = vunpack.c.l.b16 %v298
      %v335 = vpack.c.b16 %v324, %v323
      %v336 = vpack.c.b16 %v326, %v325
      %v337 = vpack.c.b16 %v328, %v327
      %v338 = vpack.c.b16 %v330, %v329
      %v339 = vpack.c.b16 %v332, %v331
      %v340 = vpack.c.b16 %v334, %v333
      %vm347 = vcmask 785408
      %v349 = vsel %vm347, %v310, 0
      %351 = vmatprep.subr.bf16.mxu0 0
      %352 = vmatpush1.bf16.msra.mxu0 %v335
      %353 = vmatprep.subr.bf16.mxu0 0
      %354 = vmatpush1.bf16.msra.mxu0 %v336
      %355 = vmatprep.subr.bf16.mxu0 0
      %356 = vmatpush1.bf16.msra.mxu0 %v337
      %357 = vmatprep.subr.bf16.mxu0 0
      %358 = vmatpush1.bf16.msra.mxu0 %v338
      %359 = vmatprep.subr.bf16.mxu0 0
      %360 = vmatpush1.bf16.msra.mxu0 %v339
      %361 = vmatprep.subr.bf16.mxu0 0
      %362 = vmatpush1.bf16.msra.mxu0 %v340
      %363 = vmatprep.subr.bf16.mxu0 0
      %364 = vmatpush1.bf16.msra.mxu0 0
      %365 = vmatprep.subr.bf16.mxu0 0
      %366 = vmatpush1.bf16.msra.mxu0 0
      %367 = vmatprep.subr.bf16.mxu0 0
      %368 = vmatpush1.bf16.msra.mxu0 0
      %369 = vmatprep.subr.bf16.mxu0 0
      %370 = vmatpush1.bf16.msra.mxu0 0
      %371 = vmatprep.subr.bf16.mxu0 0
      %372 = vmatpush1.bf16.msra.mxu0 0
      %373 = vmatprep.subr.bf16.mxu0 0
      %374 = vmatpush1.bf16.msra.mxu0 0
      %375 = vmatprep.subr.bf16.mxu0 0
      %376 = vmatpush1.bf16.msra.mxu0 0
      %377 = vmatprep.subr.bf16.mxu0 0
      %378 = vmatpush1.bf16.msra.mxu0 0
      %379 = vmatprep.subr.bf16.mxu0 0
      %380 = vmatpush1.bf16.msra.mxu0 0
      %381 = vmatprep.subr.bf16.mxu0 0
      %382 = vmatpush1.bf16.msra.mxu0 0
      %383 = vmatprep.mubr.bf16.mxu0 0
      %384 = vmatmul.mubr.bf16.gmra.mrb[0].mxu0 %v349
      %v385 = vpop.f32.mrb[0].mxu0
      %v386 = vadd.f32 0.0, %v385
      %v387 = vpop.f32.mrb[0].mxu0
      %v388 = vpop.f32.mrb[0].mxu0
      %v389 = vadd.f32 0.0, %v388
      %v390 = vpop.f32.mrb[0].mxu0
      %391 = vdwg.mxu0
      %v393 = vunpack.c.l.b16 %v270
      %v394 = vpack.c.b16 %v303, %v393
      %v407 = vunpack.c.l.b16 %v272
      %v408 = vunpack.c.l.b16 %v273
      %v409 = vunpack.c.l.b16 %v274
      %v410 = vunpack.c.l.b16 %v275
      %v411 = vunpack.c.l.b16 %v276
      %v412 = vunpack.c.l.b16 %v277
      %v413 = vunpack.c.l.b16 %v278
      %v414 = vunpack.c.l.b16 %v279
      %v415 = vunpack.c.l.b16 %v280
      %v416 = vunpack.c.l.b16 %v281
      %v417 = vunpack.c.l.b16 %v282
      %v418 = vunpack.c.l.b16 %v283
      %v419 = vpack.c.b16 %v408, %v407
      %v420 = vpack.c.b16 %v410, %v409
      %v421 = vpack.c.b16 %v412, %v411
      %v422 = vpack.c.b16 %v414, %v413
      %v423 = vpack.c.b16 %v416, %v415
      %v424 = vpack.c.b16 %v418, %v417
      %v432 = vsel %vm347, %v394, 0
      %434 = vmatprep.subr.bf16.mxu0 0
      %435 = vmatpush1.bf16.msra.mxu0 %v419
      %436 = vmatprep.subr.bf16.mxu0 0
      %437 = vmatpush1.bf16.msra.mxu0 %v420
      %438 = vmatprep.subr.bf16.mxu0 0
      %439 = vmatpush1.bf16.msra.mxu0 %v421
      %440 = vmatprep.subr.bf16.mxu0 0
      %441 = vmatpush1.bf16.msra.mxu0 %v422
      %442 = vmatprep.subr.bf16.mxu0 0
      %443 = vmatpush1.bf16.msra.mxu0 %v423
      %444 = vmatprep.subr.bf16.mxu0 0
      %445 = vmatpush1.bf16.msra.mxu0 %v424
      %446 = vmatprep.subr.bf16.mxu0 0
      %447 = vmatpush1.bf16.msra.mxu0 0
      %448 = vmatprep.subr.bf16.mxu0 0
      %449 = vmatpush1.bf16.msra.mxu0 0
      %450 = vmatprep.subr.bf16.mxu0 0
      %451 = vmatpush1.bf16.msra.mxu0 0
      %452 = vmatprep.subr.bf16.mxu0 0
      %453 = vmatpush1.bf16.msra.mxu0 0
      %454 = vmatprep.subr.bf16.mxu0 0
      %455 = vmatpush1.bf16.msra.mxu0 0
      %456 = vmatprep.subr.bf16.mxu0 0
      %457 = vmatpush1.bf16.msra.mxu0 0
      %458 = vmatprep.subr.bf16.mxu0 0
      %459 = vmatpush1.bf16.msra.mxu0 0
      %460 = vmatprep.subr.bf16.mxu0 0
      %461 = vmatpush1.bf16.msra.mxu0 0
      %462 = vmatprep.subr.bf16.mxu0 0
      %463 = vmatpush1.bf16.msra.mxu0 0
      %464 = vmatprep.subr.bf16.mxu0 0
      %465 = vmatpush1.bf16.msra.mxu0 0
      %466 = vmatprep.mubr.bf16.mxu0 0
      %467 = vmatmul.mubr.bf16.gmra.mrb[0].mxu0 %v432
      %v468 = vpop.f32.mrb[0].mxu0
      %v469 = vadd.f32 %v386, %v468
      %v470 = vpop.f32.mrb[0].mxu0
      %v471 = vpop.f32.mrb[0].mxu0
      %v472 = vadd.f32 %v389, %v471
      %v473 = vpop.f32.mrb[0].mxu0
      %474 = vdwg.mxu0
      %v475 = vld [vmem:[%s257 + $0x8] sm:$0xf]
      %s476 = scalar_lea.vmem %s1, 96
      %v477 = vld [vmem:[%s476] sm:$0xf]
      %v478 = vld [vmem:[%s476 + $0x4] sm:$0xf]
      %v479 = vld [vmem:[%s476 + $0x8] sm:$0xf]
      %v480 = vld [vmem:[%s476 + $0xc] sm:$0xf]
      %v481 = vld [vmem:[%s476 + $0x10] sm:$0xf]
      %v482 = vld [vmem:[%s476 + $0x14] sm:$0xf]
      %v483 = vld [vmem:[%s476 + $0x18] sm:$0xf]
      %v484 = vld [vmem:[%s476 + $0x1c] sm:$0xf]
      %v485 = vld [vmem:[%s476 + $0x20] sm:$0xf]
      %v486 = vld [vmem:[%s476 + $0x24] sm:$0xf]
      %v487 = vld [vmem:[%s476 + $0x28] sm:$0xf]
      %v488 = vld [vmem:[%s476 + $0x2c] sm:$0xf]
      %v490 = vunpack.c.l.b16 %v475
      %v491 = vpack.c.b16 %v490, %v303
      %v504 = vunpack.c.l.b16 %v477
      %v505 = vunpack.c.l.b16 %v478
      %v506 = vunpack.c.l.b16 %v479
      %v507 = vunpack.c.l.b16 %v480
      %v508 = vunpack.c.l.b16 %v481
      %v509 = vunpack.c.l.b16 %v482
      %v510 = vunpack.c.l.b16 %v483
      %v511 = vunpack.c.l.b16 %v484
      %v512 = vunpack.c.l.b16 %v485
      %v513 = vunpack.c.l.b16 %v486
      %v514 = vunpack.c.l.b16 %v487
      %v515 = vunpack.c.l.b16 %v488
      %v516 = vpack.c.b16 %v505, %v504
      %v517 = vpack.c.b16 %v507, %v506
      %v518 = vpack.c.b16 %v509, %v508
      %v519 = vpack.c.b16 %v511, %v510
      %v520 = vpack.c.b16 %v513, %v512
      %v521 = vpack.c.b16 %v515, %v514
      %v529 = vsel %vm347, %v491, 0
      %531 = vmatprep.subr.bf16.mxu0 0
      %532 = vmatpush1.bf16.msra.mxu0 %v516
      %533 = vmatprep.subr.bf16.mxu0 0
      %534 = vmatpush1.bf16.msra.mxu0 %v517
      %535 = vmatprep.subr.bf16.mxu0 0
      %536 = vmatpush1.bf16.msra.mxu0 %v518
      %537 = vmatprep.subr.bf16.mxu0 0
      %538 = vmatpush1.bf16.msra.mxu0 %v519
      %539 = vmatprep.subr.bf16.mxu0 0
      %540 = vmatpush1.bf16.msra.mxu0 %v520
      %541 = vmatprep.subr.bf16.mxu0 0
      %542 = vmatpush1.bf16.msra.mxu0 %v521
      %543 = vmatprep.subr.bf16.mxu0 0
      %544 = vmatpush1.bf16.msra.mxu0 0
      %545 = vmatprep.subr.bf16.mxu0 0
      %546 = vmatpush1.bf16.msra.mxu0 0
      %547 = vmatprep.subr.bf16.mxu0 0
      %548 = vmatpush1.bf16.msra.mxu0 0
      %549 = vmatprep.subr.bf16.mxu0 0
      %550 = vmatpush1.bf16.msra.mxu0 0
      %551 = vmatprep.subr.bf16.mxu0 0
      %552 = vmatpush1.bf16.msra.mxu0 0
      %553 = vmatprep.subr.bf16.mxu0 0
      %554 = vmatpush1.bf16.msra.mxu0 0
      %555 = vmatprep.subr.bf16.mxu0 0
      %556 = vmatpush1.bf16.msra.mxu0 0
      %557 = vmatprep.subr.bf16.mxu0 0
      %558 = vmatpush1.bf16.msra.mxu0 0
      %559 = vmatprep.subr.bf16.mxu0 0
      %560 = vmatpush1.bf16.msra.mxu0 0
      %561 = vmatprep.subr.bf16.mxu0 0
      %562 = vmatpush1.bf16.msra.mxu0 0
      %563 = vmatprep.mubr.bf16.mxu0 0
      %564 = vmatmul.mubr.bf16.gmra.mrb[0].mxu0 %v529
      %v565 = vpop.f32.mrb[0].mxu0
      %v566 = vadd.f32 0.0, %v565
      %v567 = vpop.f32.mrb[0].mxu0
      %v568 = vpop.f32.mrb[0].mxu0
      %v569 = vadd.f32 0.0, %v568
      %v570 = vpop.f32.mrb[0].mxu0
      %571 = vdwg.mxu0
      %v572 = vadd.f32 %v469, %v566
      %v573 = vadd.f32 %v472, %v569
      %v574 = vld [vmem:[%s2] sm:$0x1]
      %v576 = vlaneseq
      %v577 = vshrl.u32 %v576, 7
      %v578 = vsub.s32 0, %v577
      %v579 = vrot.slane %v574, %v578
      %v581 = vmul.f32 %v572, %v579
      %v582 = vmul.f32 %v573, %v579
      %v583 = vld [vmem:[%s3] sm:$0x1]
      %v585 = vlaneseq
      %v586 = vshrl.u32 %v585, 7
      %v587 = vsub.s32 0, %v586
      %v588 = vrot.slane %v583, %v587
      %v590 = vadd.f32 %v581, %v588
      %v591 = vadd.f32 %v582, %v588
      %vm592 = vcmask 261120
      %593 = vst.msk [vmem:[%s262] sm:$0xff] %vm592, %v590
      %594 = vst.msk [vmem:[%s262 + $0x8] sm:$0xff] %vm592, %v591
      %v595 = vsel %vm592, %v590, 0.0
      %v596 = vsel %vm592, %v591, 0.0
      %v597 = vadd.f32 %v595, %v596
      %v598 = vrot.slane %v597, 4
      %v599 = vadd.f32 %v597, %v598
      %v600 = vrot.slane %v599, 2
      %v601 = vadd.f32 %v599, %v600
      %v602 = vrot.slane %v601, 1
      %v603 = vadd.f32 %v601, %v602
      %v604 = vrcp.pop 16.0
      %v605 = vmul.f32 %v603, %v604
      %vm606 = vcmask 253952
      %607 = vst.msk [vmem:[%s265] sm:$0x1] %vm606, %v605
      %v608 = vsel %vm592, %v590, -inf
      %v609 = vsel %vm592, %v591, -inf
      %v610 = vmax.f32 %v608, %v609
      %v611 = vrot.slane %v610, 4
      %v612 = vmax.f32 %v610, %v611
      %v613 = vrot.slane %v612, 2
      %v614 = vmax.f32 %v612, %v613
      %v615 = vrot.slane %v614, 1
      %v616 = vmax.f32 %v614, %v615
      %617 = vst.msk [vmem:[%s268] sm:$0x1] %vm606, %v616
      %p618 = scmp.lt.s32.totalorder %s18, 1
      %s619 = scalar_select %p618, %s18, 1
      %s620 = smul.addr %s619, 2
      %s621 = smul.addr %s620, 8
      %s622 = scalar_lea.vmem %s4, %s621
      %p623 = scmp.lt.s32.totalorder %s18, 1
      %s624 = scalar_select %p623, %s18, 1
      %s625 = scalar_lea.vmem %s5, %s624
      %p626 = scmp.lt.s32.totalorder %s18, 1
      %s627 = scalar_select %p626, %s18, 1
      %s628 = scalar_lea.vmem %s6, %s627
      // Predicated region
      $region37: #{joint_conv_trans_block.26} parent=35 // pred_check
        %p629 = pneg %p125
      $region38: #{joint_conv_trans_block.26} parent=35 // pred_check_branch
        %631 = sbr.rel (%p629) target = $region40
      $region39: #{joint_conv_trans_block.26} parent=35 // pred_region
        _
      $region40: #{joint_conv_trans_block.26} parent=35 // pred_fallthru
        _
      // Predicated region
      $region41: #{joint_conv_trans_block.26} parent=35 // pred_check
        %p632 = pneg %p151
      $region42: #{joint_conv_trans_block.26} parent=35 // pred_check_branch
        %634 = sbr.rel (%p632) target = $region44
      $region43: #{joint_conv_trans_block.26} parent=35 // pred_region
        _
      $region44: #{joint_conv_trans_block.26} parent=35 // pred_fallthru
        _
      // Predicated region
      $region45: #{joint_conv_trans_block.26} parent=35 // pred_check
        %p635 = pneg %p177
      $region46: #{joint_conv_trans_block.26} parent=35 // pred_check_branch
        %637 = sbr.rel (%p635) target = $region48
      $region47: #{joint_conv_trans_block.26} parent=35 // pred_region
        _
      $region48: #{joint_conv_trans_block.26} parent=35 // pred_fallthru
        _
    $region36: #{joint_conv_trans_block.26} parent=5 // pred_fallthru
      _
    %p638 = scmp.le.s32.totalorder 2, %s13
    // Predicated region
    $region49: #{joint_conv_trans_block.26} parent=5 // pred_check
      %p639 = pneg %p638
    $region50: #{joint_conv_trans_block.26} parent=5 // pred_check_branch
      %641 = sbr.rel (%p639) target = $region52
    $region51: #{joint_conv_trans_block.26} parent=5 // pred_region
      %s642 = ssub.s32 %s13, 2
      // Predicated region
      $region53: #{joint_conv_trans_block.26} parent=51 // pred_check
        %p643 = pneg %p131
      $region54: #{joint_conv_trans_block.26} parent=51 // pred_check_branch
        %645 = sbr.rel (%p643) target = $region56
      $region55: #{joint_conv_trans_block.26} parent=51 // pred_region
        %p646 = scmp.lt.s32.totalorder %s19, 1
        %s647 = scalar_select %p646, %s19, 1
        %s648 = smul.addr %s647, 2
        %s649 = smul.addr %s648, 8
        %s650 = scalar_lea.vmem %s4, %s649
      $region56: #{joint_conv_trans_block.26} parent=51 // pred_fallthru
        _
      // Predicated region
      $region57: #{joint_conv_trans_block.26} parent=51 // pred_check
        %p651 = pneg %p157
      $region58: #{joint_conv_trans_block.26} parent=51 // pred_check_branch
        %653 = sbr.rel (%p651) target = $region60
      $region59: #{joint_conv_trans_block.26} parent=51 // pred_region
        %p654 = scmp.lt.s32.totalorder %s19, 1
        %s655 = scalar_select %p654, %s19, 1
        %s656 = scalar_lea.vmem %s5, %s655
      $region60: #{joint_conv_trans_block.26} parent=51 // pred_fallthru
        _
      // Predicated region
      $region61: #{joint_conv_trans_block.26} parent=51 // pred_check
        %p657 = pneg %p183
      $region62: #{joint_conv_trans_block.26} parent=51 // pred_check_branch
        %659 = sbr.rel (%p657) target = $region64
      $region63: #{joint_conv_trans_block.26} parent=51 // pred_region
        %p660 = scmp.lt.s32.totalorder %s19, 1
        %s661 = scalar_select %p660, %s19, 1
        %s662 = scalar_lea.vmem %s6, %s661
      $region64: #{joint_conv_trans_block.26} parent=51 // pred_fallthru
        _
    $region52: #{joint_conv_trans_block.26} parent=5 // pred_fallthru
      _
  $region6: #{joint_conv_trans_block.26} parent=0 // loop_footer
    %s17 = sadd.s32 1, %s13
  $region7: #{joint_conv_trans_block.26} parent=0 // loop_footer_branch
    %12 = sbr.rel target = $region3
  $region8: #{joint_conv_trans_block.26} parent=0 // loop_exit
    _

// kernel: joint_conv_trans_block.28
$region0: #{joint_conv_trans_block.28}
  #allocation0 [shape = 'u32[]', space=smem, size = 0x4, offset = 0x4, fixed_abs, tag = 'smem constant byte address 0x4 - core index']
  #allocation1 [shape = 'u32[144,128]{1,0:T(1,128)}', space=vmem, size = 0x12000, scoped, tag = 'internal scratch']
  %s0 = inlined_call_operand.vmem [shape: f32[2,16,32], index: 0, kind: input, shape index: {}]
  %s1 = inlined_call_operand.vmem [shape: f32[2,1,32], index: 1, kind: input, shape index: {}]
  %s2 = inlined_call_operand.vmem [shape: f32[2,16,32], index: 2, kind: output, shape index: {0}]
  %s3 = inlined_call_operand.vmem [shape: f32[2,16,2], index: 3, kind: output, shape index: {1}]
  %4 = xla_tuple %s2, %s3
  %s5 = sld [smem:[#allocation0]]
  $region49: #{joint_conv_trans_block.28} parent=0
    _
  %s7 = ssub.s32 1, %s5
  %s8 = scalar_select 0, %s7, %s5
  loop: start=0, step=1, limit=4
  $region2: #{joint_conv_trans_block.28} parent=0 // loop_pre_header
    _
  $region3: #{joint_conv_trans_block.28} parent=0 // loop_header
    %s10 = sphi 0, %s14
    %p11 = scmp.ge.s32.totalorder %s10, 4
    %s20 = sphi 0, %s22
    %s23 = sphi 0, %s20
    %s24 = sphi 0, %s23
    %s40 = sphi 0, %s24
    %s46 = sphi 0, %s48
    %s49 = sphi 0, %s46
    %s50 = sphi 0, %s49
    %s66 = sphi 0, %s50
    %s72 = sphi 0, %s74
    %s75 = sphi 0, %s72
    %s76 = sphi 0, %s75
    %s92 = sphi 0, %s76
    %s98 = sphi 0, %s100
    %s101 = sphi 0, %s98
    %s102 = sphi 0, %s101
    %s118 = sphi 0, %s102
  $region4: #{joint_conv_trans_block.28} parent=0 // loop_header_branch
    %13 = sbr.rel (%p11) target = $region8
  $region5: #{joint_conv_trans_block.28} parent=0 // loop_body
    %s15 = ssub.s32 %s10, 1
    %s16 = ssub.s32 %s10, 2
    %s17 = sadd.s32 %s10, 1
    %s18 = ssub.s32 %s10, %s17
    %p19 = scmp.eq.s32.totalorder %s18, 0
    %s21 = sadd.s32 %s20, 1
    %s22 = scalar_select %p19, %s20, %s21
    %p25 = pneg %p19
    %p26 = scmp.eq.s32.totalorder %s10, 1
    %p27 = por %p25, %p26
    %p28 = scmp.ne.s32.totalorder %s20, %s23
    %p29 = scmp.eq.s32.totalorder %s10, 0
    %p30 = por %p28, %p29
    %p31 = scmp.ne.s32.totalorder %s20, %s23
    %p32 = scmp.eq.s32.totalorder %s15, 1
    %p33 = por %p31, %p32
    %p34 = scmp.ne.s32.totalorder %s23, %s24
    %p35 = scmp.eq.s32.totalorder %s15, 0
    %p36 = por %p34, %p35
    %p37 = scmp.ne.s32.totalorder %s23, %s24
    %p38 = scmp.eq.s32.totalorder %s16, 1
    %p39 = por %p37, %p38
    %p41 = scmp.ne.s32.totalorder %s24, %s40
    %p42 = scmp.eq.s32.totalorder %s16, 0
    %p43 = por %p41, %p42
    %s44 = ssub.s32 %s10, %s17
    %p45 = scmp.eq.s32.totalorder %s44, 0
    %s47 = sadd.s32 %s46, 1
    %s48 = scalar_select %p45, %s46, %s47
    %p51 = pneg %p45
    %p52 = scmp.eq.s32.totalorder %s10, 1
    %p53 = por %p51, %p52
    %p54 = scmp.ne.s32.totalorder %s46, %s49
    %p55 = scmp.eq.s32.totalorder %s10, 0
    %p56 = por %p54, %p55
    %p57 = scmp.ne.s32.totalorder %s46, %s49
    %p58 = scmp.eq.s32.totalorder %s15, 1
    %p59 = por %p57, %p58
    %p60 = scmp.ne.s32.totalorder %s49, %s50
    %p61 = scmp.eq.s32.totalorder %s15, 0
    %p62 = por %p60, %p61
    %p63 = scmp.ne.s32.totalorder %s49, %s50
    %p64 = scmp.eq.s32.totalorder %s16, 1
    %p65 = por %p63, %p64
    %p67 = scmp.ne.s32.totalorder %s50, %s66
    %p68 = scmp.eq.s32.totalorder %s16, 0
    %p69 = por %p67, %p68
    %s70 = ssub.s32 %s10, %s17
    %p71 = scmp.eq.s32.totalorder %s70, 0
    %s73 = sadd.s32 %s72, 1
    %s74 = scalar_select %p71, %s72, %s73
    %p77 = pneg %p71
    %p78 = scmp.eq.s32.totalorder %s10, 1
    %p79 = por %p77, %p78
    %p80 = scmp.ne.s32.totalorder %s72, %s75
    %p81 = scmp.eq.s32.totalorder %s10, 0
    %p82 = por %p80, %p81
    %p83 = scmp.ne.s32.totalorder %s72, %s75
    %p84 = scmp.eq.s32.totalorder %s15, 1
    %p85 = por %p83, %p84
    %p86 = scmp.ne.s32.totalorder %s75, %s76
    %p87 = scmp.eq.s32.totalorder %s15, 0
    %p88 = por %p86, %p87
    %p89 = scmp.ne.s32.totalorder %s75, %s76
    %p90 = scmp.eq.s32.totalorder %s16, 1
    %p91 = por %p89, %p90
    %p93 = scmp.ne.s32.totalorder %s76, %s92
    %p94 = scmp.eq.s32.totalorder %s16, 0
    %p95 = por %p93, %p94
    %s96 = ssub.s32 %s10, %s17
    %p97 = scmp.eq.s32.totalorder %s96, 0
    %s99 = sadd.s32 %s98, 1
    %s100 = scalar_select %p97, %s98, %s99
    %p103 = pneg %p97
    %p104 = scmp.eq.s32.totalorder %s10, 1
    %p105 = por %p103, %p104
    %p106 = scmp.ne.s32.totalorder %s98, %s101
    %p107 = scmp.eq.s32.totalorder %s10, 0
    %p108 = por %p106, %p107
    %p109 = scmp.ne.s32.totalorder %s98, %s101
    %p110 = scmp.eq.s32.totalorder %s15, 1
    %p111 = por %p109, %p110
    %p112 = scmp.ne.s32.totalorder %s101, %s102
    %p113 = scmp.eq.s32.totalorder %s15, 0
    %p114 = por %p112, %p113
    %p115 = scmp.ne.s32.totalorder %s101, %s102
    %p116 = scmp.eq.s32.totalorder %s16, 1
    %p117 = por %p115, %p116
    %p119 = scmp.ne.s32.totalorder %s102, %s118
    %p120 = scmp.eq.s32.totalorder %s16, 0
    %p121 = por %p119, %p120
    %p122 = scmp.le.s32.totalorder 1, %s10
    %p123 = scmp.lt.s32.totalorder %s10, 3
    %p124 = pnand %p122, %p123
    %p125 = pneg %p124
    // Predicated region
    $region9: #{joint_conv_trans_block.28} parent=5 // pred_check
      _
    $region10: #{joint_conv_trans_block.28} parent=5 // pred_check_branch
      %127 = sbr.rel (%p124) target = $region12
    $region11: #{joint_conv_trans_block.28} parent=5 // pred_region
      %s128 = ssub.s32 %s10, 1
    $region12: #{joint_conv_trans_block.28} parent=5 // pred_fallthru
      _
    %p129 = scmp.lt.s32.totalorder %s10, 2
    // Predicated region
    $region13: #{joint_conv_trans_block.28} parent=5 // pred_check
      %p130 = pneg %p129
    $region14: #{joint_conv_trans_block.28} parent=5 // pred_check_branch
      %132 = sbr.rel (%p130) target = $region16
    $region15: #{joint_conv_trans_block.28} parent=5 // pred_region
      // Predicated region
      $region17: #{joint_conv_trans_block.28} parent=15 // pred_check
        %p133 = pneg %p30
      $region18: #{joint_conv_trans_block.28} parent=15 // pred_check_branch
        %135 = sbr.rel (%p133) target = $region20
      $region19: #{joint_conv_trans_block.28} parent=15 // pred_region
        %p136 = scmp.lt.s32.totalorder %s10, 1
        %s137 = scalar_select %p136, %s10, 1
        %s138 = smul.addr %s137, 2
        %s139 = smul.addr %s138, 8
        %s140 = scalar_lea.vmem %s0, %s139
      $region20: #{joint_conv_trans_block.28} parent=15 // pred_fallthru
        _
      // Predicated region
      $region21: #{joint_conv_trans_block.28} parent=15 // pred_check
        %p141 = pneg %p56
      $region22: #{joint_conv_trans_block.28} parent=15 // pred_check_branch
        %143 = sbr.rel (%p141) target = $region24
      $region23: #{joint_conv_trans_block.28} parent=15 // pred_region
        %p144 = scmp.lt.s32.totalorder %s10, 1
        %s145 = scalar_select %p144, %s10, 1
        %s146 = scalar_lea.vmem %s1, %s145
      $region24: #{joint_conv_trans_block.28} parent=15 // pred_fallthru
        _
    $region16: #{joint_conv_trans_block.28} parent=5 // pred_fallthru
      _
    %p147 = scmp.le.s32.totalorder 1, %s10
    %p148 = scmp.lt.s32.totalorder %s10, 3
    %p149 = pnand %p147, %p148
    %p150 = pneg %p149
    // Predicated region
    $region25: #{joint_conv_trans_block.28} parent=5 // pred_check
      _
    $region26: #{joint_conv_trans_block.28} parent=5 // pred_check_branch
      %152 = sbr.rel (%p149) target = $region28
    $region27: #{joint_conv_trans_block.28} parent=5 // pred_region
      %s153 = ssub.s32 %s10, 1
      %p154 = scmp.lt.s32.totalorder %s15, 1
      %s155 = scalar_select %p154, %s15, 1
      %s156 = smul.addr %s155, 2
      %s157 = smul.addr %s156, 8
      %s158 = scalar_lea.vmem %s0, %s157
      %p159 = pneg %p36
      %p160 = pneg %p33
      %p161 = scmp.lt.s32.totalorder %s15, 1
      %s162 = scalar_select %p161, %s15, 1
      %s163 = scalar_lea.vmem %s1, %s162
      %p164 = pneg %p62
      %p165 = pneg %p59
      %p166 = pneg %p88
      %p167 = pneg %p85
      %p168 = scmp.lt.s32.totalorder %s15, 1
      %s169 = scalar_select %p168, %s15, 1
      %s170 = smul.addr %s169, 2
      %s171 = smul.addr %s170, 8
      %s172 = scalar_lea.vmem %s2, %s171
      %p173 = pneg %p114
      %p174 = pneg %p111
      %p175 = scmp.lt.s32.totalorder %s15, 1
      %s176 = scalar_select %p175, %s15, 1
      %s177 = smul.addr %s176, 2
      %s178 = smul.addr %s177, 8
      %s179 = scalar_lea.vmem %s3, %s178
      %p180 = scmp.lt.s32.totalorder %s15, 1
      %s181 = scalar_select %p180, %s15, 1
      %s182 = smul.addr %s181, 2
      %s183 = smul.addr %s182, 8
      %s184 = scalar_lea.vmem %s0, %s183
      %p185 = scmp.lt.s32.totalorder %s15, 1
      %s186 = scalar_select %p185, %s15, 1
      %s187 = scalar_lea.vmem %s1, %s186
      %p188 = scmp.lt.s32.totalorder %s15, 1
      %s189 = scalar_select %p188, %s15, 1
      %s190 = smul.addr %s189, 2
      %s191 = smul.addr %s190, 8
      %s192 = scalar_lea.vmem %s2, %s191
      %p193 = scmp.lt.s32.totalorder %s15, 1
      %s194 = scalar_select %p193, %s15, 1
      %s195 = smul.addr %s194, 2
      %s196 = smul.addr %s195, 8
      %s197 = scalar_lea.vmem %s3, %s196
      %v198 = vld [vmem:[%s184] sm:$0xff]
      %v199 = vld [vmem:[%s184 + $0x8] sm:$0xff]
      %v200 = vld [vmem:[%s187] sm:$0x1]
      %v202 = vlaneseq
      %v203 = vshrl.u32 %v202, 7
      %v204 = vsub.s32 0, %v203
      %v205 = vrot.slane %v200, %v204
      %v207 = vmul.f32 %v198, %v205
      %v208 = vmul.f32 %v199, %v205
      %vm209 = vcmask 261120
      %210 = vst.msk [vmem:[%s192] sm:$0xff] %vm209, %v207
      %211 = vst.msk [vmem:[%s192 + $0x8] sm:$0xff] %vm209, %v208
      %v212 = vsel %vm209, %v207, 0.0
      %213 = vadd.xlane.f32.xlu0 %v212
      %v214 = vpop.xlane.xlu0 %213
      %v215 = vsel %vm209, %v208, 0.0
      %216 = vadd.xlane.f32.xlu0 %v215
      %v217 = vpop.xlane.xlu0 %216
      %v218 = vrcp.pop 32.0
      %v219 = vmul.f32 %v214, %v218
      %v220 = vmul.f32 %v217, %v218
      %v221 = vsel %vm209, %v207, -inf
      %222 = vmax.xlane.f32.xlu0 %v221
      %v223 = vpop.xlane.xlu0 %222
      %v224 = vsel %vm209, %v208, -inf
      %225 = vmax.xlane.f32.xlu0 %v224
      %v226 = vpop.xlane.xlu0 %225
      %vm227 = vcmask 7168
      %v228 = vsel %vm227, %v219, %v223
      %v229 = vsel %vm227, %v220, %v226
      %vm230 = vcmask 15360
      %231 = vst.msk [vmem:[%s197] sm:$0xff] %vm230, %v228
      %232 = vst.msk [vmem:[%s197 + $0x8] sm:$0xff] %vm230, %v229
      %p233 = scmp.lt.s32.totalorder %s15, 1
      %s234 = scalar_select %p233, %s15, 1
      %s235 = smul.addr %s234, 2
      %s236 = smul.addr %s235, 8
      %s237 = scalar_lea.vmem %s2, %s236
      %p238 = scmp.lt.s32.totalorder %s15, 1
      %s239 = scalar_select %p238, %s15, 1
      %s240 = smul.addr %s239, 2
      %s241 = smul.addr %s240, 8
      %s242 = scalar_lea.vmem %s3, %s241
      // Predicated region
      $region29: #{joint_conv_trans_block.28} parent=27 // pred_check
        %p243 = pneg %p85
      $region30: #{joint_conv_trans_block.28} parent=27 // pred_check_branch
        %245 = sbr.rel (%p243) target = $region32
      $region31: #{joint_conv_trans_block.28} parent=27 // pred_region
        _
      $region32: #{joint_conv_trans_block.28} parent=27 // pred_fallthru
        _
      // Predicated region
      $region33: #{joint_conv_trans_block.28} parent=27 // pred_check
        %p246 = pneg %p111
      $region34: #{joint_conv_trans_block.28} parent=27 // pred_check_branch
        %248 = sbr.rel (%p246) target = $region36
      $region35: #{joint_conv_trans_block.28} parent=27 // pred_region
        _
      $region36: #{joint_conv_trans_block.28} parent=27 // pred_fallthru
        _
    $region28: #{joint_conv_trans_block.28} parent=5 // pred_fallthru
      _
    %p249 = scmp.le.s32.totalorder 2, %s10
    // Predicated region
    $region37: #{joint_conv_trans_block.28} parent=5 // pred_check
      %p250 = pneg %p249
    $region38: #{joint_conv_trans_block.28} parent=5 // pred_check_branch
      %252 = sbr.rel (%p250) target = $region40
    $region39: #{joint_conv_trans_block.28} parent=5 // pred_region
      %s253 = ssub.s32 %s10, 2
      // Predicated region
      $region41: #{joint_conv_trans_block.28} parent=39 // pred_check
        %p254 = pneg %p91
      $region42: #{joint_conv_trans_block.28} parent=39 // pred_check_branch
        %256 = sbr.rel (%p254) target = $region44
      $region43: #{joint_conv_trans_block.28} parent=39 // pred_region
        %p257 = scmp.lt.s32.totalorder %s16, 1
        %s258 = scalar_select %p257, %s16, 1
        %s259 = smul.addr %s258, 2
        %s260 = smul.addr %s259, 8
        %s261 = scalar_lea.vmem %s2, %s260
      $region44: #{joint_conv_trans_block.28} parent=39 // pred_fallthru
        _
      // Predicated region
      $region45: #{joint_conv_trans_block.28} parent=39 // pred_check
        %p262 = pneg %p117
      $region46: #{joint_conv_trans_block.28} parent=39 // pred_check_branch
        %264 = sbr.rel (%p262) target = $region48
      $region47: #{joint_conv_trans_block.28} parent=39 // pred_region
        %p265 = scmp.lt.s32.totalorder %s16, 1
        %s266 = scalar_select %p265, %s16, 1
        %s267 = smul.addr %s266, 2
        %s268 = smul.addr %s267, 8
        %s269 = scalar_lea.vmem %s3, %s268
      $region48: #{joint_conv_trans_block.28} parent=39 // pred_fallthru
        _
    $region40: #{joint_conv_trans_block.28} parent=5 // pred_fallthru
      _
  $region6: #{joint_conv_trans_block.28} parent=0 // loop_footer
    %s14 = sadd.s32 1, %s10
  $region7: #{joint_conv_trans_block.28} parent=0 // loop_footer_branch
    %9 = sbr.rel target = $region3
  $region8: #{joint_conv_trans_block.28} parent=0 // loop_exit
    _

// kernel: joint_conv_trans_block.27
$region0: #{joint_conv_trans_block.27}
  #allocation0 [shape = 'u32[]', space=smem, size = 0x4, offset = 0x4, fixed_abs, tag = 'smem constant byte address 0x4 - core index']
  #allocation1 [shape = 'u32[144,128]{1,0:T(1,128)}', space=vmem, size = 0x12000, scoped, tag = 'internal scratch']
  %s0 = inlined_call_operand.vmem [shape: f32[2,32], index: 0, kind: input, shape index: {}]
  %s1 = inlined_call_operand.vmem [shape: f32[2,32], index: 1, kind: input, shape index: {}]
  %s2 = inlined_call_operand.vmem [shape: bf16[32,8], index: 2, kind: input, shape index: {}]
  %s3 = inlined_call_operand.vmem [shape: bf16[8,32], index: 3, kind: input, shape index: {}]
  %s4 = inlined_call_operand.vmem [shape: f32[2,32], index: 4, kind: output, shape index: {}]
  %s5 = sld [smem:[#allocation0]]
  $region26: #{joint_conv_trans_block.27} parent=0
    _
  %s7 = ssub.s32 1, %s5
  %s8 = scalar_select 0, %s7, %s5
  // Predicated region
  $region2: #{joint_conv_trans_block.27} parent=0 // pred_check
    _
  $region3: #{joint_conv_trans_block.27} parent=0 // pred_check_branch
    %10 = sbr.rel (0) target = $region5
  $region4: #{joint_conv_trans_block.27} parent=0 // pred_region
    _
  $region5: #{joint_conv_trans_block.27} parent=0 // pred_fallthru
    _
  // Predicated region
  $region6: #{joint_conv_trans_block.27} parent=0 // pred_check
    _
  $region7: #{joint_conv_trans_block.27} parent=0 // pred_check_branch
    %12 = sbr.rel (0) target = $region9
  $region8: #{joint_conv_trans_block.27} parent=0 // pred_region
    _
  $region9: #{joint_conv_trans_block.27} parent=0 // pred_fallthru
    _
  // Predicated region
  $region10: #{joint_conv_trans_block.27} parent=0 // pred_check
    _
  $region11: #{joint_conv_trans_block.27} parent=0 // pred_check_branch
    %14 = sbr.rel (0) target = $region13
  $region12: #{joint_conv_trans_block.27} parent=0 // pred_region
    _
  $region13: #{joint_conv_trans_block.27} parent=0 // pred_fallthru
    _
  // Predicated region
  $region14: #{joint_conv_trans_block.27} parent=0 // pred_check
    _
  $region15: #{joint_conv_trans_block.27} parent=0 // pred_check_branch
    %16 = sbr.rel (0) target = $region17
  $region16: #{joint_conv_trans_block.27} parent=0 // pred_region
    _
  $region17: #{joint_conv_trans_block.27} parent=0 // pred_fallthru
    _
  %v18 = vld [vmem:[%s2] sm:$0xf]
  %v19 = vld [vmem:[%s2 + $0x4] sm:$0xf]
  %v20 = vld [vmem:[%s2 + $0x8] sm:$0xf]
  %v21 = vld [vmem:[%s2 + $0xc] sm:$0xf]
  %v22 = vld [vmem:[%s3] sm:$0xf]
  %v23 = vld [vmem:[%s0] sm:$0x3]
  %v24 = vpack.c.bf16 %v23, %v23
  %v29 = vunpack.c.l.b16 %v18
  %v30 = vunpack.c.l.b16 %v19
  %v31 = vunpack.c.l.b16 %v20
  %v32 = vunpack.c.l.b16 %v21
  %v33 = vpack.c.b16 %v30, %v29
  %v34 = vpack.c.b16 %v32, %v31
  %vm37 = vcmask 261120
  %v39 = vsel %vm37, %v24, 0
  %41 = vmatprep.subr.bf16.mxu0 0
  %42 = vmatpush1.bf16.msra.mxu0 %v33
  %43 = vmatprep.subr.bf16.mxu0 0
  %44 = vmatpush1.bf16.msra.mxu0 %v34
  %45 = vmatprep.subr.bf16.mxu0 0
  %46 = vmatpush1.bf16.msra.mxu0 0
  %47 = vmatprep.subr.bf16.mxu0 0
  %48 = vmatpush1.bf16.msra.mxu0 0
  %49 = vmatprep.subr.bf16.mxu0 0
  %50 = vmatpush1.bf16.msra.mxu0 0
  %51 = vmatprep.subr.bf16.mxu0 0
  %52 = vmatpush1.bf16.msra.mxu0 0
  %53 = vmatprep.subr.bf16.mxu0 0
  %54 = vmatpush1.bf16.msra.mxu0 0
  %55 = vmatprep.subr.bf16.mxu0 0
  %56 = vmatpush1.bf16.msra.mxu0 0
  %57 = vmatprep.subr.bf16.mxu0 0
  %58 = vmatpush1.bf16.msra.mxu0 0
  %59 = vmatprep.subr.bf16.mxu0 0
  %60 = vmatpush1.bf16.msra.mxu0 0
  %61 = vmatprep.subr.bf16.mxu0 0
  %62 = vmatpush1.bf16.msra.mxu0 0
  %63 = vmatprep.subr.bf16.mxu0 0
  %64 = vmatpush1.bf16.msra.mxu0 0
  %65 = vmatprep.subr.bf16.mxu0 0
  %66 = vmatpush1.bf16.msra.mxu0 0
  %67 = vmatprep.subr.bf16.mxu0 0
  %68 = vmatpush1.bf16.msra.mxu0 0
  %69 = vmatprep.subr.bf16.mxu0 0
  %70 = vmatpush1.bf16.msra.mxu0 0
  %71 = vmatprep.subr.bf16.mxu0 0
  %72 = vmatpush1.bf16.msra.mxu0 0
  %73 = vmatprep.mubr.bf16.mxu0 0
  %74 = vmatmul.mubr.bf16.gmra.mrb[0].mxu0 %v39
  %v75 = vpop.f32.mrb[0].mxu0
  %v76 = vadd.f32 0.0, %v75
  %v77 = vpop.f32.mrb[0].mxu0
  %v78 = vpop.f32.mrb[0].mxu0
  %v79 = vpop.f32.mrb[0].mxu0
  %80 = vdwg.mxu0
  %v81 = vmax.f32 %v76, 0.0
  %v82 = vpack.c.bf16 %v81, %v81
  %v83 = vld [vmem:[%s1] sm:$0x3]
  %v84 = vpack.c.bf16 %v83, %v83
  %v86 = vsel %vm37, %v84, 0
  %88 = vmatprep.subr.bf16.mxu0 0
  %89 = vmatpush1.bf16.msra.mxu0 %v33
  %90 = vmatprep.subr.bf16.mxu0 0
  %91 = vmatpush1.bf16.msra.mxu0 %v34
  %92 = vmatprep.subr.bf16.mxu0 0
  %93 = vmatpush1.bf16.msra.mxu0 0
  %94 = vmatprep.subr.bf16.mxu0 0
  %95 = vmatpush1.bf16.msra.mxu0 0
  %96 = vmatprep.subr.bf16.mxu0 0
  %97 = vmatpush1.bf16.msra.mxu0 0
  %98 = vmatprep.subr.bf16.mxu0 0
  %99 = vmatpush1.bf16.msra.mxu0 0
  %100 = vmatprep.subr.bf16.mxu0 0
  %101 = vmatpush1.bf16.msra.mxu0 0
  %102 = vmatprep.subr.bf16.mxu0 0
  %103 = vmatpush1.bf16.msra.mxu0 0
  %104 = vmatprep.subr.bf16.mxu0 0
  %105 = vmatpush1.bf16.msra.mxu0 0
  %106 = vmatprep.subr.bf16.mxu0 0
  %107 = vmatpush1.bf16.msra.mxu0 0
  %108 = vmatprep.subr.bf16.mxu0 0
  %109 = vmatpush1.bf16.msra.mxu0 0
  %110 = vmatprep.subr.bf16.mxu0 0
  %111 = vmatpush1.bf16.msra.mxu0 0
  %112 = vmatprep.subr.bf16.mxu0 0
  %113 = vmatpush1.bf16.msra.mxu0 0
  %114 = vmatprep.subr.bf16.mxu0 0
  %115 = vmatpush1.bf16.msra.mxu0 0
  %116 = vmatprep.subr.bf16.mxu0 0
  %117 = vmatpush1.bf16.msra.mxu0 0
  %118 = vmatprep.subr.bf16.mxu0 0
  %119 = vmatpush1.bf16.msra.mxu0 0
  %120 = vmatprep.mubr.bf16.mxu0 0
  %121 = vmatmul.mubr.bf16.gmra.mrb[0].mxu0 %v86
  %v122 = vpop.f32.mrb[0].mxu0
  %v123 = vadd.f32 0.0, %v122
  %v124 = vpop.f32.mrb[0].mxu0
  %v125 = vpop.f32.mrb[0].mxu0
  %v126 = vpop.f32.mrb[0].mxu0
  %127 = vdwg.mxu0
  %v128 = vmax.f32 %v123, 0.0
  %v129 = vpack.c.bf16 %v128, %v128
  %vm130 = vcmask 64512
  %v132 = vsel %vm130, %v129, 0
  %vm134 = vcmask 1043456
  %v136 = vsel %vm134, %v22, 0
  %138 = vmatprep.subr.bf16.mxu0 0
  %139 = vmatpush1.bf16.msra.mxu0 %v136
  %140 = vmatprep.subr.bf16.mxu0 0
  %141 = vmatpush1.bf16.msra.mxu0 0
  %142 = vmatprep.subr.bf16.mxu0 0
  %143 = vmatpush1.bf16.msra.mxu0 0
  %144 = vmatprep.subr.bf16.mxu0 0
  %145 = vmatpush1.bf16.msra.mxu0 0
  %146 = vmatprep.subr.bf16.mxu0 0
  %147 = vmatpush1.bf16.msra.mxu0 0
  %148 = vmatprep.subr.bf16.mxu0 0
  %149 = vmatpush1.bf16.msra.mxu0 0
  %150 = vmatprep.subr.bf16.mxu0 0
  %151 = vmatpush1.bf16.msra.mxu0 0
  %152 = vmatprep.subr.bf16.mxu0 0
  %153 = vmatpush1.bf16.msra.mxu0 0
  %154 = vmatprep.subr.bf16.mxu0 0
  %155 = vmatpush1.bf16.msra.mxu0 0
  %156 = vmatprep.subr.bf16.mxu0 0
  %157 = vmatpush1.bf16.msra.mxu0 0
  %158 = vmatprep.subr.bf16.mxu0 0
  %159 = vmatpush1.bf16.msra.mxu0 0
  %160 = vmatprep.subr.bf16.mxu0 0
  %161 = vmatpush1.bf16.msra.mxu0 0
  %162 = vmatprep.subr.bf16.mxu0 0
  %163 = vmatpush1.bf16.msra.mxu0 0
  %164 = vmatprep.subr.bf16.mxu0 0
  %165 = vmatpush1.bf16.msra.mxu0 0
  %166 = vmatprep.subr.bf16.mxu0 0
  %167 = vmatpush1.bf16.msra.mxu0 0
  %168 = vmatprep.subr.bf16.mxu0 0
  %169 = vmatpush1.bf16.msra.mxu0 0
  %170 = vmatprep.mubr.bf16.mxu0 0
  %171 = vmatmul.mubr.bf16.gmra.mrb[0].mxu0 %v132
  %v172 = vpop.f32.mrb[0].mxu0
  %v173 = vadd.f32 0.0, %v172
  %v174 = vpop.f32.mrb[0].mxu0
  %v175 = vpop.f32.mrb[0].mxu0
  %v176 = vpop.f32.mrb[0].mxu0
  %177 = vdwg.mxu0
  %v179 = vsel %vm130, %v82, 0
  %181 = vmatprep.subr.bf16.mxu0 0
  %182 = vmatpush1.bf16.msra.mxu0 %v136
  %183 = vmatprep.subr.bf16.mxu0 0
  %184 = vmatpush1.bf16.msra.mxu0 0
  %185 = vmatprep.subr.bf16.mxu0 0
  %186 = vmatpush1.bf16.msra.mxu0 0
  %187 = vmatprep.subr.bf16.mxu0 0
  %188 = vmatpush1.bf16.msra.mxu0 0
  %189 = vmatprep.subr.bf16.mxu0 0
  %190 = vmatpush1.bf16.msra.mxu0 0
  %191 = vmatprep.subr.bf16.mxu0 0
  %192 = vmatpush1.bf16.msra.mxu0 0
  %193 = vmatprep.subr.bf16.mxu0 0
  %194 = vmatpush1.bf16.msra.mxu0 0
  %195 = vmatprep.subr.bf16.mxu0 0
  %196 = vmatpush1.bf16.msra.mxu0 0
  %197 = vmatprep.subr.bf16.mxu0 0
  %198 = vmatpush1.bf16.msra.mxu0 0
  %199 = vmatprep.subr.bf16.mxu0 0
  %200 = vmatpush1.bf16.msra.mxu0 0
  %201 = vmatprep.subr.bf16.mxu0 0
  %202 = vmatpush1.bf16.msra.mxu0 0
  %203 = vmatprep.subr.bf16.mxu0 0
  %204 = vmatpush1.bf16.msra.mxu0 0
  %205 = vmatprep.subr.bf16.mxu0 0
  %206 = vmatpush1.bf16.msra.mxu0 0
  %207 = vmatprep.subr.bf16.mxu0 0
  %208 = vmatpush1.bf16.msra.mxu0 0
  %209 = vmatprep.subr.bf16.mxu0 0
  %210 = vmatpush1.bf16.msra.mxu0 0
  %211 = vmatprep.subr.bf16.mxu0 0
  %212 = vmatpush1.bf16.msra.mxu0 0
  %213 = vmatprep.mubr.bf16.mxu0 0
  %214 = vmatmul.mubr.bf16.gmra.mrb[0].mxu0 %v179
  %v215 = vpop.f32.mrb[0].mxu0
  %v216 = vadd.f32 %v173, %v215
  %v217 = vpop.f32.mrb[0].mxu0
  %v218 = vpop.f32.mrb[0].mxu0
  %v219 = vpop.f32.mrb[0].mxu0
  %220 = vdwg.mxu0
  %v221 = vsub.f32 0.0, %v216
  %v222 = vmul.f32 %v221, 1.442695
  %v223 = vpow.pop %v222
  %v224 = vadd.f32 %v223, 1.0
  %v225 = vrcp.pop %v224
  %vm226 = vcmask 254976
  %227 = vst.msk [vmem:[%s4] sm:$0x3] %vm226, %v225
  // Predicated region
  $region18: #{joint_conv_trans_block.27} parent=0 // pred_check
    _
  $region19: #{joint_conv_trans_block.27} parent=0 // pred_check_branch
    %229 = sbr.rel (0) target = $region21
  $region20: #{joint_conv_trans_block.27} parent=0 // pred_region
    _
  $region21: #{joint_conv_trans_block.27} parent=0 // pred_fallthru
    _
  // Predicated region
  $region22: #{joint_conv_trans_block.27} parent=0 // pred_check
    _
  $region23: #{joint_conv_trans_block.27} parent=0 // pred_check_branch
    %231 = sbr.rel (0) target = $region25
  $region24: #{joint_conv_trans_block.27} parent=0 // pred_region
    _
  $region25: #{joint_conv_trans_block.27} parent=0 // pred_fallthru
    _

// kernel: joint_conv_trans_block.29
$region0: #{joint_conv_trans_block.29}
  #allocation0 [shape = 'u32[]', space=smem, size = 0x4, offset = 0x4, fixed_abs, tag = 'smem constant byte address 0x4 - core index']
  #allocation1 [shape = 'u32[144,128]{1,0:T(1,128)}', space=vmem, size = 0x12000, scoped, tag = 'internal scratch']
  %s0 = inlined_call_operand.vmem [shape: f32[32,98], index: 0, kind: input, shape index: {}]
  %s1 = inlined_call_operand.vmem [shape: bf16[98,1], index: 1, kind: input, shape index: {}]
  %s2 = inlined_call_operand.vmem [shape: f32[32,1], index: 2, kind: output, shape index: {}]
  %s3 = sld [smem:[#allocation0]]
  $region18: #{joint_conv_trans_block.29} parent=0
    _
  %s5 = ssub.s32 1, %s3
  %s6 = scalar_select 0, %s5, %s3
  // Predicated region
  $region2: #{joint_conv_trans_block.29} parent=0 // pred_check
    _
  $region3: #{joint_conv_trans_block.29} parent=0 // pred_check_branch
    %8 = sbr.rel (0) target = $region5
  $region4: #{joint_conv_trans_block.29} parent=0 // pred_region
    _
  $region5: #{joint_conv_trans_block.29} parent=0 // pred_fallthru
    _
  // Predicated region
  $region6: #{joint_conv_trans_block.29} parent=0 // pred_check
    _
  $region7: #{joint_conv_trans_block.29} parent=0 // pred_check_branch
    %10 = sbr.rel (0) target = $region9
  $region8: #{joint_conv_trans_block.29} parent=0 // pred_region
    _
  $region9: #{joint_conv_trans_block.29} parent=0 // pred_fallthru
    _
  %v12 = vld [vmem:[%s0] sm:$0xff]
  %v13 = vld [vmem:[%s0 + $0x8] sm:$0xff]
  %v14 = vld [vmem:[%s0 + $0x10] sm:$0xff]
  %v15 = vld [vmem:[%s0 + $0x18] sm:$0xff]
  %v16 = vpack.c.bf16 %v13, %v12
  %v17 = vpack.c.bf16 %v15, %v14
  %v18 = vld [vmem:[%s1] sm:$0xf]
  %v19 = vld [vmem:[%s1 + $0x4] sm:$0xf]
  %v20 = vld [vmem:[%s1 + $0x8] sm:$0xf]
  %v21 = vld [vmem:[%s1 + $0xc] sm:$0xf]
  %v22 = vld [vmem:[%s1 + $0x10] sm:$0xf]
  %v23 = vld [vmem:[%s1 + $0x14] sm:$0xf]
  %v24 = vld [vmem:[%s1 + $0x18] sm:$0xf]
  %v25 = vld [vmem:[%s1 + $0x1c] sm:$0xf]
  %v26 = vld [vmem:[%s1 + $0x20] sm:$0xf]
  %v27 = vld [vmem:[%s1 + $0x24] sm:$0xf]
  %v28 = vld [vmem:[%s1 + $0x28] sm:$0xf]
  %v29 = vld [vmem:[%s1 + $0x2c] sm:$0xf]
  %v30 = vld [vmem:[%s1 + $0x30] sm:$0x1]
  %v44 = vunpack.c.l.b16 %v18
  %v45 = vunpack.c.l.b16 %v19
  %v46 = vunpack.c.l.b16 %v20
  %v47 = vunpack.c.l.b16 %v21
  %v48 = vunpack.c.l.b16 %v22
  %v49 = vunpack.c.l.b16 %v23
  %v50 = vunpack.c.l.b16 %v24
  %v51 = vunpack.c.l.b16 %v25
  %v52 = vunpack.c.l.b16 %v26
  %v53 = vunpack.c.l.b16 %v27
  %v54 = vunpack.c.l.b16 %v28
  %v55 = vunpack.c.l.b16 %v29
  %v56 = vunpack.c.l.b16 %v30
  %v57 = vpack.c.b16 %v45, %v44
  %v58 = vpack.c.b16 %v47, %v46
  %v59 = vpack.c.b16 %v49, %v48
  %v60 = vpack.c.b16 %v51, %v50
  %v61 = vpack.c.b16 %v53, %v52
  %v62 = vpack.c.b16 %v55, %v54
  %v63 = vpack.c.b16 %v56, %v56
  %vm70 = vcmask 801792
  %v72 = vsel %vm70, %v16, 0
  %v75 = vsel %vm70, %v17, 0
  %vm77 = vcmask 1040384
  %v79 = vsel %vm77, %v63, 0
  %81 = vmatprep.subr.bf16.mxu0 0
  %82 = vmatpush1.bf16.msra.mxu0 %v57
  %83 = vmatprep.subr.bf16.mxu0 0
  %84 = vmatpush1.bf16.msra.mxu0 %v58
  %85 = vmatprep.subr.bf16.mxu0 0
  %86 = vmatpush1.bf16.msra.mxu0 %v59
  %87 = vmatprep.subr.bf16.mxu0 0
  %88 = vmatpush1.bf16.msra.mxu0 %v60
  %89 = vmatprep.subr.bf16.mxu0 0
  %90 = vmatpush1.bf16.msra.mxu0 %v61
  %91 = vmatprep.subr.bf16.mxu0 0
  %92 = vmatpush1.bf16.msra.mxu0 %v62
  %93 = vmatprep.subr.bf16.mxu0 0
  %94 = vmatpush1.bf16.msra.mxu0 %v79
  %95 = vmatprep.subr.bf16.mxu0 0
  %96 = vmatpush1.bf16.msra.mxu0 0
  %97 = vmatprep.subr.bf16.mxu0 0
  %98 = vmatpush1.bf16.msra.mxu0 0
  %99 = vmatprep.subr.bf16.mxu0 0
  %100 = vmatpush1.bf16.msra.mxu0 0
  %101 = vmatprep.subr.bf16.mxu0 0
  %102 = vmatpush1.bf16.msra.mxu0 0
  %103 = vmatprep.subr.bf16.mxu0 0
  %104 = vmatpush1.bf16.msra.mxu0 0
  %105 = vmatprep.subr.bf16.mxu0 0
  %106 = vmatpush1.bf16.msra.mxu0 0
  %107 = vmatprep.subr.bf16.mxu0 0
  %108 = vmatpush1.bf16.msra.mxu0 0
  %109 = vmatprep.subr.bf16.mxu0 0
  %110 = vmatpush1.bf16.msra.mxu0 0
  %111 = vmatprep.subr.bf16.mxu0 0
  %112 = vmatpush1.bf16.msra.mxu0 0
  %113 = vmatprep.mubr.bf16.mxu0 0
  %114 = vmatmul.mubr.bf16.gmra.mrb[0].mxu0 %v72
  %v115 = vpop.f32.mrb[0].mxu0
  %v116 = vadd.f32 0.0, %v115
  %v117 = vpop.f32.mrb[0].mxu0
  %v118 = vpop.f32.mrb[0].mxu0
  %v119 = vadd.f32 0.0, %v118
  %v120 = vpop.f32.mrb[0].mxu0
  %121 = vmatprep.mubr.bf16.mxu0 0
  %122 = vmatmul.mubr.bf16.gmra.mrb[0].mxu0 %v75
  %v123 = vpop.f32.mrb[0].mxu0
  %v124 = vadd.f32 0.0, %v123
  %v125 = vpop.f32.mrb[0].mxu0
  %v126 = vpop.f32.mrb[0].mxu0
  %v127 = vadd.f32 0.0, %v126
  %v128 = vpop.f32.mrb[0].mxu0
  %129 = vdwg.mxu0
  %v130 = vsub.f32 0.0, %v116
  %v131 = vsub.f32 0.0, %v119
  %v132 = vsub.f32 0.0, %v124
  %v133 = vsub.f32 0.0, %v127
  %v134 = vmul.f32 %v130, 1.442695
  %v135 = vpow.pop %v134
  %v136 = vmul.f32 %v131, 1.442695
  %v137 = vpow.pop %v136
  %v138 = vmul.f32 %v132, 1.442695
  %v139 = vpow.pop %v138
  %v140 = vmul.f32 %v133, 1.442695
  %v141 = vpow.pop %v140
  %v142 = vadd.f32 %v135, 1.0
  %v143 = vadd.f32 %v137, 1.0
  %v144 = vadd.f32 %v139, 1.0
  %v145 = vadd.f32 %v141, 1.0
  %v146 = vrcp.pop %v142
  %v147 = vrcp.pop %v143
  %v148 = vrcp.pop %v144
  %v149 = vrcp.pop %v145
  %vm150 = vcmask 7168
  %151 = vst.msk [vmem:[%s2] sm:$0xff] %vm150, %v146
  %152 = vst.msk [vmem:[%s2 + $0x8] sm:$0xff] %vm150, %v147
  %153 = vst.msk [vmem:[%s2 + $0x10] sm:$0xff] %vm150, %v148
  %154 = vst.msk [vmem:[%s2 + $0x18] sm:$0xff] %vm150, %v149
  // Predicated region
  $region10: #{joint_conv_trans_block.29} parent=0 // pred_check
    _
  $region11: #{joint_conv_trans_block.29} parent=0 // pred_check_branch
    %156 = sbr.rel (0) target = $region13
  $region12: #{joint_conv_trans_block.29} parent=0 // pred_region
    _
  $region13: #{joint_conv_trans_block.29} parent=0 // pred_fallthru
    _
  // Predicated region
  $region14: #{joint_conv_trans_block.29} parent=0 // pred_check
    _
  $region15: #{joint_conv_trans_block.29} parent=0 // pred_check_branch
    %158 = sbr.rel (0) target = $region17
  $region16: #{joint_conv_trans_block.29} parent=0 // pred_region
    _
  $region17: #{joint_conv_trans_block.29} parent=0 // pred_fallthru
    _

// kernel: joint_conv_trans_block.30
$region0: #{joint_conv_trans_block.30}
  #allocation0 [shape = 'u32[]', space=smem, size = 0x4, offset = 0x4, fixed_abs, tag = 'smem constant byte address 0x4 - core index']
  #allocation1 [shape = 'u32[144,128]{1,0:T(1,128)}', space=vmem, size = 0x12000, scoped, tag = 'internal scratch']
  %s0 = inlined_call_operand.vmem [shape: f32[2,16,32], index: 0, kind: input, shape index: {}]
  %s1 = inlined_call_operand.vmem [shape: f32[2,16,1], index: 1, kind: input, shape index: {}]
  %s2 = inlined_call_operand.vmem [shape: f32[2,16,32], index: 2, kind: input, shape index: {}]
  %s3 = inlined_call_operand.vmem [shape: bf16[2,16,32], index: 3, kind: output, shape index: {}]
  %s4 = sld [smem:[#allocation0]]
  $region45: #{joint_conv_trans_block.30} parent=0
    _
  %s6 = ssub.s32 1, %s4
  %s7 = scalar_select 0, %s6, %s4
  loop: start=0, step=1, limit=4
  $region2: #{joint_conv_trans_block.30} parent=0 // loop_pre_header
    _
  $region3: #{joint_conv_trans_block.30} parent=0 // loop_header
    %s9 = sphi 0, %s13
    %p10 = scmp.ge.s32.totalorder %s9, 4
    %s19 = sphi 0, %s21
    %s22 = sphi 0, %s19
    %s23 = sphi 0, %s22
    %s39 = sphi 0, %s23
    %s45 = sphi 0, %s47
    %s48 = sphi 0, %s45
    %s49 = sphi 0, %s48
    %s65 = sphi 0, %s49
    %s71 = sphi 0, %s73
    %s74 = sphi 0, %s71
    %s75 = sphi 0, %s74
    %s91 = sphi 0, %s75
    %s97 = sphi 0, %s99
    %s100 = sphi 0, %s97
    %s101 = sphi 0, %s100
    %s117 = sphi 0, %s101
  $region4: #{joint_conv_trans_block.30} parent=0 // loop_header_branch
    %12 = sbr.rel (%p10) target = $region8
  $region5: #{joint_conv_trans_block.30} parent=0 // loop_body
    %s14 = ssub.s32 %s9, 1
    %s15 = ssub.s32 %s9, 2
    %s16 = sadd.s32 %s9, 1
    %s17 = ssub.s32 %s9, %s16
    %p18 = scmp.eq.s32.totalorder %s17, 0
    %s20 = sadd.s32 %s19, 1
    %s21 = scalar_select %p18, %s19, %s20
    %p24 = pneg %p18
    %p25 = scmp.eq.s32.totalorder %s9, 1
    %p26 = por %p24, %p25
    %p27 = scmp.ne.s32.totalorder %s19, %s22
    %p28 = scmp.eq.s32.totalorder %s9, 0
    %p29 = por %p27, %p28
    %p30 = scmp.ne.s32.totalorder %s19, %s22
    %p31 = scmp.eq.s32.totalorder %s14, 1
    %p32 = por %p30, %p31
    %p33 = scmp.ne.s32.totalorder %s22, %s23
    %p34 = scmp.eq.s32.totalorder %s14, 0
    %p35 = por %p33, %p34
    %p36 = scmp.ne.s32.totalorder %s22, %s23
    %p37 = scmp.eq.s32.totalorder %s15, 1
    %p38 = por %p36, %p37
    %p40 = scmp.ne.s32.totalorder %s23, %s39
    %p41 = scmp.eq.s32.totalorder %s15, 0
    %p42 = por %p40, %p41
    %s43 = ssub.s32 %s9, %s16
    %p44 = scmp.eq.s32.totalorder %s43, 0
    %s46 = sadd.s32 %s45, 1
    %s47 = scalar_select %p44, %s45, %s46
    %p50 = pneg %p44
    %p51 = scmp.eq.s32.totalorder %s9, 1
    %p52 = por %p50, %p51
    %p53 = scmp.ne.s32.totalorder %s45, %s48
    %p54 = scmp.eq.s32.totalorder %s9, 0
    %p55 = por %p53, %p54
    %p56 = scmp.ne.s32.totalorder %s45, %s48
    %p57 = scmp.eq.s32.totalorder %s14, 1
    %p58 = por %p56, %p57
    %p59 = scmp.ne.s32.totalorder %s48, %s49
    %p60 = scmp.eq.s32.totalorder %s14, 0
    %p61 = por %p59, %p60
    %p62 = scmp.ne.s32.totalorder %s48, %s49
    %p63 = scmp.eq.s32.totalorder %s15, 1
    %p64 = por %p62, %p63
    %p66 = scmp.ne.s32.totalorder %s49, %s65
    %p67 = scmp.eq.s32.totalorder %s15, 0
    %p68 = por %p66, %p67
    %s69 = ssub.s32 %s9, %s16
    %p70 = scmp.eq.s32.totalorder %s69, 0
    %s72 = sadd.s32 %s71, 1
    %s73 = scalar_select %p70, %s71, %s72
    %p76 = pneg %p70
    %p77 = scmp.eq.s32.totalorder %s9, 1
    %p78 = por %p76, %p77
    %p79 = scmp.ne.s32.totalorder %s71, %s74
    %p80 = scmp.eq.s32.totalorder %s9, 0
    %p81 = por %p79, %p80
    %p82 = scmp.ne.s32.totalorder %s71, %s74
    %p83 = scmp.eq.s32.totalorder %s14, 1
    %p84 = por %p82, %p83
    %p85 = scmp.ne.s32.totalorder %s74, %s75
    %p86 = scmp.eq.s32.totalorder %s14, 0
    %p87 = por %p85, %p86
    %p88 = scmp.ne.s32.totalorder %s74, %s75
    %p89 = scmp.eq.s32.totalorder %s15, 1
    %p90 = por %p88, %p89
    %p92 = scmp.ne.s32.totalorder %s75, %s91
    %p93 = scmp.eq.s32.totalorder %s15, 0
    %p94 = por %p92, %p93
    %s95 = ssub.s32 %s9, %s16
    %p96 = scmp.eq.s32.totalorder %s95, 0
    %s98 = sadd.s32 %s97, 1
    %s99 = scalar_select %p96, %s97, %s98
    %p102 = pneg %p96
    %p103 = scmp.eq.s32.totalorder %s9, 1
    %p104 = por %p102, %p103
    %p105 = scmp.ne.s32.totalorder %s97, %s100
    %p106 = scmp.eq.s32.totalorder %s9, 0
    %p107 = por %p105, %p106
    %p108 = scmp.ne.s32.totalorder %s97, %s100
    %p109 = scmp.eq.s32.totalorder %s14, 1
    %p110 = por %p108, %p109
    %p111 = scmp.ne.s32.totalorder %s100, %s101
    %p112 = scmp.eq.s32.totalorder %s14, 0
    %p113 = por %p111, %p112
    %p114 = scmp.ne.s32.totalorder %s100, %s101
    %p115 = scmp.eq.s32.totalorder %s15, 1
    %p116 = por %p114, %p115
    %p118 = scmp.ne.s32.totalorder %s101, %s117
    %p119 = scmp.eq.s32.totalorder %s15, 0
    %p120 = por %p118, %p119
    %p121 = scmp.le.s32.totalorder 1, %s9
    %p122 = scmp.lt.s32.totalorder %s9, 3
    %p123 = pnand %p121, %p122
    %p124 = pneg %p123
    // Predicated region
    $region9: #{joint_conv_trans_block.30} parent=5 // pred_check
      _
    $region10: #{joint_conv_trans_block.30} parent=5 // pred_check_branch
      %126 = sbr.rel (%p123) target = $region12
    $region11: #{joint_conv_trans_block.30} parent=5 // pred_region
      %s127 = ssub.s32 %s9, 1
    $region12: #{joint_conv_trans_block.30} parent=5 // pred_fallthru
      _
    %p128 = scmp.lt.s32.totalorder %s9, 2
    // Predicated region
    $region13: #{joint_conv_trans_block.30} parent=5 // pred_check
      %p129 = pneg %p128
    $region14: #{joint_conv_trans_block.30} parent=5 // pred_check_branch
      %131 = sbr.rel (%p129) target = $region16
    $region15: #{joint_conv_trans_block.30} parent=5 // pred_region
      // Predicated region
      $region17: #{joint_conv_trans_block.30} parent=15 // pred_check
        %p132 = pneg %p29
      $region18: #{joint_conv_trans_block.30} parent=15 // pred_check_branch
        %134 = sbr.rel (%p132) target = $region20
      $region19: #{joint_conv_trans_block.30} parent=15 // pred_region
        %p135 = scmp.lt.s32.totalorder %s9, 1
        %s136 = scalar_select %p135, %s9, 1
        %s137 = smul.addr %s136, 2
        %s138 = smul.addr %s137, 8
        %s139 = scalar_lea.vmem %s0, %s138
      $region20: #{joint_conv_trans_block.30} parent=15 // pred_fallthru
        _
      // Predicated region
      $region21: #{joint_conv_trans_block.30} parent=15 // pred_check
        %p140 = pneg %p55
      $region22: #{joint_conv_trans_block.30} parent=15 // pred_check_branch
        %142 = sbr.rel (%p140) target = $region24
      $region23: #{joint_conv_trans_block.30} parent=15 // pred_region
        %p143 = scmp.lt.s32.totalorder %s9, 1
        %s144 = scalar_select %p143, %s9, 1
        %s145 = smul.addr %s144, 2
        %s146 = smul.addr %s145, 8
        %s147 = scalar_lea.vmem %s1, %s146
      $region24: #{joint_conv_trans_block.30} parent=15 // pred_fallthru
        _
      // Predicated region
      $region25: #{joint_conv_trans_block.30} parent=15 // pred_check
        %p148 = pneg %p81
      $region26: #{joint_conv_trans_block.30} parent=15 // pred_check_branch
        %150 = sbr.rel (%p148) target = $region28
      $region27: #{joint_conv_trans_block.30} parent=15 // pred_region
        %p151 = scmp.lt.s32.totalorder %s9, 1
        %s152 = scalar_select %p151, %s9, 1
        %s153 = smul.addr %s152, 2
        %s154 = smul.addr %s153, 8
        %s155 = scalar_lea.vmem %s2, %s154
      $region28: #{joint_conv_trans_block.30} parent=15 // pred_fallthru
        _
    $region16: #{joint_conv_trans_block.30} parent=5 // pred_fallthru
      _
    %p156 = scmp.le.s32.totalorder 1, %s9
    %p157 = scmp.lt.s32.totalorder %s9, 3
    %p158 = pnand %p156, %p157
    %p159 = pneg %p158
    // Predicated region
    $region29: #{joint_conv_trans_block.30} parent=5 // pred_check
      _
    $region30: #{joint_conv_trans_block.30} parent=5 // pred_check_branch
      %161 = sbr.rel (%p158) target = $region32
    $region31: #{joint_conv_trans_block.30} parent=5 // pred_region
      %s162 = ssub.s32 %s9, 1
      %p163 = scmp.lt.s32.totalorder %s14, 1
      %s164 = scalar_select %p163, %s14, 1
      %s165 = smul.addr %s164, 2
      %s166 = smul.addr %s165, 8
      %s167 = scalar_lea.vmem %s0, %s166
      %p168 = pneg %p35
      %p169 = pneg %p32
      %p170 = scmp.lt.s32.totalorder %s14, 1
      %s171 = scalar_select %p170, %s14, 1
      %s172 = smul.addr %s171, 2
      %s173 = smul.addr %s172, 8
      %s174 = scalar_lea.vmem %s1, %s173
      %p175 = pneg %p61
      %p176 = pneg %p58
      %p177 = scmp.lt.s32.totalorder %s14, 1
      %s178 = scalar_select %p177, %s14, 1
      %s179 = smul.addr %s178, 2
      %s180 = smul.addr %s179, 8
      %s181 = scalar_lea.vmem %s2, %s180
      %p182 = pneg %p87
      %p183 = pneg %p84
      %p184 = pneg %p113
      %p185 = pneg %p110
      %p186 = scmp.lt.s32.totalorder %s14, 1
      %s187 = scalar_select %p186, %s14, 1
      %s188 = smul.addr %s187, 2
      %s189 = smul.addr %s188, 4
      %s190 = scalar_lea.vmem %s3, %s189
      %p191 = scmp.lt.s32.totalorder %s14, 1
      %s192 = scalar_select %p191, %s14, 1
      %s193 = smul.addr %s192, 2
      %s194 = smul.addr %s193, 8
      %s195 = scalar_lea.vmem %s0, %s194
      %p196 = scmp.lt.s32.totalorder %s14, 1
      %s197 = scalar_select %p196, %s14, 1
      %s198 = smul.addr %s197, 2
      %s199 = smul.addr %s198, 8
      %s200 = scalar_lea.vmem %s1, %s199
      %p201 = scmp.lt.s32.totalorder %s14, 1
      %s202 = scalar_select %p201, %s14, 1
      %s203 = smul.addr %s202, 2
      %s204 = smul.addr %s203, 8
      %s205 = scalar_lea.vmem %s2, %s204
      %p206 = scmp.lt.s32.totalorder %s14, 1
      %s207 = scalar_select %p206, %s14, 1
      %s208 = smul.addr %s207, 2
      %s209 = smul.addr %s208, 4
      %s210 = scalar_lea.vmem %s3, %s209
      %v211 = vld [vmem:[%s195] sm:$0xff]
      %v212 = vld [vmem:[%s195 + $0x8] sm:$0xff]
      %v213 = vld [vmem:[%s200] sm:$0xff]
      %v214 = vld [vmem:[%s200 + $0x8] sm:$0xff]
      %216 = vset.pattern.permute.xlu0 0
      %217 = vperm.xlu0 %216, %v213
      %v218 = vpop.permute.xlu0 %217
      %221 = vset.pattern.permute.xlu0 0
      %222 = vperm.xlu0 %221, %v214
      %v223 = vpop.permute.xlu0 %222
      %v225 = vmul.f32 %v211, %v218
      %v226 = vmul.f32 %v212, %v223
      %v227 = vld [vmem:[%s205] sm:$0xff]
      %v228 = vld [vmem:[%s205 + $0x8] sm:$0xff]
      %v229 = vadd.f32 %v225, %v227
      %v230 = vadd.f32 %v226, %v228
      %v231 = vmax.f32 %v229, 0.0
      %v232 = vmax.f32 %v230, 0.0
      %v233 = vpack.c.bf16 %v232, %v231
      %v235 = vunpack.c.l.b16 %v233
      %v236 = vunpack.c.h.b16 %v233
      %v237 = vpack.c.b16 %v235, %v235
      %v238 = vpack.c.b16 %v236, %v236
      %vm241 = vcmask 257024
      %242 = vst.msk [vmem:[%s210] sm:$0xf] %vm241, %v237
      %243 = vst.msk [vmem:[%s210 + $0x4] sm:$0xf] %vm241, %v238
      %p244 = scmp.lt.s32.totalorder %s14, 1
      %s245 = scalar_select %p244, %s14, 1
      %s246 = smul.addr %s245, 2
      %s247 = smul.addr %s246, 4
      %s248 = scalar_lea.vmem %s3, %s247
      // Predicated region
      $region33: #{joint_conv_trans_block.30} parent=31 // pred_check
        %p249 = pneg %p110
      $region34: #{joint_conv_trans_block.30} parent=31 // pred_check_branch
        %251 = sbr.rel (%p249) target = $region36
      $region35: #{joint_conv_trans_block.30} parent=31 // pred_region
        _
      $region36: #{joint_conv_trans_block.30} parent=31 // pred_fallthru
        _
    $region32: #{joint_conv_trans_block.30} parent=5 // pred_fallthru
      _
    %p252 = scmp.le.s32.totalorder 2, %s9
    // Predicated region
    $region37: #{joint_conv_trans_block.30} parent=5 // pred_check
      %p253 = pneg %p252
    $region38: #{joint_conv_trans_block.30} parent=5 // pred_check_branch
      %255 = sbr.rel (%p253) target = $region40
    $region39: #{joint_conv_trans_block.30} parent=5 // pred_region
      %s256 = ssub.s32 %s9, 2
      // Predicated region
      $region41: #{joint_conv_trans_block.30} parent=39 // pred_check
        %p257 = pneg %p116
      $region42: #{joint_conv_trans_block.30} parent=39 // pred_check_branch
        %259 = sbr.rel (%p257) target = $region44
      $region43: #{joint_conv_trans_block.30} parent=39 // pred_region
        %p260 = scmp.lt.s32.totalorder %s15, 1
        %s261 = scalar_select %p260, %s15, 1
        %s262 = smul.addr %s261, 2
        %s263 = smul.addr %s262, 4
        %s264 = scalar_lea.vmem %s3, %s263
      $region44: #{joint_conv_trans_block.30} parent=39 // pred_fallthru
        _
    $region40: #{joint_conv_trans_block.30} parent=5 // pred_fallthru
      _
  $region6: #{joint_conv_trans_block.30} parent=0 // loop_footer
    %s13 = sadd.s32 1, %s9
  $region7: #{joint_conv_trans_block.30} parent=0 // loop_footer_branch
    %8 = sbr.rel target = $region3
  $region8: #{joint_conv_trans_block.30} parent=0 // loop_exit
    _

// kernel: joint_conv_trans_block.31
$region0: #{joint_conv_trans_block.31}
  #allocation0 [shape = 'u32[]', space=smem, size = 0x4, offset = 0x4, fixed_abs, tag = 'smem constant byte address 0x4 - core index']
  #allocation1 [shape = 'u32[144,128]{1,0:T(1,128)}', space=vmem, size = 0x12000, scoped, tag = 'internal scratch']
  %s0 = inlined_call_operand.vmem [shape: f32[2,16,32], index: 0, kind: input, shape index: {}]
  %s1 = inlined_call_operand.vmem [shape: bf16[32,96], index: 1, kind: input, shape index: {}]
  %s2 = inlined_call_operand.vmem [shape: f32[1,96], index: 2, kind: input, shape index: {}]
  %s3 = inlined_call_operand.vmem [shape: bf16[2,16,32], index: 3, kind: output, shape index: {}]
  %s4 = sld [smem:[#allocation0]]
  $region45: #{joint_conv_trans_block.31} parent=0
    _
  %s6 = ssub.s32 1, %s4
  %s7 = scalar_select 0, %s6, %s4
  loop: start=0, step=1, limit=4
  $region2: #{joint_conv_trans_block.31} parent=0 // loop_pre_header
    _
  $region3: #{joint_conv_trans_block.31} parent=0 // loop_header
    %s9 = sphi 0, %s13
    %p10 = scmp.ge.s32.totalorder %s9, 4
    %s19 = sphi 0, %s21
    %s22 = sphi 0, %s19
    %s23 = sphi 0, %s22
    %s39 = sphi 0, %s23
    %s43 = sphi 0, %s43
    %s45 = sphi 0, %s43
    %s46 = sphi 0, %s45
    %s60 = sphi 0, %s46
    %s64 = sphi 0, %s64
    %s66 = sphi 0, %s64
    %s67 = sphi 0, %s66
    %s81 = sphi 0, %s67
    %s87 = sphi 0, %s89
    %s90 = sphi 0, %s87
    %s91 = sphi 0, %s90
    %s107 = sphi 0, %s91
  $region4: #{joint_conv_trans_block.31} parent=0 // loop_header_branch
    %12 = sbr.rel (%p10) target = $region8
  $region5: #{joint_conv_trans_block.31} parent=0 // loop_body
    %s14 = ssub.s32 %s9, 1
    %s15 = ssub.s32 %s9, 2
    %s16 = sadd.s32 %s9, 1
    %s17 = ssub.s32 %s9, %s16
    %p18 = scmp.eq.s32.totalorder %s17, 0
    %s20 = sadd.s32 %s19, 1
    %s21 = scalar_select %p18, %s19, %s20
    %p24 = pneg %p18
    %p25 = scmp.eq.s32.totalorder %s9, 1
    %p26 = por %p24, %p25
    %p27 = scmp.ne.s32.totalorder %s19, %s22
    %p28 = scmp.eq.s32.totalorder %s9, 0
    %p29 = por %p27, %p28
    %p30 = scmp.ne.s32.totalorder %s19, %s22
    %p31 = scmp.eq.s32.totalorder %s14, 1
    %p32 = por %p30, %p31
    %p33 = scmp.ne.s32.totalorder %s22, %s23
    %p34 = scmp.eq.s32.totalorder %s14, 0
    %p35 = por %p33, %p34
    %p36 = scmp.ne.s32.totalorder %s22, %s23
    %p37 = scmp.eq.s32.totalorder %s15, 1
    %p38 = por %p36, %p37
    %p40 = scmp.ne.s32.totalorder %s23, %s39
    %p41 = scmp.eq.s32.totalorder %s15, 0
    %p42 = por %p40, %p41
    %s44 = sadd.s32 %s43, 1
    %p47 = scmp.eq.s32.totalorder %s9, 1
    %p48 = scmp.ne.s32.totalorder %s43, %s45
    %p49 = scmp.eq.s32.totalorder %s9, 0
    %p50 = por %p48, %p49
    %p51 = scmp.ne.s32.totalorder %s43, %s45
    %p52 = scmp.eq.s32.totalorder %s14, 1
    %p53 = por %p51, %p52
    %p54 = scmp.ne.s32.totalorder %s45, %s46
    %p55 = scmp.eq.s32.totalorder %s14, 0
    %p56 = por %p54, %p55
    %p57 = scmp.ne.s32.totalorder %s45, %s46
    %p58 = scmp.eq.s32.totalorder %s15, 1
    %p59 = por %p57, %p58
    %p61 = scmp.ne.s32.totalorder %s46, %s60
    %p62 = scmp.eq.s32.totalorder %s15, 0
    %p63 = por %p61, %p62
    %s65 = sadd.s32 %s64, 1
    %p68 = scmp.eq.s32.totalorder %s9, 1
    %p69 = scmp.ne.s32.totalorder %s64, %s66
    %p70 = scmp.eq.s32.totalorder %s9, 0
    %p71 = por %p69, %p70
    %p72 = scmp.ne.s32.totalorder %s64, %s66
    %p73 = scmp.eq.s32.totalorder %s14, 1
    %p74 = por %p72, %p73
    %p75 = scmp.ne.s32.totalorder %s66, %s67
    %p76 = scmp.eq.s32.totalorder %s14, 0
    %p77 = por %p75, %p76
    %p78 = scmp.ne.s32.totalorder %s66, %s67
    %p79 = scmp.eq.s32.totalorder %s15, 1
    %p80 = por %p78, %p79
    %p82 = scmp.ne.s32.totalorder %s67, %s81
    %p83 = scmp.eq.s32.totalorder %s15, 0
    %p84 = por %p82, %p83
    %s85 = ssub.s32 %s9, %s16
    %p86 = scmp.eq.s32.totalorder %s85, 0
    %s88 = sadd.s32 %s87, 1
    %s89 = scalar_select %p86, %s87, %s88
    %p92 = pneg %p86
    %p93 = scmp.eq.s32.totalorder %s9, 1
    %p94 = por %p92, %p93
    %p95 = scmp.ne.s32.totalorder %s87, %s90
    %p96 = scmp.eq.s32.totalorder %s9, 0
    %p97 = por %p95, %p96
    %p98 = scmp.ne.s32.totalorder %s87, %s90
    %p99 = scmp.eq.s32.totalorder %s14, 1
    %p100 = por %p98, %p99
    %p101 = scmp.ne.s32.totalorder %s90, %s91
    %p102 = scmp.eq.s32.totalorder %s14, 0
    %p103 = por %p101, %p102
    %p104 = scmp.ne.s32.totalorder %s90, %s91
    %p105 = scmp.eq.s32.totalorder %s15, 1
    %p106 = por %p104, %p105
    %p108 = scmp.ne.s32.totalorder %s91, %s107
    %p109 = scmp.eq.s32.totalorder %s15, 0
    %p110 = por %p108, %p109
    %p111 = scmp.le.s32.totalorder 1, %s9
    %p112 = scmp.lt.s32.totalorder %s9, 3
    %p113 = pnand %p111, %p112
    %p114 = pneg %p113
    // Predicated region
    $region9: #{joint_conv_trans_block.31} parent=5 // pred_check
      _
    $region10: #{joint_conv_trans_block.31} parent=5 // pred_check_branch
      %116 = sbr.rel (%p113) target = $region12
    $region11: #{joint_conv_trans_block.31} parent=5 // pred_region
      %s117 = ssub.s32 %s9, 1
      // Predicated region
      $region13: #{joint_conv_trans_block.31} parent=11 // pred_check
        %p118 = pneg %p56
      $region14: #{joint_conv_trans_block.31} parent=11 // pred_check_branch
        %120 = sbr.rel (%p118) target = $region16
      $region15: #{joint_conv_trans_block.31} parent=11 // pred_region
        _
      $region16: #{joint_conv_trans_block.31} parent=11 // pred_fallthru
        _
      // Predicated region
      $region17: #{joint_conv_trans_block.31} parent=11 // pred_check
        %p121 = pneg %p77
      $region18: #{joint_conv_trans_block.31} parent=11 // pred_check_branch
        %123 = sbr.rel (%p121) target = $region20
      $region19: #{joint_conv_trans_block.31} parent=11 // pred_region
        _
      $region20: #{joint_conv_trans_block.31} parent=11 // pred_fallthru
        _
    $region12: #{joint_conv_trans_block.31} parent=5 // pred_fallthru
      _
    %p124 = scmp.lt.s32.totalorder %s9, 2
    // Predicated region
    $region21: #{joint_conv_trans_block.31} parent=5 // pred_check
      %p125 = pneg %p124
    $region22: #{joint_conv_trans_block.31} parent=5 // pred_check_branch
      %127 = sbr.rel (%p125) target = $region24
    $region23: #{joint_conv_trans_block.31} parent=5 // pred_region
      // Predicated region
      $region25: #{joint_conv_trans_block.31} parent=23 // pred_check
        %p128 = pneg %p29
      $region26: #{joint_conv_trans_block.31} parent=23 // pred_check_branch
        %130 = sbr.rel (%p128) target = $region28
      $region27: #{joint_conv_trans_block.31} parent=23 // pred_region
        %p131 = scmp.lt.s32.totalorder %s9, 1
        %s132 = scalar_select %p131, %s9, 1
        %s133 = smul.addr %s132, 2
        %s134 = smul.addr %s133, 8
        %s135 = scalar_lea.vmem %s0, %s134
      $region28: #{joint_conv_trans_block.31} parent=23 // pred_fallthru
        _
    $region24: #{joint_conv_trans_block.31} parent=5 // pred_fallthru
      _
    %p136 = scmp.le.s32.totalorder 1, %s9
    %p137 = scmp.lt.s32.totalorder %s9, 3
    %p138 = pnand %p136, %p137
    %p139 = pneg %p138
    // Predicated region
    $region29: #{joint_conv_trans_block.31} parent=5 // pred_check
      _
    $region30: #{joint_conv_trans_block.31} parent=5 // pred_check_branch
      %141 = sbr.rel (%p138) target = $region32
    $region31: #{joint_conv_trans_block.31} parent=5 // pred_region
      %s142 = ssub.s32 %s9, 1
      %p143 = scmp.lt.s32.totalorder %s14, 1
      %s144 = scalar_select %p143, %s14, 1
      %s145 = smul.addr %s144, 2
      %s146 = smul.addr %s145, 8
      %s147 = scalar_lea.vmem %s0, %s146
      %p148 = pneg %p35
      %p149 = pneg %p32
      %p150 = pneg %p56
      %p151 = pneg %p53
      %p152 = pneg %p77
      %p153 = pneg %p74
      %p154 = pneg %p103
      %p155 = pneg %p100
      %p156 = scmp.lt.s32.totalorder %s14, 1
      %s157 = scalar_select %p156, %s14, 1
      %s158 = smul.addr %s157, 2
      %s159 = smul.addr %s158, 4
      %s160 = scalar_lea.vmem %s3, %s159
      %p161 = scmp.lt.s32.totalorder %s14, 1
      %s162 = scalar_select %p161, %s14, 1
      %s163 = smul.addr %s162, 2
      %s164 = smul.addr %s163, 8
      %s165 = scalar_lea.vmem %s0, %s164
      %p166 = scmp.lt.s32.totalorder %s14, 1
      %s167 = scalar_select %p166, %s14, 1
      %s168 = smul.addr %s167, 2
      %s169 = smul.addr %s168, 4
      %s170 = scalar_lea.vmem %s3, %s169
      %v172 = vld [vmem:[%s165] sm:$0xff]
      %v173 = vld [vmem:[%s165 + $0x8] sm:$0xff]
      %v174 = vpack.c.bf16 %v173, %v172
      %v175 = vld [vmem:[%s1] sm:$0xf]
      %v176 = vld [vmem:[%s1 + $0x4] sm:$0xf]
      %v177 = vld [vmem:[%s1 + $0x8] sm:$0xf]
      %v178 = vld [vmem:[%s1 + $0xc] sm:$0xf]
      %v179 = vld [vmem:[%s2] sm:$0x1]
      %v181 = vlaneseq
      %v182 = vshrl.u32 %v181, 7
      %v183 = vsub.s32 0, %v182
      %v184 = vrot.slane %v179, %v183
      %v190 = vunpack.c.l.b16 %v175
      %v191 = vunpack.c.l.b16 %v176
      %v192 = vunpack.c.l.b16 %v177
      %v193 = vunpack.c.l.b16 %v178
      %v194 = vpack.c.b16 %v191, %v190
      %v195 = vpack.c.b16 %v193, %v192
      %vm198 = vcmask 261120
      %v200 = vsel %vm198, %v174, 0
      %202 = vmatprep.subr.bf16.mxu0 0
      %203 = vmatpush1.bf16.msra.mxu0 %v194
      %204 = vmatprep.subr.bf16.mxu0 0
      %205 = vmatpush1.bf16.msra.mxu0 %v195
      %206 = vmatprep.subr.bf16.mxu0 0
      %207 = vmatpush1.bf16.msra.mxu0 0
      %208 = vmatprep.subr.bf16.mxu0 0
      %209 = vmatpush1.bf16.msra.mxu0 0
      %210 = vmatprep.subr.bf16.mxu0 0
      %211 = vmatpush1.bf16.msra.mxu0 0
      %212 = vmatprep.subr.bf16.mxu0 0
      %213 = vmatpush1.bf16.msra.mxu0 0
      %214 = vmatprep.subr.bf16.mxu0 0
      %215 = vmatpush1.bf16.msra.mxu0 0
      %216 = vmatprep.subr.bf16.mxu0 0
      %217 = vmatpush1.bf16.msra.mxu0 0
      %218 = vmatprep.subr.bf16.mxu0 0
      %219 = vmatpush1.bf16.msra.mxu0 0
      %220 = vmatprep.subr.bf16.mxu0 0
      %221 = vmatpush1.bf16.msra.mxu0 0
      %222 = vmatprep.subr.bf16.mxu0 0
      %223 = vmatpush1.bf16.msra.mxu0 0
      %224 = vmatprep.subr.bf16.mxu0 0
      %225 = vmatpush1.bf16.msra.mxu0 0
      %226 = vmatprep.subr.bf16.mxu0 0
      %227 = vmatpush1.bf16.msra.mxu0 0
      %228 = vmatprep.subr.bf16.mxu0 0
      %229 = vmatpush1.bf16.msra.mxu0 0
      %230 = vmatprep.subr.bf16.mxu0 0
      %231 = vmatpush1.bf16.msra.mxu0 0
      %232 = vmatprep.subr.bf16.mxu0 0
      %233 = vmatpush1.bf16.msra.mxu0 0
      %234 = vmatprep.mubr.bf16.mxu0 0
      %235 = vmatmul.mubr.bf16.gmra.mrb[0].mxu0 %v200
      %v236 = vpop.f32.mrb[0].mxu0
      %v237 = vadd.f32 %v184, %v236
      %v238 = vpop.f32.mrb[0].mxu0
      %v239 = vpop.f32.mrb[0].mxu0
      %v240 = vadd.f32 %v184, %v239
      %v241 = vpop.f32.mrb[0].mxu0
      %242 = vdwg.mxu0
      %v243 = vpack.c.bf16 %v240, %v237
      %245 = vrot.lane.b32.xlu0 %v243, 96
      %v246 = vpop.permute.xlu0 %245
      %vm247 = vcmask 31744
      %v249 = vsel %vm247, %v243, 0
      %v252 = vsel %vm247, %v246, 0
      %254 = vmatprep.subr.bf16.mxu0 0
      %255 = vmatpush1.bf16.xpose.msra.mxu0 %v252
      %256 = vmatprep.subr.bf16.mxu0 0
      %257 = vmatpush1.bf16.xpose.msra.mxu0 0
      %258 = vmatprep.subr.bf16.mxu0 0
      %259 = vmatpush1.bf16.xpose.msra.mxu0 0
      %260 = vmatprep.subr.bf16.mxu0 0
      %261 = vmatpush1.bf16.xpose.msra.mxu0 0
      %262 = vmatprep.subr.bf16.mxu0 0
      %263 = vmatpush1.bf16.xpose.msra.mxu0 0
      %264 = vmatprep.subr.bf16.mxu0 0
      %265 = vmatpush1.bf16.xpose.msra.mxu0 0
      %266 = vmatprep.subr.bf16.mxu0 0
      %267 = vmatpush1.bf16.xpose.msra.mxu0 0
      %268 = vmatprep.subr.bf16.mxu0 0
      %269 = vmatpush1.bf16.xpose.msra.mxu0 0
      %270 = vmatprep.subr.bf16.mxu0 0
      %271 = vmatpush1.bf16.xpose.msra.mxu0 0
      %272 = vmatprep.subr.bf16.mxu0 0
      %273 = vmatpush1.bf16.xpose.msra.mxu0 0
      %274 = vmatprep.subr.bf16.mxu0 0
      %275 = vmatpush1.bf16.xpose.msra.mxu0 0
      %276 = vmatprep.subr.bf16.mxu0 0
      %277 = vmatpush1.bf16.xpose.msra.mxu0 0
      %278 = vmatprep.subr.bf16.mxu0 0
      %279 = vmatpush1.bf16.xpose.msra.mxu0 0
      %280 = vmatprep.subr.bf16.mxu0 0
      %281 = vmatpush1.bf16.xpose.msra.mxu0 0
      %282 = vmatprep.subr.bf16.mxu0 0
      %283 = vmatpush1.bf16.xpose.msra.mxu0 0
      %284 = vmatprep.subr.bf16.mxu0 0
      %285 = vmatpush1.bf16.xpose.msra.mxu0 0
      %286 = vmatprep.mubr.bf16.mxu0 0
      %287 = vmatmul.mubr.bf16.gmra.mrb[0].mxu0 %v249
      %v288 = vpop.f32.mrb[0].mxu0
      %v289 = vadd.f32 0.0, %v288
      %v290 = vpop.f32.mrb[0].mxu0
      %v291 = vpop.f32.mrb[0].mxu0
      %v292 = vadd.f32 0.0, %v291
      %v293 = vpop.f32.mrb[0].mxu0
      %294 = vdwg.mxu0
      %v295 = vmul.f32 %v289, 0.5
      %v296 = vmul.f32 %v292, 0.5
      %vm297 = vcmask 130048
      %v298 = vsel %vm297, %v295, -inf
      %299 = vmax.xlane.f32.xlu0 %v298
      %v300 = vpop.xlane.xlu0 %299
      %v301 = vsel %vm297, %v296, -inf
      %302 = vmax.xlane.f32.xlu0 %v301
      %v303 = vpop.xlane.xlu0 %302
      %v304 = vsub.f32 -inf, %v300
      %v305 = vsub.f32 -inf, %v303
      %v306 = vmul.f32 %v304, 1.442695
      %v307 = vpow.pop %v306
      %v308 = vmul.f32 %v305, 1.442695
      %v309 = vpow.pop %v308
      %v310 = vsub.f32 %v295, %v300
      %v311 = vsub.f32 %v296, %v303
      %v312 = vmul.f32 %v310, 1.442695
      %v313 = vpow.pop %v312
      %v314 = vmul.f32 %v311, 1.442695
      %v315 = vpow.pop %v314
      %v316 = vmul.f32 %v307, 0.0
      %v317 = vmul.f32 %v309, 0.0
      %v318 = vsel %vm297, %v313, 0.0
      %319 = vadd.xlane.f32.xlu0 %v318
      %v320 = vpop.xlane.xlu0 %319
      %v321 = vsel %vm297, %v315, 0.0
      %322 = vadd.xlane.f32.xlu0 %v321
      %v323 = vpop.xlane.xlu0 %322
      %v324 = vadd.f32 %v316, %v320
      %v325 = vadd.f32 %v317, %v323
      %v326 = vpack.c.bf16 %v315, %v313
      %327 = vrot.lane.b32.xlu0 %v243, 64
      %v328 = vpop.permute.xlu0 %327
      %v331 = vsel %vm297, %v326, 0
      %333 = vmatprep.subr.bf16.mxu0 0
      %334 = vmatpush1.bf16.msra.mxu0 %v328
      %335 = vmatprep.subr.bf16.mxu0 0
      %336 = vmatpush1.bf16.msra.mxu0 0
      %337 = vmatprep.subr.bf16.mxu0 0
      %338 = vmatpush1.bf16.msra.mxu0 0
      %339 = vmatprep.subr.bf16.mxu0 0
      %340 = vmatpush1.bf16.msra.mxu0 0
      %341 = vmatprep.subr.bf16.mxu0 0
      %342 = vmatpush1.bf16.msra.mxu0 0
      %343 = vmatprep.subr.bf16.mxu0 0
      %344 = vmatpush1.bf16.msra.mxu0 0
      %345 = vmatprep.subr.bf16.mxu0 0
      %346 = vmatpush1.bf16.msra.mxu0 0
      %347 = vmatprep.subr.bf16.mxu0 0
      %348 = vmatpush1.bf16.msra.mxu0 0
      %349 = vmatprep.subr.bf16.mxu0 0
      %350 = vmatpush1.bf16.msra.mxu0 0
      %351 = vmatprep.subr.bf16.mxu0 0
      %352 = vmatpush1.bf16.msra.mxu0 0
      %353 = vmatprep.subr.bf16.mxu0 0
      %354 = vmatpush1.bf16.msra.mxu0 0
      %355 = vmatprep.subr.bf16.mxu0 0
      %356 = vmatpush1.bf16.msra.mxu0 0
      %357 = vmatprep.subr.bf16.mxu0 0
      %358 = vmatpush1.bf16.msra.mxu0 0
      %359 = vmatprep.subr.bf16.mxu0 0
      %360 = vmatpush1.bf16.msra.mxu0 0
      %361 = vmatprep.subr.bf16.mxu0 0
      %362 = vmatpush1.bf16.msra.mxu0 0
      %363 = vmatprep.subr.bf16.mxu0 0
      %364 = vmatpush1.bf16.msra.mxu0 0
      %365 = vmatprep.mubr.bf16.mxu0 0
      %366 = vmatmul.mubr.bf16.gmra.mrb[0].mxu0 %v331
      %v367 = vpop.f32.mrb[0].mxu0
      %v368 = vadd.f32 0.0, %v367
      %v369 = vpop.f32.mrb[0].mxu0
      %v370 = vpop.f32.mrb[0].mxu0
      %v371 = vadd.f32 0.0, %v370
      %v372 = vpop.f32.mrb[0].mxu0
      %373 = vdwg.mxu0
      %v374 = vadd.f32 %v316, %v368
      %v375 = vadd.f32 %v317, %v371
      %v376 = vrcp.pop %v324
      %v377 = vrcp.pop %v325
      %v378 = vmul.f32 %v374, %v376
      %v379 = vmul.f32 %v375, %v377
      %380 = vrot.lane.b32.xlu0 %v243, 124
      %v381 = vpop.permute.xlu0 %380
      %382 = vrot.lane.b32.xlu0 %v243, 92
      %v383 = vpop.permute.xlu0 %382
      %v385 = vsel %vm247, %v381, 0
      %v388 = vsel %vm247, %v383, 0
      %390 = vmatprep.subr.bf16.mxu0 0
      %391 = vmatpush1.bf16.xpose.msra.mxu0 %v388
      %392 = vmatprep.subr.bf16.mxu0 0
      %393 = vmatpush1.bf16.xpose.msra.mxu0 0
      %394 = vmatprep.subr.bf16.mxu0 0
      %395 = vmatpush1.bf16.xpose.msra.mxu0 0
      %396 = vmatprep.subr.bf16.mxu0 0
      %397 = vmatpush1.bf16.xpose.msra.mxu0 0
      %398 = vmatprep.subr.bf16.mxu0 0
      %399 = vmatpush1.bf16.xpose.msra.mxu0 0
      %400 = vmatprep.subr.bf16.mxu0 0
      %401 = vmatpush1.bf16.xpose.msra.mxu0 0
      %402 = vmatprep.subr.bf16.mxu0 0
      %403 = vmatpush1.bf16.xpose.msra.mxu0 0
      %404 = vmatprep.subr.bf16.mxu0 0
      %405 = vmatpush1.bf16.xpose.msra.mxu0 0
      %406 = vmatprep.subr.bf16.mxu0 0
      %407 = vmatpush1.bf16.xpose.msra.mxu0 0
      %408 = vmatprep.subr.bf16.mxu0 0
      %409 = vmatpush1.bf16.xpose.msra.mxu0 0
      %410 = vmatprep.subr.bf16.mxu0 0
      %411 = vmatpush1.bf16.xpose.msra.mxu0 0
      %412 = vmatprep.subr.bf16.mxu0 0
      %413 = vmatpush1.bf16.xpose.msra.mxu0 0
      %414 = vmatprep.subr.bf16.mxu0 0
      %415 = vmatpush1.bf16.xpose.msra.mxu0 0
      %416 = vmatprep.subr.bf16.mxu0 0
      %417 = vmatpush1.bf16.xpose.msra.mxu0 0
      %418 = vmatprep.subr.bf16.mxu0 0
      %419 = vmatpush1.bf16.xpose.msra.mxu0 0
      %420 = vmatprep.subr.bf16.mxu0 0
      %421 = vmatpush1.bf16.xpose.msra.mxu0 0
      %422 = vmatprep.mubr.bf16.mxu0 0
      %423 = vmatmul.mubr.bf16.gmra.mrb[0].mxu0 %v385
      %v424 = vpop.f32.mrb[0].mxu0
      %v425 = vadd.f32 0.0, %v424
      %v426 = vpop.f32.mrb[0].mxu0
      %v427 = vpop.f32.mrb[0].mxu0
      %v428 = vadd.f32 0.0, %v427
      %v429 = vpop.f32.mrb[0].mxu0
      %430 = vdwg.mxu0
      %v431 = vmul.f32 %v425, 0.5
      %v432 = vmul.f32 %v428, 0.5
      %v433 = vsel %vm297, %v431, -inf
      %434 = vmax.xlane.f32.xlu0 %v433
      %v435 = vpop.xlane.xlu0 %434
      %v436 = vsel %vm297, %v432, -inf
      %437 = vmax.xlane.f32.xlu0 %v436
      %v438 = vpop.xlane.xlu0 %437
      %v439 = vsub.f32 -inf, %v435
      %v440 = vsub.f32 -inf, %v438
      %v441 = vmul.f32 %v439, 1.442695
      %v442 = vpow.pop %v441
      %v443 = vmul.f32 %v440, 1.442695
      %v444 = vpow.pop %v443
      %v445 = vsub.f32 %v431, %v435
      %v446 = vsub.f32 %v432, %v438
      %v447 = vmul.f32 %v445, 1.442695
      %v448 = vpow.pop %v447
      %v449 = vmul.f32 %v446, 1.442695
      %v450 = vpow.pop %v449
      %v451 = vmul.f32 %v442, 0.0
      %v452 = vmul.f32 %v444, 0.0
      %v453 = vsel %vm297, %v448, 0.0
      %454 = vadd.xlane.f32.xlu0 %v453
      %v455 = vpop.xlane.xlu0 %454
      %v456 = vsel %vm297, %v450, 0.0
      %457 = vadd.xlane.f32.xlu0 %v456
      %v458 = vpop.xlane.xlu0 %457
      %v459 = vadd.f32 %v451, %v455
      %v460 = vadd.f32 %v452, %v458
      %v461 = vpack.c.bf16 %v450, %v448
      %462 = vrot.lane.b32.xlu0 %v243, 60
      %v463 = vpop.permute.xlu0 %462
      %v466 = vsel %vm297, %v461, 0
      %468 = vmatprep.subr.bf16.mxu0 0
      %469 = vmatpush1.bf16.msra.mxu0 %v463
      %470 = vmatprep.subr.bf16.mxu0 0
      %471 = vmatpush1.bf16.msra.mxu0 0
      %472 = vmatprep.subr.bf16.mxu0 0
      %473 = vmatpush1.bf16.msra.mxu0 0
      %474 = vmatprep.subr.bf16.mxu0 0
      %475 = vmatpush1.bf16.msra.mxu0 0
      %476 = vmatprep.subr.bf16.mxu0 0
      %477 = vmatpush1.bf16.msra.mxu0 0
      %478 = vmatprep.subr.bf16.mxu0 0
      %479 = vmatpush1.bf16.msra.mxu0 0
      %480 = vmatprep.subr.bf16.mxu0 0
      %481 = vmatpush1.bf16.msra.mxu0 0
      %482 = vmatprep.subr.bf16.mxu0 0
      %483 = vmatpush1.bf16.msra.mxu0 0
      %484 = vmatprep.subr.bf16.mxu0 0
      %485 = vmatpush1.bf16.msra.mxu0 0
      %486 = vmatprep.subr.bf16.mxu0 0
      %487 = vmatpush1.bf16.msra.mxu0 0
      %488 = vmatprep.subr.bf16.mxu0 0
      %489 = vmatpush1.bf16.msra.mxu0 0
      %490 = vmatprep.subr.bf16.mxu0 0
      %491 = vmatpush1.bf16.msra.mxu0 0
      %492 = vmatprep.subr.bf16.mxu0 0
      %493 = vmatpush1.bf16.msra.mxu0 0
      %494 = vmatprep.subr.bf16.mxu0 0
      %495 = vmatpush1.bf16.msra.mxu0 0
      %496 = vmatprep.subr.bf16.mxu0 0
      %497 = vmatpush1.bf16.msra.mxu0 0
      %498 = vmatprep.subr.bf16.mxu0 0
      %499 = vmatpush1.bf16.msra.mxu0 0
      %500 = vmatprep.mubr.bf16.mxu0 0
      %501 = vmatmul.mubr.bf16.gmra.mrb[0].mxu0 %v466
      %v502 = vpop.f32.mrb[0].mxu0
      %v503 = vadd.f32 0.0, %v502
      %v504 = vpop.f32.mrb[0].mxu0
      %v505 = vpop.f32.mrb[0].mxu0
      %v506 = vadd.f32 0.0, %v505
      %v507 = vpop.f32.mrb[0].mxu0
      %508 = vdwg.mxu0
      %v509 = vadd.f32 %v451, %v503
      %v510 = vadd.f32 %v452, %v506
      %v511 = vrcp.pop %v459
      %v512 = vrcp.pop %v460
      %v513 = vmul.f32 %v509, %v511
      %v514 = vmul.f32 %v510, %v512
      %515 = vrot.lane.b32.xlu0 %v243, 120
      %v516 = vpop.permute.xlu0 %515
      %517 = vrot.lane.b32.xlu0 %v243, 88
      %v518 = vpop.permute.xlu0 %517
      %v520 = vsel %vm247, %v516, 0
      %v523 = vsel %vm247, %v518, 0
      %525 = vmatprep.subr.bf16.mxu0 0
      %526 = vmatpush1.bf16.xpose.msra.mxu0 %v523
      %527 = vmatprep.subr.bf16.mxu0 0
      %528 = vmatpush1.bf16.xpose.msra.mxu0 0
      %529 = vmatprep.subr.bf16.mxu0 0
      %530 = vmatpush1.bf16.xpose.msra.mxu0 0
      %531 = vmatprep.subr.bf16.mxu0 0
      %532 = vmatpush1.bf16.xpose.msra.mxu0 0
      %533 = vmatprep.subr.bf16.mxu0 0
      %534 = vmatpush1.bf16.xpose.msra.mxu0 0
      %535 = vmatprep.subr.bf16.mxu0 0
      %536 = vmatpush1.bf16.xpose.msra.mxu0 0
      %537 = vmatprep.subr.bf16.mxu0 0
      %538 = vmatpush1.bf16.xpose.msra.mxu0 0
      %539 = vmatprep.subr.bf16.mxu0 0
      %540 = vmatpush1.bf16.xpose.msra.mxu0 0
      %541 = vmatprep.subr.bf16.mxu0 0
      %542 = vmatpush1.bf16.xpose.msra.mxu0 0
      %543 = vmatprep.subr.bf16.mxu0 0
      %544 = vmatpush1.bf16.xpose.msra.mxu0 0
      %545 = vmatprep.subr.bf16.mxu0 0
      %546 = vmatpush1.bf16.xpose.msra.mxu0 0
      %547 = vmatprep.subr.bf16.mxu0 0
      %548 = vmatpush1.bf16.xpose.msra.mxu0 0
      %549 = vmatprep.subr.bf16.mxu0 0
      %550 = vmatpush1.bf16.xpose.msra.mxu0 0
      %551 = vmatprep.subr.bf16.mxu0 0
      %552 = vmatpush1.bf16.xpose.msra.mxu0 0
      %553 = vmatprep.subr.bf16.mxu0 0
      %554 = vmatpush1.bf16.xpose.msra.mxu0 0
      %555 = vmatprep.subr.bf16.mxu0 0
      %556 = vmatpush1.bf16.xpose.msra.mxu0 0
      %557 = vmatprep.mubr.bf16.mxu0 0
      %558 = vmatmul.mubr.bf16.gmra.mrb[0].mxu0 %v520
      %v559 = vpop.f32.mrb[0].mxu0
      %v560 = vadd.f32 0.0, %v559
      %v561 = vpop.f32.mrb[0].mxu0
      %v562 = vpop.f32.mrb[0].mxu0
      %v563 = vadd.f32 0.0, %v562
      %v564 = vpop.f32.mrb[0].mxu0
      %565 = vdwg.mxu0
      %v566 = vmul.f32 %v560, 0.5
      %v567 = vmul.f32 %v563, 0.5
      %v568 = vsel %vm297, %v566, -inf
      %569 = vmax.xlane.f32.xlu0 %v568
      %v570 = vpop.xlane.xlu0 %569
      %v571 = vsel %vm297, %v567, -inf
      %572 = vmax.xlane.f32.xlu0 %v571
      %v573 = vpop.xlane.xlu0 %572
      %v574 = vsub.f32 -inf, %v570
      %v575 = vsub.f32 -inf, %v573
      %v576 = vmul.f32 %v574, 1.442695
      %v577 = vpow.pop %v576
      %v578 = vmul.f32 %v575, 1.442695
      %v579 = vpow.pop %v578
      %v580 = vsub.f32 %v566, %v570
      %v581 = vsub.f32 %v567, %v573
      %v582 = vmul.f32 %v580, 1.442695
      %v583 = vpow.pop %v582
      %v584 = vmul.f32 %v581, 1.442695
      %v585 = vpow.pop %v584
      %v586 = vmul.f32 %v577, 0.0
      %v587 = vmul.f32 %v579, 0.0
      %v588 = vsel %vm297, %v583, 0.0
      %589 = vadd.xlane.f32.xlu0 %v588
      %v590 = vpop.xlane.xlu0 %589
      %v591 = vsel %vm297, %v585, 0.0
      %592 = vadd.xlane.f32.xlu0 %v591
      %v593 = vpop.xlane.xlu0 %592
      %v594 = vadd.f32 %v586, %v590
      %v595 = vadd.f32 %v587, %v593
      %v596 = vpack.c.bf16 %v585, %v583
      %597 = vrot.lane.b32.xlu0 %v243, 56
      %v598 = vpop.permute.xlu0 %597
      %v601 = vsel %vm297, %v596, 0
      %603 = vmatprep.subr.bf16.mxu0 0
      %604 = vmatpush1.bf16.msra.mxu0 %v598
      %605 = vmatprep.subr.bf16.mxu0 0
      %606 = vmatpush1.bf16.msra.mxu0 0
      %607 = vmatprep.subr.bf16.mxu0 0
      %608 = vmatpush1.bf16.msra.mxu0 0
      %609 = vmatprep.subr.bf16.mxu0 0
      %610 = vmatpush1.bf16.msra.mxu0 0
      %611 = vmatprep.subr.bf16.mxu0 0
      %612 = vmatpush1.bf16.msra.mxu0 0
      %613 = vmatprep.subr.bf16.mxu0 0
      %614 = vmatpush1.bf16.msra.mxu0 0
      %615 = vmatprep.subr.bf16.mxu0 0
      %616 = vmatpush1.bf16.msra.mxu0 0
      %617 = vmatprep.subr.bf16.mxu0 0
      %618 = vmatpush1.bf16.msra.mxu0 0
      %619 = vmatprep.subr.bf16.mxu0 0
      %620 = vmatpush1.bf16.msra.mxu0 0
      %621 = vmatprep.subr.bf16.mxu0 0
      %622 = vmatpush1.bf16.msra.mxu0 0
      %623 = vmatprep.subr.bf16.mxu0 0
      %624 = vmatpush1.bf16.msra.mxu0 0
      %625 = vmatprep.subr.bf16.mxu0 0
      %626 = vmatpush1.bf16.msra.mxu0 0
      %627 = vmatprep.subr.bf16.mxu0 0
      %628 = vmatpush1.bf16.msra.mxu0 0
      %629 = vmatprep.subr.bf16.mxu0 0
      %630 = vmatpush1.bf16.msra.mxu0 0
      %631 = vmatprep.subr.bf16.mxu0 0
      %632 = vmatpush1.bf16.msra.mxu0 0
      %633 = vmatprep.subr.bf16.mxu0 0
      %634 = vmatpush1.bf16.msra.mxu0 0
      %635 = vmatprep.mubr.bf16.mxu0 0
      %636 = vmatmul.mubr.bf16.gmra.mrb[0].mxu0 %v601
      %v637 = vpop.f32.mrb[0].mxu0
      %v638 = vadd.f32 0.0, %v637
      %v639 = vpop.f32.mrb[0].mxu0
      %v640 = vpop.f32.mrb[0].mxu0
      %v641 = vadd.f32 0.0, %v640
      %v642 = vpop.f32.mrb[0].mxu0
      %643 = vdwg.mxu0
      %v644 = vadd.f32 %v586, %v638
      %v645 = vadd.f32 %v587, %v641
      %v646 = vrcp.pop %v594
      %v647 = vrcp.pop %v595
      %v648 = vmul.f32 %v644, %v646
      %v649 = vmul.f32 %v645, %v647
      %650 = vrot.lane.b32.xlu0 %v243, 116
      %v651 = vpop.permute.xlu0 %650
      %652 = vrot.lane.b32.xlu0 %v243, 84
      %v653 = vpop.permute.xlu0 %652
      %v655 = vsel %vm247, %v651, 0
      %v658 = vsel %vm247, %v653, 0
      %660 = vmatprep.subr.bf16.mxu0 0
      %661 = vmatpush1.bf16.xpose.msra.mxu0 %v658
      %662 = vmatprep.subr.bf16.mxu0 0
      %663 = vmatpush1.bf16.xpose.msra.mxu0 0
      %664 = vmatprep.subr.bf16.mxu0 0
      %665 = vmatpush1.bf16.xpose.msra.mxu0 0
      %666 = vmatprep.subr.bf16.mxu0 0
      %667 = vmatpush1.bf16.xpose.msra.mxu0 0
      %668 = vmatprep.subr.bf16.mxu0 0
      %669 = vmatpush1.bf16.xpose.msra.mxu0 0
      %670 = vmatprep.subr.bf16.mxu0 0
      %671 = vmatpush1.bf16.xpose.msra.mxu0 0
      %672 = vmatprep.subr.bf16.mxu0 0
      %673 = vmatpush1.bf16.xpose.msra.mxu0 0
      %674 = vmatprep.subr.bf16.mxu0 0
      %675 = vmatpush1.bf16.xpose.msra.mxu0 0
      %676 = vmatprep.subr.bf16.mxu0 0
      %677 = vmatpush1.bf16.xpose.msra.mxu0 0
      %678 = vmatprep.subr.bf16.mxu0 0
      %679 = vmatpush1.bf16.xpose.msra.mxu0 0
      %680 = vmatprep.subr.bf16.mxu0 0
      %681 = vmatpush1.bf16.xpose.msra.mxu0 0
      %682 = vmatprep.subr.bf16.mxu0 0
      %683 = vmatpush1.bf16.xpose.msra.mxu0 0
      %684 = vmatprep.subr.bf16.mxu0 0
      %685 = vmatpush1.bf16.xpose.msra.mxu0 0
      %686 = vmatprep.subr.bf16.mxu0 0
      %687 = vmatpush1.bf16.xpose.msra.mxu0 0
      %688 = vmatprep.subr.bf16.mxu0 0
      %689 = vmatpush1.bf16.xpose.msra.mxu0 0
      %690 = vmatprep.subr.bf16.mxu0 0
      %691 = vmatpush1.bf16.xpose.msra.mxu0 0
      %692 = vmatprep.mubr.bf16.mxu0 0
      %693 = vmatmul.mubr.bf16.gmra.mrb[0].mxu0 %v655
      %v694 = vpop.f32.mrb[0].mxu0
      %v695 = vadd.f32 0.0, %v694
      %v696 = vpop.f32.mrb[0].mxu0
      %v697 = vpop.f32.mrb[0].mxu0
      %v698 = vadd.f32 0.0, %v697
      %v699 = vpop.f32.mrb[0].mxu0
      %700 = vdwg.mxu0
      %v701 = vmul.f32 %v695, 0.5
      %v702 = vmul.f32 %v698, 0.5
      %v703 = vsel %vm297, %v701, -inf
      %704 = vmax.xlane.f32.xlu0 %v703
      %v705 = vpop.xlane.xlu0 %704
      %v706 = vsel %vm297, %v702, -inf
      %707 = vmax.xlane.f32.xlu0 %v706
      %v708 = vpop.xlane.xlu0 %707
      %v709 = vsub.f32 -inf, %v705
      %v710 = vsub.f32 -inf, %v708
      %v711 = vmul.f32 %v709, 1.442695
      %v712 = vpow.pop %v711
      %v713 = vmul.f32 %v710, 1.442695
      %v714 = vpow.pop %v713
      %v715 = vsub.f32 %v701, %v705
      %v716 = vsub.f32 %v702, %v708
      %v717 = vmul.f32 %v715, 1.442695
      %v718 = vpow.pop %v717
      %v719 = vmul.f32 %v716, 1.442695
      %v720 = vpow.pop %v719
      %v721 = vmul.f32 %v712, 0.0
      %v722 = vmul.f32 %v714, 0.0
      %v723 = vsel %vm297, %v718, 0.0
      %724 = vadd.xlane.f32.xlu0 %v723
      %v725 = vpop.xlane.xlu0 %724
      %v726 = vsel %vm297, %v720, 0.0
      %727 = vadd.xlane.f32.xlu0 %v726
      %v728 = vpop.xlane.xlu0 %727
      %v729 = vadd.f32 %v721, %v725
      %v730 = vadd.f32 %v722, %v728
      %v731 = vpack.c.bf16 %v720, %v718
      %732 = vrot.lane.b32.xlu0 %v243, 52
      %v733 = vpop.permute.xlu0 %732
      %v736 = vsel %vm297, %v731, 0
      %738 = vmatprep.subr.bf16.mxu0 0
      %739 = vmatpush1.bf16.msra.mxu0 %v733
      %740 = vmatprep.subr.bf16.mxu0 0
      %741 = vmatpush1.bf16.msra.mxu0 0
      %742 = vmatprep.subr.bf16.mxu0 0
      %743 = vmatpush1.bf16.msra.mxu0 0
      %744 = vmatprep.subr.bf16.mxu0 0
      %745 = vmatpush1.bf16.msra.mxu0 0
      %746 = vmatprep.subr.bf16.mxu0 0
      %747 = vmatpush1.bf16.msra.mxu0 0
      %748 = vmatprep.subr.bf16.mxu0 0
      %749 = vmatpush1.bf16.msra.mxu0 0
      %750 = vmatprep.subr.bf16.mxu0 0
      %751 = vmatpush1.bf16.msra.mxu0 0
      %752 = vmatprep.subr.bf16.mxu0 0
      %753 = vmatpush1.bf16.msra.mxu0 0
      %754 = vmatprep.subr.bf16.mxu0 0
      %755 = vmatpush1.bf16.msra.mxu0 0
      %756 = vmatprep.subr.bf16.mxu0 0
      %757 = vmatpush1.bf16.msra.mxu0 0
      %758 = vmatprep.subr.bf16.mxu0 0
      %759 = vmatpush1.bf16.msra.mxu0 0
      %760 = vmatprep.subr.bf16.mxu0 0
      %761 = vmatpush1.bf16.msra.mxu0 0
      %762 = vmatprep.subr.bf16.mxu0 0
      %763 = vmatpush1.bf16.msra.mxu0 0
      %764 = vmatprep.subr.bf16.mxu0 0
      %765 = vmatpush1.bf16.msra.mxu0 0
      %766 = vmatprep.subr.bf16.mxu0 0
      %767 = vmatpush1.bf16.msra.mxu0 0
      %768 = vmatprep.subr.bf16.mxu0 0
      %769 = vmatpush1.bf16.msra.mxu0 0
      %770 = vmatprep.mubr.bf16.mxu0 0
      %771 = vmatmul.mubr.bf16.gmra.mrb[0].mxu0 %v736
      %v772 = vpop.f32.mrb[0].mxu0
      %v773 = vadd.f32 0.0, %v772
      %v774 = vpop.f32.mrb[0].mxu0
      %v775 = vpop.f32.mrb[0].mxu0
      %v776 = vadd.f32 0.0, %v775
      %v777 = vpop.f32.mrb[0].mxu0
      %778 = vdwg.mxu0
      %v779 = vadd.f32 %v721, %v773
      %v780 = vadd.f32 %v722, %v776
      %v781 = vrcp.pop %v729
      %v782 = vrcp.pop %v730
      %v783 = vmul.f32 %v779, %v781
      %v784 = vmul.f32 %v780, %v782
      %785 = vrot.lane.b32.xlu0 %v243, 112
      %v786 = vpop.permute.xlu0 %785
      %787 = vrot.lane.b32.xlu0 %v243, 80
      %v788 = vpop.permute.xlu0 %787
      %v790 = vsel %vm247, %v786, 0
      %v793 = vsel %vm247, %v788, 0
      %795 = vmatprep.subr.bf16.mxu0 0
      %796 = vmatpush1.bf16.xpose.msra.mxu0 %v793
      %797 = vmatprep.subr.bf16.mxu0 0
      %798 = vmatpush1.bf16.xpose.msra.mxu0 0
      %799 = vmatprep.subr.bf16.mxu0 0
      %800 = vmatpush1.bf16.xpose.msra.mxu0 0
      %801 = vmatprep.subr.bf16.mxu0 0
      %802 = vmatpush1.bf16.xpose.msra.mxu0 0
      %803 = vmatprep.subr.bf16.mxu0 0
      %804 = vmatpush1.bf16.xpose.msra.mxu0 0
      %805 = vmatprep.subr.bf16.mxu0 0
      %806 = vmatpush1.bf16.xpose.msra.mxu0 0
      %807 = vmatprep.subr.bf16.mxu0 0
      %808 = vmatpush1.bf16.xpose.msra.mxu0 0
      %809 = vmatprep.subr.bf16.mxu0 0
      %810 = vmatpush1.bf16.xpose.msra.mxu0 0
      %811 = vmatprep.subr.bf16.mxu0 0
      %812 = vmatpush1.bf16.xpose.msra.mxu0 0
      %813 = vmatprep.subr.bf16.mxu0 0
      %814 = vmatpush1.bf16.xpose.msra.mxu0 0
      %815 = vmatprep.subr.bf16.mxu0 0
      %816 = vmatpush1.bf16.xpose.msra.mxu0 0
      %817 = vmatprep.subr.bf16.mxu0 0
      %818 = vmatpush1.bf16.xpose.msra.mxu0 0
      %819 = vmatprep.subr.bf16.mxu0 0
      %820 = vmatpush1.bf16.xpose.msra.mxu0 0
      %821 = vmatprep.subr.bf16.mxu0 0
      %822 = vmatpush1.bf16.xpose.msra.mxu0 0
      %823 = vmatprep.subr.bf16.mxu0 0
      %824 = vmatpush1.bf16.xpose.msra.mxu0 0
      %825 = vmatprep.subr.bf16.mxu0 0
      %826 = vmatpush1.bf16.xpose.msra.mxu0 0
      %827 = vmatprep.mubr.bf16.mxu0 0
      %828 = vmatmul.mubr.bf16.gmra.mrb[0].mxu0 %v790
      %v829 = vpop.f32.mrb[0].mxu0
      %v830 = vadd.f32 0.0, %v829
      %v831 = vpop.f32.mrb[0].mxu0
      %v832 = vpop.f32.mrb[0].mxu0
      %v833 = vadd.f32 0.0, %v832
      %v834 = vpop.f32.mrb[0].mxu0
      %835 = vdwg.mxu0
      %v836 = vmul.f32 %v830, 0.5
      %v837 = vmul.f32 %v833, 0.5
      %v838 = vsel %vm297, %v836, -inf
      %839 = vmax.xlane.f32.xlu0 %v838
      %v840 = vpop.xlane.xlu0 %839
      %v841 = vsel %vm297, %v837, -inf
      %842 = vmax.xlane.f32.xlu0 %v841
      %v843 = vpop.xlane.xlu0 %842
      %v844 = vsub.f32 -inf, %v840
      %v845 = vsub.f32 -inf, %v843
      %v846 = vmul.f32 %v844, 1.442695
      %v847 = vpow.pop %v846
      %v848 = vmul.f32 %v845, 1.442695
      %v849 = vpow.pop %v848
      %v850 = vsub.f32 %v836, %v840
      %v851 = vsub.f32 %v837, %v843
      %v852 = vmul.f32 %v850, 1.442695
      %v853 = vpow.pop %v852
      %v854 = vmul.f32 %v851, 1.442695
      %v855 = vpow.pop %v854
      %v856 = vmul.f32 %v847, 0.0
      %v857 = vmul.f32 %v849, 0.0
      %v858 = vsel %vm297, %v853, 0.0
      %859 = vadd.xlane.f32.xlu0 %v858
      %v860 = vpop.xlane.xlu0 %859
      %v861 = vsel %vm297, %v855, 0.0
      %862 = vadd.xlane.f32.xlu0 %v861
      %v863 = vpop.xlane.xlu0 %862
      %v864 = vadd.f32 %v856, %v860
      %v865 = vadd.f32 %v857, %v863
      %v866 = vpack.c.bf16 %v855, %v853
      %867 = vrot.lane.b32.xlu0 %v243, 48
      %v868 = vpop.permute.xlu0 %867
      %v871 = vsel %vm297, %v866, 0
      %873 = vmatprep.subr.bf16.mxu0 0
      %874 = vmatpush1.bf16.msra.mxu0 %v868
      %875 = vmatprep.subr.bf16.mxu0 0
      %876 = vmatpush1.bf16.msra.mxu0 0
      %877 = vmatprep.subr.bf16.mxu0 0
      %878 = vmatpush1.bf16.msra.mxu0 0
      %879 = vmatprep.subr.bf16.mxu0 0
      %880 = vmatpush1.bf16.msra.mxu0 0
      %881 = vmatprep.subr.bf16.mxu0 0
      %882 = vmatpush1.bf16.msra.mxu0 0
      %883 = vmatprep.subr.bf16.mxu0 0
      %884 = vmatpush1.bf16.msra.mxu0 0
      %885 = vmatprep.subr.bf16.mxu0 0
      %886 = vmatpush1.bf16.msra.mxu0 0
      %887 = vmatprep.subr.bf16.mxu0 0
      %888 = vmatpush1.bf16.msra.mxu0 0
      %889 = vmatprep.subr.bf16.mxu0 0
      %890 = vmatpush1.bf16.msra.mxu0 0
      %891 = vmatprep.subr.bf16.mxu0 0
      %892 = vmatpush1.bf16.msra.mxu0 0
      %893 = vmatprep.subr.bf16.mxu0 0
      %894 = vmatpush1.bf16.msra.mxu0 0
      %895 = vmatprep.subr.bf16.mxu0 0
      %896 = vmatpush1.bf16.msra.mxu0 0
      %897 = vmatprep.subr.bf16.mxu0 0
      %898 = vmatpush1.bf16.msra.mxu0 0
      %899 = vmatprep.subr.bf16.mxu0 0
      %900 = vmatpush1.bf16.msra.mxu0 0
      %901 = vmatprep.subr.bf16.mxu0 0
      %902 = vmatpush1.bf16.msra.mxu0 0
      %903 = vmatprep.subr.bf16.mxu0 0
      %904 = vmatpush1.bf16.msra.mxu0 0
      %905 = vmatprep.mubr.bf16.mxu0 0
      %906 = vmatmul.mubr.bf16.gmra.mrb[0].mxu0 %v871
      %v907 = vpop.f32.mrb[0].mxu0
      %v908 = vadd.f32 0.0, %v907
      %v909 = vpop.f32.mrb[0].mxu0
      %v910 = vpop.f32.mrb[0].mxu0
      %v911 = vadd.f32 0.0, %v910
      %v912 = vpop.f32.mrb[0].mxu0
      %913 = vdwg.mxu0
      %v914 = vadd.f32 %v856, %v908
      %v915 = vadd.f32 %v857, %v911
      %v916 = vrcp.pop %v864
      %v917 = vrcp.pop %v865
      %v918 = vmul.f32 %v914, %v916
      %v919 = vmul.f32 %v915, %v917
      %920 = vrot.lane.b32.xlu0 %v243, 108
      %v921 = vpop.permute.xlu0 %920
      %922 = vrot.lane.b32.xlu0 %v243, 76
      %v923 = vpop.permute.xlu0 %922
      %v925 = vsel %vm247, %v921, 0
      %v928 = vsel %vm247, %v923, 0
      %930 = vmatprep.subr.bf16.mxu0 0
      %931 = vmatpush1.bf16.xpose.msra.mxu0 %v928
      %932 = vmatprep.subr.bf16.mxu0 0
      %933 = vmatpush1.bf16.xpose.msra.mxu0 0
      %934 = vmatprep.subr.bf16.mxu0 0
      %935 = vmatpush1.bf16.xpose.msra.mxu0 0
      %936 = vmatprep.subr.bf16.mxu0 0
      %937 = vmatpush1.bf16.xpose.msra.mxu0 0
      %938 = vmatprep.subr.bf16.mxu0 0
      %939 = vmatpush1.bf16.xpose.msra.mxu0 0
      %940 = vmatprep.subr.bf16.mxu0 0
      %941 = vmatpush1.bf16.xpose.msra.mxu0 0
      %942 = vmatprep.subr.bf16.mxu0 0
      %943 = vmatpush1.bf16.xpose.msra.mxu0 0
      %944 = vmatprep.subr.bf16.mxu0 0
      %945 = vmatpush1.bf16.xpose.msra.mxu0 0
      %946 = vmatprep.subr.bf16.mxu0 0
      %947 = vmatpush1.bf16.xpose.msra.mxu0 0
      %948 = vmatprep.subr.bf16.mxu0 0
      %949 = vmatpush1.bf16.xpose.msra.mxu0 0
      %950 = vmatprep.subr.bf16.mxu0 0
      %951 = vmatpush1.bf16.xpose.msra.mxu0 0
      %952 = vmatprep.subr.bf16.mxu0 0
      %953 = vmatpush1.bf16.xpose.msra.mxu0 0
      %954 = vmatprep.subr.bf16.mxu0 0
      %955 = vmatpush1.bf16.xpose.msra.mxu0 0
      %956 = vmatprep.subr.bf16.mxu0 0
      %957 = vmatpush1.bf16.xpose.msra.mxu0 0
      %958 = vmatprep.subr.bf16.mxu0 0
      %959 = vmatpush1.bf16.xpose.msra.mxu0 0
      %960 = vmatprep.subr.bf16.mxu0 0
      %961 = vmatpush1.bf16.xpose.msra.mxu0 0
      %962 = vmatprep.mubr.bf16.mxu0 0
      %963 = vmatmul.mubr.bf16.gmra.mrb[0].mxu0 %v925
      %v964 = vpop.f32.mrb[0].mxu0
      %v965 = vadd.f32 0.0, %v964
      %v966 = vpop.f32.mrb[0].mxu0
      %v967 = vpop.f32.mrb[0].mxu0
      %v968 = vadd.f32 0.0, %v967
      %v969 = vpop.f32.mrb[0].mxu0
      %970 = vdwg.mxu0
      %v971 = vmul.f32 %v965, 0.5
      %v972 = vmul.f32 %v968, 0.5
      %v973 = vsel %vm297, %v971, -inf
      %974 = vmax.xlane.f32.xlu0 %v973
      %v975 = vpop.xlane.xlu0 %974
      %v976 = vsel %vm297, %v972, -inf
      %977 = vmax.xlane.f32.xlu0 %v976
      %v978 = vpop.xlane.xlu0 %977
      %v979 = vsub.f32 -inf, %v975
      %v980 = vsub.f32 -inf, %v978
      %v981 = vmul.f32 %v979, 1.442695
      %v982 = vpow.pop %v981
      %v983 = vmul.f32 %v980, 1.442695
      %v984 = vpow.pop %v983
      %v985 = vsub.f32 %v971, %v975
      %v986 = vsub.f32 %v972, %v978
      %v987 = vmul.f32 %v985, 1.442695
      %v988 = vpow.pop %v987
      %v989 = vmul.f32 %v986, 1.442695
      %v990 = vpow.pop %v989
      %v991 = vmul.f32 %v982, 0.0
      %v992 = vmul.f32 %v984, 0.0
      %v993 = vsel %vm297, %v988, 0.0
      %994 = vadd.xlane.f32.xlu0 %v993
      %v995 = vpop.xlane.xlu0 %994
      %v996 = vsel %vm297, %v990, 0.0
      %997 = vadd.xlane.f32.xlu0 %v996
      %v998 = vpop.xlane.xlu0 %997
      %v999 = vadd.f32 %v991, %v995
      %v1000 = vadd.f32 %v992, %v998
      %v1001 = vpack.c.bf16 %v990, %v988
      %1002 = vrot.lane.b32.xlu0 %v243, 44
      %v1003 = vpop.permute.xlu0 %1002
      %v1006 = vsel %vm297, %v1001, 0
      %1008 = vmatprep.subr.bf16.mxu0 0
      %1009 = vmatpush1.bf16.msra.mxu0 %v1003
      %1010 = vmatprep.subr.bf16.mxu0 0
      %1011 = vmatpush1.bf16.msra.mxu0 0
      %1012 = vmatprep.subr.bf16.mxu0 0
      %1013 = vmatpush1.bf16.msra.mxu0 0
      %1014 = vmatprep.subr.bf16.mxu0 0
      %1015 = vmatpush1.bf16.msra.mxu0 0
      %1016 = vmatprep.subr.bf16.mxu0 0
      %1017 = vmatpush1.bf16.msra.mxu0 0
      %1018 = vmatprep.subr.bf16.mxu0 0
      %1019 = vmatpush1.bf16.msra.mxu0 0
      %1020 = vmatprep.subr.bf16.mxu0 0
      %1021 = vmatpush1.bf16.msra.mxu0 0
      %1022 = vmatprep.subr.bf16.mxu0 0
      %1023 = vmatpush1.bf16.msra.mxu0 0
      %1024 = vmatprep.subr.bf16.mxu0 0
      %1025 = vmatpush1.bf16.msra.mxu0 0
      %1026 = vmatprep.subr.bf16.mxu0 0
      %1027 = vmatpush1.bf16.msra.mxu0 0
      %1028 = vmatprep.subr.bf16.mxu0 0
      %1029 = vmatpush1.bf16.msra.mxu0 0
      %1030 = vmatprep.subr.bf16.mxu0 0
      %1031 = vmatpush1.bf16.msra.mxu0 0
      %1032 = vmatprep.subr.bf16.mxu0 0
      %1033 = vmatpush1.bf16.msra.mxu0 0
      %1034 = vmatprep.subr.bf16.mxu0 0
      %1035 = vmatpush1.bf16.msra.mxu0 0
      %1036 = vmatprep.subr.bf16.mxu0 0
      %1037 = vmatpush1.bf16.msra.mxu0 0
      %1038 = vmatprep.subr.bf16.mxu0 0
      %1039 = vmatpush1.bf16.msra.mxu0 0
      %1040 = vmatprep.mubr.bf16.mxu0 0
      %1041 = vmatmul.mubr.bf16.gmra.mrb[0].mxu0 %v1006
      %v1042 = vpop.f32.mrb[0].mxu0
      %v1043 = vadd.f32 0.0, %v1042
      %v1044 = vpop.f32.mrb[0].mxu0
      %v1045 = vpop.f32.mrb[0].mxu0
      %v1046 = vadd.f32 0.0, %v1045
      %v1047 = vpop.f32.mrb[0].mxu0
      %1048 = vdwg.mxu0
      %v1049 = vadd.f32 %v991, %v1043
      %v1050 = vadd.f32 %v992, %v1046
      %v1051 = vrcp.pop %v999
      %v1052 = vrcp.pop %v1000
      %v1053 = vmul.f32 %v1049, %v1051
      %v1054 = vmul.f32 %v1050, %v1052
      %1055 = vrot.lane.b32.xlu0 %v243, 104
      %v1056 = vpop.permute.xlu0 %1055
      %1057 = vrot.lane.b32.xlu0 %v243, 72
      %v1058 = vpop.permute.xlu0 %1057
      %v1060 = vsel %vm247, %v1056, 0
      %v1063 = vsel %vm247, %v1058, 0
      %1065 = vmatprep.subr.bf16.mxu0 0
      %1066 = vmatpush1.bf16.xpose.msra.mxu0 %v1063
      %1067 = vmatprep.subr.bf16.mxu0 0
      %1068 = vmatpush1.bf16.xpose.msra.mxu0 0
      %1069 = vmatprep.subr.bf16.mxu0 0
      %1070 = vmatpush1.bf16.xpose.msra.mxu0 0
      %1071 = vmatprep.subr.bf16.mxu0 0
      %1072 = vmatpush1.bf16.xpose.msra.mxu0 0
      %1073 = vmatprep.subr.bf16.mxu0 0
      %1074 = vmatpush1.bf16.xpose.msra.mxu0 0
      %1075 = vmatprep.subr.bf16.mxu0 0
      %1076 = vmatpush1.bf16.xpose.msra.mxu0 0
      %1077 = vmatprep.subr.bf16.mxu0 0
      %1078 = vmatpush1.bf16.xpose.msra.mxu0 0
      %1079 = vmatprep.subr.bf16.mxu0 0
      %1080 = vmatpush1.bf16.xpose.msra.mxu0 0
      %1081 = vmatprep.subr.bf16.mxu0 0
      %1082 = vmatpush1.bf16.xpose.msra.mxu0 0
      %1083 = vmatprep.subr.bf16.mxu0 0
      %1084 = vmatpush1.bf16.xpose.msra.mxu0 0
      %1085 = vmatprep.subr.bf16.mxu0 0
      %1086 = vmatpush1.bf16.xpose.msra.mxu0 0
      %1087 = vmatprep.subr.bf16.mxu0 0
      %1088 = vmatpush1.bf16.xpose.msra.mxu0 0
      %1089 = vmatprep.subr.bf16.mxu0 0
      %1090 = vmatpush1.bf16.xpose.msra.mxu0 0
      %1091 = vmatprep.subr.bf16.mxu0 0
      %1092 = vmatpush1.bf16.xpose.msra.mxu0 0
      %1093 = vmatprep.subr.bf16.mxu0 0
      %1094 = vmatpush1.bf16.xpose.msra.mxu0 0
      %1095 = vmatprep.subr.bf16.mxu0 0
      %1096 = vmatpush1.bf16.xpose.msra.mxu0 0
      %1097 = vmatprep.mubr.bf16.mxu0 0
      %1098 = vmatmul.mubr.bf16.gmra.mrb[0].mxu0 %v1060
      %v1099 = vpop.f32.mrb[0].mxu0
      %v1100 = vadd.f32 0.0, %v1099
      %v1101 = vpop.f32.mrb[0].mxu0
      %v1102 = vpop.f32.mrb[0].mxu0
      %v1103 = vadd.f32 0.0, %v1102
      %v1104 = vpop.f32.mrb[0].mxu0
      %1105 = vdwg.mxu0
      %v1106 = vmul.f32 %v1100, 0.5
      %v1107 = vmul.f32 %v1103, 0.5
      %v1108 = vsel %vm297, %v1106, -inf
      %1109 = vmax.xlane.f32.xlu0 %v1108
      %v1110 = vpop.xlane.xlu0 %1109
      %v1111 = vsel %vm297, %v1107, -inf
      %1112 = vmax.xlane.f32.xlu0 %v1111
      %v1113 = vpop.xlane.xlu0 %1112
      %v1114 = vsub.f32 -inf, %v1110
      %v1115 = vsub.f32 -inf, %v1113
      %v1116 = vmul.f32 %v1114, 1.442695
      %v1117 = vpow.pop %v1116
      %v1118 = vmul.f32 %v1115, 1.442695
      %v1119 = vpow.pop %v1118
      %v1120 = vsub.f32 %v1106, %v1110
      %v1121 = vsub.f32 %v1107, %v1113
      %v1122 = vmul.f32 %v1120, 1.442695
      %v1123 = vpow.pop %v1122
      %v1124 = vmul.f32 %v1121, 1.442695
      %v1125 = vpow.pop %v1124
      %v1126 = vmul.f32 %v1117, 0.0
      %v1127 = vmul.f32 %v1119, 0.0
      %v1128 = vsel %vm297, %v1123, 0.0
      %1129 = vadd.xlane.f32.xlu0 %v1128
      %v1130 = vpop.xlane.xlu0 %1129
      %v1131 = vsel %vm297, %v1125, 0.0
      %1132 = vadd.xlane.f32.xlu0 %v1131
      %v1133 = vpop.xlane.xlu0 %1132
      %v1134 = vadd.f32 %v1126, %v1130
      %v1135 = vadd.f32 %v1127, %v1133
      %v1136 = vpack.c.bf16 %v1125, %v1123
      %1137 = vrot.lane.b32.xlu0 %v243, 40
      %v1138 = vpop.permute.xlu0 %1137
      %v1141 = vsel %vm297, %v1136, 0
      %1143 = vmatprep.subr.bf16.mxu0 0
      %1144 = vmatpush1.bf16.msra.mxu0 %v1138
      %1145 = vmatprep.subr.bf16.mxu0 0
      %1146 = vmatpush1.bf16.msra.mxu0 0
      %1147 = vmatprep.subr.bf16.mxu0 0
      %1148 = vmatpush1.bf16.msra.mxu0 0
      %1149 = vmatprep.subr.bf16.mxu0 0
      %1150 = vmatpush1.bf16.msra.mxu0 0
      %1151 = vmatprep.subr.bf16.mxu0 0
      %1152 = vmatpush1.bf16.msra.mxu0 0
      %1153 = vmatprep.subr.bf16.mxu0 0
      %1154 = vmatpush1.bf16.msra.mxu0 0
      %1155 = vmatprep.subr.bf16.mxu0 0
      %1156 = vmatpush1.bf16.msra.mxu0 0
      %1157 = vmatprep.subr.bf16.mxu0 0
      %1158 = vmatpush1.bf16.msra.mxu0 0
      %1159 = vmatprep.subr.bf16.mxu0 0
      %1160 = vmatpush1.bf16.msra.mxu0 0
      %1161 = vmatprep.subr.bf16.mxu0 0
      %1162 = vmatpush1.bf16.msra.mxu0 0
      %1163 = vmatprep.subr.bf16.mxu0 0
      %1164 = vmatpush1.bf16.msra.mxu0 0
      %1165 = vmatprep.subr.bf16.mxu0 0
      %1166 = vmatpush1.bf16.msra.mxu0 0
      %1167 = vmatprep.subr.bf16.mxu0 0
      %1168 = vmatpush1.bf16.msra.mxu0 0
      %1169 = vmatprep.subr.bf16.mxu0 0
      %1170 = vmatpush1.bf16.msra.mxu0 0
      %1171 = vmatprep.subr.bf16.mxu0 0
      %1172 = vmatpush1.bf16.msra.mxu0 0
      %1173 = vmatprep.subr.bf16.mxu0 0
      %1174 = vmatpush1.bf16.msra.mxu0 0
      %1175 = vmatprep.mubr.bf16.mxu0 0
      %1176 = vmatmul.mubr.bf16.gmra.mrb[0].mxu0 %v1141
      %v1177 = vpop.f32.mrb[0].mxu0
      %v1178 = vadd.f32 0.0, %v1177
      %v1179 = vpop.f32.mrb[0].mxu0
      %v1180 = vpop.f32.mrb[0].mxu0
      %v1181 = vadd.f32 0.0, %v1180
      %v1182 = vpop.f32.mrb[0].mxu0
      %1183 = vdwg.mxu0
      %v1184 = vadd.f32 %v1126, %v1178
      %v1185 = vadd.f32 %v1127, %v1181
      %v1186 = vrcp.pop %v1134
      %v1187 = vrcp.pop %v1135
      %v1188 = vmul.f32 %v1184, %v1186
      %v1189 = vmul.f32 %v1185, %v1187
      %1190 = vrot.lane.b32.xlu0 %v243, 100
      %v1191 = vpop.permute.xlu0 %1190
      %1192 = vrot.lane.b32.xlu0 %v243, 68
      %v1193 = vpop.permute.xlu0 %1192
      %v1195 = vsel %vm247, %v1191, 0
      %v1198 = vsel %vm247, %v1193, 0
      %1200 = vmatprep.subr.bf16.mxu0 0
      %1201 = vmatpush1.bf16.xpose.msra.mxu0 %v1198
      %1202 = vmatprep.subr.bf16.mxu0 0
      %1203 = vmatpush1.bf16.xpose.msra.mxu0 0
      %1204 = vmatprep.subr.bf16.mxu0 0
      %1205 = vmatpush1.bf16.xpose.msra.mxu0 0
      %1206 = vmatprep.subr.bf16.mxu0 0
      %1207 = vmatpush1.bf16.xpose.msra.mxu0 0
      %1208 = vmatprep.subr.bf16.mxu0 0
      %1209 = vmatpush1.bf16.xpose.msra.mxu0 0
      %1210 = vmatprep.subr.bf16.mxu0 0
      %1211 = vmatpush1.bf16.xpose.msra.mxu0 0
      %1212 = vmatprep.subr.bf16.mxu0 0
      %1213 = vmatpush1.bf16.xpose.msra.mxu0 0
      %1214 = vmatprep.subr.bf16.mxu0 0
      %1215 = vmatpush1.bf16.xpose.msra.mxu0 0
      %1216 = vmatprep.subr.bf16.mxu0 0
      %1217 = vmatpush1.bf16.xpose.msra.mxu0 0
      %1218 = vmatprep.subr.bf16.mxu0 0
      %1219 = vmatpush1.bf16.xpose.msra.mxu0 0
      %1220 = vmatprep.subr.bf16.mxu0 0
      %1221 = vmatpush1.bf16.xpose.msra.mxu0 0
      %1222 = vmatprep.subr.bf16.mxu0 0
      %1223 = vmatpush1.bf16.xpose.msra.mxu0 0
      %1224 = vmatprep.subr.bf16.mxu0 0
      %1225 = vmatpush1.bf16.xpose.msra.mxu0 0
      %1226 = vmatprep.subr.bf16.mxu0 0
      %1227 = vmatpush1.bf16.xpose.msra.mxu0 0
      %1228 = vmatprep.subr.bf16.mxu0 0
      %1229 = vmatpush1.bf16.xpose.msra.mxu0 0
      %1230 = vmatprep.subr.bf16.mxu0 0
      %1231 = vmatpush1.bf16.xpose.msra.mxu0 0
      %1232 = vmatprep.mubr.bf16.mxu0 0
      %1233 = vmatmul.mubr.bf16.gmra.mrb[0].mxu0 %v1195
      %v1234 = vpop.f32.mrb[0].mxu0
      %v1235 = vadd.f32 0.0, %v1234
      %v1236 = vpop.f32.mrb[0].mxu0
      %v1237 = vpop.f32.mrb[0].mxu0
      %v1238 = vadd.f32 0.0, %v1237
      %v1239 = vpop.f32.mrb[0].mxu0
      %1240 = vdwg.mxu0
      %v1241 = vmul.f32 %v1235, 0.5
      %v1242 = vmul.f32 %v1238, 0.5
      %v1243 = vsel %vm297, %v1241, -inf
      %1244 = vmax.xlane.f32.xlu0 %v1243
      %v1245 = vpop.xlane.xlu0 %1244
      %v1246 = vsel %vm297, %v1242, -inf
      %1247 = vmax.xlane.f32.xlu0 %v1246
      %v1248 = vpop.xlane.xlu0 %1247
      %v1249 = vsub.f32 -inf, %v1245
      %v1250 = vsub.f32 -inf, %v1248
      %v1251 = vmul.f32 %v1249, 1.442695
      %v1252 = vpow.pop %v1251
      %v1253 = vmul.f32 %v1250, 1.442695
      %v1254 = vpow.pop %v1253
      %v1255 = vsub.f32 %v1241, %v1245
      %v1256 = vsub.f32 %v1242, %v1248
      %v1257 = vmul.f32 %v1255, 1.442695
      %v1258 = vpow.pop %v1257
      %v1259 = vmul.f32 %v1256, 1.442695
      %v1260 = vpow.pop %v1259
      %v1261 = vmul.f32 %v1252, 0.0
      %v1262 = vmul.f32 %v1254, 0.0
      %v1263 = vsel %vm297, %v1258, 0.0
      %1264 = vadd.xlane.f32.xlu0 %v1263
      %v1265 = vpop.xlane.xlu0 %1264
      %v1266 = vsel %vm297, %v1260, 0.0
      %1267 = vadd.xlane.f32.xlu0 %v1266
      %v1268 = vpop.xlane.xlu0 %1267
      %v1269 = vadd.f32 %v1261, %v1265
      %v1270 = vadd.f32 %v1262, %v1268
      %v1271 = vpack.c.bf16 %v1260, %v1258
      %1272 = vrot.lane.b32.xlu0 %v243, 36
      %v1273 = vpop.permute.xlu0 %1272
      %v1276 = vsel %vm297, %v1271, 0
      %1278 = vmatprep.subr.bf16.mxu0 0
      %1279 = vmatpush1.bf16.msra.mxu0 %v1273
      %1280 = vmatprep.subr.bf16.mxu0 0
      %1281 = vmatpush1.bf16.msra.mxu0 0
      %1282 = vmatprep.subr.bf16.mxu0 0
      %1283 = vmatpush1.bf16.msra.mxu0 0
      %1284 = vmatprep.subr.bf16.mxu0 0
      %1285 = vmatpush1.bf16.msra.mxu0 0
      %1286 = vmatprep.subr.bf16.mxu0 0
      %1287 = vmatpush1.bf16.msra.mxu0 0
      %1288 = vmatprep.subr.bf16.mxu0 0
      %1289 = vmatpush1.bf16.msra.mxu0 0
      %1290 = vmatprep.subr.bf16.mxu0 0
      %1291 = vmatpush1.bf16.msra.mxu0 0
      %1292 = vmatprep.subr.bf16.mxu0 0
      %1293 = vmatpush1.bf16.msra.mxu0 0
      %1294 = vmatprep.subr.bf16.mxu0 0
      %1295 = vmatpush1.bf16.msra.mxu0 0
      %1296 = vmatprep.subr.bf16.mxu0 0
      %1297 = vmatpush1.bf16.msra.mxu0 0
      %1298 = vmatprep.subr.bf16.mxu0 0
      %1299 = vmatpush1.bf16.msra.mxu0 0
      %1300 = vmatprep.subr.bf16.mxu0 0
      %1301 = vmatpush1.bf16.msra.mxu0 0
      %1302 = vmatprep.subr.bf16.mxu0 0
      %1303 = vmatpush1.bf16.msra.mxu0 0
      %1304 = vmatprep.subr.bf16.mxu0 0
      %1305 = vmatpush1.bf16.msra.mxu0 0
      %1306 = vmatprep.subr.bf16.mxu0 0
      %1307 = vmatpush1.bf16.msra.mxu0 0
      %1308 = vmatprep.subr.bf16.mxu0 0
      %1309 = vmatpush1.bf16.msra.mxu0 0
      %1310 = vmatprep.mubr.bf16.mxu0 0
      %1311 = vmatmul.mubr.bf16.gmra.mrb[0].mxu0 %v1276
      %v1312 = vpop.f32.mrb[0].mxu0
      %v1313 = vadd.f32 0.0, %v1312
      %v1314 = vpop.f32.mrb[0].mxu0
      %v1315 = vpop.f32.mrb[0].mxu0
      %v1316 = vadd.f32 0.0, %v1315
      %v1317 = vpop.f32.mrb[0].mxu0
      %1318 = vdwg.mxu0
      %v1319 = vadd.f32 %v1261, %v1313
      %v1320 = vadd.f32 %v1262, %v1316
      %v1321 = vrcp.pop %v1269
      %v1322 = vrcp.pop %v1270
      %v1323 = vmul.f32 %v1319, %v1321
      %v1324 = vmul.f32 %v1320, %v1322
      %1327 = vrot.lane.b32.xlu0 %v513, 4
      %v1328 = vpop.permute.xlu0 %1327
      %1329 = vrot.lane.b32.xlu0 %v514, 4
      %v1330 = vpop.permute.xlu0 %1329
      %1335 = vrot.lane.b32.xlu0 %v648, 8
      %v1336 = vpop.permute.xlu0 %1335
      %1337 = vrot.lane.b32.xlu0 %v649, 8
      %v1338 = vpop.permute.xlu0 %1337
      %1343 = vrot.lane.b32.xlu0 %v783, 12
      %v1344 = vpop.permute.xlu0 %1343
      %1345 = vrot.lane.b32.xlu0 %v784, 12
      %v1346 = vpop.permute.xlu0 %1345
      %1351 = vrot.lane.b32.xlu0 %v918, 16
      %v1352 = vpop.permute.xlu0 %1351
      %1353 = vrot.lane.b32.xlu0 %v919, 16
      %v1354 = vpop.permute.xlu0 %1353
      %1359 = vrot.lane.b32.xlu0 %v1053, 20
      %v1360 = vpop.permute.xlu0 %1359
      %1361 = vrot.lane.b32.xlu0 %v1054, 20
      %v1362 = vpop.permute.xlu0 %1361
      %1367 = vrot.lane.b32.xlu0 %v1188, 24
      %v1368 = vpop.permute.xlu0 %1367
      %1369 = vrot.lane.b32.xlu0 %v1189, 24
      %v1370 = vpop.permute.xlu0 %1369
      %1375 = vrot.lane.b32.xlu0 %v1323, 28
      %v1376 = vpop.permute.xlu0 %1375
      %1377 = vrot.lane.b32.xlu0 %v1324, 28
      %v1378 = vpop.permute.xlu0 %1377
      %v1381 = vsel %vm247, %v378, %v1328
      %v1382 = vsel %vm247, %v379, %v1330
      %vm1383 = vcmask 64512
      %v1384 = vsel %vm1383, %v1381, %v1336
      %v1385 = vsel %vm1383, %v1382, %v1338
      %vm1386 = vcmask 97280
      %v1387 = vsel %vm1386, %v1384, %v1344
      %v1388 = vsel %vm1386, %v1385, %v1346
      %v1389 = vsel %vm297, %v1387, %v1352
      %v1390 = vsel %vm297, %v1388, %v1354
      %vm1391 = vcmask 162816
      %v1392 = vsel %vm1391, %v1389, %v1360
      %v1393 = vsel %vm1391, %v1390, %v1362
      %vm1394 = vcmask 195584
      %v1395 = vsel %vm1394, %v1392, %v1368
      %v1396 = vsel %vm1394, %v1393, %v1370
      %vm1397 = vcmask 228352
      %v1398 = vsel %vm1397, %v1395, %v1376
      %v1399 = vsel %vm1397, %v1396, %v1378
      %v1400 = vpack.c.bf16 %v1399, %v1398
      %v1402 = vunpack.c.l.b16 %v1400
      %v1403 = vunpack.c.h.b16 %v1400
      %v1404 = vpack.c.b16 %v1402, %v1402
      %v1405 = vpack.c.b16 %v1403, %v1403
      %vm1408 = vcmask 257024
      %1409 = vst.msk [vmem:[%s170] sm:$0xf] %vm1408, %v1404
      %1410 = vst.msk [vmem:[%s170 + $0x4] sm:$0xf] %vm1408, %v1405
      %p1411 = scmp.lt.s32.totalorder %s14, 1
      %s1412 = scalar_select %p1411, %s14, 1
      %s1413 = smul.addr %s1412, 2
      %s1414 = smul.addr %s1413, 4
      %s1415 = scalar_lea.vmem %s3, %s1414
      // Predicated region
      $region33: #{joint_conv_trans_block.31} parent=31 // pred_check
        %p1416 = pneg %p100
      $region34: #{joint_conv_trans_block.31} parent=31 // pred_check_branch
        %1418 = sbr.rel (%p1416) target = $region36
      $region35: #{joint_conv_trans_block.31} parent=31 // pred_region
        _
      $region36: #{joint_conv_trans_block.31} parent=31 // pred_fallthru
        _
    $region32: #{joint_conv_trans_block.31} parent=5 // pred_fallthru
      _
    %p1419 = scmp.le.s32.totalorder 2, %s9
    // Predicated region
    $region37: #{joint_conv_trans_block.31} parent=5 // pred_check
      %p1420 = pneg %p1419
    $region38: #{joint_conv_trans_block.31} parent=5 // pred_check_branch
      %1422 = sbr.rel (%p1420) target = $region40
    $region39: #{joint_conv_trans_block.31} parent=5 // pred_region
      %s1423 = ssub.s32 %s9, 2
      // Predicated region
      $region41: #{joint_conv_trans_block.31} parent=39 // pred_check
        %p1424 = pneg %p106
      $region42: #{joint_conv_trans_block.31} parent=39 // pred_check_branch
        %1426 = sbr.rel (%p1424) target = $region44
      $region43: #{joint_conv_trans_block.31} parent=39 // pred_region
        %p1427 = scmp.lt.s32.totalorder %s15, 1
        %s1428 = scalar_select %p1427, %s15, 1
        %s1429 = smul.addr %s1428, 2
        %s1430 = smul.addr %s1429, 4
        %s1431 = scalar_lea.vmem %s3, %s1430
      $region44: #{joint_conv_trans_block.31} parent=39 // pred_fallthru
        _
    $region40: #{joint_conv_trans_block.31} parent=5 // pred_fallthru
      _
  $region6: #{joint_conv_trans_block.31} parent=0 // loop_footer
    %s13 = sadd.s32 1, %s9
  $region7: #{joint_conv_trans_block.31} parent=0 // loop_footer_branch
    %8 = sbr.rel target = $region3
  $region8: #{joint_conv_trans_block.31} parent=0 // loop_exit
    _

// kernel: joint_conv_trans_block.32
$region0: #{joint_conv_trans_block.32}
  #allocation0 [shape = 'u32[]', space=smem, size = 0x4, offset = 0x4, fixed_abs, tag = 'smem constant byte address 0x4 - core index']
  #allocation1 [shape = 'u32[144,128]{1,0:T(1,128)}', space=vmem, size = 0x12000, scoped, tag = 'internal scratch']
  %s0 = inlined_call_operand.vmem [shape: bf16[32,32], index: 0, kind: input, shape index: {}]
  %s1 = inlined_call_operand.vmem [shape: bf16[32,32], index: 1, kind: input, shape index: {}]
  %s2 = inlined_call_operand.vmem [shape: f32[1,32], index: 2, kind: input, shape index: {}]
  %s3 = inlined_call_operand.vmem [shape: f32[32,32], index: 3, kind: input, shape index: {}]
  %s4 = inlined_call_operand.vmem [shape: f32[1,32], index: 4, kind: input, shape index: {}]
  %s5 = inlined_call_operand.vmem [shape: f32[1,32], index: 5, kind: input, shape index: {}]
  %s6 = inlined_call_operand.vmem [shape: f32[32,32], index: 6, kind: output, shape index: {}]
  %s7 = sld [smem:[#allocation0]]
  $region34: #{joint_conv_trans_block.32} parent=0
    _
  %s9 = ssub.s32 1, %s7
  %s10 = scalar_select 0, %s9, %s7
  // Predicated region
  $region2: #{joint_conv_trans_block.32} parent=0 // pred_check
    _
  $region3: #{joint_conv_trans_block.32} parent=0 // pred_check_branch
    %12 = sbr.rel (0) target = $region5
  $region4: #{joint_conv_trans_block.32} parent=0 // pred_region
    _
  $region5: #{joint_conv_trans_block.32} parent=0 // pred_fallthru
    _
  // Predicated region
  $region6: #{joint_conv_trans_block.32} parent=0 // pred_check
    _
  $region7: #{joint_conv_trans_block.32} parent=0 // pred_check_branch
    %14 = sbr.rel (0) target = $region9
  $region8: #{joint_conv_trans_block.32} parent=0 // pred_region
    _
  $region9: #{joint_conv_trans_block.32} parent=0 // pred_fallthru
    _
  // Predicated region
  $region10: #{joint_conv_trans_block.32} parent=0 // pred_check
    _
  $region11: #{joint_conv_trans_block.32} parent=0 // pred_check_branch
    %16 = sbr.rel (0) target = $region13
  $region12: #{joint_conv_trans_block.32} parent=0 // pred_region
    _
  $region13: #{joint_conv_trans_block.32} parent=0 // pred_fallthru
    _
  // Predicated region
  $region14: #{joint_conv_trans_block.32} parent=0 // pred_check
    _
  $region15: #{joint_conv_trans_block.32} parent=0 // pred_check_branch
    %18 = sbr.rel (0) target = $region17
  $region16: #{joint_conv_trans_block.32} parent=0 // pred_region
    _
  $region17: #{joint_conv_trans_block.32} parent=0 // pred_fallthru
    _
  // Predicated region
  $region18: #{joint_conv_trans_block.32} parent=0 // pred_check
    _
  $region19: #{joint_conv_trans_block.32} parent=0 // pred_check_branch
    %20 = sbr.rel (0) target = $region21
  $region20: #{joint_conv_trans_block.32} parent=0 // pred_region
    _
  $region21: #{joint_conv_trans_block.32} parent=0 // pred_fallthru
    _
  // Predicated region
  $region22: #{joint_conv_trans_block.32} parent=0 // pred_check
    _
  $region23: #{joint_conv_trans_block.32} parent=0 // pred_check_branch
    %22 = sbr.rel (0) target = $region25
  $region24: #{joint_conv_trans_block.32} parent=0 // pred_region
    _
  $region25: #{joint_conv_trans_block.32} parent=0 // pred_fallthru
    _
  %v24 = vld [vmem:[%s0] sm:$0xf]
  %v25 = vld [vmem:[%s0 + $0x4] sm:$0xf]
  %v26 = vld [vmem:[%s0 + $0x8] sm:$0xf]
  %v27 = vld [vmem:[%s0 + $0xc] sm:$0xf]
  %v28 = vld [vmem:[%s1] sm:$0xf]
  %v29 = vld [vmem:[%s1 + $0x4] sm:$0xf]
  %v30 = vld [vmem:[%s1 + $0x8] sm:$0xf]
  %v31 = vld [vmem:[%s1 + $0xc] sm:$0xf]
  %v32 = vld [vmem:[%s2] sm:$0x1]
  %v34 = vlaneseq
  %v35 = vshrl.u32 %v34, 7
  %v36 = vsub.s32 0, %v35
  %v37 = vrot.slane %v32, %v36
  %v43 = vunpack.c.l.b16 %v24
  %v44 = vunpack.c.l.b16 %v25
  %v45 = vunpack.c.l.b16 %v26
  %v46 = vunpack.c.l.b16 %v27
  %v47 = vpack.c.b16 %v44, %v43
  %v48 = vpack.c.b16 %v46, %v45
  %v53 = vunpack.c.l.b16 %v28
  %v54 = vunpack.c.l.b16 %v29
  %v55 = vunpack.c.l.b16 %v30
  %v56 = vunpack.c.l.b16 %v31
  %v57 = vpack.c.b16 %v54, %v53
  %v58 = vpack.c.b16 %v56, %v55
  %vm61 = vcmask 261120
  %v63 = vsel %vm61, %v47, 0
  %v66 = vsel %vm61, %v48, 0
  %68 = vmatprep.subr.bf16.mxu0 0
  %69 = vmatpush1.bf16.msra.mxu0 %v57
  %70 = vmatprep.subr.bf16.mxu0 0
  %71 = vmatpush1.bf16.msra.mxu0 %v58
  %72 = vmatprep.subr.bf16.mxu0 0
  %73 = vmatpush1.bf16.msra.mxu0 0
  %74 = vmatprep.subr.bf16.mxu0 0
  %75 = vmatpush1.bf16.msra.mxu0 0
  %76 = vmatprep.subr.bf16.mxu0 0
  %77 = vmatpush1.bf16.msra.mxu0 0
  %78 = vmatprep.subr.bf16.mxu0 0
  %79 = vmatpush1.bf16.msra.mxu0 0
  %80 = vmatprep.subr.bf16.mxu0 0
  %81 = vmatpush1.bf16.msra.mxu0 0
  %82 = vmatprep.subr.bf16.mxu0 0
  %83 = vmatpush1.bf16.msra.mxu0 0
  %84 = vmatprep.subr.bf16.mxu0 0
  %85 = vmatpush1.bf16.msra.mxu0 0
  %86 = vmatprep.subr.bf16.mxu0 0
  %87 = vmatpush1.bf16.msra.mxu0 0
  %88 = vmatprep.subr.bf16.mxu0 0
  %89 = vmatpush1.bf16.msra.mxu0 0
  %90 = vmatprep.subr.bf16.mxu0 0
  %91 = vmatpush1.bf16.msra.mxu0 0
  %92 = vmatprep.subr.bf16.mxu0 0
  %93 = vmatpush1.bf16.msra.mxu0 0
  %94 = vmatprep.subr.bf16.mxu0 0
  %95 = vmatpush1.bf16.msra.mxu0 0
  %96 = vmatprep.subr.bf16.mxu0 0
  %97 = vmatpush1.bf16.msra.mxu0 0
  %98 = vmatprep.subr.bf16.mxu0 0
  %99 = vmatpush1.bf16.msra.mxu0 0
  %100 = vmatprep.mubr.bf16.mxu0 0
  %101 = vmatmul.mubr.bf16.gmra.mrb[0].mxu0 %v63
  %v102 = vpop.f32.mrb[0].mxu0
  %v103 = vadd.f32 %v37, %v102
  %v104 = vpop.f32.mrb[0].mxu0
  %v105 = vpop.f32.mrb[0].mxu0
  %v106 = vadd.f32 %v37, %v105
  %v107 = vpop.f32.mrb[0].mxu0
  %108 = vmatprep.mubr.bf16.mxu0 0
  %109 = vmatmul.mubr.bf16.gmra.mrb[0].mxu0 %v66
  %v110 = vpop.f32.mrb[0].mxu0
  %v111 = vadd.f32 %v37, %v110
  %v112 = vpop.f32.mrb[0].mxu0
  %v113 = vpop.f32.mrb[0].mxu0
  %v114 = vadd.f32 %v37, %v113
  %v115 = vpop.f32.mrb[0].mxu0
  %116 = vdwg.mxu0
  %v117 = vld [vmem:[%s3] sm:$0xff]
  %v118 = vld [vmem:[%s3 + $0x8] sm:$0xff]
  %v119 = vld [vmem:[%s3 + $0x10] sm:$0xff]
  %v120 = vld [vmem:[%s3 + $0x18] sm:$0xff]
  %v121 = vadd.f32 %v103, %v117
  %v122 = vadd.f32 %v106, %v118
  %v123 = vadd.f32 %v111, %v119
  %v124 = vadd.f32 %v114, %v120
  %v125 = vsel %vm61, %v121, 0.0
  %126 = vadd.xlane.f32.xlu0 %v125
  %v127 = vpop.xlane.xlu0 %126
  %v128 = vsel %vm61, %v122, 0.0
  %129 = vadd.xlane.f32.xlu0 %v128
  %v130 = vpop.xlane.xlu0 %129
  %v131 = vsel %vm61, %v123, 0.0
  %132 = vadd.xlane.f32.xlu0 %v131
  %v133 = vpop.xlane.xlu0 %132
  %v134 = vsel %vm61, %v124, 0.0
  %135 = vadd.xlane.f32.xlu0 %v134
  %v136 = vpop.xlane.xlu0 %135
  %v137 = vrcp.pop 32.0
  %v138 = vmul.f32 %v127, %v137
  %v139 = vmul.f32 %v130, %v137
  %v140 = vmul.f32 %v133, %v137
  %v141 = vmul.f32 %v136, %v137
  %v142 = vsub.f32 %v121, %v138
  %v143 = vsub.f32 %v122, %v139
  %v144 = vsub.f32 %v123, %v140
  %v145 = vsub.f32 %v124, %v141
  %v146 = vmul.f32 %v142, %v142
  %v147 = vmul.f32 %v143, %v143
  %v148 = vmul.f32 %v144, %v144
  %v149 = vmul.f32 %v145, %v145
  %v150 = vsel %vm61, %v146, 0.0
  %151 = vadd.xlane.f32.xlu0 %v150
  %v152 = vpop.xlane.xlu0 %151
  %v153 = vsel %vm61, %v147, 0.0
  %154 = vadd.xlane.f32.xlu0 %v153
  %v155 = vpop.xlane.xlu0 %154
  %v156 = vsel %vm61, %v148, 0.0
  %157 = vadd.xlane.f32.xlu0 %v156
  %v158 = vpop.xlane.xlu0 %157
  %v159 = vsel %vm61, %v149, 0.0
  %160 = vadd.xlane.f32.xlu0 %v159
  %v161 = vpop.xlane.xlu0 %160
  %v162 = vmul.f32 %v152, %v137
  %v163 = vmul.f32 %v155, %v137
  %v164 = vmul.f32 %v158, %v137
  %v165 = vmul.f32 %v161, %v137
  %v166 = vadd.f32 %v162, 1e-05
  %v167 = vadd.f32 %v163, 1e-05
  %v168 = vadd.f32 %v164, 1e-05
  %v169 = vadd.f32 %v165, 1e-05
  %v170 = vrsqrt.pop %v166
  %v171 = vrsqrt.pop %v167
  %v172 = vrsqrt.pop %v168
  %v173 = vrsqrt.pop %v169
  %v174 = vmul.f32 %v142, %v170
  %v175 = vmul.f32 %v143, %v171
  %v176 = vmul.f32 %v144, %v172
  %v177 = vmul.f32 %v145, %v173
  %v178 = vld [vmem:[%s4] sm:$0x1]
  %v180 = vlaneseq
  %v181 = vshrl.u32 %v180, 7
  %v182 = vsub.s32 0, %v181
  %v183 = vrot.slane %v178, %v182
  %v185 = vmul.f32 %v174, %v183
  %v186 = vmul.f32 %v175, %v183
  %v187 = vmul.f32 %v176, %v183
  %v188 = vmul.f32 %v177, %v183
  %v189 = vld [vmem:[%s5] sm:$0x1]
  %v191 = vlaneseq
  %v192 = vshrl.u32 %v191, 7
  %v193 = vsub.s32 0, %v192
  %v194 = vrot.slane %v189, %v193
  %v196 = vadd.f32 %v185, %v194
  %v197 = vadd.f32 %v186, %v194
  %v198 = vadd.f32 %v187, %v194
  %v199 = vadd.f32 %v188, %v194
  %200 = vst.msk [vmem:[%s6] sm:$0xff] %vm61, %v196
  %201 = vst.msk [vmem:[%s6 + $0x8] sm:$0xff] %vm61, %v197
  %202 = vst.msk [vmem:[%s6 + $0x10] sm:$0xff] %vm61, %v198
  %203 = vst.msk [vmem:[%s6 + $0x18] sm:$0xff] %vm61, %v199
  // Predicated region
  $region26: #{joint_conv_trans_block.32} parent=0 // pred_check
    _
  $region27: #{joint_conv_trans_block.32} parent=0 // pred_check_branch
    %205 = sbr.rel (0) target = $region29
  $region28: #{joint_conv_trans_block.32} parent=0 // pred_region
    _
  $region29: #{joint_conv_trans_block.32} parent=0 // pred_fallthru
    _
  // Predicated region
  $region30: #{joint_conv_trans_block.32} parent=0 // pred_check
    _
  $region31: #{joint_conv_trans_block.32} parent=0 // pred_check_branch
    %207 = sbr.rel (0) target = $region33
  $region32: #{joint_conv_trans_block.32} parent=0 // pred_region
    _
  $region33: #{joint_conv_trans_block.32} parent=0 // pred_fallthru
    _

// kernel: joint_conv_trans_block.33
$region0: #{joint_conv_trans_block.33}
  #allocation0 [shape = 'u32[]', space=smem, size = 0x4, offset = 0x4, fixed_abs, tag = 'smem constant byte address 0x4 - core index']
  #allocation1 [shape = 'u32[144,128]{1,0:T(1,128)}', space=vmem, size = 0x12000, scoped, tag = 'internal scratch']
  %s0 = inlined_call_operand.vmem [shape: f32[32,32], index: 0, kind: input, shape index: {}]
  %s1 = inlined_call_operand.vmem [shape: bf16[32,1024], index: 1, kind: input, shape index: {}]
  %s2 = inlined_call_operand.vmem [shape: f32[1,1024], index: 2, kind: input, shape index: {}]
  %s3 = inlined_call_operand.vmem [shape: bf16[32,1024], index: 3, kind: output, shape index: {}]
  %s4 = sld [smem:[#allocation0]]
  $region22: #{joint_conv_trans_block.33} parent=0
    _
  %s6 = ssub.s32 1, %s4
  %s7 = scalar_select 0, %s6, %s4
  // Predicated region
  $region2: #{joint_conv_trans_block.33} parent=0 // pred_check
    _
  $region3: #{joint_conv_trans_block.33} parent=0 // pred_check_branch
    %9 = sbr.rel (0) target = $region5
  $region4: #{joint_conv_trans_block.33} parent=0 // pred_region
    _
  $region5: #{joint_conv_trans_block.33} parent=0 // pred_fallthru
    _
  // Predicated region
  $region6: #{joint_conv_trans_block.33} parent=0 // pred_check
    _
  $region7: #{joint_conv_trans_block.33} parent=0 // pred_check_branch
    %11 = sbr.rel (0) target = $region9
  $region8: #{joint_conv_trans_block.33} parent=0 // pred_region
    _
  $region9: #{joint_conv_trans_block.33} parent=0 // pred_fallthru
    _
  // Predicated region
  $region10: #{joint_conv_trans_block.33} parent=0 // pred_check
    _
  $region11: #{joint_conv_trans_block.33} parent=0 // pred_check_branch
    %13 = sbr.rel (0) target = $region13
  $region12: #{joint_conv_trans_block.33} parent=0 // pred_region
    _
  $region13: #{joint_conv_trans_block.33} parent=0 // pred_fallthru
    _
  %v15 = vld [vmem:[%s0] sm:$0xff]
  %v16 = vld [vmem:[%s0 + $0x8] sm:$0xff]
  %v17 = vld [vmem:[%s0 + $0x10] sm:$0xff]
  %v18 = vld [vmem:[%s0 + $0x18] sm:$0xff]
  %v19 = vpack.c.bf16 %v16, %v15
  %v20 = vpack.c.bf16 %v18, %v17
  %v21 = vld [vmem:[%s1] sm:$0xff]
  %v22 = vld [vmem:[%s1 + $0x8] sm:$0xff]
  %v23 = vld [vmem:[%s1 + $0x10] sm:$0xff]
  %v24 = vld [vmem:[%s1 + $0x18] sm:$0xff]
  %v25 = vld [vmem:[%s1 + $0x20] sm:$0xff]
  %v26 = vld [vmem:[%s1 + $0x28] sm:$0xff]
  %v27 = vld [vmem:[%s1 + $0x30] sm:$0xff]
  %v28 = vld [vmem:[%s1 + $0x38] sm:$0xff]
  %v29 = vld [vmem:[%s1 + $0x40] sm:$0xff]
  %v30 = vld [vmem:[%s1 + $0x48] sm:$0xff]
  %v31 = vld [vmem:[%s1 + $0x50] sm:$0xff]
  %v32 = vld [vmem:[%s1 + $0x58] sm:$0xff]
  %v33 = vld [vmem:[%s1 + $0x60] sm:$0xff]
  %v34 = vld [vmem:[%s1 + $0x68] sm:$0xff]
  %v35 = vld [vmem:[%s1 + $0x70] sm:$0xff]
  %v36 = vld [vmem:[%s1 + $0x78] sm:$0xff]
  %v37 = vld [vmem:[%s2] sm:$0xff]
  %v39 = vlaneseq
  %v40 = vshrl.u32 %v39, 7
  %v41 = vsub.s32 0, %v40
  %v42 = vrot.slane %v37, %v41
  %v43 = vlaneseq
  %v44 = vshrl.u32 %v43, 7
  %v45 = vsub.s32 1, %v44
  %v46 = vrot.slane %v37, %v45
  %v47 = vlaneseq
  %v48 = vshrl.u32 %v47, 7
  %v49 = vsub.s32 2, %v48
  %v50 = vrot.slane %v37, %v49
  %v51 = vlaneseq
  %v52 = vshrl.u32 %v51, 7
  %v53 = vsub.s32 3, %v52
  %v54 = vrot.slane %v37, %v53
  %v55 = vlaneseq
  %v56 = vshrl.u32 %v55, 7
  %v57 = vsub.s32 4, %v56
  %v58 = vrot.slane %v37, %v57
  %v59 = vlaneseq
  %v60 = vshrl.u32 %v59, 7
  %v61 = vsub.s32 5, %v60
  %v62 = vrot.slane %v37, %v61
  %v63 = vlaneseq
  %v64 = vshrl.u32 %v63, 7
  %v65 = vsub.s32 6, %v64
  %v66 = vrot.slane %v37, %v65
  %v67 = vlaneseq
  %v68 = vshrl.u32 %v67, 7
  %v69 = vsub.s32 7, %v68
  %v70 = vrot.slane %v37, %v69
  %v95 = vunpack.c.l.b16 %v21
  %v96 = vunpack.c.h.b16 %v21
  %v97 = vunpack.c.l.b16 %v22
  %v98 = vunpack.c.h.b16 %v22
  %v99 = vunpack.c.l.b16 %v23
  %v100 = vunpack.c.h.b16 %v23
  %v101 = vunpack.c.l.b16 %v24
  %v102 = vunpack.c.h.b16 %v24
  %v103 = vunpack.c.l.b16 %v25
  %v104 = vunpack.c.h.b16 %v25
  %v105 = vunpack.c.l.b16 %v26
  %v106 = vunpack.c.h.b16 %v26
  %v107 = vunpack.c.l.b16 %v27
  %v108 = vunpack.c.h.b16 %v27
  %v109 = vunpack.c.l.b16 %v28
  %v110 = vunpack.c.h.b16 %v28
  %v111 = vunpack.c.l.b16 %v29
  %v112 = vunpack.c.h.b16 %v29
  %v113 = vunpack.c.l.b16 %v30
  %v114 = vunpack.c.h.b16 %v30
  %v115 = vunpack.c.l.b16 %v31
  %v116 = vunpack.c.h.b16 %v31
  %v117 = vunpack.c.l.b16 %v32
  %v118 = vunpack.c.h.b16 %v32
  %v119 = vunpack.c.l.b16 %v33
  %v120 = vunpack.c.h.b16 %v33
  %v121 = vunpack.c.l.b16 %v34
  %v122 = vunpack.c.h.b16 %v34
  %v123 = vunpack.c.l.b16 %v35
  %v124 = vunpack.c.h.b16 %v35
  %v125 = vunpack.c.l.b16 %v36
  %v126 = vunpack.c.h.b16 %v36
  %v127 = vpack.c.b16 %v103, %v95
  %v128 = vpack.c.b16 %v104, %v96
  %v129 = vpack.c.b16 %v105, %v97
  %v130 = vpack.c.b16 %v106, %v98
  %v131 = vpack.c.b16 %v107, %v99
  %v132 = vpack.c.b16 %v108, %v100
  %v133 = vpack.c.b16 %v109, %v101
  %v134 = vpack.c.b16 %v110, %v102
  %v135 = vpack.c.b16 %v119, %v111
  %v136 = vpack.c.b16 %v120, %v112
  %v137 = vpack.c.b16 %v121, %v113
  %v138 = vpack.c.b16 %v122, %v114
  %v139 = vpack.c.b16 %v123, %v115
  %v140 = vpack.c.b16 %v124, %v116
  %v141 = vpack.c.b16 %v125, %v117
  %v142 = vpack.c.b16 %v126, %v118
  %vm159 = vcmask 261120
  %v161 = vsel %vm159, %v19, 0
  %v164 = vsel %vm159, %v20, 0
  %166 = vmatprep.subr.bf16.mxu0 %v128
  %167 = vmatpush1.bf16.msra.mxu0 %v127
  %168 = vmatprep.subr.bf16.mxu0 %v136
  %169 = vmatpush1.bf16.msra.mxu0 %v135
  %170 = vmatprep.subr.bf16.mxu0 0
  %171 = vmatpush1.bf16.msra.mxu0 0
  %172 = vmatprep.subr.bf16.mxu0 0
  %173 = vmatpush1.bf16.msra.mxu0 0
  %174 = vmatprep.subr.bf16.mxu0 0
  %175 = vmatpush1.bf16.msra.mxu0 0
  %176 = vmatprep.subr.bf16.mxu0 0
  %177 = vmatpush1.bf16.msra.mxu0 0
  %178 = vmatprep.subr.bf16.mxu0 0
  %179 = vmatpush1.bf16.msra.mxu0 0
  %180 = vmatprep.subr.bf16.mxu0 0
  %181 = vmatpush1.bf16.msra.mxu0 0
  %182 = vmatprep.subr.bf16.mxu0 0
  %183 = vmatpush1.bf16.msra.mxu0 0
  %184 = vmatprep.subr.bf16.mxu0 0
  %185 = vmatpush1.bf16.msra.mxu0 0
  %186 = vmatprep.subr.bf16.mxu0 0
  %187 = vmatpush1.bf16.msra.mxu0 0
  %188 = vmatprep.subr.bf16.mxu0 0
  %189 = vmatpush1.bf16.msra.mxu0 0
  %190 = vmatprep.subr.bf16.mxu0 0
  %191 = vmatpush1.bf16.msra.mxu0 0
  %192 = vmatprep.subr.bf16.mxu0 0
  %193 = vmatpush1.bf16.msra.mxu0 0
  %194 = vmatprep.subr.bf16.mxu0 0
  %195 = vmatpush1.bf16.msra.mxu0 0
  %196 = vmatprep.subr.bf16.mxu0 0
  %197 = vmatpush1.bf16.msra.mxu0 0
  %198 = vmatprep.mubr.bf16.mxu0 0
  %199 = vmatmul.mubr.bf16.gmra.mrb[0].mxu0 %v161
  %v200 = vpop.f32.mrb[0].mxu0
  %v201 = vadd.f32 %v42, %v200
  %v202 = vpop.f32.mrb[0].mxu0
  %v203 = vadd.f32 %v46, %v202
  %v204 = vpop.f32.mrb[0].mxu0
  %v205 = vadd.f32 %v42, %v204
  %v206 = vpop.f32.mrb[0].mxu0
  %v207 = vadd.f32 %v46, %v206
  %208 = vmatprep.mubr.bf16.mxu0 0
  %209 = vmatmul.mubr.bf16.gmra.mrb[0].mxu0 %v164
  %v210 = vpop.f32.mrb[0].mxu0
  %v211 = vadd.f32 %v42, %v210
  %v212 = vpop.f32.mrb[0].mxu0
  %v213 = vadd.f32 %v46, %v212
  %v214 = vpop.f32.mrb[0].mxu0
  %v215 = vadd.f32 %v42, %v214
  %v216 = vpop.f32.mrb[0].mxu0
  %v217 = vadd.f32 %v46, %v216
  %218 = vdwg.mxu0
  %219 = vmatprep.subr.bf16.mxu0 %v130
  %220 = vmatpush1.bf16.msra.mxu0 %v129
  %221 = vmatprep.subr.bf16.mxu0 %v138
  %222 = vmatpush1.bf16.msra.mxu0 %v137
  %223 = vmatprep.subr.bf16.mxu0 0
  %224 = vmatpush1.bf16.msra.mxu0 0
  %225 = vmatprep.subr.bf16.mxu0 0
  %226 = vmatpush1.bf16.msra.mxu0 0
  %227 = vmatprep.subr.bf16.mxu0 0
  %228 = vmatpush1.bf16.msra.mxu0 0
  %229 = vmatprep.subr.bf16.mxu0 0
  %230 = vmatpush1.bf16.msra.mxu0 0
  %231 = vmatprep.subr.bf16.mxu0 0
  %232 = vmatpush1.bf16.msra.mxu0 0
  %233 = vmatprep.subr.bf16.mxu0 0
  %234 = vmatpush1.bf16.msra.mxu0 0
  %235 = vmatprep.subr.bf16.mxu0 0
  %236 = vmatpush1.bf16.msra.mxu0 0
  %237 = vmatprep.subr.bf16.mxu0 0
  %238 = vmatpush1.bf16.msra.mxu0 0
  %239 = vmatprep.subr.bf16.mxu0 0
  %240 = vmatpush1.bf16.msra.mxu0 0
  %241 = vmatprep.subr.bf16.mxu0 0
  %242 = vmatpush1.bf16.msra.mxu0 0
  %243 = vmatprep.subr.bf16.mxu0 0
  %244 = vmatpush1.bf16.msra.mxu0 0
  %245 = vmatprep.subr.bf16.mxu0 0
  %246 = vmatpush1.bf16.msra.mxu0 0
  %247 = vmatprep.subr.bf16.mxu0 0
  %248 = vmatpush1.bf16.msra.mxu0 0
  %249 = vmatprep.subr.bf16.mxu0 0
  %250 = vmatpush1.bf16.msra.mxu0 0
  %251 = vmatprep.mubr.bf16.mxu0 0
  %252 = vmatmul.mubr.bf16.gmra.mrb[0].mxu0 %v161
  %v253 = vpop.f32.mrb[0].mxu0
  %v254 = vadd.f32 %v50, %v253
  %v255 = vpop.f32.mrb[0].mxu0
  %v256 = vadd.f32 %v54, %v255
  %v257 = vpop.f32.mrb[0].mxu0
  %v258 = vadd.f32 %v50, %v257
  %v259 = vpop.f32.mrb[0].mxu0
  %v260 = vadd.f32 %v54, %v259
  %261 = vmatprep.mubr.bf16.mxu0 0
  %262 = vmatmul.mubr.bf16.gmra.mrb[0].mxu0 %v164
  %v263 = vpop.f32.mrb[0].mxu0
  %v264 = vadd.f32 %v50, %v263
  %v265 = vpop.f32.mrb[0].mxu0
  %v266 = vadd.f32 %v54, %v265
  %v267 = vpop.f32.mrb[0].mxu0
  %v268 = vadd.f32 %v50, %v267
  %v269 = vpop.f32.mrb[0].mxu0
  %v270 = vadd.f32 %v54, %v269
  %271 = vdwg.mxu0
  %272 = vmatprep.subr.bf16.mxu0 %v132
  %273 = vmatpush1.bf16.msra.mxu0 %v131
  %274 = vmatprep.subr.bf16.mxu0 %v140
  %275 = vmatpush1.bf16.msra.mxu0 %v139
  %276 = vmatprep.subr.bf16.mxu0 0
  %277 = vmatpush1.bf16.msra.mxu0 0
  %278 = vmatprep.subr.bf16.mxu0 0
  %279 = vmatpush1.bf16.msra.mxu0 0
  %280 = vmatprep.subr.bf16.mxu0 0
  %281 = vmatpush1.bf16.msra.mxu0 0
  %282 = vmatprep.subr.bf16.mxu0 0
  %283 = vmatpush1.bf16.msra.mxu0 0
  %284 = vmatprep.subr.bf16.mxu0 0
  %285 = vmatpush1.bf16.msra.mxu0 0
  %286 = vmatprep.subr.bf16.mxu0 0
  %287 = vmatpush1.bf16.msra.mxu0 0
  %288 = vmatprep.subr.bf16.mxu0 0
  %289 = vmatpush1.bf16.msra.mxu0 0
  %290 = vmatprep.subr.bf16.mxu0 0
  %291 = vmatpush1.bf16.msra.mxu0 0
  %292 = vmatprep.subr.bf16.mxu0 0
  %293 = vmatpush1.bf16.msra.mxu0 0
  %294 = vmatprep.subr.bf16.mxu0 0
  %295 = vmatpush1.bf16.msra.mxu0 0
  %296 = vmatprep.subr.bf16.mxu0 0
  %297 = vmatpush1.bf16.msra.mxu0 0
  %298 = vmatprep.subr.bf16.mxu0 0
  %299 = vmatpush1.bf16.msra.mxu0 0
  %300 = vmatprep.subr.bf16.mxu0 0
  %301 = vmatpush1.bf16.msra.mxu0 0
  %302 = vmatprep.subr.bf16.mxu0 0
  %303 = vmatpush1.bf16.msra.mxu0 0
  %304 = vmatprep.mubr.bf16.mxu0 0
  %305 = vmatmul.mubr.bf16.gmra.mrb[0].mxu0 %v161
  %v306 = vpop.f32.mrb[0].mxu0
  %v307 = vadd.f32 %v58, %v306
  %v308 = vpop.f32.mrb[0].mxu0
  %v309 = vadd.f32 %v62, %v308
  %v310 = vpop.f32.mrb[0].mxu0
  %v311 = vadd.f32 %v58, %v310
  %v312 = vpop.f32.mrb[0].mxu0
  %v313 = vadd.f32 %v62, %v312
  %314 = vmatprep.mubr.bf16.mxu0 0
  %315 = vmatmul.mubr.bf16.gmra.mrb[0].mxu0 %v164
  %v316 = vpop.f32.mrb[0].mxu0
  %v317 = vadd.f32 %v58, %v316
  %v318 = vpop.f32.mrb[0].mxu0
  %v319 = vadd.f32 %v62, %v318
  %v320 = vpop.f32.mrb[0].mxu0
  %v321 = vadd.f32 %v58, %v320
  %v322 = vpop.f32.mrb[0].mxu0
  %v323 = vadd.f32 %v62, %v322
  %324 = vdwg.mxu0
  %325 = vmatprep.subr.bf16.mxu0 %v134
  %326 = vmatpush1.bf16.msra.mxu0 %v133
  %327 = vmatprep.subr.bf16.mxu0 %v142
  %328 = vmatpush1.bf16.msra.mxu0 %v141
  %329 = vmatprep.subr.bf16.mxu0 0
  %330 = vmatpush1.bf16.msra.mxu0 0
  %331 = vmatprep.subr.bf16.mxu0 0
  %332 = vmatpush1.bf16.msra.mxu0 0
  %333 = vmatprep.subr.bf16.mxu0 0
  %334 = vmatpush1.bf16.msra.mxu0 0
  %335 = vmatprep.subr.bf16.mxu0 0
  %336 = vmatpush1.bf16.msra.mxu0 0
  %337 = vmatprep.subr.bf16.mxu0 0
  %338 = vmatpush1.bf16.msra.mxu0 0
  %339 = vmatprep.subr.bf16.mxu0 0
  %340 = vmatpush1.bf16.msra.mxu0 0
  %341 = vmatprep.subr.bf16.mxu0 0
  %342 = vmatpush1.bf16.msra.mxu0 0
  %343 = vmatprep.subr.bf16.mxu0 0
  %344 = vmatpush1.bf16.msra.mxu0 0
  %345 = vmatprep.subr.bf16.mxu0 0
  %346 = vmatpush1.bf16.msra.mxu0 0
  %347 = vmatprep.subr.bf16.mxu0 0
  %348 = vmatpush1.bf16.msra.mxu0 0
  %349 = vmatprep.subr.bf16.mxu0 0
  %350 = vmatpush1.bf16.msra.mxu0 0
  %351 = vmatprep.subr.bf16.mxu0 0
  %352 = vmatpush1.bf16.msra.mxu0 0
  %353 = vmatprep.subr.bf16.mxu0 0
  %354 = vmatpush1.bf16.msra.mxu0 0
  %355 = vmatprep.subr.bf16.mxu0 0
  %356 = vmatpush1.bf16.msra.mxu0 0
  %357 = vmatprep.mubr.bf16.mxu0 0
  %358 = vmatmul.mubr.bf16.gmra.mrb[0].mxu0 %v161
  %v359 = vpop.f32.mrb[0].mxu0
  %v360 = vadd.f32 %v66, %v359
  %v361 = vpop.f32.mrb[0].mxu0
  %v362 = vadd.f32 %v70, %v361
  %v363 = vpop.f32.mrb[0].mxu0
  %v364 = vadd.f32 %v66, %v363
  %v365 = vpop.f32.mrb[0].mxu0
  %v366 = vadd.f32 %v70, %v365
  %367 = vmatprep.mubr.bf16.mxu0 0
  %368 = vmatmul.mubr.bf16.gmra.mrb[0].mxu0 %v164
  %v369 = vpop.f32.mrb[0].mxu0
  %v370 = vadd.f32 %v66, %v369
  %v371 = vpop.f32.mrb[0].mxu0
  %v372 = vadd.f32 %v70, %v371
  %v373 = vpop.f32.mrb[0].mxu0
  %v374 = vadd.f32 %v66, %v373
  %v375 = vpop.f32.mrb[0].mxu0
  %v376 = vadd.f32 %v70, %v375
  %377 = vdwg.mxu0
  %v378 = vmax.f32 %v201, 0.0
  %v379 = vmax.f32 %v203, 0.0
  %v380 = vmax.f32 %v254, 0.0
  %v381 = vmax.f32 %v256, 0.0
  %v382 = vmax.f32 %v307, 0.0
  %v383 = vmax.f32 %v309, 0.0
  %v384 = vmax.f32 %v360, 0.0
  %v385 = vmax.f32 %v362, 0.0
  %v386 = vmax.f32 %v205, 0.0
  %v387 = vmax.f32 %v207, 0.0
  %v388 = vmax.f32 %v258, 0.0
  %v389 = vmax.f32 %v260, 0.0
  %v390 = vmax.f32 %v311, 0.0
  %v391 = vmax.f32 %v313, 0.0
  %v392 = vmax.f32 %v364, 0.0
  %v393 = vmax.f32 %v366, 0.0
  %v394 = vmax.f32 %v211, 0.0
  %v395 = vmax.f32 %v213, 0.0
  %v396 = vmax.f32 %v264, 0.0
  %v397 = vmax.f32 %v266, 0.0
  %v398 = vmax.f32 %v317, 0.0
  %v399 = vmax.f32 %v319, 0.0
  %v400 = vmax.f32 %v370, 0.0
  %v401 = vmax.f32 %v372, 0.0
  %v402 = vmax.f32 %v215, 0.0
  %v403 = vmax.f32 %v217, 0.0
  %v404 = vmax.f32 %v268, 0.0
  %v405 = vmax.f32 %v270, 0.0
  %v406 = vmax.f32 %v321, 0.0
  %v407 = vmax.f32 %v323, 0.0
  %v408 = vmax.f32 %v374, 0.0
  %v409 = vmax.f32 %v376, 0.0
  %v410 = vpack.c.bf16 %v386, %v378
  %v411 = vpack.c.bf16 %v387, %v379
  %v412 = vpack.c.bf16 %v388, %v380
  %v413 = vpack.c.bf16 %v389, %v381
  %v414 = vpack.c.bf16 %v390, %v382
  %v415 = vpack.c.bf16 %v391, %v383
  %v416 = vpack.c.bf16 %v392, %v384
  %v417 = vpack.c.bf16 %v393, %v385
  %v418 = vpack.c.bf16 %v402, %v394
  %v419 = vpack.c.bf16 %v403, %v395
  %v420 = vpack.c.bf16 %v404, %v396
  %v421 = vpack.c.bf16 %v405, %v397
  %v422 = vpack.c.bf16 %v406, %v398
  %v423 = vpack.c.bf16 %v407, %v399
  %v424 = vpack.c.bf16 %v408, %v400
  %v425 = vpack.c.bf16 %v409, %v401
  %v442 = vunpack.c.l.b16 %v410
  %v443 = vunpack.c.l.b16 %v411
  %v444 = vunpack.c.l.b16 %v412
  %v445 = vunpack.c.l.b16 %v413
  %v446 = vunpack.c.l.b16 %v414
  %v447 = vunpack.c.l.b16 %v415
  %v448 = vunpack.c.l.b16 %v416
  %v449 = vunpack.c.l.b16 %v417
  %v450 = vunpack.c.h.b16 %v410
  %v451 = vunpack.c.h.b16 %v411
  %v452 = vunpack.c.h.b16 %v412
  %v453 = vunpack.c.h.b16 %v413
  %v454 = vunpack.c.h.b16 %v414
  %v455 = vunpack.c.h.b16 %v415
  %v456 = vunpack.c.h.b16 %v416
  %v457 = vunpack.c.h.b16 %v417
  %v458 = vunpack.c.l.b16 %v418
  %v459 = vunpack.c.l.b16 %v419
  %v460 = vunpack.c.l.b16 %v420
  %v461 = vunpack.c.l.b16 %v421
  %v462 = vunpack.c.l.b16 %v422
  %v463 = vunpack.c.l.b16 %v423
  %v464 = vunpack.c.l.b16 %v424
  %v465 = vunpack.c.l.b16 %v425
  %v466 = vunpack.c.h.b16 %v418
  %v467 = vunpack.c.h.b16 %v419
  %v468 = vunpack.c.h.b16 %v420
  %v469 = vunpack.c.h.b16 %v421
  %v470 = vunpack.c.h.b16 %v422
  %v471 = vunpack.c.h.b16 %v423
  %v472 = vunpack.c.h.b16 %v424
  %v473 = vunpack.c.h.b16 %v425
  %v474 = vpack.c.b16 %v443, %v442
  %v475 = vpack.c.b16 %v445, %v444
  %v476 = vpack.c.b16 %v447, %v446
  %v477 = vpack.c.b16 %v449, %v448
  %v478 = vpack.c.b16 %v451, %v450
  %v479 = vpack.c.b16 %v453, %v452
  %v480 = vpack.c.b16 %v455, %v454
  %v481 = vpack.c.b16 %v457, %v456
  %v482 = vpack.c.b16 %v459, %v458
  %v483 = vpack.c.b16 %v461, %v460
  %v484 = vpack.c.b16 %v463, %v462
  %v485 = vpack.c.b16 %v465, %v464
  %v486 = vpack.c.b16 %v467, %v466
  %v487 = vpack.c.b16 %v469, %v468
  %v488 = vpack.c.b16 %v471, %v470
  %v489 = vpack.c.b16 %v473, %v472
  %506 = vst [vmem:[%s3] sm:$0xff] %v474
  %507 = vst [vmem:[%s3 + $0x8] sm:$0xff] %v475
  %508 = vst [vmem:[%s3 + $0x10] sm:$0xff] %v476
  %509 = vst [vmem:[%s3 + $0x18] sm:$0xff] %v477
  %510 = vst [vmem:[%s3 + $0x20] sm:$0xff] %v478
  %511 = vst [vmem:[%s3 + $0x28] sm:$0xff] %v479
  %512 = vst [vmem:[%s3 + $0x30] sm:$0xff] %v480
  %513 = vst [vmem:[%s3 + $0x38] sm:$0xff] %v481
  %514 = vst [vmem:[%s3 + $0x40] sm:$0xff] %v482
  %515 = vst [vmem:[%s3 + $0x48] sm:$0xff] %v483
  %516 = vst [vmem:[%s3 + $0x50] sm:$0xff] %v484
  %517 = vst [vmem:[%s3 + $0x58] sm:$0xff] %v485
  %518 = vst [vmem:[%s3 + $0x60] sm:$0xff] %v486
  %519 = vst [vmem:[%s3 + $0x68] sm:$0xff] %v487
  %520 = vst [vmem:[%s3 + $0x70] sm:$0xff] %v488
  %521 = vst [vmem:[%s3 + $0x78] sm:$0xff] %v489
  // Predicated region
  $region14: #{joint_conv_trans_block.33} parent=0 // pred_check
    _
  $region15: #{joint_conv_trans_block.33} parent=0 // pred_check_branch
    %523 = sbr.rel (0) target = $region17
  $region16: #{joint_conv_trans_block.33} parent=0 // pred_region
    _
  $region17: #{joint_conv_trans_block.33} parent=0 // pred_fallthru
    _
  // Predicated region
  $region18: #{joint_conv_trans_block.33} parent=0 // pred_check
    _
  $region19: #{joint_conv_trans_block.33} parent=0 // pred_check_branch
    %525 = sbr.rel (0) target = $region21
  $region20: #{joint_conv_trans_block.33} parent=0 // pred_region
    _
  $region21: #{joint_conv_trans_block.33} parent=0 // pred_fallthru
    _

// kernel: joint_conv_trans_block.47
$region0: #{joint_conv_trans_block.47}
  #allocation0 [shape = 'u32[]', space=smem, size = 0x4, offset = 0x4, fixed_abs, tag = 'smem constant byte address 0x4 - core index']
  #allocation1 [shape = 'u32[144,128]{1,0:T(1,128)}', space=vmem, size = 0x12000, scoped, tag = 'internal scratch']
  %s0 = inlined_call_operand.vmem [shape: bf16[32,32], index: 0, kind: input, shape index: {}]
  %s1 = inlined_call_operand.vmem [shape: bf16[32,32], index: 1, kind: input, shape index: {}]
  %s2 = inlined_call_operand.vmem [shape: f32[32,32], index: 2, kind: input, shape index: {}]
  %s3 = inlined_call_operand.vmem [shape: bf16[32,32], index: 3, kind: input, shape index: {}]
  %s4 = inlined_call_operand.vmem [shape: f32[1,32], index: 4, kind: input, shape index: {}]
  %s5 = inlined_call_operand.hbm [shape: f32[32,32], index: 5, kind: output, shape index: {}]
  %s6 = sld [smem:[#allocation0]]
  $region30: #{joint_conv_trans_block.47} parent=0
    _
  %s8 = ssub.s32 1, %s6
  %s9 = scalar_select 0, %s8, %s6
  $region1: #{joint_conv_trans_block.47} parent=0
    #allocation2 [shape = 'u8[16384]{0}', space=vmem, size = 0x4000, scoped, tag = 'output window, operand 0, single buffered']
    #allocation3 [shape = 's32[1]{0}', space=sflag, size = 0x4, scoped, tag = 'scoped memory for joint_conv_trans_block.47']
    %10 = vsyncpa [#allocation3], 0
    // Predicated region
    $region2: #{joint_conv_trans_block.47} parent=1 // pred_check
      _
    $region3: #{joint_conv_trans_block.47} parent=1 // pred_check_branch
      %12 = sbr.rel (0) target = $region5
    $region4: #{joint_conv_trans_block.47} parent=1 // pred_region
      _
    $region5: #{joint_conv_trans_block.47} parent=1 // pred_fallthru
      _
    // Predicated region
    $region6: #{joint_conv_trans_block.47} parent=1 // pred_check
      _
    $region7: #{joint_conv_trans_block.47} parent=1 // pred_check_branch
      %14 = sbr.rel (0) target = $region9
    $region8: #{joint_conv_trans_block.47} parent=1 // pred_region
      _
    $region9: #{joint_conv_trans_block.47} parent=1 // pred_fallthru
      _
    // Predicated region
    $region10: #{joint_conv_trans_block.47} parent=1 // pred_check
      _
    $region11: #{joint_conv_trans_block.47} parent=1 // pred_check_branch
      %16 = sbr.rel (0) target = $region13
    $region12: #{joint_conv_trans_block.47} parent=1 // pred_region
      _
    $region13: #{joint_conv_trans_block.47} parent=1 // pred_fallthru
      _
    // Predicated region
    $region14: #{joint_conv_trans_block.47} parent=1 // pred_check
      _
    $region15: #{joint_conv_trans_block.47} parent=1 // pred_check_branch
      %18 = sbr.rel (0) target = $region17
    $region16: #{joint_conv_trans_block.47} parent=1 // pred_region
      _
    $region17: #{joint_conv_trans_block.47} parent=1 // pred_fallthru
      _
    // Predicated region
    $region18: #{joint_conv_trans_block.47} parent=1 // pred_check
      _
    $region19: #{joint_conv_trans_block.47} parent=1 // pred_check_branch
      %20 = sbr.rel (0) target = $region21
    $region20: #{joint_conv_trans_block.47} parent=1 // pred_region
      _
    $region21: #{joint_conv_trans_block.47} parent=1 // pred_fallthru
      _
    %v22 = vld [vmem:[%s0] sm:$0xf]
    %v23 = vld [vmem:[%s0 + $0x4] sm:$0xf]
    %v24 = vld [vmem:[%s0 + $0x8] sm:$0xf]
    %v25 = vld [vmem:[%s0 + $0xc] sm:$0xf]
    %v26 = vld [vmem:[%s2] sm:$0xff]
    %v27 = vld [vmem:[%s2 + $0x8] sm:$0xff]
    %v28 = vld [vmem:[%s2 + $0x10] sm:$0xff]
    %v29 = vld [vmem:[%s2 + $0x18] sm:$0xff]
    %v30 = vpack.c.bf16 %v27, %v26
    %v31 = vpack.c.bf16 %v29, %v28
    %v32 = vld [vmem:[%s1] sm:$0xf]
    %v33 = vld [vmem:[%s1 + $0x4] sm:$0xf]
    %v34 = vld [vmem:[%s1 + $0x8] sm:$0xf]
    %v35 = vld [vmem:[%s1 + $0xc] sm:$0xf]
    %v36 = vld [vmem:[%s3] sm:$0xf]
    %v37 = vld [vmem:[%s3 + $0x4] sm:$0xf]
    %v38 = vld [vmem:[%s3 + $0x8] sm:$0xf]
    %v39 = vld [vmem:[%s3 + $0xc] sm:$0xf]
    %v44 = vunpack.c.l.b16 %v36
    %v45 = vunpack.c.l.b16 %v37
    %v46 = vunpack.c.l.b16 %v38
    %v47 = vunpack.c.l.b16 %v39
    %v48 = vpack.c.b16 %v45, %v44
    %v49 = vpack.c.b16 %v47, %v46
    %vm52 = vcmask 261120
    %v54 = vsel %vm52, %v30, 0
    %v57 = vsel %vm52, %v31, 0
    %59 = vmatprep.subr.bf16.mxu0 0
    %60 = vmatpush1.bf16.msra.mxu0 %v48
    %61 = vmatprep.subr.bf16.mxu0 0
    %62 = vmatpush1.bf16.msra.mxu0 %v49
    %63 = vmatprep.subr.bf16.mxu0 0
    %64 = vmatpush1.bf16.msra.mxu0 0
    %65 = vmatprep.subr.bf16.mxu0 0
    %66 = vmatpush1.bf16.msra.mxu0 0
    %67 = vmatprep.subr.bf16.mxu0 0
    %68 = vmatpush1.bf16.msra.mxu0 0
    %69 = vmatprep.subr.bf16.mxu0 0
    %70 = vmatpush1.bf16.msra.mxu0 0
    %71 = vmatprep.subr.bf16.mxu0 0
    %72 = vmatpush1.bf16.msra.mxu0 0
    %73 = vmatprep.subr.bf16.mxu0 0
    %74 = vmatpush1.bf16.msra.mxu0 0
    %75 = vmatprep.subr.bf16.mxu0 0
    %76 = vmatpush1.bf16.msra.mxu0 0
    %77 = vmatprep.subr.bf16.mxu0 0
    %78 = vmatpush1.bf16.msra.mxu0 0
    %79 = vmatprep.subr.bf16.mxu0 0
    %80 = vmatpush1.bf16.msra.mxu0 0
    %81 = vmatprep.subr.bf16.mxu0 0
    %82 = vmatpush1.bf16.msra.mxu0 0
    %83 = vmatprep.subr.bf16.mxu0 0
    %84 = vmatpush1.bf16.msra.mxu0 0
    %85 = vmatprep.subr.bf16.mxu0 0
    %86 = vmatpush1.bf16.msra.mxu0 0
    %87 = vmatprep.subr.bf16.mxu0 0
    %88 = vmatpush1.bf16.msra.mxu0 0
    %89 = vmatprep.subr.bf16.mxu0 0
    %90 = vmatpush1.bf16.msra.mxu0 0
    %91 = vmatprep.mubr.bf16.mxu0 0
    %92 = vmatmul.mubr.bf16.gmra.mrb[0].mxu0 %v54
    %v93 = vpop.f32.mrb[0].mxu0
    %v94 = vadd.f32 0.0, %v93
    %v95 = vpop.f32.mrb[0].mxu0
    %v96 = vpop.f32.mrb[0].mxu0
    %v97 = vadd.f32 0.0, %v96
    %v98 = vpop.f32.mrb[0].mxu0
    %99 = vmatprep.mubr.bf16.mxu0 0
    %100 = vmatmul.mubr.bf16.gmra.mrb[0].mxu0 %v57
    %v101 = vpop.f32.mrb[0].mxu0
    %v102 = vadd.f32 0.0, %v101
    %v103 = vpop.f32.mrb[0].mxu0
    %v104 = vpop.f32.mrb[0].mxu0
    %v105 = vadd.f32 0.0, %v104
    %v106 = vpop.f32.mrb[0].mxu0
    %107 = vdwg.mxu0
    %v112 = vunpack.c.l.b16 %v22
    %v113 = vunpack.c.l.b16 %v23
    %v114 = vunpack.c.l.b16 %v24
    %v115 = vunpack.c.l.b16 %v25
    %v116 = vpack.c.b16 %v113, %v112
    %v117 = vpack.c.b16 %v115, %v114
    %v122 = vunpack.c.l.b16 %v32
    %v123 = vunpack.c.l.b16 %v33
    %v124 = vunpack.c.l.b16 %v34
    %v125 = vunpack.c.l.b16 %v35
    %v126 = vpack.c.b16 %v123, %v122
    %v127 = vpack.c.b16 %v125, %v124
    %v131 = vsel %vm52, %v116, 0
    %v134 = vsel %vm52, %v117, 0
    %136 = vmatprep.subr.bf16.mxu0 0
    %137 = vmatpush1.bf16.msra.mxu0 %v126
    %138 = vmatprep.subr.bf16.mxu0 0
    %139 = vmatpush1.bf16.msra.mxu0 %v127
    %140 = vmatprep.subr.bf16.mxu0 0
    %141 = vmatpush1.bf16.msra.mxu0 0
    %142 = vmatprep.subr.bf16.mxu0 0
    %143 = vmatpush1.bf16.msra.mxu0 0
    %144 = vmatprep.subr.bf16.mxu0 0
    %145 = vmatpush1.bf16.msra.mxu0 0
    %146 = vmatprep.subr.bf16.mxu0 0
    %147 = vmatpush1.bf16.msra.mxu0 0
    %148 = vmatprep.subr.bf16.mxu0 0
    %149 = vmatpush1.bf16.msra.mxu0 0
    %150 = vmatprep.subr.bf16.mxu0 0
    %151 = vmatpush1.bf16.msra.mxu0 0
    %152 = vmatprep.subr.bf16.mxu0 0
    %153 = vmatpush1.bf16.msra.mxu0 0
    %154 = vmatprep.subr.bf16.mxu0 0
    %155 = vmatpush1.bf16.msra.mxu0 0
    %156 = vmatprep.subr.bf16.mxu0 0
    %157 = vmatpush1.bf16.msra.mxu0 0
    %158 = vmatprep.subr.bf16.mxu0 0
    %159 = vmatpush1.bf16.msra.mxu0 0
    %160 = vmatprep.subr.bf16.mxu0 0
    %161 = vmatpush1.bf16.msra.mxu0 0
    %162 = vmatprep.subr.bf16.mxu0 0
    %163 = vmatpush1.bf16.msra.mxu0 0
    %164 = vmatprep.subr.bf16.mxu0 0
    %165 = vmatpush1.bf16.msra.mxu0 0
    %166 = vmatprep.subr.bf16.mxu0 0
    %167 = vmatpush1.bf16.msra.mxu0 0
    %168 = vmatprep.mubr.bf16.mxu0 0
    %169 = vmatmul.mubr.bf16.gmra.mrb[0].mxu0 %v131
    %v170 = vpop.f32.mrb[0].mxu0
    %v171 = vadd.f32 %v94, %v170
    %v172 = vpop.f32.mrb[0].mxu0
    %v173 = vpop.f32.mrb[0].mxu0
    %v174 = vadd.f32 %v97, %v173
    %v175 = vpop.f32.mrb[0].mxu0
    %176 = vmatprep.mubr.bf16.mxu0 0
    %177 = vmatmul.mubr.bf16.gmra.mrb[0].mxu0 %v134
    %v178 = vpop.f32.mrb[0].mxu0
    %v179 = vadd.f32 %v102, %v178
    %v180 = vpop.f32.mrb[0].mxu0
    %v181 = vpop.f32.mrb[0].mxu0
    %v182 = vadd.f32 %v105, %v181
    %v183 = vpop.f32.mrb[0].mxu0
    %184 = vdwg.mxu0
    %v185 = vld [vmem:[%s4] sm:$0x1]
    %v187 = vlaneseq
    %v188 = vshrl.u32 %v187, 7
    %v189 = vsub.s32 0, %v188
    %v190 = vrot.slane %v185, %v189
    %v192 = vadd.f32 %v171, %v190
    %v193 = vadd.f32 %v174, %v190
    %v194 = vadd.f32 %v179, %v190
    %v195 = vadd.f32 %v182, %v190
    %196 = vst.msk [vmem:[#allocation2] sm:$0xff] %vm52, %v192
    %197 = vst.msk [vmem:[#allocation2 + $0x8] sm:$0xff] %vm52, %v193
    %198 = vst.msk [vmem:[#allocation2 + $0x10] sm:$0xff] %vm52, %v194
    %199 = vst.msk [vmem:[#allocation2 + $0x18] sm:$0xff] %vm52, %v195
    // Predicated region
    $region22: #{joint_conv_trans_block.47} parent=1 // pred_check
      _
    $region23: #{joint_conv_trans_block.47} parent=1 // pred_check_branch
      %201 = sbr.rel (0) target = $region25
    $region24: #{joint_conv_trans_block.47} parent=1 // pred_region
      %s203 = ssub.s32 512, 512
      %204 = vsyncadd [#allocation3], %s203
      %s205 = sshll.u32 [#allocation2], 4
      %s206 = int_to_ptr.vmem [resolvable:$true] %s205
      %211 = dma.vmem_to_hbm [thread:$0]  %s206, 512, %s5, [#allocation3], 128, 128, 8
    $region25: #{joint_conv_trans_block.47} parent=1 // pred_fallthru
      _
    // Predicated region
    $region26: #{joint_conv_trans_block.47} parent=1 // pred_check
      _
    $region27: #{joint_conv_trans_block.47} parent=1 // pred_check_branch
      %213 = sbr.rel (0) target = $region29
    $region28: #{joint_conv_trans_block.47} parent=1 // pred_region
      %214 = dma.done [#allocation3], 512
    $region29: #{joint_conv_trans_block.47} parent=1 // pred_fallthru
      _
    %215 = vsyncpa [#allocation3], 1

// kernel: joint_conv_trans_block.34
$region0: #{joint_conv_trans_block.34}
  #allocation0 [shape = 'u32[]', space=smem, size = 0x4, offset = 0x4, fixed_abs, tag = 'smem constant byte address 0x4 - core index']
  #allocation1 [shape = 'u32[144,128]{1,0:T(1,128)}', space=vmem, size = 0x12000, scoped, tag = 'internal scratch']
  %s0 = inlined_call_operand.vmem [shape: bf16[32,1024], index: 0, kind: input, shape index: {}]
  %s1 = inlined_call_operand.vmem [shape: bf16[1024,32], index: 1, kind: input, shape index: {}]
  %s2 = inlined_call_operand.vmem [shape: f32[1,32], index: 2, kind: input, shape index: {}]
  %s3 = inlined_call_operand.vmem [shape: f32[32,32], index: 3, kind: input, shape index: {}]
  %s4 = inlined_call_operand.vmem [shape: f32[1,32], index: 4, kind: input, shape index: {}]
  %s5 = inlined_call_operand.vmem [shape: f32[1,32], index: 5, kind: input, shape index: {}]
  %s6 = inlined_call_operand.vmem [shape: f32[32,32], index: 6, kind: output, shape index: {}]
  %s7 = sld [smem:[#allocation0]]
  $region34: #{joint_conv_trans_block.34} parent=0
    _
  %s9 = ssub.s32 1, %s7
  %s10 = scalar_select 0, %s9, %s7
  // Predicated region
  $region2: #{joint_conv_trans_block.34} parent=0 // pred_check
    _
  $region3: #{joint_conv_trans_block.34} parent=0 // pred_check_branch
    %12 = sbr.rel (0) target = $region5
  $region4: #{joint_conv_trans_block.34} parent=0 // pred_region
    _
  $region5: #{joint_conv_trans_block.34} parent=0 // pred_fallthru
    _
  // Predicated region
  $region6: #{joint_conv_trans_block.34} parent=0 // pred_check
    _
  $region7: #{joint_conv_trans_block.34} parent=0 // pred_check_branch
    %14 = sbr.rel (0) target = $region9
  $region8: #{joint_conv_trans_block.34} parent=0 // pred_region
    _
  $region9: #{joint_conv_trans_block.34} parent=0 // pred_fallthru
    _
  // Predicated region
  $region10: #{joint_conv_trans_block.34} parent=0 // pred_check
    _
  $region11: #{joint_conv_trans_block.34} parent=0 // pred_check_branch
    %16 = sbr.rel (0) target = $region13
  $region12: #{joint_conv_trans_block.34} parent=0 // pred_region
    _
  $region13: #{joint_conv_trans_block.34} parent=0 // pred_fallthru
    _
  // Predicated region
  $region14: #{joint_conv_trans_block.34} parent=0 // pred_check
    _
  $region15: #{joint_conv_trans_block.34} parent=0 // pred_check_branch
    %18 = sbr.rel (0) target = $region17
  $region16: #{joint_conv_trans_block.34} parent=0 // pred_region
    _
  $region17: #{joint_conv_trans_block.34} parent=0 // pred_fallthru
    _
  // Predicated region
  $region18: #{joint_conv_trans_block.34} parent=0 // pred_check
    _
  $region19: #{joint_conv_trans_block.34} parent=0 // pred_check_branch
    %20 = sbr.rel (0) target = $region21
  $region20: #{joint_conv_trans_block.34} parent=0 // pred_region
    _
  $region21: #{joint_conv_trans_block.34} parent=0 // pred_fallthru
    _
  // Predicated region
  $region22: #{joint_conv_trans_block.34} parent=0 // pred_check
    _
  $region23: #{joint_conv_trans_block.34} parent=0 // pred_check_branch
    %22 = sbr.rel (0) target = $region25
  $region24: #{joint_conv_trans_block.34} parent=0 // pred_region
    _
  $region25: #{joint_conv_trans_block.34} parent=0 // pred_fallthru
    _
  %v24 = vld [vmem:[%s0] sm:$0xff]
  %v25 = vld [vmem:[%s0 + $0x8] sm:$0xff]
  %v26 = vld [vmem:[%s0 + $0x10] sm:$0xff]
  %v27 = vld [vmem:[%s0 + $0x18] sm:$0xff]
  %v28 = vld [vmem:[%s0 + $0x20] sm:$0xff]
  %v29 = vld [vmem:[%s0 + $0x28] sm:$0xff]
  %v30 = vld [vmem:[%s0 + $0x30] sm:$0xff]
  %v31 = vld [vmem:[%s0 + $0x38] sm:$0xff]
  %v32 = vld [vmem:[%s0 + $0x40] sm:$0xff]
  %v33 = vld [vmem:[%s0 + $0x48] sm:$0xff]
  %v34 = vld [vmem:[%s0 + $0x50] sm:$0xff]
  %v35 = vld [vmem:[%s0 + $0x58] sm:$0xff]
  %v36 = vld [vmem:[%s0 + $0x60] sm:$0xff]
  %v37 = vld [vmem:[%s0 + $0x68] sm:$0xff]
  %v38 = vld [vmem:[%s0 + $0x70] sm:$0xff]
  %v39 = vld [vmem:[%s0 + $0x78] sm:$0xff]
  %v40 = vld [vmem:[%s1] sm:$0xf]
  %v41 = vld [vmem:[%s1 + $0x4] sm:$0xf]
  %v42 = vld [vmem:[%s1 + $0x8] sm:$0xf]
  %v43 = vld [vmem:[%s1 + $0xc] sm:$0xf]
  %v44 = vld [vmem:[%s1 + $0x10] sm:$0xf]
  %v45 = vld [vmem:[%s1 + $0x14] sm:$0xf]
  %v46 = vld [vmem:[%s1 + $0x18] sm:$0xf]
  %v47 = vld [vmem:[%s1 + $0x1c] sm:$0xf]
  %v48 = vld [vmem:[%s1 + $0x20] sm:$0xf]
  %v49 = vld [vmem:[%s1 + $0x24] sm:$0xf]
  %v50 = vld [vmem:[%s1 + $0x28] sm:$0xf]
  %v51 = vld [vmem:[%s1 + $0x2c] sm:$0xf]
  %v52 = vld [vmem:[%s1 + $0x30] sm:$0xf]
  %v53 = vld [vmem:[%s1 + $0x34] sm:$0xf]
  %v54 = vld [vmem:[%s1 + $0x38] sm:$0xf]
  %v55 = vld [vmem:[%s1 + $0x3c] sm:$0xf]
  %v56 = vld [vmem:[%s1 + $0x40] sm:$0xf]
  %v57 = vld [vmem:[%s1 + $0x44] sm:$0xf]
  %v58 = vld [vmem:[%s1 + $0x48] sm:$0xf]
  %v59 = vld [vmem:[%s1 + $0x4c] sm:$0xf]
  %v60 = vld [vmem:[%s1 + $0x50] sm:$0xf]
  %v61 = vld [vmem:[%s1 + $0x54] sm:$0xf]
  %v62 = vld [vmem:[%s1 + $0x58] sm:$0xf]
  %v63 = vld [vmem:[%s1 + $0x5c] sm:$0xf]
  %v64 = vld [vmem:[%s1 + $0x60] sm:$0xf]
  %v65 = vld [vmem:[%s1 + $0x64] sm:$0xf]
  %v66 = vld [vmem:[%s1 + $0x68] sm:$0xf]
  %v67 = vld [vmem:[%s1 + $0x6c] sm:$0xf]
  %v68 = vld [vmem:[%s1 + $0x70] sm:$0xf]
  %v69 = vld [vmem:[%s1 + $0x74] sm:$0xf]
  %v70 = vld [vmem:[%s1 + $0x78] sm:$0xf]
  %v71 = vld [vmem:[%s1 + $0x7c] sm:$0xf]
  %v72 = vld [vmem:[%s1 + $0x80] sm:$0xf]
  %v73 = vld [vmem:[%s1 + $0x84] sm:$0xf]
  %v74 = vld [vmem:[%s1 + $0x88] sm:$0xf]
  %v75 = vld [vmem:[%s1 + $0x8c] sm:$0xf]
  %v76 = vld [vmem:[%s1 + $0x90] sm:$0xf]
  %v77 = vld [vmem:[%s1 + $0x94] sm:$0xf]
  %v78 = vld [vmem:[%s1 + $0x98] sm:$0xf]
  %v79 = vld [vmem:[%s1 + $0x9c] sm:$0xf]
  %v80 = vld [vmem:[%s1 + $0xa0] sm:$0xf]
  %v81 = vld [vmem:[%s1 + $0xa4] sm:$0xf]
  %v82 = vld [vmem:[%s1 + $0xa8] sm:$0xf]
  %v83 = vld [vmem:[%s1 + $0xac] sm:$0xf]
  %v84 = vld [vmem:[%s1 + $0xb0] sm:$0xf]
  %v85 = vld [vmem:[%s1 + $0xb4] sm:$0xf]
  %v86 = vld [vmem:[%s1 + $0xb8] sm:$0xf]
  %v87 = vld [vmem:[%s1 + $0xbc] sm:$0xf]
  %v88 = vld [vmem:[%s1 + $0xc0] sm:$0xf]
  %v89 = vld [vmem:[%s1 + $0xc4] sm:$0xf]
  %v90 = vld [vmem:[%s1 + $0xc8] sm:$0xf]
  %v91 = vld [vmem:[%s1 + $0xcc] sm:$0xf]
  %v92 = vld [vmem:[%s1 + $0xd0] sm:$0xf]
  %v93 = vld [vmem:[%s1 + $0xd4] sm:$0xf]
  %v94 = vld [vmem:[%s1 + $0xd8] sm:$0xf]
  %v95 = vld [vmem:[%s1 + $0xdc] sm:$0xf]
  %v96 = vld [vmem:[%s1 + $0xe0] sm:$0xf]
  %v97 = vld [vmem:[%s1 + $0xe4] sm:$0xf]
  %v98 = vld [vmem:[%s1 + $0xe8] sm:$0xf]
  %v99 = vld [vmem:[%s1 + $0xec] sm:$0xf]
  %v100 = vld [vmem:[%s1 + $0xf0] sm:$0xf]
  %v101 = vld [vmem:[%s1 + $0xf4] sm:$0xf]
  %v102 = vld [vmem:[%s1 + $0xf8] sm:$0xf]
  %v103 = vld [vmem:[%s1 + $0xfc] sm:$0xf]
  %v104 = vld [vmem:[%s1 + $0x100] sm:$0xf]
  %v105 = vld [vmem:[%s1 + $0x104] sm:$0xf]
  %v106 = vld [vmem:[%s1 + $0x108] sm:$0xf]
  %v107 = vld [vmem:[%s1 + $0x10c] sm:$0xf]
  %v108 = vld [vmem:[%s1 + $0x110] sm:$0xf]
  %v109 = vld [vmem:[%s1 + $0x114] sm:$0xf]
  %v110 = vld [vmem:[%s1 + $0x118] sm:$0xf]
  %v111 = vld [vmem:[%s1 + $0x11c] sm:$0xf]
  %v112 = vld [vmem:[%s1 + $0x120] sm:$0xf]
  %v113 = vld [vmem:[%s1 + $0x124] sm:$0xf]
  %v114 = vld [vmem:[%s1 + $0x128] sm:$0xf]
  %v115 = vld [vmem:[%s1 + $0x12c] sm:$0xf]
  %v116 = vld [vmem:[%s1 + $0x130] sm:$0xf]
  %v117 = vld [vmem:[%s1 + $0x134] sm:$0xf]
  %v118 = vld [vmem:[%s1 + $0x138] sm:$0xf]
  %v119 = vld [vmem:[%s1 + $0x13c] sm:$0xf]
  %v120 = vld [vmem:[%s1 + $0x140] sm:$0xf]
  %v121 = vld [vmem:[%s1 + $0x144] sm:$0xf]
  %v122 = vld [vmem:[%s1 + $0x148] sm:$0xf]
  %v123 = vld [vmem:[%s1 + $0x14c] sm:$0xf]
  %v124 = vld [vmem:[%s1 + $0x150] sm:$0xf]
  %v125 = vld [vmem:[%s1 + $0x154] sm:$0xf]
  %v126 = vld [vmem:[%s1 + $0x158] sm:$0xf]
  %v127 = vld [vmem:[%s1 + $0x15c] sm:$0xf]
  %v128 = vld [vmem:[%s1 + $0x160] sm:$0xf]
  %v129 = vld [vmem:[%s1 + $0x164] sm:$0xf]
  %v130 = vld [vmem:[%s1 + $0x168] sm:$0xf]
  %v131 = vld [vmem:[%s1 + $0x16c] sm:$0xf]
  %v132 = vld [vmem:[%s1 + $0x170] sm:$0xf]
  %v133 = vld [vmem:[%s1 + $0x174] sm:$0xf]
  %v134 = vld [vmem:[%s1 + $0x178] sm:$0xf]
  %v135 = vld [vmem:[%s1 + $0x17c] sm:$0xf]
  %v136 = vld [vmem:[%s1 + $0x180] sm:$0xf]
  %v137 = vld [vmem:[%s1 + $0x184] sm:$0xf]
  %v138 = vld [vmem:[%s1 + $0x188] sm:$0xf]
  %v139 = vld [vmem:[%s1 + $0x18c] sm:$0xf]
  %v140 = vld [vmem:[%s1 + $0x190] sm:$0xf]
  %v141 = vld [vmem:[%s1 + $0x194] sm:$0xf]
  %v142 = vld [vmem:[%s1 + $0x198] sm:$0xf]
  %v143 = vld [vmem:[%s1 + $0x19c] sm:$0xf]
  %v144 = vld [vmem:[%s1 + $0x1a0] sm:$0xf]
  %v145 = vld [vmem:[%s1 + $0x1a4] sm:$0xf]
  %v146 = vld [vmem:[%s1 + $0x1a8] sm:$0xf]
  %v147 = vld [vmem:[%s1 + $0x1ac] sm:$0xf]
  %v148 = vld [vmem:[%s1 + $0x1b0] sm:$0xf]
  %v149 = vld [vmem:[%s1 + $0x1b4] sm:$0xf]
  %v150 = vld [vmem:[%s1 + $0x1b8] sm:$0xf]
  %v151 = vld [vmem:[%s1 + $0x1bc] sm:$0xf]
  %v152 = vld [vmem:[%s1 + $0x1c0] sm:$0xf]
  %v153 = vld [vmem:[%s1 + $0x1c4] sm:$0xf]
  %v154 = vld [vmem:[%s1 + $0x1c8] sm:$0xf]
  %v155 = vld [vmem:[%s1 + $0x1cc] sm:$0xf]
  %v156 = vld [vmem:[%s1 + $0x1d0] sm:$0xf]
  %v157 = vld [vmem:[%s1 + $0x1d4] sm:$0xf]
  %v158 = vld [vmem:[%s1 + $0x1d8] sm:$0xf]
  %v159 = vld [vmem:[%s1 + $0x1dc] sm:$0xf]
  %v160 = vld [vmem:[%s1 + $0x1e0] sm:$0xf]
  %v161 = vld [vmem:[%s1 + $0x1e4] sm:$0xf]
  %v162 = vld [vmem:[%s1 + $0x1e8] sm:$0xf]
  %v163 = vld [vmem:[%s1 + $0x1ec] sm:$0xf]
  %v164 = vld [vmem:[%s1 + $0x1f0] sm:$0xf]
  %v165 = vld [vmem:[%s1 + $0x1f4] sm:$0xf]
  %v166 = vld [vmem:[%s1 + $0x1f8] sm:$0xf]
  %v167 = vld [vmem:[%s1 + $0x1fc] sm:$0xf]
  %v168 = vld [vmem:[%s2] sm:$0x1]
  %v170 = vlaneseq
  %v171 = vshrl.u32 %v170, 7
  %v172 = vsub.s32 0, %v171
  %v173 = vrot.slane %v168, %v172
  %v191 = vunpack.c.l.b16 %v24
  %v192 = vunpack.c.h.b16 %v24
  %v193 = vunpack.c.l.b16 %v25
  %v194 = vunpack.c.h.b16 %v25
  %v195 = vunpack.c.l.b16 %v26
  %v196 = vunpack.c.h.b16 %v26
  %v197 = vunpack.c.l.b16 %v27
  %v198 = vunpack.c.h.b16 %v27
  %v199 = vunpack.c.l.b16 %v28
  %v200 = vunpack.c.h.b16 %v28
  %v201 = vunpack.c.l.b16 %v29
  %v202 = vunpack.c.h.b16 %v29
  %v203 = vunpack.c.l.b16 %v30
  %v204 = vunpack.c.h.b16 %v30
  %v205 = vunpack.c.l.b16 %v31
  %v206 = vunpack.c.h.b16 %v31
  %v207 = vunpack.c.l.b16 %v32
  %v208 = vunpack.c.h.b16 %v32
  %v209 = vunpack.c.l.b16 %v33
  %v210 = vunpack.c.h.b16 %v33
  %v211 = vunpack.c.l.b16 %v34
  %v212 = vunpack.c.h.b16 %v34
  %v213 = vunpack.c.l.b16 %v35
  %v214 = vunpack.c.h.b16 %v35
  %v215 = vunpack.c.l.b16 %v36
  %v216 = vunpack.c.h.b16 %v36
  %v217 = vunpack.c.l.b16 %v37
  %v218 = vunpack.c.h.b16 %v37
  %v219 = vunpack.c.l.b16 %v38
  %v220 = vunpack.c.h.b16 %v38
  %v221 = vunpack.c.l.b16 %v39
  %v222 = vunpack.c.h.b16 %v39
  %v223 = vpack.c.b16 %v199, %v191
  %v224 = vpack.c.b16 %v200, %v192
  %v225 = vpack.c.b16 %v201, %v193
  %v226 = vpack.c.b16 %v202, %v194
  %v227 = vpack.c.b16 %v203, %v195
  %v228 = vpack.c.b16 %v204, %v196
  %v229 = vpack.c.b16 %v205, %v197
  %v230 = vpack.c.b16 %v206, %v198
  %v231 = vpack.c.b16 %v215, %v207
  %v232 = vpack.c.b16 %v216, %v208
  %v233 = vpack.c.b16 %v217, %v209
  %v234 = vpack.c.b16 %v218, %v210
  %v235 = vpack.c.b16 %v219, %v211
  %v236 = vpack.c.b16 %v220, %v212
  %v237 = vpack.c.b16 %v221, %v213
  %v238 = vpack.c.b16 %v222, %v214
  %v383 = vunpack.c.l.b16 %v40
  %v384 = vunpack.c.l.b16 %v41
  %v385 = vunpack.c.l.b16 %v42
  %v386 = vunpack.c.l.b16 %v43
  %v387 = vunpack.c.l.b16 %v44
  %v388 = vunpack.c.l.b16 %v45
  %v389 = vunpack.c.l.b16 %v46
  %v390 = vunpack.c.l.b16 %v47
  %v391 = vunpack.c.l.b16 %v48
  %v392 = vunpack.c.l.b16 %v49
  %v393 = vunpack.c.l.b16 %v50
  %v394 = vunpack.c.l.b16 %v51
  %v395 = vunpack.c.l.b16 %v52
  %v396 = vunpack.c.l.b16 %v53
  %v397 = vunpack.c.l.b16 %v54
  %v398 = vunpack.c.l.b16 %v55
  %v399 = vunpack.c.l.b16 %v56
  %v400 = vunpack.c.l.b16 %v57
  %v401 = vunpack.c.l.b16 %v58
  %v402 = vunpack.c.l.b16 %v59
  %v403 = vunpack.c.l.b16 %v60
  %v404 = vunpack.c.l.b16 %v61
  %v405 = vunpack.c.l.b16 %v62
  %v406 = vunpack.c.l.b16 %v63
  %v407 = vunpack.c.l.b16 %v64
  %v408 = vunpack.c.l.b16 %v65
  %v409 = vunpack.c.l.b16 %v66
  %v410 = vunpack.c.l.b16 %v67
  %v411 = vunpack.c.l.b16 %v68
  %v412 = vunpack.c.l.b16 %v69
  %v413 = vunpack.c.l.b16 %v70
  %v414 = vunpack.c.l.b16 %v71
  %v415 = vunpack.c.l.b16 %v72
  %v416 = vunpack.c.l.b16 %v73
  %v417 = vunpack.c.l.b16 %v74
  %v418 = vunpack.c.l.b16 %v75
  %v419 = vunpack.c.l.b16 %v76
  %v420 = vunpack.c.l.b16 %v77
  %v421 = vunpack.c.l.b16 %v78
  %v422 = vunpack.c.l.b16 %v79
  %v423 = vunpack.c.l.b16 %v80
  %v424 = vunpack.c.l.b16 %v81
  %v425 = vunpack.c.l.b16 %v82
  %v426 = vunpack.c.l.b16 %v83
  %v427 = vunpack.c.l.b16 %v84
  %v428 = vunpack.c.l.b16 %v85
  %v429 = vunpack.c.l.b16 %v86
  %v430 = vunpack.c.l.b16 %v87
  %v431 = vunpack.c.l.b16 %v88
  %v432 = vunpack.c.l.b16 %v89
  %v433 = vunpack.c.l.b16 %v90
  %v434 = vunpack.c.l.b16 %v91
  %v435 = vunpack.c.l.b16 %v92
  %v436 = vunpack.c.l.b16 %v93
  %v437 = vunpack.c.l.b16 %v94
  %v438 = vunpack.c.l.b16 %v95
  %v439 = vunpack.c.l.b16 %v96
  %v440 = vunpack.c.l.b16 %v97
  %v441 = vunpack.c.l.b16 %v98
  %v442 = vunpack.c.l.b16 %v99
  %v443 = vunpack.c.l.b16 %v100
  %v444 = vunpack.c.l.b16 %v101
  %v445 = vunpack.c.l.b16 %v102
  %v446 = vunpack.c.l.b16 %v103
  %v447 = vunpack.c.l.b16 %v104
  %v448 = vunpack.c.l.b16 %v105
  %v449 = vunpack.c.l.b16 %v106
  %v450 = vunpack.c.l.b16 %v107
  %v451 = vunpack.c.l.b16 %v108
  %v452 = vunpack.c.l.b16 %v109
  %v453 = vunpack.c.l.b16 %v110
  %v454 = vunpack.c.l.b16 %v111
  %v455 = vunpack.c.l.b16 %v112
  %v456 = vunpack.c.l.b16 %v113
  %v457 = vunpack.c.l.b16 %v114
  %v458 = vunpack.c.l.b16 %v115
  %v459 = vunpack.c.l.b16 %v116
  %v460 = vunpack.c.l.b16 %v117
  %v461 = vunpack.c.l.b16 %v118
  %v462 = vunpack.c.l.b16 %v119
  %v463 = vunpack.c.l.b16 %v120
  %v464 = vunpack.c.l.b16 %v121
  %v465 = vunpack.c.l.b16 %v122
  %v466 = vunpack.c.l.b16 %v123
  %v467 = vunpack.c.l.b16 %v124
  %v468 = vunpack.c.l.b16 %v125
  %v469 = vunpack.c.l.b16 %v126
  %v470 = vunpack.c.l.b16 %v127
  %v471 = vunpack.c.l.b16 %v128
  %v472 = vunpack.c.l.b16 %v129
  %v473 = vunpack.c.l.b16 %v130
  %v474 = vunpack.c.l.b16 %v131
  %v475 = vunpack.c.l.b16 %v132
  %v476 = vunpack.c.l.b16 %v133
  %v477 = vunpack.c.l.b16 %v134
  %v478 = vunpack.c.l.b16 %v135
  %v479 = vunpack.c.l.b16 %v136
  %v480 = vunpack.c.l.b16 %v137
  %v481 = vunpack.c.l.b16 %v138
  %v482 = vunpack.c.l.b16 %v139
  %v483 = vunpack.c.l.b16 %v140
  %v484 = vunpack.c.l.b16 %v141
  %v485 = vunpack.c.l.b16 %v142
  %v486 = vunpack.c.l.b16 %v143
  %v487 = vunpack.c.l.b16 %v144
  %v488 = vunpack.c.l.b16 %v145
  %v489 = vunpack.c.l.b16 %v146
  %v490 = vunpack.c.l.b16 %v147
  %v491 = vunpack.c.l.b16 %v148
  %v492 = vunpack.c.l.b16 %v149
  %v493 = vunpack.c.l.b16 %v150
  %v494 = vunpack.c.l.b16 %v151
  %v495 = vunpack.c.l.b16 %v152
  %v496 = vunpack.c.l.b16 %v153
  %v497 = vunpack.c.l.b16 %v154
  %v498 = vunpack.c.l.b16 %v155
  %v499 = vunpack.c.l.b16 %v156
  %v500 = vunpack.c.l.b16 %v157
  %v501 = vunpack.c.l.b16 %v158
  %v502 = vunpack.c.l.b16 %v159
  %v503 = vunpack.c.l.b16 %v160
  %v504 = vunpack.c.l.b16 %v161
  %v505 = vunpack.c.l.b16 %v162
  %v506 = vunpack.c.l.b16 %v163
  %v507 = vunpack.c.l.b16 %v164
  %v508 = vunpack.c.l.b16 %v165
  %v509 = vunpack.c.l.b16 %v166
  %v510 = vunpack.c.l.b16 %v167
  %v511 = vpack.c.b16 %v384, %v383
  %v512 = vpack.c.b16 %v386, %v385
  %v513 = vpack.c.b16 %v388, %v387
  %v514 = vpack.c.b16 %v390, %v389
  %v515 = vpack.c.b16 %v392, %v391
  %v516 = vpack.c.b16 %v394, %v393
  %v517 = vpack.c.b16 %v396, %v395
  %v518 = vpack.c.b16 %v398, %v397
  %v519 = vpack.c.b16 %v400, %v399
  %v520 = vpack.c.b16 %v402, %v401
  %v521 = vpack.c.b16 %v404, %v403
  %v522 = vpack.c.b16 %v406, %v405
  %v523 = vpack.c.b16 %v408, %v407
  %v524 = vpack.c.b16 %v410, %v409
  %v525 = vpack.c.b16 %v412, %v411
  %v526 = vpack.c.b16 %v414, %v413
  %v527 = vpack.c.b16 %v416, %v415
  %v528 = vpack.c.b16 %v418, %v417
  %v529 = vpack.c.b16 %v420, %v419
  %v530 = vpack.c.b16 %v422, %v421
  %v531 = vpack.c.b16 %v424, %v423
  %v532 = vpack.c.b16 %v426, %v425
  %v533 = vpack.c.b16 %v428, %v427
  %v534 = vpack.c.b16 %v430, %v429
  %v535 = vpack.c.b16 %v432, %v431
  %v536 = vpack.c.b16 %v434, %v433
  %v537 = vpack.c.b16 %v436, %v435
  %v538 = vpack.c.b16 %v438, %v437
  %v539 = vpack.c.b16 %v440, %v439
  %v540 = vpack.c.b16 %v442, %v441
  %v541 = vpack.c.b16 %v444, %v443
  %v542 = vpack.c.b16 %v446, %v445
  %v543 = vpack.c.b16 %v448, %v447
  %v544 = vpack.c.b16 %v450, %v449
  %v545 = vpack.c.b16 %v452, %v451
  %v546 = vpack.c.b16 %v454, %v453
  %v547 = vpack.c.b16 %v456, %v455
  %v548 = vpack.c.b16 %v458, %v457
  %v549 = vpack.c.b16 %v460, %v459
  %v550 = vpack.c.b16 %v462, %v461
  %v551 = vpack.c.b16 %v464, %v463
  %v552 = vpack.c.b16 %v466, %v465
  %v553 = vpack.c.b16 %v468, %v467
  %v554 = vpack.c.b16 %v470, %v469
  %v555 = vpack.c.b16 %v472, %v471
  %v556 = vpack.c.b16 %v474, %v473
  %v557 = vpack.c.b16 %v476, %v475
  %v558 = vpack.c.b16 %v478, %v477
  %v559 = vpack.c.b16 %v480, %v479
  %v560 = vpack.c.b16 %v482, %v481
  %v561 = vpack.c.b16 %v484, %v483
  %v562 = vpack.c.b16 %v486, %v485
  %v563 = vpack.c.b16 %v488, %v487
  %v564 = vpack.c.b16 %v490, %v489
  %v565 = vpack.c.b16 %v492, %v491
  %v566 = vpack.c.b16 %v494, %v493
  %v567 = vpack.c.b16 %v496, %v495
  %v568 = vpack.c.b16 %v498, %v497
  %v569 = vpack.c.b16 %v500, %v499
  %v570 = vpack.c.b16 %v502, %v501
  %v571 = vpack.c.b16 %v504, %v503
  %v572 = vpack.c.b16 %v506, %v505
  %v573 = vpack.c.b16 %v508, %v507
  %v574 = vpack.c.b16 %v510, %v509
  %639 = vmatprep.subr.bf16.mxu0 0
  %640 = vmatpush1.bf16.msra.mxu0 %v511
  %641 = vmatprep.subr.bf16.mxu0 0
  %642 = vmatpush1.bf16.msra.mxu0 %v512
  %643 = vmatprep.subr.bf16.mxu0 0
  %644 = vmatpush1.bf16.msra.mxu0 %v513
  %645 = vmatprep.subr.bf16.mxu0 0
  %646 = vmatpush1.bf16.msra.mxu0 %v514
  %647 = vmatprep.subr.bf16.mxu0 0
  %648 = vmatpush1.bf16.msra.mxu0 %v515
  %649 = vmatprep.subr.bf16.mxu0 0
  %650 = vmatpush1.bf16.msra.mxu0 %v516
  %651 = vmatprep.subr.bf16.mxu0 0
  %652 = vmatpush1.bf16.msra.mxu0 %v517
  %653 = vmatprep.subr.bf16.mxu0 0
  %654 = vmatpush1.bf16.msra.mxu0 %v518
  %655 = vmatprep.subr.bf16.mxu0 0
  %656 = vmatpush1.bf16.msra.mxu0 %v519
  %657 = vmatprep.subr.bf16.mxu0 0
  %658 = vmatpush1.bf16.msra.mxu0 %v520
  %659 = vmatprep.subr.bf16.mxu0 0
  %660 = vmatpush1.bf16.msra.mxu0 %v521
  %661 = vmatprep.subr.bf16.mxu0 0
  %662 = vmatpush1.bf16.msra.mxu0 %v522
  %663 = vmatprep.subr.bf16.mxu0 0
  %664 = vmatpush1.bf16.msra.mxu0 %v523
  %665 = vmatprep.subr.bf16.mxu0 0
  %666 = vmatpush1.bf16.msra.mxu0 %v524
  %667 = vmatprep.subr.bf16.mxu0 0
  %668 = vmatpush1.bf16.msra.mxu0 %v525
  %669 = vmatprep.subr.bf16.mxu0 0
  %670 = vmatpush1.bf16.msra.mxu0 %v526
  %671 = vmatprep.mubr.bf16.mxu0 %v224
  %672 = vmatmul.mubr.bf16.gmra.mrb[0].mxu0 %v223
  %v673 = vpop.f32.mrb[0].mxu0
  %v674 = vadd.f32 %v173, %v673
  %v675 = vpop.f32.mrb[0].mxu0
  %v676 = vpop.f32.mrb[0].mxu0
  %v677 = vadd.f32 %v173, %v676
  %v678 = vpop.f32.mrb[0].mxu0
  %679 = vmatprep.mubr.bf16.mxu0 %v232
  %680 = vmatmul.mubr.bf16.gmra.mrb[0].mxu0 %v231
  %v681 = vpop.f32.mrb[0].mxu0
  %v682 = vadd.f32 %v173, %v681
  %v683 = vpop.f32.mrb[0].mxu0
  %v684 = vpop.f32.mrb[0].mxu0
  %v685 = vadd.f32 %v173, %v684
  %v686 = vpop.f32.mrb[0].mxu0
  %687 = vdwg.mxu0
  %688 = vmatprep.subr.bf16.mxu0 0
  %689 = vmatpush1.bf16.msra.mxu0 %v527
  %690 = vmatprep.subr.bf16.mxu0 0
  %691 = vmatpush1.bf16.msra.mxu0 %v528
  %692 = vmatprep.subr.bf16.mxu0 0
  %693 = vmatpush1.bf16.msra.mxu0 %v529
  %694 = vmatprep.subr.bf16.mxu0 0
  %695 = vmatpush1.bf16.msra.mxu0 %v530
  %696 = vmatprep.subr.bf16.mxu0 0
  %697 = vmatpush1.bf16.msra.mxu0 %v531
  %698 = vmatprep.subr.bf16.mxu0 0
  %699 = vmatpush1.bf16.msra.mxu0 %v532
  %700 = vmatprep.subr.bf16.mxu0 0
  %701 = vmatpush1.bf16.msra.mxu0 %v533
  %702 = vmatprep.subr.bf16.mxu0 0
  %703 = vmatpush1.bf16.msra.mxu0 %v534
  %704 = vmatprep.subr.bf16.mxu0 0
  %705 = vmatpush1.bf16.msra.mxu0 %v535
  %706 = vmatprep.subr.bf16.mxu0 0
  %707 = vmatpush1.bf16.msra.mxu0 %v536
  %708 = vmatprep.subr.bf16.mxu0 0
  %709 = vmatpush1.bf16.msra.mxu0 %v537
  %710 = vmatprep.subr.bf16.mxu0 0
  %711 = vmatpush1.bf16.msra.mxu0 %v538
  %712 = vmatprep.subr.bf16.mxu0 0
  %713 = vmatpush1.bf16.msra.mxu0 %v539
  %714 = vmatprep.subr.bf16.mxu0 0
  %715 = vmatpush1.bf16.msra.mxu0 %v540
  %716 = vmatprep.subr.bf16.mxu0 0
  %717 = vmatpush1.bf16.msra.mxu0 %v541
  %718 = vmatprep.subr.bf16.mxu0 0
  %719 = vmatpush1.bf16.msra.mxu0 %v542
  %720 = vmatprep.mubr.bf16.mxu0 %v226
  %721 = vmatmul.mubr.bf16.gmra.mrb[0].mxu0 %v225
  %v722 = vpop.f32.mrb[0].mxu0
  %v723 = vadd.f32 %v674, %v722
  %v724 = vpop.f32.mrb[0].mxu0
  %v725 = vpop.f32.mrb[0].mxu0
  %v726 = vadd.f32 %v677, %v725
  %v727 = vpop.f32.mrb[0].mxu0
  %728 = vmatprep.mubr.bf16.mxu0 %v234
  %729 = vmatmul.mubr.bf16.gmra.mrb[0].mxu0 %v233
  %v730 = vpop.f32.mrb[0].mxu0
  %v731 = vadd.f32 %v682, %v730
  %v732 = vpop.f32.mrb[0].mxu0
  %v733 = vpop.f32.mrb[0].mxu0
  %v734 = vadd.f32 %v685, %v733
  %v735 = vpop.f32.mrb[0].mxu0
  %736 = vdwg.mxu0
  %737 = vmatprep.subr.bf16.mxu0 0
  %738 = vmatpush1.bf16.msra.mxu0 %v543
  %739 = vmatprep.subr.bf16.mxu0 0
  %740 = vmatpush1.bf16.msra.mxu0 %v544
  %741 = vmatprep.subr.bf16.mxu0 0
  %742 = vmatpush1.bf16.msra.mxu0 %v545
  %743 = vmatprep.subr.bf16.mxu0 0
  %744 = vmatpush1.bf16.msra.mxu0 %v546
  %745 = vmatprep.subr.bf16.mxu0 0
  %746 = vmatpush1.bf16.msra.mxu0 %v547
  %747 = vmatprep.subr.bf16.mxu0 0
  %748 = vmatpush1.bf16.msra.mxu0 %v548
  %749 = vmatprep.subr.bf16.mxu0 0
  %750 = vmatpush1.bf16.msra.mxu0 %v549
  %751 = vmatprep.subr.bf16.mxu0 0
  %752 = vmatpush1.bf16.msra.mxu0 %v550
  %753 = vmatprep.subr.bf16.mxu0 0
  %754 = vmatpush1.bf16.msra.mxu0 %v551
  %755 = vmatprep.subr.bf16.mxu0 0
  %756 = vmatpush1.bf16.msra.mxu0 %v552
  %757 = vmatprep.subr.bf16.mxu0 0
  %758 = vmatpush1.bf16.msra.mxu0 %v553
  %759 = vmatprep.subr.bf16.mxu0 0
  %760 = vmatpush1.bf16.msra.mxu0 %v554
  %761 = vmatprep.subr.bf16.mxu0 0
  %762 = vmatpush1.bf16.msra.mxu0 %v555
  %763 = vmatprep.subr.bf16.mxu0 0
  %764 = vmatpush1.bf16.msra.mxu0 %v556
  %765 = vmatprep.subr.bf16.mxu0 0
  %766 = vmatpush1.bf16.msra.mxu0 %v557
  %767 = vmatprep.subr.bf16.mxu0 0
  %768 = vmatpush1.bf16.msra.mxu0 %v558
  %769 = vmatprep.mubr.bf16.mxu0 %v228
  %770 = vmatmul.mubr.bf16.gmra.mrb[0].mxu0 %v227
  %v771 = vpop.f32.mrb[0].mxu0
  %v772 = vadd.f32 %v723, %v771
  %v773 = vpop.f32.mrb[0].mxu0
  %v774 = vpop.f32.mrb[0].mxu0
  %v775 = vadd.f32 %v726, %v774
  %v776 = vpop.f32.mrb[0].mxu0
  %777 = vmatprep.mubr.bf16.mxu0 %v236
  %778 = vmatmul.mubr.bf16.gmra.mrb[0].mxu0 %v235
  %v779 = vpop.f32.mrb[0].mxu0
  %v780 = vadd.f32 %v731, %v779
  %v781 = vpop.f32.mrb[0].mxu0
  %v782 = vpop.f32.mrb[0].mxu0
  %v783 = vadd.f32 %v734, %v782
  %v784 = vpop.f32.mrb[0].mxu0
  %785 = vdwg.mxu0
  %786 = vmatprep.subr.bf16.mxu0 0
  %787 = vmatpush1.bf16.msra.mxu0 %v559
  %788 = vmatprep.subr.bf16.mxu0 0
  %789 = vmatpush1.bf16.msra.mxu0 %v560
  %790 = vmatprep.subr.bf16.mxu0 0
  %791 = vmatpush1.bf16.msra.mxu0 %v561
  %792 = vmatprep.subr.bf16.mxu0 0
  %793 = vmatpush1.bf16.msra.mxu0 %v562
  %794 = vmatprep.subr.bf16.mxu0 0
  %795 = vmatpush1.bf16.msra.mxu0 %v563
  %796 = vmatprep.subr.bf16.mxu0 0
  %797 = vmatpush1.bf16.msra.mxu0 %v564
  %798 = vmatprep.subr.bf16.mxu0 0
  %799 = vmatpush1.bf16.msra.mxu0 %v565
  %800 = vmatprep.subr.bf16.mxu0 0
  %801 = vmatpush1.bf16.msra.mxu0 %v566
  %802 = vmatprep.subr.bf16.mxu0 0
  %803 = vmatpush1.bf16.msra.mxu0 %v567
  %804 = vmatprep.subr.bf16.mxu0 0
  %805 = vmatpush1.bf16.msra.mxu0 %v568
  %806 = vmatprep.subr.bf16.mxu0 0
  %807 = vmatpush1.bf16.msra.mxu0 %v569
  %808 = vmatprep.subr.bf16.mxu0 0
  %809 = vmatpush1.bf16.msra.mxu0 %v570
  %810 = vmatprep.subr.bf16.mxu0 0
  %811 = vmatpush1.bf16.msra.mxu0 %v571
  %812 = vmatprep.subr.bf16.mxu0 0
  %813 = vmatpush1.bf16.msra.mxu0 %v572
  %814 = vmatprep.subr.bf16.mxu0 0
  %815 = vmatpush1.bf16.msra.mxu0 %v573
  %816 = vmatprep.subr.bf16.mxu0 0
  %817 = vmatpush1.bf16.msra.mxu0 %v574
  %818 = vmatprep.mubr.bf16.mxu0 %v230
  %819 = vmatmul.mubr.bf16.gmra.mrb[0].mxu0 %v229
  %v820 = vpop.f32.mrb[0].mxu0
  %v821 = vadd.f32 %v772, %v820
  %v822 = vpop.f32.mrb[0].mxu0
  %v823 = vpop.f32.mrb[0].mxu0
  %v824 = vadd.f32 %v775, %v823
  %v825 = vpop.f32.mrb[0].mxu0
  %826 = vmatprep.mubr.bf16.mxu0 %v238
  %827 = vmatmul.mubr.bf16.gmra.mrb[0].mxu0 %v237
  %v828 = vpop.f32.mrb[0].mxu0
  %v829 = vadd.f32 %v780, %v828
  %v830 = vpop.f32.mrb[0].mxu0
  %v831 = vpop.f32.mrb[0].mxu0
  %v832 = vadd.f32 %v783, %v831
  %v833 = vpop.f32.mrb[0].mxu0
  %834 = vdwg.mxu0
  %v835 = vld [vmem:[%s3] sm:$0xff]
  %v836 = vld [vmem:[%s3 + $0x8] sm:$0xff]
  %v837 = vld [vmem:[%s3 + $0x10] sm:$0xff]
  %v838 = vld [vmem:[%s3 + $0x18] sm:$0xff]
  %v839 = vadd.f32 %v821, %v835
  %v840 = vadd.f32 %v824, %v836
  %v841 = vadd.f32 %v829, %v837
  %v842 = vadd.f32 %v832, %v838
  %vm843 = vcmask 261120
  %v844 = vsel %vm843, %v839, 0.0
  %845 = vadd.xlane.f32.xlu0 %v844
  %v846 = vpop.xlane.xlu0 %845
  %v847 = vsel %vm843, %v840, 0.0
  %848 = vadd.xlane.f32.xlu0 %v847
  %v849 = vpop.xlane.xlu0 %848
  %v850 = vsel %vm843, %v841, 0.0
  %851 = vadd.xlane.f32.xlu0 %v850
  %v852 = vpop.xlane.xlu0 %851
  %v853 = vsel %vm843, %v842, 0.0
  %854 = vadd.xlane.f32.xlu0 %v853
  %v855 = vpop.xlane.xlu0 %854
  %v856 = vrcp.pop 32.0
  %v857 = vmul.f32 %v846, %v856
  %v858 = vmul.f32 %v849, %v856
  %v859 = vmul.f32 %v852, %v856
  %v860 = vmul.f32 %v855, %v856
  %v861 = vsub.f32 %v839, %v857
  %v862 = vsub.f32 %v840, %v858
  %v863 = vsub.f32 %v841, %v859
  %v864 = vsub.f32 %v842, %v860
  %v865 = vmul.f32 %v861, %v861
  %v866 = vmul.f32 %v862, %v862
  %v867 = vmul.f32 %v863, %v863
  %v868 = vmul.f32 %v864, %v864
  %v869 = vsel %vm843, %v865, 0.0
  %870 = vadd.xlane.f32.xlu0 %v869
  %v871 = vpop.xlane.xlu0 %870
  %v872 = vsel %vm843, %v866, 0.0
  %873 = vadd.xlane.f32.xlu0 %v872
  %v874 = vpop.xlane.xlu0 %873
  %v875 = vsel %vm843, %v867, 0.0
  %876 = vadd.xlane.f32.xlu0 %v875
  %v877 = vpop.xlane.xlu0 %876
  %v878 = vsel %vm843, %v868, 0.0
  %879 = vadd.xlane.f32.xlu0 %v878
  %v880 = vpop.xlane.xlu0 %879
  %v881 = vmul.f32 %v871, %v856
  %v882 = vmul.f32 %v874, %v856
  %v883 = vmul.f32 %v877, %v856
  %v884 = vmul.f32 %v880, %v856
  %v885 = vadd.f32 %v881, 1e-05
  %v886 = vadd.f32 %v882, 1e-05
  %v887 = vadd.f32 %v883, 1e-05
  %v888 = vadd.f32 %v884, 1e-05
  %v889 = vrsqrt.pop %v885
  %v890 = vrsqrt.pop %v886
  %v891 = vrsqrt.pop %v887
  %v892 = vrsqrt.pop %v888
  %v893 = vmul.f32 %v861, %v889
  %v894 = vmul.f32 %v862, %v890
  %v895 = vmul.f32 %v863, %v891
  %v896 = vmul.f32 %v864, %v892
  %v897 = vld [vmem:[%s4] sm:$0x1]
  %v899 = vlaneseq
  %v900 = vshrl.u32 %v899, 7
  %v901 = vsub.s32 0, %v900
  %v902 = vrot.slane %v897, %v901
  %v904 = vmul.f32 %v893, %v902
  %v905 = vmul.f32 %v894, %v902
  %v906 = vmul.f32 %v895, %v902
  %v907 = vmul.f32 %v896, %v902
  %v908 = vld [vmem:[%s5] sm:$0x1]
  %v910 = vlaneseq
  %v911 = vshrl.u32 %v910, 7
  %v912 = vsub.s32 0, %v911
  %v913 = vrot.slane %v908, %v912
  %v915 = vadd.f32 %v904, %v913
  %v916 = vadd.f32 %v905, %v913
  %v917 = vadd.f32 %v906, %v913
  %v918 = vadd.f32 %v907, %v913
  %919 = vst.msk [vmem:[%s6] sm:$0xff] %vm843, %v915
  %920 = vst.msk [vmem:[%s6 + $0x8] sm:$0xff] %vm843, %v916
  %921 = vst.msk [vmem:[%s6 + $0x10] sm:$0xff] %vm843, %v917
  %922 = vst.msk [vmem:[%s6 + $0x18] sm:$0xff] %vm843, %v918
  // Predicated region
  $region26: #{joint_conv_trans_block.34} parent=0 // pred_check
    _
  $region27: #{joint_conv_trans_block.34} parent=0 // pred_check_branch
    %924 = sbr.rel (0) target = $region29
  $region28: #{joint_conv_trans_block.34} parent=0 // pred_region
    _
  $region29: #{joint_conv_trans_block.34} parent=0 // pred_fallthru
    _
  // Predicated region
  $region30: #{joint_conv_trans_block.34} parent=0 // pred_check
    _
  $region31: #{joint_conv_trans_block.34} parent=0 // pred_check_branch
    %926 = sbr.rel (0) target = $region33
  $region32: #{joint_conv_trans_block.34} parent=0 // pred_region
    _
  $region33: #{joint_conv_trans_block.34} parent=0 // pred_fallthru
    _

</llo_original>
